<compile_context>
chip_gen: v7x
topology: tpu7x:2x2x1
jax: 0.10.0
libtpu: 0.0.40
codegen_flags: <defaults>
</compile_context>

<pallas_src>
import jax
import jax.numpy as jnp
from jax import lax
from jax.experimental import pallas as pl
from jax.experimental.pallas import tpu as pltpu

EPS = 1e-5
N_LAYERS = 5


# --------------------------------- kernel ------------------------------------

def _make_kernel(N, H, W, C):
    R, WC = N * H, W * C
    inv_nhw = 1.0 / float(N * H * W)
    w_steps = W.bit_length() - 1          # log2(W); W asserted power-of-two in wrapper

    def kernel(x_ref, b_ref, w_hbm, o_ref, wbuf, sem):
        # Prime the weight pipeline: layer 0 -> slot 0.
        pltpu.make_async_copy(w_hbm.at[0], wbuf.at[0], sem.at[0]).start()

        # Row-tap validity: rolling the (N*H, W*C) slab by +/-1 row across an image
        # boundary corresponds to the conv's zero padding along H.
        h = lax.broadcasted_iota(jnp.int32, (R, 1), 0) % H
        valid_up = h >= 1                  # row r-1 belongs to the same image
        valid_dn = h <= H - 2              # row r+1 belongs to the same image

        def conv3x3(x, layer, slot):
            # kh = -1/0/+1 row taps; the kw taps and the zero padding along W are baked
            # into the (3*WC, WC) banded weight -> a single K=768 MXU matmul, f32 accum.
            x_up = jnp.where(valid_up, pltpu.roll(x, shift=1, axis=0), 0.0)
            x_dn = jnp.where(valid_dn, pltpu.roll(x, shift=R - 1, axis=0), 0.0)
            xcat = jnp.concatenate([x_up, x, x_dn], axis=1).astype(jnp.bfloat16)
            acc = jnp.dot(xcat, wbuf[slot], preferred_element_type=jnp.float32)
            return acc + b_ref[layer]      # (R, WC) + (1, WC) W-tiled bias

        def channel_fold(s):
            # s: (1, WC).  Cyclic lane-roll tree (XLU) sums the W positions of every
            # channel and leaves the per-channel sum replicated across W — exactly what
            # the old fold matmul produced, with zero HBM/MXU cost.
            for k in range(w_steps):
                s = s + pltpu.roll(s, shift=C << k, axis=1)
            return s

        def batchnorm(x):
            # Training-mode BatchNorm2d(affine=False): batch stats over (N, H, W),
            # biased variance, two-pass for numerical stability.
            mean = channel_fold(jnp.sum(x, axis=0, keepdims=True)) * inv_nhw
            d = x - mean
            var = channel_fold(jnp.sum(d * d, axis=0, keepdims=True)) * inv_nhw
            return d * lax.rsqrt(var + EPS)

        x = x_ref[...]
        for layer in range(N_LAYERS):
            slot = layer & 1
            if layer + 1 < N_LAYERS:       # prefetch next layer's weights into other slot
                pltpu.make_async_copy(w_hbm.at[layer + 1], wbuf.at[1 - slot],
                                      sem.at[1 - slot]).start()
            pltpu.make_async_copy(w_hbm.at[layer], wbuf.at[slot],
                                  sem.at[slot]).wait()
            y = conv3x3(x, layer, slot)
            if layer < 2:                  # conv1 / conv2 are followed by BatchNorm
                y = batchnorm(y)
            x = jnp.maximum(y, 0.0)        # ReLU
        o_ref[...] = x                     # lane-dense (R, WC) store

    return kernel


# -------------------------------- wrapper ------------------------------------

def _banded_weight(w_hwio, W_sp, C):
    """(3, 3, Cin, Cout) HWIO conv weight -> (3*W*C, W*C) block-banded matrix.

    B[kh*WC + wi*C + ci, wo*C + co] = w_hwio[kh, wi-wo+1, ci, co] if |wi-wo| <= 1 else 0,
    so [x_up | x | x_dn] @ B applies all 9 taps and the zero padding along W.
    """
    wi = jnp.arange(W_sp)[:, None]
    wo = jnp.arange(W_sp)[None, :]
    diff = wi - wo
    band = (jnp.abs(diff) <= 1).astype(w_hwio.dtype)               # (W, W)
    kw_idx = jnp.clip(diff + 1, 0, 2)                              # (W, W)
    blk = w_hwio[:, kw_idx, :, :] * band[None, :, :, None, None]   # (3, W, W, Cin, Cout)
    blk = jnp.transpose(blk, (0, 1, 3, 2, 4))                      # (kh, wi, ci, wo, co)
    return blk.reshape(3 * W_sp * C, W_sp * C)


def conv_block(x_nchw, params):
    """x_nchw: (N, C, H, W) float32 -> (N, C, H, W) float32."""
    w1, b1, w2, w3, b3, w4, b4, w5, b5 = params
    N, C, H, W = x_nchw.shape
    assert W & (W - 1) == 0, "lane roll-tree BN reduction assumes W is a power of 2"
    R, WC = N * H, W * C

    # NCHW -> lane-dense (N*H, W*C) slab (wrapper-side layout plumbing only).
    x = jnp.transpose(x_nchw, (0, 2, 3, 1)).astype(jnp.float32).reshape(R, WC)

    # Banded weights (bf16, streamed from HBM one layer at a time) and W-tiled f32
    # biases (zero row for conv2's bias=False).
    w_banded = jnp.stack(
        [_banded_weight(w, W, C) for w in (w1, w2, w3, w4, w5)]
    ).astype(jnp.bfloat16)                                          # (5, 3*WC, WC)
    zero_b = jnp.zeros((1, C), jnp.float32)
    biases = jnp.stack([jnp.tile(b, (1, W))
                        for b in (b1, zero_b, b3, b4, b5)])         # (5, 1, WC)

    grid_spec = pltpu.PrefetchScalarGridSpec(
        num_scalar_prefetch=0,
        grid=(1,),
        in_specs=[
            pl.BlockSpec((R, WC), lambda i: (0, 0)),                # activations -> VMEM
            pl.BlockSpec((N_LAYERS, 1, WC), lambda i: (0, 0, 0)),   # biases -> VMEM (5 KB)
            pl.BlockSpec(memory_space=pl.ANY),                      # weights stay in HBM
        ],
        out_specs=pl.BlockSpec((R, WC), lambda i: (0, 0)),
        scratch_shapes=[
            pltpu.VMEM((2, 3 * WC, WC), jnp.bfloat16),              # double-buffered layer weights
            pltpu.SemaphoreType.DMA((2,)),
        ],
    )

    out = pl.pallas_call(
        _make_kernel(N, H, W, C),
        out_shape=jax.ShapeDtypeStruct((R, WC), jnp.float32),
        grid_spec=grid_spec,
        compiler_params=pltpu.CompilerParams(
            dimension_semantics=("arbitrary",)),
    )(x, biases, w_banded)

    return jnp.transpose(out.reshape(N, H, W, C), (0, 3, 1, 2))     # -> NCHW


# --------------------------- deterministic params -----------------------------

def init_params(key, channels):
    """Conv weights in HWIO (3, 3, Cin, Cout); biases as (1, C) rows."""
    fan_in = channels * 9
    w_scale = 1.0 / jnp.sqrt(jnp.float32(fan_in))
    keys = jax.random.split(key, 9)

    def wgt(k):
        return (jax.random.normal(k, (3, 3, channels, channels), jnp.float32)
                * w_scale)

    def bias(k):
        return (jax.random.uniform(k, (1, channels), jnp.float32,
                                   minval=-1.0, maxval=1.0) * w_scale)

    w1, b1 = wgt(keys[0]), bias(keys[1])
    w2 = wgt(keys[2])                      # conv2 has bias=False
    w3, b3 = wgt(keys[3]), bias(keys[4])
    w4, b4 = wgt(keys[5]), bias(keys[6])
    w5, b5 = wgt(keys[7]), bias(keys[8])
    return (w1, b1, w2, w3, b3, w4, b4, w5, b5)


# ---------------------------------- main --------------------------------------

if __name__ == "__main__":
    channels = 16                      # module default
    N, H, W = 2, 16, 16

    key = jax.random.PRNGKey(0)
    k_x, k_p = jax.random.split(key)
    x = jax.random.normal(k_x, (N, channels, H, W), jnp.float32)   # NCHW input
    params = init_params(k_p, channels)

    y = jax.jit(conv_block)(x, params)
    y = jax.block_until_ready(y)

    assert y.shape == (N, channels, H, W), y.shape
    assert bool(jnp.all(jnp.isfinite(y)))
    assert bool(jnp.all(y >= 0.0))     # final ReLU

    print("KERNEL_OK")
</pallas_src>

<mosaic_0001>
module attributes {stable_mosaic.version = 11 : i64} {
  func.func @kernel(%arg0: i32, %arg1: memref<32x256xf32, #tpu.memory_space<vmem>>, %arg2: memref<5x1x256xf32, #tpu.memory_space<vmem>>, %arg3: memref<5x768x256xbf16, #tpu.memory_space<any>>, %arg4: memref<32x256xf32, #tpu.memory_space<vmem>>, %arg5: memref<2x768x256xbf16, #tpu.memory_space<vmem>>, %arg6: memref<2x!tpu.dma_semaphore, #tpu.memory_space<semaphore_mem>>) attributes {dimension_semantics = [#tpu.dimension_semantics<arbitrary>], iteration_bounds = array<i64: 1>, scalar_prefetch = 0 : i64, scratch_operands = 2 : i64, tpu.core_type = #tpu.core_type<tc>, window_params = [{pipeline_mode = #tpu.pipeline_mode<synchronous>, transform_indices = @transform_0, window_bounds = array<i64: 32, 256>}, {pipeline_mode = #tpu.pipeline_mode<synchronous>, transform_indices = @transform_1, window_bounds = array<i64: 5, 1, 256>}, {}, {pipeline_mode = #tpu.pipeline_mode<synchronous>, transform_indices = @transform_3, window_bounds = array<i64: 32, 256>}]} {
    %c0_i32 = arith.constant 0 : i32
    %c0_i32_0 = arith.constant 0 : i32
    %c0_i32_1 = arith.constant 0 : i32
    %c0_i32_2 = arith.constant 0 : i32
    %c0_i32_3 = arith.constant 0 : i32
    %0 = tpu.memref_slice %arg3[%c0_i32, %c0_i32_2, %c0_i32_3] : memref<5x768x256xbf16, #tpu.memory_space<any>> -> memref<1x768x256xbf16, #tpu.memory_space<any>>
    %1 = tpu.memref_squeeze %0 : memref<1x768x256xbf16, #tpu.memory_space<any>> -> memref<768x256xbf16, #tpu.memory_space<any>>
    %c0_i32_4 = arith.constant 0 : i32
    %c0_i32_5 = arith.constant 0 : i32
    %2 = tpu.memref_slice %arg5[%c0_i32_0, %c0_i32_4, %c0_i32_5] : memref<2x768x256xbf16, #tpu.memory_space<vmem>> -> memref<1x768x256xbf16, #tpu.memory_space<vmem>>
    %3 = tpu.memref_squeeze %2 : memref<1x768x256xbf16, #tpu.memory_space<vmem>> -> memref<768x256xbf16, #tpu.memory_space<vmem>>
    %4 = tpu.memref_slice %arg6[%c0_i32_1] : memref<2x!tpu.dma_semaphore, #tpu.memory_space<semaphore_mem>> -> memref<1x!tpu.dma_semaphore, #tpu.memory_space<semaphore_mem>>
    %5 = tpu.memref_squeeze %4 : memref<1x!tpu.dma_semaphore, #tpu.memory_space<semaphore_mem>> -> memref<!tpu.dma_semaphore, #tpu.memory_space<semaphore_mem>>
    tpu.enqueue_dma source(%1 : memref<768x256xbf16, #tpu.memory_space<any>>) target(%3 : memref<768x256xbf16, #tpu.memory_space<vmem>>) target_semaphore(%5 : memref<!tpu.dma_semaphore, #tpu.memory_space<semaphore_mem>>)
    %6 = tpu.iota {dimensions = array<i32: 0>} : vector<32x1xi32>
    %c16_i32 = arith.constant 16 : i32
    %c0_i32_6 = arith.constant 0 : i32
    %7 = arith.cmpi eq, %c16_i32, %c0_i32_6 : i32
    %c1_i32 = arith.constant 1 : i32
    %8 = arith.select %7, %c1_i32, %c16_i32 : i32
    %9 = vector.broadcast %8 : i32 to vector<32x1xi32>
    %10 = arith.remsi %6, %9 : vector<32x1xi32>
    %c0_i32_7 = arith.constant 0 : i32
    %11 = vector.broadcast %c0_i32_7 : i32 to vector<32x1xi32>
    %12 = arith.cmpi ne, %10, %11 : vector<32x1xi32>
    %c0_i32_8 = arith.constant 0 : i32
    %13 = vector.broadcast %c0_i32_8 : i32 to vector<32x1xi32>
    %14 = arith.cmpi slt, %10, %13 : vector<32x1xi32>
    %c0_i32_9 = arith.constant 0 : i32
    %15 = arith.cmpi slt, %8, %c0_i32_9 : i32
    %16 = vector.broadcast %15 : i1 to vector<32x1xi1>
    %17 = vector.broadcast %16 : vector<32x1xi1> to vector<32x1xi1>
    %18 = arith.xori %14, %17 : vector<32x1xi1>
    %19 = arith.andi %18, %12 : vector<32x1xi1>
    %20 = vector.broadcast %8 : i32 to vector<32x1xi32>
    %21 = arith.addi %10, %20 : vector<32x1xi32>
    %22 = arith.select %19, %21, %10 : vector<32x1xi1>, vector<32x1xi32>
    %c1_i32_10 = arith.constant 1 : i32
    %23 = vector.broadcast %c1_i32_10 : i32 to vector<32x1xi32>
    %24 = arith.cmpi sge, %22, %23 : vector<32x1xi32>
    %c14_i32 = arith.constant 14 : i32
    %25 = vector.broadcast %c14_i32 : i32 to vector<32x1xi32>
    %26 = arith.cmpi sle, %22, %25 : vector<32x1xi32>
    %c0 = arith.constant 0 : index
    %c0_11 = arith.constant 0 : index
    %27 = vector.load %arg1[%c0, %c0_11] : memref<32x256xf32, #tpu.memory_space<vmem>>, vector<32x256xf32>
    %c1_i32_12 = arith.constant 1 : i32
    %c1_i32_13 = arith.constant 1 : i32
    %c1_i32_14 = arith.constant 1 : i32
    %c0_i32_15 = arith.constant 0 : i32
    %c0_i32_16 = arith.constant 0 : i32
    %28 = tpu.memref_slice %arg3[%c1_i32_12, %c0_i32_15, %c0_i32_16] : memref<5x768x256xbf16, #tpu.memory_space<any>> -> memref<1x768x256xbf16, #tpu.memory_space<any>>
    %29 = tpu.memref_squeeze %28 : memref<1x768x256xbf16, #tpu.memory_space<any>> -> memref<768x256xbf16, #tpu.memory_space<any>>
    %c0_i32_17 = arith.constant 0 : i32
    %c0_i32_18 = arith.constant 0 : i32
    %30 = tpu.memref_slice %arg5[%c1_i32_13, %c0_i32_17, %c0_i32_18] : memref<2x768x256xbf16, #tpu.memory_space<vmem>> -> memref<1x768x256xbf16, #tpu.memory_space<vmem>>
    %31 = tpu.memref_squeeze %30 : memref<1x768x256xbf16, #tpu.memory_space<vmem>> -> memref<768x256xbf16, #tpu.memory_space<vmem>>
    %32 = tpu.memref_slice %arg6[%c1_i32_14] : memref<2x!tpu.dma_semaphore, #tpu.memory_space<semaphore_mem>> -> memref<1x!tpu.dma_semaphore, #tpu.memory_space<semaphore_mem>>
    %33 = tpu.memref_squeeze %32 : memref<1x!tpu.dma_semaphore, #tpu.memory_space<semaphore_mem>> -> memref<!tpu.dma_semaphore, #tpu.memory_space<semaphore_mem>>
    tpu.enqueue_dma source(%29 : memref<768x256xbf16, #tpu.memory_space<any>>) target(%31 : memref<768x256xbf16, #tpu.memory_space<vmem>>) target_semaphore(%33 : memref<!tpu.dma_semaphore, #tpu.memory_space<semaphore_mem>>)
    %c0_i32_19 = arith.constant 0 : i32
    %c0_i32_20 = arith.constant 0 : i32
    %c0_i32_21 = arith.constant 0 : i32
    %c0_i32_22 = arith.constant 0 : i32
    %c0_i32_23 = arith.constant 0 : i32
    %34 = tpu.memref_slice %arg3[%c0_i32_19, %c0_i32_22, %c0_i32_23] : memref<5x768x256xbf16, #tpu.memory_space<any>> -> memref<1x768x256xbf16, #tpu.memory_space<any>>
    %35 = tpu.memref_squeeze %34 : memref<1x768x256xbf16, #tpu.memory_space<any>> -> memref<768x256xbf16, #tpu.memory_space<any>>
    %c0_i32_24 = arith.constant 0 : i32
    %c0_i32_25 = arith.constant 0 : i32
    %36 = tpu.memref_slice %arg5[%c0_i32_20, %c0_i32_24, %c0_i32_25] : memref<2x768x256xbf16, #tpu.memory_space<vmem>> -> memref<1x768x256xbf16, #tpu.memory_space<vmem>>
    %37 = tpu.memref_squeeze %36 : memref<1x768x256xbf16, #tpu.memory_space<vmem>> -> memref<768x256xbf16, #tpu.memory_space<vmem>>
    %38 = tpu.memref_slice %arg6[%c0_i32_21] : memref<2x!tpu.dma_semaphore, #tpu.memory_space<semaphore_mem>> -> memref<1x!tpu.dma_semaphore, #tpu.memory_space<semaphore_mem>>
    %39 = tpu.memref_squeeze %38 : memref<1x!tpu.dma_semaphore, #tpu.memory_space<semaphore_mem>> -> memref<!tpu.dma_semaphore, #tpu.memory_space<semaphore_mem>>
    tpu.wait_dma2 semaphore(%39 : memref<!tpu.dma_semaphore, #tpu.memory_space<semaphore_mem>>) src(%35 : memref<768x256xbf16, #tpu.memory_space<any>>) dst(%37 : memref<768x256xbf16, #tpu.memory_space<vmem>>)
    %c1_i32_26 = arith.constant 1 : i32
    %40 = tpu.dynamic_rotate %27 by %c1_i32_26 dim 0 : vector<32x256xf32>, i32 -> vector<32x256xf32>
    %cst = arith.constant 0.000000e+00 : f32
    %41 = vector.shape_cast %24 : vector<32x1xi1> to vector<32x1xi1>
    %42 = vector.broadcast %41 : vector<32x1xi1> to vector<32x256xi1>
    %43 = vector.broadcast %cst : f32 to vector<32x256xf32>
    %44 = arith.select %42, %40, %43 : vector<32x256xi1>, vector<32x256xf32>
    %c31_i32 = arith.constant 31 : i32
    %45 = tpu.dynamic_rotate %27 by %c31_i32 dim 0 : vector<32x256xf32>, i32 -> vector<32x256xf32>
    %cst_27 = arith.constant 0.000000e+00 : f32
    %46 = vector.shape_cast %26 : vector<32x1xi1> to vector<32x1xi1>
    %47 = vector.broadcast %46 : vector<32x1xi1> to vector<32x256xi1>
    %48 = vector.broadcast %cst_27 : f32 to vector<32x256xf32>
    %49 = arith.select %47, %45, %48 : vector<32x256xi1>, vector<32x256xf32>
    %50 = tpu.concatenate %44, %27, %49 in 1 : vector<32x256xf32>, vector<32x256xf32>, vector<32x256xf32> -> vector<32x768xf32>
    %51 = arith.truncf %50 : vector<32x768xf32> to vector<32x768xbf16>
    %c0_28 = arith.constant 0 : index
    %c0_29 = arith.constant 0 : index
    %c0_30 = arith.constant 0 : index
    %52 = vector.load %arg5[%c0_28, %c0_29, %c0_30] : memref<2x768x256xbf16, #tpu.memory_space<vmem>>, vector<1x768x256xbf16>
    %53 = vector.shape_cast %52 : vector<1x768x256xbf16> to vector<768x256xbf16>
    %cst_31 = arith.constant dense<0.000000e+00> : vector<32x256xf32>
    %54 = tpu.matmul %51, %53, %cst_31 {dimension_numbers = #tpu.dot_dimension_numbers<[1], [0], [0], [1], [0, 0, 1, 1], [], []>} : vector<32x768xbf16>, vector<768x256xbf16>, vector<32x256xf32> -> vector<32x256xf32>
    %c0_32 = arith.constant 0 : index
    %c0_33 = arith.constant 0 : index
    %c0_34 = arith.constant 0 : index
    %55 = vector.load %arg2[%c0_32, %c0_33, %c0_34] : memref<5x1x256xf32, #tpu.memory_space<vmem>>, vector<1x1x256xf32>
    %56 = vector.shape_cast %55 : vector<1x1x256xf32> to vector<1x256xf32>
    %57 = vector.broadcast %56 : vector<1x256xf32> to vector<32x256xf32>
    %58 = arith.addf %54, %57 : vector<32x256xf32>
    %cst_35 = arith.constant dense<0.000000e+00> : vector<256xf32>
    %59 = vector.multi_reduction <add>, %58, %cst_35 [0] : vector<32x256xf32> to vector<256xf32>
    %60 = vector.shape_cast %59 : vector<256xf32> to vector<1x256xf32>
    %c16_i32_36 = arith.constant 16 : i32
    %61 = tpu.dynamic_rotate %60 by %c16_i32_36 dim 1 : vector<1x256xf32>, i32 -> vector<1x256xf32>
    %62 = arith.addf %60, %61 : vector<1x256xf32>
    %c32_i32 = arith.constant 32 : i32
    %63 = tpu.dynamic_rotate %62 by %c32_i32 dim 1 : vector<1x256xf32>, i32 -> vector<1x256xf32>
    %64 = arith.addf %62, %63 : vector<1x256xf32>
    %c64_i32 = arith.constant 64 : i32
    %65 = tpu.dynamic_rotate %64 by %c64_i32 dim 1 : vector<1x256xf32>, i32 -> vector<1x256xf32>
    %66 = arith.addf %64, %65 : vector<1x256xf32>
    %c128_i32 = arith.constant 128 : i32
    %67 = tpu.dynamic_rotate %66 by %c128_i32 dim 1 : vector<1x256xf32>, i32 -> vector<1x256xf32>
    %68 = arith.addf %66, %67 : vector<1x256xf32>
    %cst_37 = arith.constant 0.001953125 : f32
    %69 = vector.broadcast %cst_37 : f32 to vector<1x256xf32>
    %70 = arith.mulf %68, %69 : vector<1x256xf32>
    %71 = vector.broadcast %70 : vector<1x256xf32> to vector<32x256xf32>
    %72 = arith.subf %58, %71 : vector<32x256xf32>
    %73 = arith.mulf %72, %72 : vector<32x256xf32>
    %cst_38 = arith.constant dense<0.000000e+00> : vector<256xf32>
    %74 = vector.multi_reduction <add>, %73, %cst_38 [0] : vector<32x256xf32> to vector<256xf32>
    %75 = vector.shape_cast %74 : vector<256xf32> to vector<1x256xf32>
    %c16_i32_39 = arith.constant 16 : i32
    %76 = tpu.dynamic_rotate %75 by %c16_i32_39 dim 1 : vector<1x256xf32>, i32 -> vector<1x256xf32>
    %77 = arith.addf %75, %76 : vector<1x256xf32>
    %c32_i32_40 = arith.constant 32 : i32
    %78 = tpu.dynamic_rotate %77 by %c32_i32_40 dim 1 : vector<1x256xf32>, i32 -> vector<1x256xf32>
    %79 = arith.addf %77, %78 : vector<1x256xf32>
    %c64_i32_41 = arith.constant 64 : i32
    %80 = tpu.dynamic_rotate %79 by %c64_i32_41 dim 1 : vector<1x256xf32>, i32 -> vector<1x256xf32>
    %81 = arith.addf %79, %80 : vector<1x256xf32>
    %c128_i32_42 = arith.constant 128 : i32
    %82 = tpu.dynamic_rotate %81 by %c128_i32_42 dim 1 : vector<1x256xf32>, i32 -> vector<1x256xf32>
    %83 = arith.addf %81, %82 : vector<1x256xf32>
    %cst_43 = arith.constant 0.001953125 : f32
    %84 = vector.broadcast %cst_43 : f32 to vector<1x256xf32>
    %85 = arith.mulf %83, %84 : vector<1x256xf32>
    %cst_44 = arith.constant 9.99999974E-6 : f32
    %86 = vector.broadcast %cst_44 : f32 to vector<1x256xf32>
    %87 = arith.addf %85, %86 : vector<1x256xf32>
    %88 = math.rsqrt %87 : vector<1x256xf32>
    %89 = vector.broadcast %88 : vector<1x256xf32> to vector<32x256xf32>
    %90 = arith.mulf %72, %89 : vector<32x256xf32>
    %cst_45 = arith.constant 0.000000e+00 : f32
    %91 = vector.broadcast %cst_45 : f32 to vector<32x256xf32>
    %92 = arith.maximumf %90, %91 : vector<32x256xf32>
    %c2_i32 = arith.constant 2 : i32
    %c0_i32_46 = arith.constant 0 : i32
    %c0_i32_47 = arith.constant 0 : i32
    %c0_i32_48 = arith.constant 0 : i32
    %c0_i32_49 = arith.constant 0 : i32
    %93 = tpu.memref_slice %arg3[%c2_i32, %c0_i32_48, %c0_i32_49] : memref<5x768x256xbf16, #tpu.memory_space<any>> -> memref<1x768x256xbf16, #tpu.memory_space<any>>
    %94 = tpu.memref_squeeze %93 : memref<1x768x256xbf16, #tpu.memory_space<any>> -> memref<768x256xbf16, #tpu.memory_space<any>>
    %c0_i32_50 = arith.constant 0 : i32
    %c0_i32_51 = arith.constant 0 : i32
    %95 = tpu.memref_slice %arg5[%c0_i32_46, %c0_i32_50, %c0_i32_51] : memref<2x768x256xbf16, #tpu.memory_space<vmem>> -> memref<1x768x256xbf16, #tpu.memory_space<vmem>>
    %96 = tpu.memref_squeeze %95 : memref<1x768x256xbf16, #tpu.memory_space<vmem>> -> memref<768x256xbf16, #tpu.memory_space<vmem>>
    %97 = tpu.memref_slice %arg6[%c0_i32_47] : memref<2x!tpu.dma_semaphore, #tpu.memory_space<semaphore_mem>> -> memref<1x!tpu.dma_semaphore, #tpu.memory_space<semaphore_mem>>
    %98 = tpu.memref_squeeze %97 : memref<1x!tpu.dma_semaphore, #tpu.memory_space<semaphore_mem>> -> memref<!tpu.dma_semaphore, #tpu.memory_space<semaphore_mem>>
    tpu.enqueue_dma source(%94 : memref<768x256xbf16, #tpu.memory_space<any>>) target(%96 : memref<768x256xbf16, #tpu.memory_space<vmem>>) target_semaphore(%98 : memref<!tpu.dma_semaphore, #tpu.memory_space<semaphore_mem>>)
    %c1_i32_52 = arith.constant 1 : i32
    %c1_i32_53 = arith.constant 1 : i32
    %c1_i32_54 = arith.constant 1 : i32
    %c0_i32_55 = arith.constant 0 : i32
    %c0_i32_56 = arith.constant 0 : i32
    %99 = tpu.memref_slice %arg3[%c1_i32_52, %c0_i32_55, %c0_i32_56] : memref<5x768x256xbf16, #tpu.memory_space<any>> -> memref<1x768x256xbf16, #tpu.memory_space<any>>
    %100 = tpu.memref_squeeze %99 : memref<1x768x256xbf16, #tpu.memory_space<any>> -> memref<768x256xbf16, #tpu.memory_space<any>>
    %c0_i32_57 = arith.constant 0 : i32
    %c0_i32_58 = arith.constant 0 : i32
    %101 = tpu.memref_slice %arg5[%c1_i32_53, %c0_i32_57, %c0_i32_58] : memref<2x768x256xbf16, #tpu.memory_space<vmem>> -> memref<1x768x256xbf16, #tpu.memory_space<vmem>>
    %102 = tpu.memref_squeeze %101 : memref<1x768x256xbf16, #tpu.memory_space<vmem>> -> memref<768x256xbf16, #tpu.memory_space<vmem>>
    %103 = tpu.memref_slice %arg6[%c1_i32_54] : memref<2x!tpu.dma_semaphore, #tpu.memory_space<semaphore_mem>> -> memref<1x!tpu.dma_semaphore, #tpu.memory_space<semaphore_mem>>
    %104 = tpu.memref_squeeze %103 : memref<1x!tpu.dma_semaphore, #tpu.memory_space<semaphore_mem>> -> memref<!tpu.dma_semaphore, #tpu.memory_space<semaphore_mem>>
    tpu.wait_dma2 semaphore(%104 : memref<!tpu.dma_semaphore, #tpu.memory_space<semaphore_mem>>) src(%100 : memref<768x256xbf16, #tpu.memory_space<any>>) dst(%102 : memref<768x256xbf16, #tpu.memory_space<vmem>>)
    %c1_i32_59 = arith.constant 1 : i32
    %105 = tpu.dynamic_rotate %92 by %c1_i32_59 dim 0 : vector<32x256xf32>, i32 -> vector<32x256xf32>
    %cst_60 = arith.constant 0.000000e+00 : f32
    %106 = vector.shape_cast %24 : vector<32x1xi1> to vector<32x1xi1>
    %107 = vector.broadcast %106 : vector<32x1xi1> to vector<32x256xi1>
    %108 = vector.broadcast %cst_60 : f32 to vector<32x256xf32>
    %109 = arith.select %107, %105, %108 : vector<32x256xi1>, vector<32x256xf32>
    %c31_i32_61 = arith.constant 31 : i32
    %110 = tpu.dynamic_rotate %92 by %c31_i32_61 dim 0 : vector<32x256xf32>, i32 -> vector<32x256xf32>
    %cst_62 = arith.constant 0.000000e+00 : f32
    %111 = vector.shape_cast %26 : vector<32x1xi1> to vector<32x1xi1>
    %112 = vector.broadcast %111 : vector<32x1xi1> to vector<32x256xi1>
    %113 = vector.broadcast %cst_62 : f32 to vector<32x256xf32>
    %114 = arith.select %112, %110, %113 : vector<32x256xi1>, vector<32x256xf32>
    %115 = tpu.concatenate %109, %92, %114 in 1 : vector<32x256xf32>, vector<32x256xf32>, vector<32x256xf32> -> vector<32x768xf32>
    %116 = arith.truncf %115 : vector<32x768xf32> to vector<32x768xbf16>
    %c1 = arith.constant 1 : index
    %c0_63 = arith.constant 0 : index
    %c0_64 = arith.constant 0 : index
    %117 = vector.load %arg5[%c1, %c0_63, %c0_64] : memref<2x768x256xbf16, #tpu.memory_space<vmem>>, vector<1x768x256xbf16>
    %118 = vector.shape_cast %117 : vector<1x768x256xbf16> to vector<768x256xbf16>
    %cst_65 = arith.constant dense<0.000000e+00> : vector<32x256xf32>
    %119 = tpu.matmul %116, %118, %cst_65 {dimension_numbers = #tpu.dot_dimension_numbers<[1], [0], [0], [1], [0, 0, 1, 1], [], []>} : vector<32x768xbf16>, vector<768x256xbf16>, vector<32x256xf32> -> vector<32x256xf32>
    %c1_66 = arith.constant 1 : index
    %c0_67 = arith.constant 0 : index
    %c0_68 = arith.constant 0 : index
    %120 = vector.load %arg2[%c1_66, %c0_67, %c0_68] : memref<5x1x256xf32, #tpu.memory_space<vmem>>, vector<1x1x256xf32>
    %121 = vector.shape_cast %120 : vector<1x1x256xf32> to vector<1x256xf32>
    %122 = vector.broadcast %121 : vector<1x256xf32> to vector<32x256xf32>
    %123 = arith.addf %119, %122 : vector<32x256xf32>
    %cst_69 = arith.constant dense<0.000000e+00> : vector<256xf32>
    %124 = vector.multi_reduction <add>, %123, %cst_69 [0] : vector<32x256xf32> to vector<256xf32>
    %125 = vector.shape_cast %124 : vector<256xf32> to vector<1x256xf32>
    %c16_i32_70 = arith.constant 16 : i32
    %126 = tpu.dynamic_rotate %125 by %c16_i32_70 dim 1 : vector<1x256xf32>, i32 -> vector<1x256xf32>
    %127 = arith.addf %125, %126 : vector<1x256xf32>
    %c32_i32_71 = arith.constant 32 : i32
    %128 = tpu.dynamic_rotate %127 by %c32_i32_71 dim 1 : vector<1x256xf32>, i32 -> vector<1x256xf32>
    %129 = arith.addf %127, %128 : vector<1x256xf32>
    %c64_i32_72 = arith.constant 64 : i32
    %130 = tpu.dynamic_rotate %129 by %c64_i32_72 dim 1 : vector<1x256xf32>, i32 -> vector<1x256xf32>
    %131 = arith.addf %129, %130 : vector<1x256xf32>
    %c128_i32_73 = arith.constant 128 : i32
    %132 = tpu.dynamic_rotate %131 by %c128_i32_73 dim 1 : vector<1x256xf32>, i32 -> vector<1x256xf32>
    %133 = arith.addf %131, %132 : vector<1x256xf32>
    %cst_74 = arith.constant 0.001953125 : f32
    %134 = vector.broadcast %cst_74 : f32 to vector<1x256xf32>
    %135 = arith.mulf %133, %134 : vector<1x256xf32>
    %136 = vector.broadcast %135 : vector<1x256xf32> to vector<32x256xf32>
    %137 = arith.subf %123, %136 : vector<32x256xf32>
    %138 = arith.mulf %137, %137 : vector<32x256xf32>
    %cst_75 = arith.constant dense<0.000000e+00> : vector<256xf32>
    %139 = vector.multi_reduction <add>, %138, %cst_75 [0] : vector<32x256xf32> to vector<256xf32>
    %140 = vector.shape_cast %139 : vector<256xf32> to vector<1x256xf32>
    %c16_i32_76 = arith.constant 16 : i32
    %141 = tpu.dynamic_rotate %140 by %c16_i32_76 dim 1 : vector<1x256xf32>, i32 -> vector<1x256xf32>
    %142 = arith.addf %140, %141 : vector<1x256xf32>
    %c32_i32_77 = arith.constant 32 : i32
    %143 = tpu.dynamic_rotate %142 by %c32_i32_77 dim 1 : vector<1x256xf32>, i32 -> vector<1x256xf32>
    %144 = arith.addf %142, %143 : vector<1x256xf32>
    %c64_i32_78 = arith.constant 64 : i32
    %145 = tpu.dynamic_rotate %144 by %c64_i32_78 dim 1 : vector<1x256xf32>, i32 -> vector<1x256xf32>
    %146 = arith.addf %144, %145 : vector<1x256xf32>
    %c128_i32_79 = arith.constant 128 : i32
    %147 = tpu.dynamic_rotate %146 by %c128_i32_79 dim 1 : vector<1x256xf32>, i32 -> vector<1x256xf32>
    %148 = arith.addf %146, %147 : vector<1x256xf32>
    %cst_80 = arith.constant 0.001953125 : f32
    %149 = vector.broadcast %cst_80 : f32 to vector<1x256xf32>
    %150 = arith.mulf %148, %149 : vector<1x256xf32>
    %cst_81 = arith.constant 9.99999974E-6 : f32
    %151 = vector.broadcast %cst_81 : f32 to vector<1x256xf32>
    %152 = arith.addf %150, %151 : vector<1x256xf32>
    %153 = math.rsqrt %152 : vector<1x256xf32>
    %154 = vector.broadcast %153 : vector<1x256xf32> to vector<32x256xf32>
    %155 = arith.mulf %137, %154 : vector<32x256xf32>
    %cst_82 = arith.constant 0.000000e+00 : f32
    %156 = vector.broadcast %cst_82 : f32 to vector<32x256xf32>
    %157 = arith.maximumf %155, %156 : vector<32x256xf32>
    %c3_i32 = arith.constant 3 : i32
    %c1_i32_83 = arith.constant 1 : i32
    %c1_i32_84 = arith.constant 1 : i32
    %c0_i32_85 = arith.constant 0 : i32
    %c0_i32_86 = arith.constant 0 : i32
    %158 = tpu.memref_slice %arg3[%c3_i32, %c0_i32_85, %c0_i32_86] : memref<5x768x256xbf16, #tpu.memory_space<any>> -> memref<1x768x256xbf16, #tpu.memory_space<any>>
    %159 = tpu.memref_squeeze %158 : memref<1x768x256xbf16, #tpu.memory_space<any>> -> memref<768x256xbf16, #tpu.memory_space<any>>
    %c0_i32_87 = arith.constant 0 : i32
    %c0_i32_88 = arith.constant 0 : i32
    %160 = tpu.memref_slice %arg5[%c1_i32_83, %c0_i32_87, %c0_i32_88] : memref<2x768x256xbf16, #tpu.memory_space<vmem>> -> memref<1x768x256xbf16, #tpu.memory_space<vmem>>
    %161 = tpu.memref_squeeze %160 : memref<1x768x256xbf16, #tpu.memory_space<vmem>> -> memref<768x256xbf16, #tpu.memory_space<vmem>>
    %162 = tpu.memref_slice %arg6[%c1_i32_84] : memref<2x!tpu.dma_semaphore, #tpu.memory_space<semaphore_mem>> -> memref<1x!tpu.dma_semaphore, #tpu.memory_space<semaphore_mem>>
    %163 = tpu.memref_squeeze %162 : memref<1x!tpu.dma_semaphore, #tpu.memory_space<semaphore_mem>> -> memref<!tpu.dma_semaphore, #tpu.memory_space<semaphore_mem>>
    tpu.enqueue_dma source(%159 : memref<768x256xbf16, #tpu.memory_space<any>>) target(%161 : memref<768x256xbf16, #tpu.memory_space<vmem>>) target_semaphore(%163 : memref<!tpu.dma_semaphore, #tpu.memory_space<semaphore_mem>>)
    %c2_i32_89 = arith.constant 2 : i32
    %c0_i32_90 = arith.constant 0 : i32
    %c0_i32_91 = arith.constant 0 : i32
    %c0_i32_92 = arith.constant 0 : i32
    %c0_i32_93 = arith.constant 0 : i32
    %164 = tpu.memref_slice %arg3[%c2_i32_89, %c0_i32_92, %c0_i32_93] : memref<5x768x256xbf16, #tpu.memory_space<any>> -> memref<1x768x256xbf16, #tpu.memory_space<any>>
    %165 = tpu.memref_squeeze %164 : memref<1x768x256xbf16, #tpu.memory_space<any>> -> memref<768x256xbf16, #tpu.memory_space<any>>
    %c0_i32_94 = arith.constant 0 : i32
    %c0_i32_95 = arith.constant 0 : i32
    %166 = tpu.memref_slice %arg5[%c0_i32_90, %c0_i32_94, %c0_i32_95] : memref<2x768x256xbf16, #tpu.memory_space<vmem>> -> memref<1x768x256xbf16, #tpu.memory_space<vmem>>
    %167 = tpu.memref_squeeze %166 : memref<1x768x256xbf16, #tpu.memory_space<vmem>> -> memref<768x256xbf16, #tpu.memory_space<vmem>>
    %168 = tpu.memref_slice %arg6[%c0_i32_91] : memref<2x!tpu.dma_semaphore, #tpu.memory_space<semaphore_mem>> -> memref<1x!tpu.dma_semaphore, #tpu.memory_space<semaphore_mem>>
    %169 = tpu.memref_squeeze %168 : memref<1x!tpu.dma_semaphore, #tpu.memory_space<semaphore_mem>> -> memref<!tpu.dma_semaphore, #tpu.memory_space<semaphore_mem>>
    tpu.wait_dma2 semaphore(%169 : memref<!tpu.dma_semaphore, #tpu.memory_space<semaphore_mem>>) src(%165 : memref<768x256xbf16, #tpu.memory_space<any>>) dst(%167 : memref<768x256xbf16, #tpu.memory_space<vmem>>)
    %c1_i32_96 = arith.constant 1 : i32
    %170 = tpu.dynamic_rotate %157 by %c1_i32_96 dim 0 : vector<32x256xf32>, i32 -> vector<32x256xf32>
    %cst_97 = arith.constant 0.000000e+00 : f32
    %171 = vector.shape_cast %24 : vector<32x1xi1> to vector<32x1xi1>
    %172 = vector.broadcast %171 : vector<32x1xi1> to vector<32x256xi1>
    %173 = vector.broadcast %cst_97 : f32 to vector<32x256xf32>
    %174 = arith.select %172, %170, %173 : vector<32x256xi1>, vector<32x256xf32>
    %c31_i32_98 = arith.constant 31 : i32
    %175 = tpu.dynamic_rotate %157 by %c31_i32_98 dim 0 : vector<32x256xf32>, i32 -> vector<32x256xf32>
    %cst_99 = arith.constant 0.000000e+00 : f32
    %176 = vector.shape_cast %26 : vector<32x1xi1> to vector<32x1xi1>
    %177 = vector.broadcast %176 : vector<32x1xi1> to vector<32x256xi1>
    %178 = vector.broadcast %cst_99 : f32 to vector<32x256xf32>
    %179 = arith.select %177, %175, %178 : vector<32x256xi1>, vector<32x256xf32>
    %180 = tpu.concatenate %174, %157, %179 in 1 : vector<32x256xf32>, vector<32x256xf32>, vector<32x256xf32> -> vector<32x768xf32>
    %181 = arith.truncf %180 : vector<32x768xf32> to vector<32x768xbf16>
    %c0_100 = arith.constant 0 : index
    %c0_101 = arith.constant 0 : index
    %c0_102 = arith.constant 0 : index
    %182 = vector.load %arg5[%c0_100, %c0_101, %c0_102] : memref<2x768x256xbf16, #tpu.memory_space<vmem>>, vector<1x768x256xbf16>
    %183 = vector.shape_cast %182 : vector<1x768x256xbf16> to vector<768x256xbf16>
    %cst_103 = arith.constant dense<0.000000e+00> : vector<32x256xf32>
    %184 = tpu.matmul %181, %183, %cst_103 {dimension_numbers = #tpu.dot_dimension_numbers<[1], [0], [0], [1], [0, 0, 1, 1], [], []>} : vector<32x768xbf16>, vector<768x256xbf16>, vector<32x256xf32> -> vector<32x256xf32>
    %c2 = arith.constant 2 : index
    %c0_104 = arith.constant 0 : index
    %c0_105 = arith.constant 0 : index
    %185 = vector.load %arg2[%c2, %c0_104, %c0_105] : memref<5x1x256xf32, #tpu.memory_space<vmem>>, vector<1x1x256xf32>
    %186 = vector.shape_cast %185 : vector<1x1x256xf32> to vector<1x256xf32>
    %187 = vector.broadcast %186 : vector<1x256xf32> to vector<32x256xf32>
    %188 = arith.addf %184, %187 : vector<32x256xf32>
    %cst_106 = arith.constant 0.000000e+00 : f32
    %189 = vector.broadcast %cst_106 : f32 to vector<32x256xf32>
    %190 = arith.maximumf %188, %189 : vector<32x256xf32>
    %c4_i32 = arith.constant 4 : i32
    %c0_i32_107 = arith.constant 0 : i32
    %c0_i32_108 = arith.constant 0 : i32
    %c0_i32_109 = arith.constant 0 : i32
    %c0_i32_110 = arith.constant 0 : i32
    %191 = tpu.memref_slice %arg3[%c4_i32, %c0_i32_109, %c0_i32_110] : memref<5x768x256xbf16, #tpu.memory_space<any>> -> memref<1x768x256xbf16, #tpu.memory_space<any>>
    %192 = tpu.memref_squeeze %191 : memref<1x768x256xbf16, #tpu.memory_space<any>> -> memref<768x256xbf16, #tpu.memory_space<any>>
    %c0_i32_111 = arith.constant 0 : i32
    %c0_i32_112 = arith.constant 0 : i32
    %193 = tpu.memref_slice %arg5[%c0_i32_107, %c0_i32_111, %c0_i32_112] : memref<2x768x256xbf16, #tpu.memory_space<vmem>> -> memref<1x768x256xbf16, #tpu.memory_space<vmem>>
    %194 = tpu.memref_squeeze %193 : memref<1x768x256xbf16, #tpu.memory_space<vmem>> -> memref<768x256xbf16, #tpu.memory_space<vmem>>
    %195 = tpu.memref_slice %arg6[%c0_i32_108] : memref<2x!tpu.dma_semaphore, #tpu.memory_space<semaphore_mem>> -> memref<1x!tpu.dma_semaphore, #tpu.memory_space<semaphore_mem>>
    %196 = tpu.memref_squeeze %195 : memref<1x!tpu.dma_semaphore, #tpu.memory_space<semaphore_mem>> -> memref<!tpu.dma_semaphore, #tpu.memory_space<semaphore_mem>>
    tpu.enqueue_dma source(%192 : memref<768x256xbf16, #tpu.memory_space<any>>) target(%194 : memref<768x256xbf16, #tpu.memory_space<vmem>>) target_semaphore(%196 : memref<!tpu.dma_semaphore, #tpu.memory_space<semaphore_mem>>)
    %c3_i32_113 = arith.constant 3 : i32
    %c1_i32_114 = arith.constant 1 : i32
    %c1_i32_115 = arith.constant 1 : i32
    %c0_i32_116 = arith.constant 0 : i32
    %c0_i32_117 = arith.constant 0 : i32
    %197 = tpu.memref_slice %arg3[%c3_i32_113, %c0_i32_116, %c0_i32_117] : memref<5x768x256xbf16, #tpu.memory_space<any>> -> memref<1x768x256xbf16, #tpu.memory_space<any>>
    %198 = tpu.memref_squeeze %197 : memref<1x768x256xbf16, #tpu.memory_space<any>> -> memref<768x256xbf16, #tpu.memory_space<any>>
    %c0_i32_118 = arith.constant 0 : i32
    %c0_i32_119 = arith.constant 0 : i32
    %199 = tpu.memref_slice %arg5[%c1_i32_114, %c0_i32_118, %c0_i32_119] : memref<2x768x256xbf16, #tpu.memory_space<vmem>> -> memref<1x768x256xbf16, #tpu.memory_space<vmem>>
    %200 = tpu.memref_squeeze %199 : memref<1x768x256xbf16, #tpu.memory_space<vmem>> -> memref<768x256xbf16, #tpu.memory_space<vmem>>
    %201 = tpu.memref_slice %arg6[%c1_i32_115] : memref<2x!tpu.dma_semaphore, #tpu.memory_space<semaphore_mem>> -> memref<1x!tpu.dma_semaphore, #tpu.memory_space<semaphore_mem>>
    %202 = tpu.memref_squeeze %201 : memref<1x!tpu.dma_semaphore, #tpu.memory_space<semaphore_mem>> -> memref<!tpu.dma_semaphore, #tpu.memory_space<semaphore_mem>>
    tpu.wait_dma2 semaphore(%202 : memref<!tpu.dma_semaphore, #tpu.memory_space<semaphore_mem>>) src(%198 : memref<768x256xbf16, #tpu.memory_space<any>>) dst(%200 : memref<768x256xbf16, #tpu.memory_space<vmem>>)
    %c1_i32_120 = arith.constant 1 : i32
    %203 = tpu.dynamic_rotate %190 by %c1_i32_120 dim 0 : vector<32x256xf32>, i32 -> vector<32x256xf32>
    %cst_121 = arith.constant 0.000000e+00 : f32
    %204 = vector.shape_cast %24 : vector<32x1xi1> to vector<32x1xi1>
    %205 = vector.broadcast %204 : vector<32x1xi1> to vector<32x256xi1>
    %206 = vector.broadcast %cst_121 : f32 to vector<32x256xf32>
    %207 = arith.select %205, %203, %206 : vector<32x256xi1>, vector<32x256xf32>
    %c31_i32_122 = arith.constant 31 : i32
    %208 = tpu.dynamic_rotate %190 by %c31_i32_122 dim 0 : vector<32x256xf32>, i32 -> vector<32x256xf32>
    %cst_123 = arith.constant 0.000000e+00 : f32
    %209 = vector.shape_cast %26 : vector<32x1xi1> to vector<32x1xi1>
    %210 = vector.broadcast %209 : vector<32x1xi1> to vector<32x256xi1>
    %211 = vector.broadcast %cst_123 : f32 to vector<32x256xf32>
    %212 = arith.select %210, %208, %211 : vector<32x256xi1>, vector<32x256xf32>
    %213 = tpu.concatenate %207, %190, %212 in 1 : vector<32x256xf32>, vector<32x256xf32>, vector<32x256xf32> -> vector<32x768xf32>
    %214 = arith.truncf %213 : vector<32x768xf32> to vector<32x768xbf16>
    %c1_124 = arith.constant 1 : index
    %c0_125 = arith.constant 0 : index
    %c0_126 = arith.constant 0 : index
    %215 = vector.load %arg5[%c1_124, %c0_125, %c0_126] : memref<2x768x256xbf16, #tpu.memory_space<vmem>>, vector<1x768x256xbf16>
    %216 = vector.shape_cast %215 : vector<1x768x256xbf16> to vector<768x256xbf16>
    %cst_127 = arith.constant dense<0.000000e+00> : vector<32x256xf32>
    %217 = tpu.matmul %214, %216, %cst_127 {dimension_numbers = #tpu.dot_dimension_numbers<[1], [0], [0], [1], [0, 0, 1, 1], [], []>} : vector<32x768xbf16>, vector<768x256xbf16>, vector<32x256xf32> -> vector<32x256xf32>
    %c3 = arith.constant 3 : index
    %c0_128 = arith.constant 0 : index
    %c0_129 = arith.constant 0 : index
    %218 = vector.load %arg2[%c3, %c0_128, %c0_129] : memref<5x1x256xf32, #tpu.memory_space<vmem>>, vector<1x1x256xf32>
    %219 = vector.shape_cast %218 : vector<1x1x256xf32> to vector<1x256xf32>
    %220 = vector.broadcast %219 : vector<1x256xf32> to vector<32x256xf32>
    %221 = arith.addf %217, %220 : vector<32x256xf32>
    %cst_130 = arith.constant 0.000000e+00 : f32
    %222 = vector.broadcast %cst_130 : f32 to vector<32x256xf32>
    %223 = arith.maximumf %221, %222 : vector<32x256xf32>
    %c4_i32_131 = arith.constant 4 : i32
    %c0_i32_132 = arith.constant 0 : i32
    %c0_i32_133 = arith.constant 0 : i32
    %c0_i32_134 = arith.constant 0 : i32
    %c0_i32_135 = arith.constant 0 : i32
    %224 = tpu.memref_slice %arg3[%c4_i32_131, %c0_i32_134, %c0_i32_135] : memref<5x768x256xbf16, #tpu.memory_space<any>> -> memref<1x768x256xbf16, #tpu.memory_space<any>>
    %225 = tpu.memref_squeeze %224 : memref<1x768x256xbf16, #tpu.memory_space<any>> -> memref<768x256xbf16, #tpu.memory_space<any>>
    %c0_i32_136 = arith.constant 0 : i32
    %c0_i32_137 = arith.constant 0 : i32
    %226 = tpu.memref_slice %arg5[%c0_i32_132, %c0_i32_136, %c0_i32_137] : memref<2x768x256xbf16, #tpu.memory_space<vmem>> -> memref<1x768x256xbf16, #tpu.memory_space<vmem>>
    %227 = tpu.memref_squeeze %226 : memref<1x768x256xbf16, #tpu.memory_space<vmem>> -> memref<768x256xbf16, #tpu.memory_space<vmem>>
    %228 = tpu.memref_slice %arg6[%c0_i32_133] : memref<2x!tpu.dma_semaphore, #tpu.memory_space<semaphore_mem>> -> memref<1x!tpu.dma_semaphore, #tpu.memory_space<semaphore_mem>>
    %229 = tpu.memref_squeeze %228 : memref<1x!tpu.dma_semaphore, #tpu.memory_space<semaphore_mem>> -> memref<!tpu.dma_semaphore, #tpu.memory_space<semaphore_mem>>
    tpu.wait_dma2 semaphore(%229 : memref<!tpu.dma_semaphore, #tpu.memory_space<semaphore_mem>>) src(%225 : memref<768x256xbf16, #tpu.memory_space<any>>) dst(%227 : memref<768x256xbf16, #tpu.memory_space<vmem>>)
    %c1_i32_138 = arith.constant 1 : i32
    %230 = tpu.dynamic_rotate %223 by %c1_i32_138 dim 0 : vector<32x256xf32>, i32 -> vector<32x256xf32>
    %cst_139 = arith.constant 0.000000e+00 : f32
    %231 = vector.shape_cast %24 : vector<32x1xi1> to vector<32x1xi1>
    %232 = vector.broadcast %231 : vector<32x1xi1> to vector<32x256xi1>
    %233 = vector.broadcast %cst_139 : f32 to vector<32x256xf32>
    %234 = arith.select %232, %230, %233 : vector<32x256xi1>, vector<32x256xf32>
    %c31_i32_140 = arith.constant 31 : i32
    %235 = tpu.dynamic_rotate %223 by %c31_i32_140 dim 0 : vector<32x256xf32>, i32 -> vector<32x256xf32>
    %cst_141 = arith.constant 0.000000e+00 : f32
    %236 = vector.shape_cast %26 : vector<32x1xi1> to vector<32x1xi1>
    %237 = vector.broadcast %236 : vector<32x1xi1> to vector<32x256xi1>
    %238 = vector.broadcast %cst_141 : f32 to vector<32x256xf32>
    %239 = arith.select %237, %235, %238 : vector<32x256xi1>, vector<32x256xf32>
    %240 = tpu.concatenate %234, %223, %239 in 1 : vector<32x256xf32>, vector<32x256xf32>, vector<32x256xf32> -> vector<32x768xf32>
    %241 = arith.truncf %240 : vector<32x768xf32> to vector<32x768xbf16>
    %c0_142 = arith.constant 0 : index
    %c0_143 = arith.constant 0 : index
    %c0_144 = arith.constant 0 : index
    %242 = vector.load %arg5[%c0_142, %c0_143, %c0_144] : memref<2x768x256xbf16, #tpu.memory_space<vmem>>, vector<1x768x256xbf16>
    %243 = vector.shape_cast %242 : vector<1x768x256xbf16> to vector<768x256xbf16>
    %cst_145 = arith.constant dense<0.000000e+00> : vector<32x256xf32>
    %244 = tpu.matmul %241, %243, %cst_145 {dimension_numbers = #tpu.dot_dimension_numbers<[1], [0], [0], [1], [0, 0, 1, 1], [], []>} : vector<32x768xbf16>, vector<768x256xbf16>, vector<32x256xf32> -> vector<32x256xf32>
    %c4 = arith.constant 4 : index
    %c0_146 = arith.constant 0 : index
    %c0_147 = arith.constant 0 : index
    %245 = vector.load %arg2[%c4, %c0_146, %c0_147] : memref<5x1x256xf32, #tpu.memory_space<vmem>>, vector<1x1x256xf32>
    %246 = vector.shape_cast %245 : vector<1x1x256xf32> to vector<1x256xf32>
    %247 = vector.broadcast %246 : vector<1x256xf32> to vector<32x256xf32>
    %248 = arith.addf %244, %247 : vector<32x256xf32>
    %cst_148 = arith.constant 0.000000e+00 : f32
    %249 = vector.broadcast %cst_148 : f32 to vector<32x256xf32>
    %250 = arith.maximumf %248, %249 : vector<32x256xf32>
    %c0_149 = arith.constant 0 : index
    %c0_150 = arith.constant 0 : index
    %251 = vector.load %arg4[%c0_149, %c0_150] : memref<32x256xf32, #tpu.memory_space<vmem>>, vector<32x256xf32>
    tpu.vector_store %arg4[%c0_149, %c0_150], %250 {strides = array<i32>} : memref<32x256xf32, #tpu.memory_space<vmem>>, vector<32x256xf32>,
    return
  }
  func.func @transform_0(%arg0: i32) -> (i32, i32) {
    %c0_i32 = arith.constant 0 : i32
    %c0_i32_0 = arith.constant 0 : i32
    %c0_i32_1 = arith.constant 0 : i32
    return %c0_i32, %c0_i32_0 : i32, i32
  }
  func.func @transform_1(%arg0: i32) -> (i32, i32, i32) {
    %c0_i32 = arith.constant 0 : i32
    %c0_i32_0 = arith.constant 0 : i32
    %c0_i32_1 = arith.constant 0 : i32
    %c0_i32_2 = arith.constant 0 : i32
    return %c0_i32, %c0_i32_0, %c0_i32_1 : i32, i32, i32
  }
  func.func @transform_3(%arg0: i32) -> (i32, i32) {
    %c0_i32 = arith.constant 0 : i32
    %c0_i32_0 = arith.constant 0 : i32
    %c0_i32_1 = arith.constant 0 : i32
    return %c0_i32, %c0_i32_0 : i32, i32
  }
}

</mosaic_0001>

<llo_original>
// kernel: conv_block.1
$region0: #{conv_block.1}
  #allocation0 [shape = 'u32[]', space=smem, size = 0x4, offset = 0x4, fixed_abs, tag = 'smem constant byte address 0x4 - core index']
  #allocation1 [shape = 'u32[144,128]{1,0:T(1,128)}', space=vmem, size = 0x12000, scoped, tag = 'internal scratch']
  #allocation2 [shape = 'bf16[2,768,256]{2,1,0:T(16,128)(2,1)}', space=vmem, size = 0xc0000, scoped, tag = 'scratch operand']
  #allocation3 [shape = 's32[2]{0}', space=sflag, size = 0x8, scoped, tag = 'scratch operand']
  #allocation4 [shape = 's32[]', space=sflag, size = 0x4, offset = 0, fixed_abs, tag = 'sflag constant byte address 0x0 - dummy sync flag']
  #allocation5 [shape = 's32[]', space=sflag, size = 0x4, offset = 0, fixed_abs, tag = 'sflag constant byte address 0x0 - dummy sync flag']
  #allocation6 [shape = 's32[]', space=sflag, size = 0x4, offset = 0, fixed_abs, tag = 'sflag constant byte address 0x0 - dummy sync flag']
  #allocation7 [shape = 's32[]', space=sflag, size = 0x4, offset = 0, fixed_abs, tag = 'sflag constant byte address 0x0 - dummy sync flag']
  #allocation8 [shape = 's32[]', space=sflag, size = 0x4, offset = 0, fixed_abs, tag = 'sflag constant byte address 0x0 - dummy sync flag']
  %s0 = inlined_call_operand.vmem [shape: f32[32,256], index: 0, kind: input, shape index: {}]
  %s1 = inlined_call_operand.vmem [shape: f32[5,1,256], index: 1, kind: input, shape index: {}]
  %s2 = inlined_call_operand.vmem [shape: bf16[5,768,256], index: 2, kind: input, shape index: {}]
  %s3 = inlined_call_operand.vmem [shape: f32[32,256], index: 3, kind: output, shape index: {}]
  %s4 = sld [smem:[#allocation0]]
  $region203: #{conv_block.1} parent=0
    _
  %s6 = ssub.s32 1, %s4
  %s7 = scalar_select 0, %s6, %s4
  // Predicated region
  $region2: #{conv_block.1} parent=0 // pred_check
    _
  $region3: #{conv_block.1} parent=0 // pred_check_branch
    %9 = sbr.rel (0) target = $region5
  $region4: #{conv_block.1} parent=0 // pred_region
    _
  $region5: #{conv_block.1} parent=0 // pred_fallthru
    _
  // Predicated region
  $region6: #{conv_block.1} parent=0 // pred_check
    _
  $region7: #{conv_block.1} parent=0 // pred_check_branch
    %11 = sbr.rel (0) target = $region9
  $region8: #{conv_block.1} parent=0 // pred_region
    _
  $region9: #{conv_block.1} parent=0 // pred_fallthru
    _
  %p13 = scmp.lt.u32.totalorder 4, 8
  %p14 = pneg %p13
  // Predicated region
  $region10: #{conv_block.1} parent=0 // pred_check
    _
  $region11: #{conv_block.1} parent=0 // pred_check_branch
    %16 = sbr.rel (%p13) target = $region13
  $region12: #{conv_block.1} parent=0 // pred_region
    %s413 = sand.u32 4, 7
    %p414 = scmp.eq.s32.totalorder %s413, 0
    %p415 = pneg %p414
    // Predicated region
    $region25: #{conv_block.1} parent=12 // pred_check
      _
    $region26: #{conv_block.1} parent=12 // pred_check_branch
      %417 = sbr.rel (%p414) target = $region28
    $region27: #{conv_block.1} parent=12 // pred_region
      %s418 = sand.u32 4, 7
      %s419 = ssub.s32 4, %s418
      %s420 = scalar_lea.vmem %s2, %s419
      %s421 = ssub.s32 4, %s418
      %s422 = scalar_lea.vmem [#allocation2], %s421
      loop: start=0, step=1, limit=1
      $region29: #{conv_block.1} parent=27 // loop_pre_header
        _
      $region30: #{conv_block.1} parent=27 // loop_header
        %s424 = sphi 0, %s428
        %p425 = scmp.ge.s32.totalorder %s424, 1
        %s429 = sphi %s2, %s2
        %s430 = sphi [#allocation2], [#allocation2]
      $region31: #{conv_block.1} parent=27 // loop_header_branch
        %427 = sbr.rel (%p425) target = $region35
      $region32: #{conv_block.1} parent=27 // loop_body
        _
      $region33: #{conv_block.1} parent=27 // loop_footer
        %s428 = sadd.s32 1, %s424
      $region34: #{conv_block.1} parent=27 // loop_footer_branch
        %423 = sbr.rel target = $region30
      $region35: #{conv_block.1} parent=27 // loop_exit
        _
      %s431 = sshllo.u32 0, %s418
      loop: start=0, step=1, limit=1
      $region36: #{conv_block.1} parent=27 // loop_pre_header
        _
      $region37: #{conv_block.1} parent=27 // loop_header
        %s433 = sphi 0, %s437
        %p434 = scmp.ge.s32.totalorder %s433, 1
        %s438 = sphi %s420, %s420
        %s439 = sphi %s422, %s422
      $region38: #{conv_block.1} parent=27 // loop_header_branch
        %436 = sbr.rel (%p434) target = $region42
      $region39: #{conv_block.1} parent=27 // loop_body
        %v440 = vld [vmem:[%s438] sm:%s431]
        %441 = vst [vmem:[%s439] sm:%s431] %v440
        %v442 = vld [vmem:[%s438 + $0x8] sm:%s431]
        %443 = vst [vmem:[%s439 + $0x4] sm:%s431] %v442
        %v444 = vld [vmem:[%s438 + $0x4] sm:%s431]
        %445 = vst [vmem:[%s439 + $0x8] sm:%s431] %v444
        %v446 = vld [vmem:[%s438 + $0xc] sm:%s431]
        %447 = vst [vmem:[%s439 + $0xc] sm:%s431] %v446
        %v448 = vld [vmem:[%s438 + $0x10] sm:%s431]
        %449 = vst [vmem:[%s439 + $0x10] sm:%s431] %v448
        %v450 = vld [vmem:[%s438 + $0x18] sm:%s431]
        %451 = vst [vmem:[%s439 + $0x14] sm:%s431] %v450
        %v452 = vld [vmem:[%s438 + $0x14] sm:%s431]
        %453 = vst [vmem:[%s439 + $0x18] sm:%s431] %v452
        %v454 = vld [vmem:[%s438 + $0x1c] sm:%s431]
        %455 = vst [vmem:[%s439 + $0x1c] sm:%s431] %v454
        %v456 = vld [vmem:[%s438 + $0x20] sm:%s431]
        %457 = vst [vmem:[%s439 + $0x20] sm:%s431] %v456
        %v458 = vld [vmem:[%s438 + $0x28] sm:%s431]
        %459 = vst [vmem:[%s439 + $0x24] sm:%s431] %v458
        %v460 = vld [vmem:[%s438 + $0x24] sm:%s431]
        %461 = vst [vmem:[%s439 + $0x28] sm:%s431] %v460
        %v462 = vld [vmem:[%s438 + $0x2c] sm:%s431]
        %463 = vst [vmem:[%s439 + $0x2c] sm:%s431] %v462
        %v464 = vld [vmem:[%s438 + $0x30] sm:%s431]
        %465 = vst [vmem:[%s439 + $0x30] sm:%s431] %v464
        %v466 = vld [vmem:[%s438 + $0x38] sm:%s431]
        %467 = vst [vmem:[%s439 + $0x34] sm:%s431] %v466
        %v468 = vld [vmem:[%s438 + $0x34] sm:%s431]
        %469 = vst [vmem:[%s439 + $0x38] sm:%s431] %v468
        %v470 = vld [vmem:[%s438 + $0x3c] sm:%s431]
        %471 = vst [vmem:[%s439 + $0x3c] sm:%s431] %v470
        %v472 = vld [vmem:[%s438 + $0x40] sm:%s431]
        %473 = vst [vmem:[%s439 + $0x40] sm:%s431] %v472
        %v474 = vld [vmem:[%s438 + $0x48] sm:%s431]
        %475 = vst [vmem:[%s439 + $0x44] sm:%s431] %v474
        %v476 = vld [vmem:[%s438 + $0x44] sm:%s431]
        %477 = vst [vmem:[%s439 + $0x48] sm:%s431] %v476
        %v478 = vld [vmem:[%s438 + $0x4c] sm:%s431]
        %479 = vst [vmem:[%s439 + $0x4c] sm:%s431] %v478
        %v480 = vld [vmem:[%s438 + $0x50] sm:%s431]
        %481 = vst [vmem:[%s439 + $0x50] sm:%s431] %v480
        %v482 = vld [vmem:[%s438 + $0x58] sm:%s431]
        %483 = vst [vmem:[%s439 + $0x54] sm:%s431] %v482
        %v484 = vld [vmem:[%s438 + $0x54] sm:%s431]
        %485 = vst [vmem:[%s439 + $0x58] sm:%s431] %v484
        %v486 = vld [vmem:[%s438 + $0x5c] sm:%s431]
        %487 = vst [vmem:[%s439 + $0x5c] sm:%s431] %v486
        %v488 = vld [vmem:[%s438 + $0x60] sm:%s431]
        %489 = vst [vmem:[%s439 + $0x60] sm:%s431] %v488
        %v490 = vld [vmem:[%s438 + $0x68] sm:%s431]
        %491 = vst [vmem:[%s439 + $0x64] sm:%s431] %v490
        %v492 = vld [vmem:[%s438 + $0x64] sm:%s431]
        %493 = vst [vmem:[%s439 + $0x68] sm:%s431] %v492
        %v494 = vld [vmem:[%s438 + $0x6c] sm:%s431]
        %495 = vst [vmem:[%s439 + $0x6c] sm:%s431] %v494
        %v496 = vld [vmem:[%s438 + $0x70] sm:%s431]
        %497 = vst [vmem:[%s439 + $0x70] sm:%s431] %v496
        %v498 = vld [vmem:[%s438 + $0x78] sm:%s431]
        %499 = vst [vmem:[%s439 + $0x74] sm:%s431] %v498
        %v500 = vld [vmem:[%s438 + $0x74] sm:%s431]
        %501 = vst [vmem:[%s439 + $0x78] sm:%s431] %v500
        %v502 = vld [vmem:[%s438 + $0x7c] sm:%s431]
        %503 = vst [vmem:[%s439 + $0x7c] sm:%s431] %v502
        %v504 = vld [vmem:[%s438 + $0x80] sm:%s431]
        %505 = vst [vmem:[%s439 + $0x80] sm:%s431] %v504
        %v506 = vld [vmem:[%s438 + $0x88] sm:%s431]
        %507 = vst [vmem:[%s439 + $0x84] sm:%s431] %v506
        %v508 = vld [vmem:[%s438 + $0x84] sm:%s431]
        %509 = vst [vmem:[%s439 + $0x88] sm:%s431] %v508
        %v510 = vld [vmem:[%s438 + $0x8c] sm:%s431]
        %511 = vst [vmem:[%s439 + $0x8c] sm:%s431] %v510
        %v512 = vld [vmem:[%s438 + $0x90] sm:%s431]
        %513 = vst [vmem:[%s439 + $0x90] sm:%s431] %v512
        %v514 = vld [vmem:[%s438 + $0x98] sm:%s431]
        %515 = vst [vmem:[%s439 + $0x94] sm:%s431] %v514
        %v516 = vld [vmem:[%s438 + $0x94] sm:%s431]
        %517 = vst [vmem:[%s439 + $0x98] sm:%s431] %v516
        %v518 = vld [vmem:[%s438 + $0x9c] sm:%s431]
        %519 = vst [vmem:[%s439 + $0x9c] sm:%s431] %v518
        %v520 = vld [vmem:[%s438 + $0xa0] sm:%s431]
        %521 = vst [vmem:[%s439 + $0xa0] sm:%s431] %v520
        %v522 = vld [vmem:[%s438 + $0xa8] sm:%s431]
        %523 = vst [vmem:[%s439 + $0xa4] sm:%s431] %v522
        %v524 = vld [vmem:[%s438 + $0xa4] sm:%s431]
        %525 = vst [vmem:[%s439 + $0xa8] sm:%s431] %v524
        %v526 = vld [vmem:[%s438 + $0xac] sm:%s431]
        %527 = vst [vmem:[%s439 + $0xac] sm:%s431] %v526
        %v528 = vld [vmem:[%s438 + $0xb0] sm:%s431]
        %529 = vst [vmem:[%s439 + $0xb0] sm:%s431] %v528
        %v530 = vld [vmem:[%s438 + $0xb8] sm:%s431]
        %531 = vst [vmem:[%s439 + $0xb4] sm:%s431] %v530
        %v532 = vld [vmem:[%s438 + $0xb4] sm:%s431]
        %533 = vst [vmem:[%s439 + $0xb8] sm:%s431] %v532
        %v534 = vld [vmem:[%s438 + $0xbc] sm:%s431]
        %535 = vst [vmem:[%s439 + $0xbc] sm:%s431] %v534
        %v536 = vld [vmem:[%s438 + $0xc0] sm:%s431]
        %537 = vst [vmem:[%s439 + $0xc0] sm:%s431] %v536
        %v538 = vld [vmem:[%s438 + $0xc8] sm:%s431]
        %539 = vst [vmem:[%s439 + $0xc4] sm:%s431] %v538
        %v540 = vld [vmem:[%s438 + $0xc4] sm:%s431]
        %541 = vst [vmem:[%s439 + $0xc8] sm:%s431] %v540
        %v542 = vld [vmem:[%s438 + $0xcc] sm:%s431]
        %543 = vst [vmem:[%s439 + $0xcc] sm:%s431] %v542
        %v544 = vld [vmem:[%s438 + $0xd0] sm:%s431]
        %545 = vst [vmem:[%s439 + $0xd0] sm:%s431] %v544
        %v546 = vld [vmem:[%s438 + $0xd8] sm:%s431]
        %547 = vst [vmem:[%s439 + $0xd4] sm:%s431] %v546
        %v548 = vld [vmem:[%s438 + $0xd4] sm:%s431]
        %549 = vst [vmem:[%s439 + $0xd8] sm:%s431] %v548
        %v550 = vld [vmem:[%s438 + $0xdc] sm:%s431]
        %551 = vst [vmem:[%s439 + $0xdc] sm:%s431] %v550
        %v552 = vld [vmem:[%s438 + $0xe0] sm:%s431]
        %553 = vst [vmem:[%s439 + $0xe0] sm:%s431] %v552
        %v554 = vld [vmem:[%s438 + $0xe8] sm:%s431]
        %555 = vst [vmem:[%s439 + $0xe4] sm:%s431] %v554
        %v556 = vld [vmem:[%s438 + $0xe4] sm:%s431]
        %557 = vst [vmem:[%s439 + $0xe8] sm:%s431] %v556
        %v558 = vld [vmem:[%s438 + $0xec] sm:%s431]
        %559 = vst [vmem:[%s439 + $0xec] sm:%s431] %v558
        %v560 = vld [vmem:[%s438 + $0xf0] sm:%s431]
        %561 = vst [vmem:[%s439 + $0xf0] sm:%s431] %v560
        %v562 = vld [vmem:[%s438 + $0xf8] sm:%s431]
        %563 = vst [vmem:[%s439 + $0xf4] sm:%s431] %v562
        %v564 = vld [vmem:[%s438 + $0xf4] sm:%s431]
        %565 = vst [vmem:[%s439 + $0xf8] sm:%s431] %v564
        %v566 = vld [vmem:[%s438 + $0xfc] sm:%s431]
        %567 = vst [vmem:[%s439 + $0xfc] sm:%s431] %v566
        %v568 = vld [vmem:[%s438 + $0x100] sm:%s431]
        %569 = vst [vmem:[%s439 + $0x100] sm:%s431] %v568
        %v570 = vld [vmem:[%s438 + $0x108] sm:%s431]
        %571 = vst [vmem:[%s439 + $0x104] sm:%s431] %v570
        %v572 = vld [vmem:[%s438 + $0x104] sm:%s431]
        %573 = vst [vmem:[%s439 + $0x108] sm:%s431] %v572
        %v574 = vld [vmem:[%s438 + $0x10c] sm:%s431]
        %575 = vst [vmem:[%s439 + $0x10c] sm:%s431] %v574
        %v576 = vld [vmem:[%s438 + $0x110] sm:%s431]
        %577 = vst [vmem:[%s439 + $0x110] sm:%s431] %v576
        %v578 = vld [vmem:[%s438 + $0x118] sm:%s431]
        %579 = vst [vmem:[%s439 + $0x114] sm:%s431] %v578
        %v580 = vld [vmem:[%s438 + $0x114] sm:%s431]
        %581 = vst [vmem:[%s439 + $0x118] sm:%s431] %v580
        %v582 = vld [vmem:[%s438 + $0x11c] sm:%s431]
        %583 = vst [vmem:[%s439 + $0x11c] sm:%s431] %v582
        %v584 = vld [vmem:[%s438 + $0x120] sm:%s431]
        %585 = vst [vmem:[%s439 + $0x120] sm:%s431] %v584
        %v586 = vld [vmem:[%s438 + $0x128] sm:%s431]
        %587 = vst [vmem:[%s439 + $0x124] sm:%s431] %v586
        %v588 = vld [vmem:[%s438 + $0x124] sm:%s431]
        %589 = vst [vmem:[%s439 + $0x128] sm:%s431] %v588
        %v590 = vld [vmem:[%s438 + $0x12c] sm:%s431]
        %591 = vst [vmem:[%s439 + $0x12c] sm:%s431] %v590
        %v592 = vld [vmem:[%s438 + $0x130] sm:%s431]
        %593 = vst [vmem:[%s439 + $0x130] sm:%s431] %v592
        %v594 = vld [vmem:[%s438 + $0x138] sm:%s431]
        %595 = vst [vmem:[%s439 + $0x134] sm:%s431] %v594
        %v596 = vld [vmem:[%s438 + $0x134] sm:%s431]
        %597 = vst [vmem:[%s439 + $0x138] sm:%s431] %v596
        %v598 = vld [vmem:[%s438 + $0x13c] sm:%s431]
        %599 = vst [vmem:[%s439 + $0x13c] sm:%s431] %v598
        %v600 = vld [vmem:[%s438 + $0x140] sm:%s431]
        %601 = vst [vmem:[%s439 + $0x140] sm:%s431] %v600
        %v602 = vld [vmem:[%s438 + $0x148] sm:%s431]
        %603 = vst [vmem:[%s439 + $0x144] sm:%s431] %v602
        %v604 = vld [vmem:[%s438 + $0x144] sm:%s431]
        %605 = vst [vmem:[%s439 + $0x148] sm:%s431] %v604
        %v606 = vld [vmem:[%s438 + $0x14c] sm:%s431]
        %607 = vst [vmem:[%s439 + $0x14c] sm:%s431] %v606
        %v608 = vld [vmem:[%s438 + $0x150] sm:%s431]
        %609 = vst [vmem:[%s439 + $0x150] sm:%s431] %v608
        %v610 = vld [vmem:[%s438 + $0x158] sm:%s431]
        %611 = vst [vmem:[%s439 + $0x154] sm:%s431] %v610
        %v612 = vld [vmem:[%s438 + $0x154] sm:%s431]
        %613 = vst [vmem:[%s439 + $0x158] sm:%s431] %v612
        %v614 = vld [vmem:[%s438 + $0x15c] sm:%s431]
        %615 = vst [vmem:[%s439 + $0x15c] sm:%s431] %v614
        %v616 = vld [vmem:[%s438 + $0x160] sm:%s431]
        %617 = vst [vmem:[%s439 + $0x160] sm:%s431] %v616
        %v618 = vld [vmem:[%s438 + $0x168] sm:%s431]
        %619 = vst [vmem:[%s439 + $0x164] sm:%s431] %v618
        %v620 = vld [vmem:[%s438 + $0x164] sm:%s431]
        %621 = vst [vmem:[%s439 + $0x168] sm:%s431] %v620
        %v622 = vld [vmem:[%s438 + $0x16c] sm:%s431]
        %623 = vst [vmem:[%s439 + $0x16c] sm:%s431] %v622
        %v624 = vld [vmem:[%s438 + $0x170] sm:%s431]
        %625 = vst [vmem:[%s439 + $0x170] sm:%s431] %v624
        %v626 = vld [vmem:[%s438 + $0x178] sm:%s431]
        %627 = vst [vmem:[%s439 + $0x174] sm:%s431] %v626
        %v628 = vld [vmem:[%s438 + $0x174] sm:%s431]
        %629 = vst [vmem:[%s439 + $0x178] sm:%s431] %v628
        %v630 = vld [vmem:[%s438 + $0x17c] sm:%s431]
        %631 = vst [vmem:[%s439 + $0x17c] sm:%s431] %v630
        %v632 = vld [vmem:[%s438 + $0x180] sm:%s431]
        %633 = vst [vmem:[%s439 + $0x180] sm:%s431] %v632
        %v634 = vld [vmem:[%s438 + $0x188] sm:%s431]
        %635 = vst [vmem:[%s439 + $0x184] sm:%s431] %v634
        %v636 = vld [vmem:[%s438 + $0x184] sm:%s431]
        %637 = vst [vmem:[%s439 + $0x188] sm:%s431] %v636
        %v638 = vld [vmem:[%s438 + $0x18c] sm:%s431]
        %639 = vst [vmem:[%s439 + $0x18c] sm:%s431] %v638
        %v640 = vld [vmem:[%s438 + $0x190] sm:%s431]
        %641 = vst [vmem:[%s439 + $0x190] sm:%s431] %v640
        %v642 = vld [vmem:[%s438 + $0x198] sm:%s431]
        %643 = vst [vmem:[%s439 + $0x194] sm:%s431] %v642
        %v644 = vld [vmem:[%s438 + $0x194] sm:%s431]
        %645 = vst [vmem:[%s439 + $0x198] sm:%s431] %v644
        %v646 = vld [vmem:[%s438 + $0x19c] sm:%s431]
        %647 = vst [vmem:[%s439 + $0x19c] sm:%s431] %v646
        %v648 = vld [vmem:[%s438 + $0x1a0] sm:%s431]
        %649 = vst [vmem:[%s439 + $0x1a0] sm:%s431] %v648
        %v650 = vld [vmem:[%s438 + $0x1a8] sm:%s431]
        %651 = vst [vmem:[%s439 + $0x1a4] sm:%s431] %v650
        %v652 = vld [vmem:[%s438 + $0x1a4] sm:%s431]
        %653 = vst [vmem:[%s439 + $0x1a8] sm:%s431] %v652
        %v654 = vld [vmem:[%s438 + $0x1ac] sm:%s431]
        %655 = vst [vmem:[%s439 + $0x1ac] sm:%s431] %v654
        %v656 = vld [vmem:[%s438 + $0x1b0] sm:%s431]
        %657 = vst [vmem:[%s439 + $0x1b0] sm:%s431] %v656
        %v658 = vld [vmem:[%s438 + $0x1b8] sm:%s431]
        %659 = vst [vmem:[%s439 + $0x1b4] sm:%s431] %v658
        %v660 = vld [vmem:[%s438 + $0x1b4] sm:%s431]
        %661 = vst [vmem:[%s439 + $0x1b8] sm:%s431] %v660
        %v662 = vld [vmem:[%s438 + $0x1bc] sm:%s431]
        %663 = vst [vmem:[%s439 + $0x1bc] sm:%s431] %v662
        %v664 = vld [vmem:[%s438 + $0x1c0] sm:%s431]
        %665 = vst [vmem:[%s439 + $0x1c0] sm:%s431] %v664
        %v666 = vld [vmem:[%s438 + $0x1c8] sm:%s431]
        %667 = vst [vmem:[%s439 + $0x1c4] sm:%s431] %v666
        %v668 = vld [vmem:[%s438 + $0x1c4] sm:%s431]
        %669 = vst [vmem:[%s439 + $0x1c8] sm:%s431] %v668
        %v670 = vld [vmem:[%s438 + $0x1cc] sm:%s431]
        %671 = vst [vmem:[%s439 + $0x1cc] sm:%s431] %v670
        %v672 = vld [vmem:[%s438 + $0x1d0] sm:%s431]
        %673 = vst [vmem:[%s439 + $0x1d0] sm:%s431] %v672
        %v674 = vld [vmem:[%s438 + $0x1d8] sm:%s431]
        %675 = vst [vmem:[%s439 + $0x1d4] sm:%s431] %v674
        %v676 = vld [vmem:[%s438 + $0x1d4] sm:%s431]
        %677 = vst [vmem:[%s439 + $0x1d8] sm:%s431] %v676
        %v678 = vld [vmem:[%s438 + $0x1dc] sm:%s431]
        %679 = vst [vmem:[%s439 + $0x1dc] sm:%s431] %v678
        %v680 = vld [vmem:[%s438 + $0x1e0] sm:%s431]
        %681 = vst [vmem:[%s439 + $0x1e0] sm:%s431] %v680
        %v682 = vld [vmem:[%s438 + $0x1e8] sm:%s431]
        %683 = vst [vmem:[%s439 + $0x1e4] sm:%s431] %v682
        %v684 = vld [vmem:[%s438 + $0x1e4] sm:%s431]
        %685 = vst [vmem:[%s439 + $0x1e8] sm:%s431] %v684
        %v686 = vld [vmem:[%s438 + $0x1ec] sm:%s431]
        %687 = vst [vmem:[%s439 + $0x1ec] sm:%s431] %v686
        %v688 = vld [vmem:[%s438 + $0x1f0] sm:%s431]
        %689 = vst [vmem:[%s439 + $0x1f0] sm:%s431] %v688
        %v690 = vld [vmem:[%s438 + $0x1f8] sm:%s431]
        %691 = vst [vmem:[%s439 + $0x1f4] sm:%s431] %v690
        %v692 = vld [vmem:[%s438 + $0x1f4] sm:%s431]
        %693 = vst [vmem:[%s439 + $0x1f8] sm:%s431] %v692
        %v694 = vld [vmem:[%s438 + $0x1fc] sm:%s431]
        %695 = vst [vmem:[%s439 + $0x1fc] sm:%s431] %v694
        %v696 = vld [vmem:[%s438 + $0x200] sm:%s431]
        %697 = vst [vmem:[%s439 + $0x200] sm:%s431] %v696
        %v698 = vld [vmem:[%s438 + $0x208] sm:%s431]
        %699 = vst [vmem:[%s439 + $0x204] sm:%s431] %v698
        %v700 = vld [vmem:[%s438 + $0x204] sm:%s431]
        %701 = vst [vmem:[%s439 + $0x208] sm:%s431] %v700
        %v702 = vld [vmem:[%s438 + $0x20c] sm:%s431]
        %703 = vst [vmem:[%s439 + $0x20c] sm:%s431] %v702
        %v704 = vld [vmem:[%s438 + $0x210] sm:%s431]
        %705 = vst [vmem:[%s439 + $0x210] sm:%s431] %v704
        %v706 = vld [vmem:[%s438 + $0x218] sm:%s431]
        %707 = vst [vmem:[%s439 + $0x214] sm:%s431] %v706
        %v708 = vld [vmem:[%s438 + $0x214] sm:%s431]
        %709 = vst [vmem:[%s439 + $0x218] sm:%s431] %v708
        %v710 = vld [vmem:[%s438 + $0x21c] sm:%s431]
        %711 = vst [vmem:[%s439 + $0x21c] sm:%s431] %v710
        %v712 = vld [vmem:[%s438 + $0x220] sm:%s431]
        %713 = vst [vmem:[%s439 + $0x220] sm:%s431] %v712
        %v714 = vld [vmem:[%s438 + $0x228] sm:%s431]
        %715 = vst [vmem:[%s439 + $0x224] sm:%s431] %v714
        %v716 = vld [vmem:[%s438 + $0x224] sm:%s431]
        %717 = vst [vmem:[%s439 + $0x228] sm:%s431] %v716
        %v718 = vld [vmem:[%s438 + $0x22c] sm:%s431]
        %719 = vst [vmem:[%s439 + $0x22c] sm:%s431] %v718
        %v720 = vld [vmem:[%s438 + $0x230] sm:%s431]
        %721 = vst [vmem:[%s439 + $0x230] sm:%s431] %v720
        %v722 = vld [vmem:[%s438 + $0x238] sm:%s431]
        %723 = vst [vmem:[%s439 + $0x234] sm:%s431] %v722
        %v724 = vld [vmem:[%s438 + $0x234] sm:%s431]
        %725 = vst [vmem:[%s439 + $0x238] sm:%s431] %v724
        %v726 = vld [vmem:[%s438 + $0x23c] sm:%s431]
        %727 = vst [vmem:[%s439 + $0x23c] sm:%s431] %v726
        %v728 = vld [vmem:[%s438 + $0x240] sm:%s431]
        %729 = vst [vmem:[%s439 + $0x240] sm:%s431] %v728
        %v730 = vld [vmem:[%s438 + $0x248] sm:%s431]
        %731 = vst [vmem:[%s439 + $0x244] sm:%s431] %v730
        %v732 = vld [vmem:[%s438 + $0x244] sm:%s431]
        %733 = vst [vmem:[%s439 + $0x248] sm:%s431] %v732
        %v734 = vld [vmem:[%s438 + $0x24c] sm:%s431]
        %735 = vst [vmem:[%s439 + $0x24c] sm:%s431] %v734
        %v736 = vld [vmem:[%s438 + $0x250] sm:%s431]
        %737 = vst [vmem:[%s439 + $0x250] sm:%s431] %v736
        %v738 = vld [vmem:[%s438 + $0x258] sm:%s431]
        %739 = vst [vmem:[%s439 + $0x254] sm:%s431] %v738
        %v740 = vld [vmem:[%s438 + $0x254] sm:%s431]
        %741 = vst [vmem:[%s439 + $0x258] sm:%s431] %v740
        %v742 = vld [vmem:[%s438 + $0x25c] sm:%s431]
        %743 = vst [vmem:[%s439 + $0x25c] sm:%s431] %v742
        %v744 = vld [vmem:[%s438 + $0x260] sm:%s431]
        %745 = vst [vmem:[%s439 + $0x260] sm:%s431] %v744
        %v746 = vld [vmem:[%s438 + $0x268] sm:%s431]
        %747 = vst [vmem:[%s439 + $0x264] sm:%s431] %v746
        %v748 = vld [vmem:[%s438 + $0x264] sm:%s431]
        %749 = vst [vmem:[%s439 + $0x268] sm:%s431] %v748
        %v750 = vld [vmem:[%s438 + $0x26c] sm:%s431]
        %751 = vst [vmem:[%s439 + $0x26c] sm:%s431] %v750
        %v752 = vld [vmem:[%s438 + $0x270] sm:%s431]
        %753 = vst [vmem:[%s439 + $0x270] sm:%s431] %v752
        %v754 = vld [vmem:[%s438 + $0x278] sm:%s431]
        %755 = vst [vmem:[%s439 + $0x274] sm:%s431] %v754
        %v756 = vld [vmem:[%s438 + $0x274] sm:%s431]
        %757 = vst [vmem:[%s439 + $0x278] sm:%s431] %v756
        %v758 = vld [vmem:[%s438 + $0x27c] sm:%s431]
        %759 = vst [vmem:[%s439 + $0x27c] sm:%s431] %v758
        %v760 = vld [vmem:[%s438 + $0x280] sm:%s431]
        %761 = vst [vmem:[%s439 + $0x280] sm:%s431] %v760
        %v762 = vld [vmem:[%s438 + $0x288] sm:%s431]
        %763 = vst [vmem:[%s439 + $0x284] sm:%s431] %v762
        %v764 = vld [vmem:[%s438 + $0x284] sm:%s431]
        %765 = vst [vmem:[%s439 + $0x288] sm:%s431] %v764
        %v766 = vld [vmem:[%s438 + $0x28c] sm:%s431]
        %767 = vst [vmem:[%s439 + $0x28c] sm:%s431] %v766
        %v768 = vld [vmem:[%s438 + $0x290] sm:%s431]
        %769 = vst [vmem:[%s439 + $0x290] sm:%s431] %v768
        %v770 = vld [vmem:[%s438 + $0x298] sm:%s431]
        %771 = vst [vmem:[%s439 + $0x294] sm:%s431] %v770
        %v772 = vld [vmem:[%s438 + $0x294] sm:%s431]
        %773 = vst [vmem:[%s439 + $0x298] sm:%s431] %v772
        %v774 = vld [vmem:[%s438 + $0x29c] sm:%s431]
        %775 = vst [vmem:[%s439 + $0x29c] sm:%s431] %v774
        %v776 = vld [vmem:[%s438 + $0x2a0] sm:%s431]
        %777 = vst [vmem:[%s439 + $0x2a0] sm:%s431] %v776
        %v778 = vld [vmem:[%s438 + $0x2a8] sm:%s431]
        %779 = vst [vmem:[%s439 + $0x2a4] sm:%s431] %v778
        %v780 = vld [vmem:[%s438 + $0x2a4] sm:%s431]
        %781 = vst [vmem:[%s439 + $0x2a8] sm:%s431] %v780
        %v782 = vld [vmem:[%s438 + $0x2ac] sm:%s431]
        %783 = vst [vmem:[%s439 + $0x2ac] sm:%s431] %v782
        %v784 = vld [vmem:[%s438 + $0x2b0] sm:%s431]
        %785 = vst [vmem:[%s439 + $0x2b0] sm:%s431] %v784
        %v786 = vld [vmem:[%s438 + $0x2b8] sm:%s431]
        %787 = vst [vmem:[%s439 + $0x2b4] sm:%s431] %v786
        %v788 = vld [vmem:[%s438 + $0x2b4] sm:%s431]
        %789 = vst [vmem:[%s439 + $0x2b8] sm:%s431] %v788
        %v790 = vld [vmem:[%s438 + $0x2bc] sm:%s431]
        %791 = vst [vmem:[%s439 + $0x2bc] sm:%s431] %v790
        %v792 = vld [vmem:[%s438 + $0x2c0] sm:%s431]
        %793 = vst [vmem:[%s439 + $0x2c0] sm:%s431] %v792
        %v794 = vld [vmem:[%s438 + $0x2c8] sm:%s431]
        %795 = vst [vmem:[%s439 + $0x2c4] sm:%s431] %v794
        %v796 = vld [vmem:[%s438 + $0x2c4] sm:%s431]
        %797 = vst [vmem:[%s439 + $0x2c8] sm:%s431] %v796
        %v798 = vld [vmem:[%s438 + $0x2cc] sm:%s431]
        %799 = vst [vmem:[%s439 + $0x2cc] sm:%s431] %v798
        %v800 = vld [vmem:[%s438 + $0x2d0] sm:%s431]
        %801 = vst [vmem:[%s439 + $0x2d0] sm:%s431] %v800
        %v802 = vld [vmem:[%s438 + $0x2d8] sm:%s431]
        %803 = vst [vmem:[%s439 + $0x2d4] sm:%s431] %v802
        %v804 = vld [vmem:[%s438 + $0x2d4] sm:%s431]
        %805 = vst [vmem:[%s439 + $0x2d8] sm:%s431] %v804
        %v806 = vld [vmem:[%s438 + $0x2dc] sm:%s431]
        %807 = vst [vmem:[%s439 + $0x2dc] sm:%s431] %v806
        %v808 = vld [vmem:[%s438 + $0x2e0] sm:%s431]
        %809 = vst [vmem:[%s439 + $0x2e0] sm:%s431] %v808
        %v810 = vld [vmem:[%s438 + $0x2e8] sm:%s431]
        %811 = vst [vmem:[%s439 + $0x2e4] sm:%s431] %v810
        %v812 = vld [vmem:[%s438 + $0x2e4] sm:%s431]
        %813 = vst [vmem:[%s439 + $0x2e8] sm:%s431] %v812
        %v814 = vld [vmem:[%s438 + $0x2ec] sm:%s431]
        %815 = vst [vmem:[%s439 + $0x2ec] sm:%s431] %v814
        %v816 = vld [vmem:[%s438 + $0x2f0] sm:%s431]
        %817 = vst [vmem:[%s439 + $0x2f0] sm:%s431] %v816
        %v818 = vld [vmem:[%s438 + $0x2f8] sm:%s431]
        %819 = vst [vmem:[%s439 + $0x2f4] sm:%s431] %v818
        %v820 = vld [vmem:[%s438 + $0x2f4] sm:%s431]
        %821 = vst [vmem:[%s439 + $0x2f8] sm:%s431] %v820
        %v822 = vld [vmem:[%s438 + $0x2fc] sm:%s431]
        %823 = vst [vmem:[%s439 + $0x2fc] sm:%s431] %v822
      $region40: #{conv_block.1} parent=27 // loop_footer
        %s437 = sadd.s32 1, %s433
      $region41: #{conv_block.1} parent=27 // loop_footer_branch
        %432 = sbr.rel target = $region37
      $region42: #{conv_block.1} parent=27 // loop_exit
        _
    $region28: #{conv_block.1} parent=12 // pred_fallthru
      _
  $region13: #{conv_block.1} parent=0 // pred_fallthru
    _
  // Predicated region
  $region14: #{conv_block.1} parent=0 // pred_check
    %p17 = pneg %p13
  $region15: #{conv_block.1} parent=0 // pred_check_branch
    %19 = sbr.rel (%p17) target = $region17
  $region16: #{conv_block.1} parent=0 // pred_region
    %s20 = sshllo.u32 0, 4
    loop: start=0, step=1, limit=1
    $region18: #{conv_block.1} parent=16 // loop_pre_header
      _
    $region19: #{conv_block.1} parent=16 // loop_header
      %s22 = sphi 0, %s26
      %p23 = scmp.ge.s32.totalorder %s22, 1
      %s27 = sphi %s2, %s2
      %s28 = sphi [#allocation2], [#allocation2]
    $region20: #{conv_block.1} parent=16 // loop_header_branch
      %25 = sbr.rel (%p23) target = $region24
    $region21: #{conv_block.1} parent=16 // loop_body
      %v29 = vld [vmem:[%s27] sm:%s20]
      %30 = vst [vmem:[%s28] sm:%s20] %v29
      %v31 = vld [vmem:[%s27 + $0x8] sm:%s20]
      %32 = vst [vmem:[%s28 + $0x4] sm:%s20] %v31
      %v33 = vld [vmem:[%s27 + $0x4] sm:%s20]
      %34 = vst [vmem:[%s28 + $0x8] sm:%s20] %v33
      %v35 = vld [vmem:[%s27 + $0xc] sm:%s20]
      %36 = vst [vmem:[%s28 + $0xc] sm:%s20] %v35
      %v37 = vld [vmem:[%s27 + $0x10] sm:%s20]
      %38 = vst [vmem:[%s28 + $0x10] sm:%s20] %v37
      %v39 = vld [vmem:[%s27 + $0x18] sm:%s20]
      %40 = vst [vmem:[%s28 + $0x14] sm:%s20] %v39
      %v41 = vld [vmem:[%s27 + $0x14] sm:%s20]
      %42 = vst [vmem:[%s28 + $0x18] sm:%s20] %v41
      %v43 = vld [vmem:[%s27 + $0x1c] sm:%s20]
      %44 = vst [vmem:[%s28 + $0x1c] sm:%s20] %v43
      %v45 = vld [vmem:[%s27 + $0x20] sm:%s20]
      %46 = vst [vmem:[%s28 + $0x20] sm:%s20] %v45
      %v47 = vld [vmem:[%s27 + $0x28] sm:%s20]
      %48 = vst [vmem:[%s28 + $0x24] sm:%s20] %v47
      %v49 = vld [vmem:[%s27 + $0x24] sm:%s20]
      %50 = vst [vmem:[%s28 + $0x28] sm:%s20] %v49
      %v51 = vld [vmem:[%s27 + $0x2c] sm:%s20]
      %52 = vst [vmem:[%s28 + $0x2c] sm:%s20] %v51
      %v53 = vld [vmem:[%s27 + $0x30] sm:%s20]
      %54 = vst [vmem:[%s28 + $0x30] sm:%s20] %v53
      %v55 = vld [vmem:[%s27 + $0x38] sm:%s20]
      %56 = vst [vmem:[%s28 + $0x34] sm:%s20] %v55
      %v57 = vld [vmem:[%s27 + $0x34] sm:%s20]
      %58 = vst [vmem:[%s28 + $0x38] sm:%s20] %v57
      %v59 = vld [vmem:[%s27 + $0x3c] sm:%s20]
      %60 = vst [vmem:[%s28 + $0x3c] sm:%s20] %v59
      %v61 = vld [vmem:[%s27 + $0x40] sm:%s20]
      %62 = vst [vmem:[%s28 + $0x40] sm:%s20] %v61
      %v63 = vld [vmem:[%s27 + $0x48] sm:%s20]
      %64 = vst [vmem:[%s28 + $0x44] sm:%s20] %v63
      %v65 = vld [vmem:[%s27 + $0x44] sm:%s20]
      %66 = vst [vmem:[%s28 + $0x48] sm:%s20] %v65
      %v67 = vld [vmem:[%s27 + $0x4c] sm:%s20]
      %68 = vst [vmem:[%s28 + $0x4c] sm:%s20] %v67
      %v69 = vld [vmem:[%s27 + $0x50] sm:%s20]
      %70 = vst [vmem:[%s28 + $0x50] sm:%s20] %v69
      %v71 = vld [vmem:[%s27 + $0x58] sm:%s20]
      %72 = vst [vmem:[%s28 + $0x54] sm:%s20] %v71
      %v73 = vld [vmem:[%s27 + $0x54] sm:%s20]
      %74 = vst [vmem:[%s28 + $0x58] sm:%s20] %v73
      %v75 = vld [vmem:[%s27 + $0x5c] sm:%s20]
      %76 = vst [vmem:[%s28 + $0x5c] sm:%s20] %v75
      %v77 = vld [vmem:[%s27 + $0x60] sm:%s20]
      %78 = vst [vmem:[%s28 + $0x60] sm:%s20] %v77
      %v79 = vld [vmem:[%s27 + $0x68] sm:%s20]
      %80 = vst [vmem:[%s28 + $0x64] sm:%s20] %v79
      %v81 = vld [vmem:[%s27 + $0x64] sm:%s20]
      %82 = vst [vmem:[%s28 + $0x68] sm:%s20] %v81
      %v83 = vld [vmem:[%s27 + $0x6c] sm:%s20]
      %84 = vst [vmem:[%s28 + $0x6c] sm:%s20] %v83
      %v85 = vld [vmem:[%s27 + $0x70] sm:%s20]
      %86 = vst [vmem:[%s28 + $0x70] sm:%s20] %v85
      %v87 = vld [vmem:[%s27 + $0x78] sm:%s20]
      %88 = vst [vmem:[%s28 + $0x74] sm:%s20] %v87
      %v89 = vld [vmem:[%s27 + $0x74] sm:%s20]
      %90 = vst [vmem:[%s28 + $0x78] sm:%s20] %v89
      %v91 = vld [vmem:[%s27 + $0x7c] sm:%s20]
      %92 = vst [vmem:[%s28 + $0x7c] sm:%s20] %v91
      %v93 = vld [vmem:[%s27 + $0x80] sm:%s20]
      %94 = vst [vmem:[%s28 + $0x80] sm:%s20] %v93
      %v95 = vld [vmem:[%s27 + $0x88] sm:%s20]
      %96 = vst [vmem:[%s28 + $0x84] sm:%s20] %v95
      %v97 = vld [vmem:[%s27 + $0x84] sm:%s20]
      %98 = vst [vmem:[%s28 + $0x88] sm:%s20] %v97
      %v99 = vld [vmem:[%s27 + $0x8c] sm:%s20]
      %100 = vst [vmem:[%s28 + $0x8c] sm:%s20] %v99
      %v101 = vld [vmem:[%s27 + $0x90] sm:%s20]
      %102 = vst [vmem:[%s28 + $0x90] sm:%s20] %v101
      %v103 = vld [vmem:[%s27 + $0x98] sm:%s20]
      %104 = vst [vmem:[%s28 + $0x94] sm:%s20] %v103
      %v105 = vld [vmem:[%s27 + $0x94] sm:%s20]
      %106 = vst [vmem:[%s28 + $0x98] sm:%s20] %v105
      %v107 = vld [vmem:[%s27 + $0x9c] sm:%s20]
      %108 = vst [vmem:[%s28 + $0x9c] sm:%s20] %v107
      %v109 = vld [vmem:[%s27 + $0xa0] sm:%s20]
      %110 = vst [vmem:[%s28 + $0xa0] sm:%s20] %v109
      %v111 = vld [vmem:[%s27 + $0xa8] sm:%s20]
      %112 = vst [vmem:[%s28 + $0xa4] sm:%s20] %v111
      %v113 = vld [vmem:[%s27 + $0xa4] sm:%s20]
      %114 = vst [vmem:[%s28 + $0xa8] sm:%s20] %v113
      %v115 = vld [vmem:[%s27 + $0xac] sm:%s20]
      %116 = vst [vmem:[%s28 + $0xac] sm:%s20] %v115
      %v117 = vld [vmem:[%s27 + $0xb0] sm:%s20]
      %118 = vst [vmem:[%s28 + $0xb0] sm:%s20] %v117
      %v119 = vld [vmem:[%s27 + $0xb8] sm:%s20]
      %120 = vst [vmem:[%s28 + $0xb4] sm:%s20] %v119
      %v121 = vld [vmem:[%s27 + $0xb4] sm:%s20]
      %122 = vst [vmem:[%s28 + $0xb8] sm:%s20] %v121
      %v123 = vld [vmem:[%s27 + $0xbc] sm:%s20]
      %124 = vst [vmem:[%s28 + $0xbc] sm:%s20] %v123
      %v125 = vld [vmem:[%s27 + $0xc0] sm:%s20]
      %126 = vst [vmem:[%s28 + $0xc0] sm:%s20] %v125
      %v127 = vld [vmem:[%s27 + $0xc8] sm:%s20]
      %128 = vst [vmem:[%s28 + $0xc4] sm:%s20] %v127
      %v129 = vld [vmem:[%s27 + $0xc4] sm:%s20]
      %130 = vst [vmem:[%s28 + $0xc8] sm:%s20] %v129
      %v131 = vld [vmem:[%s27 + $0xcc] sm:%s20]
      %132 = vst [vmem:[%s28 + $0xcc] sm:%s20] %v131
      %v133 = vld [vmem:[%s27 + $0xd0] sm:%s20]
      %134 = vst [vmem:[%s28 + $0xd0] sm:%s20] %v133
      %v135 = vld [vmem:[%s27 + $0xd8] sm:%s20]
      %136 = vst [vmem:[%s28 + $0xd4] sm:%s20] %v135
      %v137 = vld [vmem:[%s27 + $0xd4] sm:%s20]
      %138 = vst [vmem:[%s28 + $0xd8] sm:%s20] %v137
      %v139 = vld [vmem:[%s27 + $0xdc] sm:%s20]
      %140 = vst [vmem:[%s28 + $0xdc] sm:%s20] %v139
      %v141 = vld [vmem:[%s27 + $0xe0] sm:%s20]
      %142 = vst [vmem:[%s28 + $0xe0] sm:%s20] %v141
      %v143 = vld [vmem:[%s27 + $0xe8] sm:%s20]
      %144 = vst [vmem:[%s28 + $0xe4] sm:%s20] %v143
      %v145 = vld [vmem:[%s27 + $0xe4] sm:%s20]
      %146 = vst [vmem:[%s28 + $0xe8] sm:%s20] %v145
      %v147 = vld [vmem:[%s27 + $0xec] sm:%s20]
      %148 = vst [vmem:[%s28 + $0xec] sm:%s20] %v147
      %v149 = vld [vmem:[%s27 + $0xf0] sm:%s20]
      %150 = vst [vmem:[%s28 + $0xf0] sm:%s20] %v149
      %v151 = vld [vmem:[%s27 + $0xf8] sm:%s20]
      %152 = vst [vmem:[%s28 + $0xf4] sm:%s20] %v151
      %v153 = vld [vmem:[%s27 + $0xf4] sm:%s20]
      %154 = vst [vmem:[%s28 + $0xf8] sm:%s20] %v153
      %v155 = vld [vmem:[%s27 + $0xfc] sm:%s20]
      %156 = vst [vmem:[%s28 + $0xfc] sm:%s20] %v155
      %v157 = vld [vmem:[%s27 + $0x100] sm:%s20]
      %158 = vst [vmem:[%s28 + $0x100] sm:%s20] %v157
      %v159 = vld [vmem:[%s27 + $0x108] sm:%s20]
      %160 = vst [vmem:[%s28 + $0x104] sm:%s20] %v159
      %v161 = vld [vmem:[%s27 + $0x104] sm:%s20]
      %162 = vst [vmem:[%s28 + $0x108] sm:%s20] %v161
      %v163 = vld [vmem:[%s27 + $0x10c] sm:%s20]
      %164 = vst [vmem:[%s28 + $0x10c] sm:%s20] %v163
      %v165 = vld [vmem:[%s27 + $0x110] sm:%s20]
      %166 = vst [vmem:[%s28 + $0x110] sm:%s20] %v165
      %v167 = vld [vmem:[%s27 + $0x118] sm:%s20]
      %168 = vst [vmem:[%s28 + $0x114] sm:%s20] %v167
      %v169 = vld [vmem:[%s27 + $0x114] sm:%s20]
      %170 = vst [vmem:[%s28 + $0x118] sm:%s20] %v169
      %v171 = vld [vmem:[%s27 + $0x11c] sm:%s20]
      %172 = vst [vmem:[%s28 + $0x11c] sm:%s20] %v171
      %v173 = vld [vmem:[%s27 + $0x120] sm:%s20]
      %174 = vst [vmem:[%s28 + $0x120] sm:%s20] %v173
      %v175 = vld [vmem:[%s27 + $0x128] sm:%s20]
      %176 = vst [vmem:[%s28 + $0x124] sm:%s20] %v175
      %v177 = vld [vmem:[%s27 + $0x124] sm:%s20]
      %178 = vst [vmem:[%s28 + $0x128] sm:%s20] %v177
      %v179 = vld [vmem:[%s27 + $0x12c] sm:%s20]
      %180 = vst [vmem:[%s28 + $0x12c] sm:%s20] %v179
      %v181 = vld [vmem:[%s27 + $0x130] sm:%s20]
      %182 = vst [vmem:[%s28 + $0x130] sm:%s20] %v181
      %v183 = vld [vmem:[%s27 + $0x138] sm:%s20]
      %184 = vst [vmem:[%s28 + $0x134] sm:%s20] %v183
      %v185 = vld [vmem:[%s27 + $0x134] sm:%s20]
      %186 = vst [vmem:[%s28 + $0x138] sm:%s20] %v185
      %v187 = vld [vmem:[%s27 + $0x13c] sm:%s20]
      %188 = vst [vmem:[%s28 + $0x13c] sm:%s20] %v187
      %v189 = vld [vmem:[%s27 + $0x140] sm:%s20]
      %190 = vst [vmem:[%s28 + $0x140] sm:%s20] %v189
      %v191 = vld [vmem:[%s27 + $0x148] sm:%s20]
      %192 = vst [vmem:[%s28 + $0x144] sm:%s20] %v191
      %v193 = vld [vmem:[%s27 + $0x144] sm:%s20]
      %194 = vst [vmem:[%s28 + $0x148] sm:%s20] %v193
      %v195 = vld [vmem:[%s27 + $0x14c] sm:%s20]
      %196 = vst [vmem:[%s28 + $0x14c] sm:%s20] %v195
      %v197 = vld [vmem:[%s27 + $0x150] sm:%s20]
      %198 = vst [vmem:[%s28 + $0x150] sm:%s20] %v197
      %v199 = vld [vmem:[%s27 + $0x158] sm:%s20]
      %200 = vst [vmem:[%s28 + $0x154] sm:%s20] %v199
      %v201 = vld [vmem:[%s27 + $0x154] sm:%s20]
      %202 = vst [vmem:[%s28 + $0x158] sm:%s20] %v201
      %v203 = vld [vmem:[%s27 + $0x15c] sm:%s20]
      %204 = vst [vmem:[%s28 + $0x15c] sm:%s20] %v203
      %v205 = vld [vmem:[%s27 + $0x160] sm:%s20]
      %206 = vst [vmem:[%s28 + $0x160] sm:%s20] %v205
      %v207 = vld [vmem:[%s27 + $0x168] sm:%s20]
      %208 = vst [vmem:[%s28 + $0x164] sm:%s20] %v207
      %v209 = vld [vmem:[%s27 + $0x164] sm:%s20]
      %210 = vst [vmem:[%s28 + $0x168] sm:%s20] %v209
      %v211 = vld [vmem:[%s27 + $0x16c] sm:%s20]
      %212 = vst [vmem:[%s28 + $0x16c] sm:%s20] %v211
      %v213 = vld [vmem:[%s27 + $0x170] sm:%s20]
      %214 = vst [vmem:[%s28 + $0x170] sm:%s20] %v213
      %v215 = vld [vmem:[%s27 + $0x178] sm:%s20]
      %216 = vst [vmem:[%s28 + $0x174] sm:%s20] %v215
      %v217 = vld [vmem:[%s27 + $0x174] sm:%s20]
      %218 = vst [vmem:[%s28 + $0x178] sm:%s20] %v217
      %v219 = vld [vmem:[%s27 + $0x17c] sm:%s20]
      %220 = vst [vmem:[%s28 + $0x17c] sm:%s20] %v219
      %v221 = vld [vmem:[%s27 + $0x180] sm:%s20]
      %222 = vst [vmem:[%s28 + $0x180] sm:%s20] %v221
      %v223 = vld [vmem:[%s27 + $0x188] sm:%s20]
      %224 = vst [vmem:[%s28 + $0x184] sm:%s20] %v223
      %v225 = vld [vmem:[%s27 + $0x184] sm:%s20]
      %226 = vst [vmem:[%s28 + $0x188] sm:%s20] %v225
      %v227 = vld [vmem:[%s27 + $0x18c] sm:%s20]
      %228 = vst [vmem:[%s28 + $0x18c] sm:%s20] %v227
      %v229 = vld [vmem:[%s27 + $0x190] sm:%s20]
      %230 = vst [vmem:[%s28 + $0x190] sm:%s20] %v229
      %v231 = vld [vmem:[%s27 + $0x198] sm:%s20]
      %232 = vst [vmem:[%s28 + $0x194] sm:%s20] %v231
      %v233 = vld [vmem:[%s27 + $0x194] sm:%s20]
      %234 = vst [vmem:[%s28 + $0x198] sm:%s20] %v233
      %v235 = vld [vmem:[%s27 + $0x19c] sm:%s20]
      %236 = vst [vmem:[%s28 + $0x19c] sm:%s20] %v235
      %v237 = vld [vmem:[%s27 + $0x1a0] sm:%s20]
      %238 = vst [vmem:[%s28 + $0x1a0] sm:%s20] %v237
      %v239 = vld [vmem:[%s27 + $0x1a8] sm:%s20]
      %240 = vst [vmem:[%s28 + $0x1a4] sm:%s20] %v239
      %v241 = vld [vmem:[%s27 + $0x1a4] sm:%s20]
      %242 = vst [vmem:[%s28 + $0x1a8] sm:%s20] %v241
      %v243 = vld [vmem:[%s27 + $0x1ac] sm:%s20]
      %244 = vst [vmem:[%s28 + $0x1ac] sm:%s20] %v243
      %v245 = vld [vmem:[%s27 + $0x1b0] sm:%s20]
      %246 = vst [vmem:[%s28 + $0x1b0] sm:%s20] %v245
      %v247 = vld [vmem:[%s27 + $0x1b8] sm:%s20]
      %248 = vst [vmem:[%s28 + $0x1b4] sm:%s20] %v247
      %v249 = vld [vmem:[%s27 + $0x1b4] sm:%s20]
      %250 = vst [vmem:[%s28 + $0x1b8] sm:%s20] %v249
      %v251 = vld [vmem:[%s27 + $0x1bc] sm:%s20]
      %252 = vst [vmem:[%s28 + $0x1bc] sm:%s20] %v251
      %v253 = vld [vmem:[%s27 + $0x1c0] sm:%s20]
      %254 = vst [vmem:[%s28 + $0x1c0] sm:%s20] %v253
      %v255 = vld [vmem:[%s27 + $0x1c8] sm:%s20]
      %256 = vst [vmem:[%s28 + $0x1c4] sm:%s20] %v255
      %v257 = vld [vmem:[%s27 + $0x1c4] sm:%s20]
      %258 = vst [vmem:[%s28 + $0x1c8] sm:%s20] %v257
      %v259 = vld [vmem:[%s27 + $0x1cc] sm:%s20]
      %260 = vst [vmem:[%s28 + $0x1cc] sm:%s20] %v259
      %v261 = vld [vmem:[%s27 + $0x1d0] sm:%s20]
      %262 = vst [vmem:[%s28 + $0x1d0] sm:%s20] %v261
      %v263 = vld [vmem:[%s27 + $0x1d8] sm:%s20]
      %264 = vst [vmem:[%s28 + $0x1d4] sm:%s20] %v263
      %v265 = vld [vmem:[%s27 + $0x1d4] sm:%s20]
      %266 = vst [vmem:[%s28 + $0x1d8] sm:%s20] %v265
      %v267 = vld [vmem:[%s27 + $0x1dc] sm:%s20]
      %268 = vst [vmem:[%s28 + $0x1dc] sm:%s20] %v267
      %v269 = vld [vmem:[%s27 + $0x1e0] sm:%s20]
      %270 = vst [vmem:[%s28 + $0x1e0] sm:%s20] %v269
      %v271 = vld [vmem:[%s27 + $0x1e8] sm:%s20]
      %272 = vst [vmem:[%s28 + $0x1e4] sm:%s20] %v271
      %v273 = vld [vmem:[%s27 + $0x1e4] sm:%s20]
      %274 = vst [vmem:[%s28 + $0x1e8] sm:%s20] %v273
      %v275 = vld [vmem:[%s27 + $0x1ec] sm:%s20]
      %276 = vst [vmem:[%s28 + $0x1ec] sm:%s20] %v275
      %v277 = vld [vmem:[%s27 + $0x1f0] sm:%s20]
      %278 = vst [vmem:[%s28 + $0x1f0] sm:%s20] %v277
      %v279 = vld [vmem:[%s27 + $0x1f8] sm:%s20]
      %280 = vst [vmem:[%s28 + $0x1f4] sm:%s20] %v279
      %v281 = vld [vmem:[%s27 + $0x1f4] sm:%s20]
      %282 = vst [vmem:[%s28 + $0x1f8] sm:%s20] %v281
      %v283 = vld [vmem:[%s27 + $0x1fc] sm:%s20]
      %284 = vst [vmem:[%s28 + $0x1fc] sm:%s20] %v283
      %v285 = vld [vmem:[%s27 + $0x200] sm:%s20]
      %286 = vst [vmem:[%s28 + $0x200] sm:%s20] %v285
      %v287 = vld [vmem:[%s27 + $0x208] sm:%s20]
      %288 = vst [vmem:[%s28 + $0x204] sm:%s20] %v287
      %v289 = vld [vmem:[%s27 + $0x204] sm:%s20]
      %290 = vst [vmem:[%s28 + $0x208] sm:%s20] %v289
      %v291 = vld [vmem:[%s27 + $0x20c] sm:%s20]
      %292 = vst [vmem:[%s28 + $0x20c] sm:%s20] %v291
      %v293 = vld [vmem:[%s27 + $0x210] sm:%s20]
      %294 = vst [vmem:[%s28 + $0x210] sm:%s20] %v293
      %v295 = vld [vmem:[%s27 + $0x218] sm:%s20]
      %296 = vst [vmem:[%s28 + $0x214] sm:%s20] %v295
      %v297 = vld [vmem:[%s27 + $0x214] sm:%s20]
      %298 = vst [vmem:[%s28 + $0x218] sm:%s20] %v297
      %v299 = vld [vmem:[%s27 + $0x21c] sm:%s20]
      %300 = vst [vmem:[%s28 + $0x21c] sm:%s20] %v299
      %v301 = vld [vmem:[%s27 + $0x220] sm:%s20]
      %302 = vst [vmem:[%s28 + $0x220] sm:%s20] %v301
      %v303 = vld [vmem:[%s27 + $0x228] sm:%s20]
      %304 = vst [vmem:[%s28 + $0x224] sm:%s20] %v303
      %v305 = vld [vmem:[%s27 + $0x224] sm:%s20]
      %306 = vst [vmem:[%s28 + $0x228] sm:%s20] %v305
      %v307 = vld [vmem:[%s27 + $0x22c] sm:%s20]
      %308 = vst [vmem:[%s28 + $0x22c] sm:%s20] %v307
      %v309 = vld [vmem:[%s27 + $0x230] sm:%s20]
      %310 = vst [vmem:[%s28 + $0x230] sm:%s20] %v309
      %v311 = vld [vmem:[%s27 + $0x238] sm:%s20]
      %312 = vst [vmem:[%s28 + $0x234] sm:%s20] %v311
      %v313 = vld [vmem:[%s27 + $0x234] sm:%s20]
      %314 = vst [vmem:[%s28 + $0x238] sm:%s20] %v313
      %v315 = vld [vmem:[%s27 + $0x23c] sm:%s20]
      %316 = vst [vmem:[%s28 + $0x23c] sm:%s20] %v315
      %v317 = vld [vmem:[%s27 + $0x240] sm:%s20]
      %318 = vst [vmem:[%s28 + $0x240] sm:%s20] %v317
      %v319 = vld [vmem:[%s27 + $0x248] sm:%s20]
      %320 = vst [vmem:[%s28 + $0x244] sm:%s20] %v319
      %v321 = vld [vmem:[%s27 + $0x244] sm:%s20]
      %322 = vst [vmem:[%s28 + $0x248] sm:%s20] %v321
      %v323 = vld [vmem:[%s27 + $0x24c] sm:%s20]
      %324 = vst [vmem:[%s28 + $0x24c] sm:%s20] %v323
      %v325 = vld [vmem:[%s27 + $0x250] sm:%s20]
      %326 = vst [vmem:[%s28 + $0x250] sm:%s20] %v325
      %v327 = vld [vmem:[%s27 + $0x258] sm:%s20]
      %328 = vst [vmem:[%s28 + $0x254] sm:%s20] %v327
      %v329 = vld [vmem:[%s27 + $0x254] sm:%s20]
      %330 = vst [vmem:[%s28 + $0x258] sm:%s20] %v329
      %v331 = vld [vmem:[%s27 + $0x25c] sm:%s20]
      %332 = vst [vmem:[%s28 + $0x25c] sm:%s20] %v331
      %v333 = vld [vmem:[%s27 + $0x260] sm:%s20]
      %334 = vst [vmem:[%s28 + $0x260] sm:%s20] %v333
      %v335 = vld [vmem:[%s27 + $0x268] sm:%s20]
      %336 = vst [vmem:[%s28 + $0x264] sm:%s20] %v335
      %v337 = vld [vmem:[%s27 + $0x264] sm:%s20]
      %338 = vst [vmem:[%s28 + $0x268] sm:%s20] %v337
      %v339 = vld [vmem:[%s27 + $0x26c] sm:%s20]
      %340 = vst [vmem:[%s28 + $0x26c] sm:%s20] %v339
      %v341 = vld [vmem:[%s27 + $0x270] sm:%s20]
      %342 = vst [vmem:[%s28 + $0x270] sm:%s20] %v341
      %v343 = vld [vmem:[%s27 + $0x278] sm:%s20]
      %344 = vst [vmem:[%s28 + $0x274] sm:%s20] %v343
      %v345 = vld [vmem:[%s27 + $0x274] sm:%s20]
      %346 = vst [vmem:[%s28 + $0x278] sm:%s20] %v345
      %v347 = vld [vmem:[%s27 + $0x27c] sm:%s20]
      %348 = vst [vmem:[%s28 + $0x27c] sm:%s20] %v347
      %v349 = vld [vmem:[%s27 + $0x280] sm:%s20]
      %350 = vst [vmem:[%s28 + $0x280] sm:%s20] %v349
      %v351 = vld [vmem:[%s27 + $0x288] sm:%s20]
      %352 = vst [vmem:[%s28 + $0x284] sm:%s20] %v351
      %v353 = vld [vmem:[%s27 + $0x284] sm:%s20]
      %354 = vst [vmem:[%s28 + $0x288] sm:%s20] %v353
      %v355 = vld [vmem:[%s27 + $0x28c] sm:%s20]
      %356 = vst [vmem:[%s28 + $0x28c] sm:%s20] %v355
      %v357 = vld [vmem:[%s27 + $0x290] sm:%s20]
      %358 = vst [vmem:[%s28 + $0x290] sm:%s20] %v357
      %v359 = vld [vmem:[%s27 + $0x298] sm:%s20]
      %360 = vst [vmem:[%s28 + $0x294] sm:%s20] %v359
      %v361 = vld [vmem:[%s27 + $0x294] sm:%s20]
      %362 = vst [vmem:[%s28 + $0x298] sm:%s20] %v361
      %v363 = vld [vmem:[%s27 + $0x29c] sm:%s20]
      %364 = vst [vmem:[%s28 + $0x29c] sm:%s20] %v363
      %v365 = vld [vmem:[%s27 + $0x2a0] sm:%s20]
      %366 = vst [vmem:[%s28 + $0x2a0] sm:%s20] %v365
      %v367 = vld [vmem:[%s27 + $0x2a8] sm:%s20]
      %368 = vst [vmem:[%s28 + $0x2a4] sm:%s20] %v367
      %v369 = vld [vmem:[%s27 + $0x2a4] sm:%s20]
      %370 = vst [vmem:[%s28 + $0x2a8] sm:%s20] %v369
      %v371 = vld [vmem:[%s27 + $0x2ac] sm:%s20]
      %372 = vst [vmem:[%s28 + $0x2ac] sm:%s20] %v371
      %v373 = vld [vmem:[%s27 + $0x2b0] sm:%s20]
      %374 = vst [vmem:[%s28 + $0x2b0] sm:%s20] %v373
      %v375 = vld [vmem:[%s27 + $0x2b8] sm:%s20]
      %376 = vst [vmem:[%s28 + $0x2b4] sm:%s20] %v375
      %v377 = vld [vmem:[%s27 + $0x2b4] sm:%s20]
      %378 = vst [vmem:[%s28 + $0x2b8] sm:%s20] %v377
      %v379 = vld [vmem:[%s27 + $0x2bc] sm:%s20]
      %380 = vst [vmem:[%s28 + $0x2bc] sm:%s20] %v379
      %v381 = vld [vmem:[%s27 + $0x2c0] sm:%s20]
      %382 = vst [vmem:[%s28 + $0x2c0] sm:%s20] %v381
      %v383 = vld [vmem:[%s27 + $0x2c8] sm:%s20]
      %384 = vst [vmem:[%s28 + $0x2c4] sm:%s20] %v383
      %v385 = vld [vmem:[%s27 + $0x2c4] sm:%s20]
      %386 = vst [vmem:[%s28 + $0x2c8] sm:%s20] %v385
      %v387 = vld [vmem:[%s27 + $0x2cc] sm:%s20]
      %388 = vst [vmem:[%s28 + $0x2cc] sm:%s20] %v387
      %v389 = vld [vmem:[%s27 + $0x2d0] sm:%s20]
      %390 = vst [vmem:[%s28 + $0x2d0] sm:%s20] %v389
      %v391 = vld [vmem:[%s27 + $0x2d8] sm:%s20]
      %392 = vst [vmem:[%s28 + $0x2d4] sm:%s20] %v391
      %v393 = vld [vmem:[%s27 + $0x2d4] sm:%s20]
      %394 = vst [vmem:[%s28 + $0x2d8] sm:%s20] %v393
      %v395 = vld [vmem:[%s27 + $0x2dc] sm:%s20]
      %396 = vst [vmem:[%s28 + $0x2dc] sm:%s20] %v395
      %v397 = vld [vmem:[%s27 + $0x2e0] sm:%s20]
      %398 = vst [vmem:[%s28 + $0x2e0] sm:%s20] %v397
      %v399 = vld [vmem:[%s27 + $0x2e8] sm:%s20]
      %400 = vst [vmem:[%s28 + $0x2e4] sm:%s20] %v399
      %v401 = vld [vmem:[%s27 + $0x2e4] sm:%s20]
      %402 = vst [vmem:[%s28 + $0x2e8] sm:%s20] %v401
      %v403 = vld [vmem:[%s27 + $0x2ec] sm:%s20]
      %404 = vst [vmem:[%s28 + $0x2ec] sm:%s20] %v403
      %v405 = vld [vmem:[%s27 + $0x2f0] sm:%s20]
      %406 = vst [vmem:[%s28 + $0x2f0] sm:%s20] %v405
      %v407 = vld [vmem:[%s27 + $0x2f8] sm:%s20]
      %408 = vst [vmem:[%s28 + $0x2f4] sm:%s20] %v407
      %v409 = vld [vmem:[%s27 + $0x2f4] sm:%s20]
      %410 = vst [vmem:[%s28 + $0x2f8] sm:%s20] %v409
      %v411 = vld [vmem:[%s27 + $0x2fc] sm:%s20]
      %412 = vst [vmem:[%s28 + $0x2fc] sm:%s20] %v411
    $region22: #{conv_block.1} parent=16 // loop_footer
      %s26 = sadd.s32 1, %s22
    $region23: #{conv_block.1} parent=16 // loop_footer_branch
      %21 = sbr.rel target = $region19
    $region24: #{conv_block.1} parent=16 // loop_exit
      _
  $region17: #{conv_block.1} parent=0 // pred_fallthru
    _
  // Predicated region
  $region43: #{conv_block.1} parent=0 // pred_check
    _
  $region44: #{conv_block.1} parent=0 // pred_check_branch
    %826 = sbr.rel (0) target = $region46
  $region45: #{conv_block.1} parent=0 // pred_region
    %827 = vsyncadd [#allocation3], 12288
  $region46: #{conv_block.1} parent=0 // pred_fallthru
    _
  %v828 = vlaneseq
  %v829 = vshrl.u32 %v828, 7
  %v830 = vadd.s32 %v829, 8
  %v831 = vadd.s32 %v829, 16
  %v832 = vadd.s32 %v829, 24
  %vm833 = vcmp.lt.s32.totalorder %v829, 0
  %v834 = vsub.s32 0, %v829
  %v835 = vsel %vm833, %v834, %v829
  %v836 = vshrl.u32 %v835, 4
  %v837 = vand.u32 %v835, 15
  %v838 = vsub.s32 0, %v837
  %v839 = vsel %vm833, %v838, %v837
  %vm840 = vcmp.lt.s32.totalorder %v830, 0
  %v841 = vsub.s32 0, %v830
  %v842 = vsel %vm840, %v841, %v830
  %v843 = vshrl.u32 %v842, 4
  %v844 = vand.u32 %v842, 15
  %v845 = vsub.s32 0, %v844
  %v846 = vsel %vm840, %v845, %v844
  %vm847 = vcmp.lt.s32.totalorder %v831, 0
  %v848 = vsub.s32 0, %v831
  %v849 = vsel %vm847, %v848, %v831
  %v850 = vshrl.u32 %v849, 4
  %v851 = vand.u32 %v849, 15
  %v852 = vsub.s32 0, %v851
  %v853 = vsel %vm847, %v852, %v851
  %vm854 = vcmp.lt.s32.totalorder %v832, 0
  %v855 = vsub.s32 0, %v832
  %v856 = vsel %vm854, %v855, %v832
  %v857 = vshrl.u32 %v856, 4
  %v858 = vand.u32 %v856, 15
  %v859 = vsub.s32 0, %v858
  %v860 = vsel %vm854, %v859, %v858
  %vm861 = vcmp.ne.s32.totalorder %v839, 0
  %vm862 = vcmp.ne.s32.totalorder %v846, 0
  %vm863 = vcmp.ne.s32.totalorder %v853, 0
  %vm864 = vcmp.ne.s32.totalorder %v860, 0
  %vm865 = vcmp.lt.s32.totalorder %v839, 0
  %vm866 = vcmp.lt.s32.totalorder %v846, 0
  %vm867 = vcmp.lt.s32.totalorder %v853, 0
  %vm868 = vcmp.lt.s32.totalorder %v860, 0
  %vm869 = vmand %vm865, %vm861
  %vm870 = vmand %vm866, %vm862
  %vm871 = vmand %vm867, %vm863
  %vm872 = vmand %vm868, %vm864
  %v873 = vadd.s32 %v839, 16
  %v874 = vadd.s32 %v846, 16
  %v875 = vadd.s32 %v853, 16
  %v876 = vadd.s32 %v860, 16
  %v877 = vsel %vm869, %v873, %v839
  %v878 = vsel %vm870, %v874, %v846
  %v879 = vsel %vm871, %v875, %v853
  %v880 = vsel %vm872, %v876, %v860
  %vm881 = vcmp.ge.s32.totalorder %v877, 1
  %vm882 = vcmp.ge.s32.totalorder %v878, 1
  %vm883 = vcmp.ge.s32.totalorder %v879, 1
  %vm884 = vcmp.ge.s32.totalorder %v880, 1
  %vm885 = vcmp.le.s32.totalorder %v877, 14
  %vm886 = vcmp.le.s32.totalorder %v878, 14
  %vm887 = vcmp.le.s32.totalorder %v879, 14
  %vm888 = vcmp.le.s32.totalorder %v880, 14
  %v889 = vld [vmem:[%s0] sm:$0xff]
  %v890 = vld [vmem:[%s0 + $0x8] sm:$0xff]
  %v891 = vld [vmem:[%s0 + $0x10] sm:$0xff]
  %v892 = vld [vmem:[%s0 + $0x18] sm:$0xff]
  %v893 = vld [vmem:[%s0 + $0x20] sm:$0xff]
  %v894 = vld [vmem:[%s0 + $0x28] sm:$0xff]
  %v895 = vld [vmem:[%s0 + $0x30] sm:$0xff]
  %v896 = vld [vmem:[%s0 + $0x38] sm:$0xff]
  %s897 = scalar_lea.vmem %s2, 768
  %s898 = scalar_lea.vmem [#allocation2], 768
  %s899 = scalar_lea.sflag [#allocation3], 1
  %p901 = scmp.lt.u32.totalorder 4, 8
  %p902 = pneg %p901
  // Predicated region
  $region47: #{conv_block.1} parent=0 // pred_check
    _
  $region48: #{conv_block.1} parent=0 // pred_check_branch
    %904 = sbr.rel (%p901) target = $region50
  $region49: #{conv_block.1} parent=0 // pred_region
    %s1301 = sand.u32 4, 7
    %p1302 = scmp.eq.s32.totalorder %s1301, 0
    %p1303 = pneg %p1302
    // Predicated region
    $region62: #{conv_block.1} parent=49 // pred_check
      _
    $region63: #{conv_block.1} parent=49 // pred_check_branch
      %1305 = sbr.rel (%p1302) target = $region65
    $region64: #{conv_block.1} parent=49 // pred_region
      %s1306 = sand.u32 4, 7
      %s1307 = ssub.s32 4, %s1306
      %s1308 = scalar_lea.vmem %s897, %s1307
      %s1309 = ssub.s32 4, %s1306
      %s1310 = scalar_lea.vmem %s898, %s1309 [#allocation2]
      loop: start=0, step=1, limit=1
      $region66: #{conv_block.1} parent=64 // loop_pre_header
        _
      $region67: #{conv_block.1} parent=64 // loop_header
        %s1312 = sphi 0, %s1316
        %p1313 = scmp.ge.s32.totalorder %s1312, 1
        %s1317 = sphi %s897, %s897
        %s1318 = sphi %s898, %s898
      $region68: #{conv_block.1} parent=64 // loop_header_branch
        %1315 = sbr.rel (%p1313) target = $region72
      $region69: #{conv_block.1} parent=64 // loop_body
        _
      $region70: #{conv_block.1} parent=64 // loop_footer
        %s1316 = sadd.s32 1, %s1312
      $region71: #{conv_block.1} parent=64 // loop_footer_branch
        %1311 = sbr.rel target = $region67
      $region72: #{conv_block.1} parent=64 // loop_exit
        _
      %s1319 = sshllo.u32 0, %s1306
      loop: start=0, step=1, limit=1
      $region73: #{conv_block.1} parent=64 // loop_pre_header
        _
      $region74: #{conv_block.1} parent=64 // loop_header
        %s1321 = sphi 0, %s1325
        %p1322 = scmp.ge.s32.totalorder %s1321, 1
        %s1326 = sphi %s1308, %s1308
        %s1327 = sphi %s1310, %s1310
      $region75: #{conv_block.1} parent=64 // loop_header_branch
        %1324 = sbr.rel (%p1322) target = $region79
      $region76: #{conv_block.1} parent=64 // loop_body
        %v1328 = vld [vmem:[%s1326] sm:%s1319]
        %1329 = vst [vmem:[%s1327] sm:%s1319] %v1328
        %v1330 = vld [vmem:[%s1326 + $0x8] sm:%s1319]
        %1331 = vst [vmem:[%s1327 + $0x4] sm:%s1319] %v1330
        %v1332 = vld [vmem:[%s1326 + $0x4] sm:%s1319]
        %1333 = vst [vmem:[%s1327 + $0x8] sm:%s1319] %v1332
        %v1334 = vld [vmem:[%s1326 + $0xc] sm:%s1319]
        %1335 = vst [vmem:[%s1327 + $0xc] sm:%s1319] %v1334
        %v1336 = vld [vmem:[%s1326 + $0x10] sm:%s1319]
        %1337 = vst [vmem:[%s1327 + $0x10] sm:%s1319] %v1336
        %v1338 = vld [vmem:[%s1326 + $0x18] sm:%s1319]
        %1339 = vst [vmem:[%s1327 + $0x14] sm:%s1319] %v1338
        %v1340 = vld [vmem:[%s1326 + $0x14] sm:%s1319]
        %1341 = vst [vmem:[%s1327 + $0x18] sm:%s1319] %v1340
        %v1342 = vld [vmem:[%s1326 + $0x1c] sm:%s1319]
        %1343 = vst [vmem:[%s1327 + $0x1c] sm:%s1319] %v1342
        %v1344 = vld [vmem:[%s1326 + $0x20] sm:%s1319]
        %1345 = vst [vmem:[%s1327 + $0x20] sm:%s1319] %v1344
        %v1346 = vld [vmem:[%s1326 + $0x28] sm:%s1319]
        %1347 = vst [vmem:[%s1327 + $0x24] sm:%s1319] %v1346
        %v1348 = vld [vmem:[%s1326 + $0x24] sm:%s1319]
        %1349 = vst [vmem:[%s1327 + $0x28] sm:%s1319] %v1348
        %v1350 = vld [vmem:[%s1326 + $0x2c] sm:%s1319]
        %1351 = vst [vmem:[%s1327 + $0x2c] sm:%s1319] %v1350
        %v1352 = vld [vmem:[%s1326 + $0x30] sm:%s1319]
        %1353 = vst [vmem:[%s1327 + $0x30] sm:%s1319] %v1352
        %v1354 = vld [vmem:[%s1326 + $0x38] sm:%s1319]
        %1355 = vst [vmem:[%s1327 + $0x34] sm:%s1319] %v1354
        %v1356 = vld [vmem:[%s1326 + $0x34] sm:%s1319]
        %1357 = vst [vmem:[%s1327 + $0x38] sm:%s1319] %v1356
        %v1358 = vld [vmem:[%s1326 + $0x3c] sm:%s1319]
        %1359 = vst [vmem:[%s1327 + $0x3c] sm:%s1319] %v1358
        %v1360 = vld [vmem:[%s1326 + $0x40] sm:%s1319]
        %1361 = vst [vmem:[%s1327 + $0x40] sm:%s1319] %v1360
        %v1362 = vld [vmem:[%s1326 + $0x48] sm:%s1319]
        %1363 = vst [vmem:[%s1327 + $0x44] sm:%s1319] %v1362
        %v1364 = vld [vmem:[%s1326 + $0x44] sm:%s1319]
        %1365 = vst [vmem:[%s1327 + $0x48] sm:%s1319] %v1364
        %v1366 = vld [vmem:[%s1326 + $0x4c] sm:%s1319]
        %1367 = vst [vmem:[%s1327 + $0x4c] sm:%s1319] %v1366
        %v1368 = vld [vmem:[%s1326 + $0x50] sm:%s1319]
        %1369 = vst [vmem:[%s1327 + $0x50] sm:%s1319] %v1368
        %v1370 = vld [vmem:[%s1326 + $0x58] sm:%s1319]
        %1371 = vst [vmem:[%s1327 + $0x54] sm:%s1319] %v1370
        %v1372 = vld [vmem:[%s1326 + $0x54] sm:%s1319]
        %1373 = vst [vmem:[%s1327 + $0x58] sm:%s1319] %v1372
        %v1374 = vld [vmem:[%s1326 + $0x5c] sm:%s1319]
        %1375 = vst [vmem:[%s1327 + $0x5c] sm:%s1319] %v1374
        %v1376 = vld [vmem:[%s1326 + $0x60] sm:%s1319]
        %1377 = vst [vmem:[%s1327 + $0x60] sm:%s1319] %v1376
        %v1378 = vld [vmem:[%s1326 + $0x68] sm:%s1319]
        %1379 = vst [vmem:[%s1327 + $0x64] sm:%s1319] %v1378
        %v1380 = vld [vmem:[%s1326 + $0x64] sm:%s1319]
        %1381 = vst [vmem:[%s1327 + $0x68] sm:%s1319] %v1380
        %v1382 = vld [vmem:[%s1326 + $0x6c] sm:%s1319]
        %1383 = vst [vmem:[%s1327 + $0x6c] sm:%s1319] %v1382
        %v1384 = vld [vmem:[%s1326 + $0x70] sm:%s1319]
        %1385 = vst [vmem:[%s1327 + $0x70] sm:%s1319] %v1384
        %v1386 = vld [vmem:[%s1326 + $0x78] sm:%s1319]
        %1387 = vst [vmem:[%s1327 + $0x74] sm:%s1319] %v1386
        %v1388 = vld [vmem:[%s1326 + $0x74] sm:%s1319]
        %1389 = vst [vmem:[%s1327 + $0x78] sm:%s1319] %v1388
        %v1390 = vld [vmem:[%s1326 + $0x7c] sm:%s1319]
        %1391 = vst [vmem:[%s1327 + $0x7c] sm:%s1319] %v1390
        %v1392 = vld [vmem:[%s1326 + $0x80] sm:%s1319]
        %1393 = vst [vmem:[%s1327 + $0x80] sm:%s1319] %v1392
        %v1394 = vld [vmem:[%s1326 + $0x88] sm:%s1319]
        %1395 = vst [vmem:[%s1327 + $0x84] sm:%s1319] %v1394
        %v1396 = vld [vmem:[%s1326 + $0x84] sm:%s1319]
        %1397 = vst [vmem:[%s1327 + $0x88] sm:%s1319] %v1396
        %v1398 = vld [vmem:[%s1326 + $0x8c] sm:%s1319]
        %1399 = vst [vmem:[%s1327 + $0x8c] sm:%s1319] %v1398
        %v1400 = vld [vmem:[%s1326 + $0x90] sm:%s1319]
        %1401 = vst [vmem:[%s1327 + $0x90] sm:%s1319] %v1400
        %v1402 = vld [vmem:[%s1326 + $0x98] sm:%s1319]
        %1403 = vst [vmem:[%s1327 + $0x94] sm:%s1319] %v1402
        %v1404 = vld [vmem:[%s1326 + $0x94] sm:%s1319]
        %1405 = vst [vmem:[%s1327 + $0x98] sm:%s1319] %v1404
        %v1406 = vld [vmem:[%s1326 + $0x9c] sm:%s1319]
        %1407 = vst [vmem:[%s1327 + $0x9c] sm:%s1319] %v1406
        %v1408 = vld [vmem:[%s1326 + $0xa0] sm:%s1319]
        %1409 = vst [vmem:[%s1327 + $0xa0] sm:%s1319] %v1408
        %v1410 = vld [vmem:[%s1326 + $0xa8] sm:%s1319]
        %1411 = vst [vmem:[%s1327 + $0xa4] sm:%s1319] %v1410
        %v1412 = vld [vmem:[%s1326 + $0xa4] sm:%s1319]
        %1413 = vst [vmem:[%s1327 + $0xa8] sm:%s1319] %v1412
        %v1414 = vld [vmem:[%s1326 + $0xac] sm:%s1319]
        %1415 = vst [vmem:[%s1327 + $0xac] sm:%s1319] %v1414
        %v1416 = vld [vmem:[%s1326 + $0xb0] sm:%s1319]
        %1417 = vst [vmem:[%s1327 + $0xb0] sm:%s1319] %v1416
        %v1418 = vld [vmem:[%s1326 + $0xb8] sm:%s1319]
        %1419 = vst [vmem:[%s1327 + $0xb4] sm:%s1319] %v1418
        %v1420 = vld [vmem:[%s1326 + $0xb4] sm:%s1319]
        %1421 = vst [vmem:[%s1327 + $0xb8] sm:%s1319] %v1420
        %v1422 = vld [vmem:[%s1326 + $0xbc] sm:%s1319]
        %1423 = vst [vmem:[%s1327 + $0xbc] sm:%s1319] %v1422
        %v1424 = vld [vmem:[%s1326 + $0xc0] sm:%s1319]
        %1425 = vst [vmem:[%s1327 + $0xc0] sm:%s1319] %v1424
        %v1426 = vld [vmem:[%s1326 + $0xc8] sm:%s1319]
        %1427 = vst [vmem:[%s1327 + $0xc4] sm:%s1319] %v1426
        %v1428 = vld [vmem:[%s1326 + $0xc4] sm:%s1319]
        %1429 = vst [vmem:[%s1327 + $0xc8] sm:%s1319] %v1428
        %v1430 = vld [vmem:[%s1326 + $0xcc] sm:%s1319]
        %1431 = vst [vmem:[%s1327 + $0xcc] sm:%s1319] %v1430
        %v1432 = vld [vmem:[%s1326 + $0xd0] sm:%s1319]
        %1433 = vst [vmem:[%s1327 + $0xd0] sm:%s1319] %v1432
        %v1434 = vld [vmem:[%s1326 + $0xd8] sm:%s1319]
        %1435 = vst [vmem:[%s1327 + $0xd4] sm:%s1319] %v1434
        %v1436 = vld [vmem:[%s1326 + $0xd4] sm:%s1319]
        %1437 = vst [vmem:[%s1327 + $0xd8] sm:%s1319] %v1436
        %v1438 = vld [vmem:[%s1326 + $0xdc] sm:%s1319]
        %1439 = vst [vmem:[%s1327 + $0xdc] sm:%s1319] %v1438
        %v1440 = vld [vmem:[%s1326 + $0xe0] sm:%s1319]
        %1441 = vst [vmem:[%s1327 + $0xe0] sm:%s1319] %v1440
        %v1442 = vld [vmem:[%s1326 + $0xe8] sm:%s1319]
        %1443 = vst [vmem:[%s1327 + $0xe4] sm:%s1319] %v1442
        %v1444 = vld [vmem:[%s1326 + $0xe4] sm:%s1319]
        %1445 = vst [vmem:[%s1327 + $0xe8] sm:%s1319] %v1444
        %v1446 = vld [vmem:[%s1326 + $0xec] sm:%s1319]
        %1447 = vst [vmem:[%s1327 + $0xec] sm:%s1319] %v1446
        %v1448 = vld [vmem:[%s1326 + $0xf0] sm:%s1319]
        %1449 = vst [vmem:[%s1327 + $0xf0] sm:%s1319] %v1448
        %v1450 = vld [vmem:[%s1326 + $0xf8] sm:%s1319]
        %1451 = vst [vmem:[%s1327 + $0xf4] sm:%s1319] %v1450
        %v1452 = vld [vmem:[%s1326 + $0xf4] sm:%s1319]
        %1453 = vst [vmem:[%s1327 + $0xf8] sm:%s1319] %v1452
        %v1454 = vld [vmem:[%s1326 + $0xfc] sm:%s1319]
        %1455 = vst [vmem:[%s1327 + $0xfc] sm:%s1319] %v1454
        %v1456 = vld [vmem:[%s1326 + $0x100] sm:%s1319]
        %1457 = vst [vmem:[%s1327 + $0x100] sm:%s1319] %v1456
        %v1458 = vld [vmem:[%s1326 + $0x108] sm:%s1319]
        %1459 = vst [vmem:[%s1327 + $0x104] sm:%s1319] %v1458
        %v1460 = vld [vmem:[%s1326 + $0x104] sm:%s1319]
        %1461 = vst [vmem:[%s1327 + $0x108] sm:%s1319] %v1460
        %v1462 = vld [vmem:[%s1326 + $0x10c] sm:%s1319]
        %1463 = vst [vmem:[%s1327 + $0x10c] sm:%s1319] %v1462
        %v1464 = vld [vmem:[%s1326 + $0x110] sm:%s1319]
        %1465 = vst [vmem:[%s1327 + $0x110] sm:%s1319] %v1464
        %v1466 = vld [vmem:[%s1326 + $0x118] sm:%s1319]
        %1467 = vst [vmem:[%s1327 + $0x114] sm:%s1319] %v1466
        %v1468 = vld [vmem:[%s1326 + $0x114] sm:%s1319]
        %1469 = vst [vmem:[%s1327 + $0x118] sm:%s1319] %v1468
        %v1470 = vld [vmem:[%s1326 + $0x11c] sm:%s1319]
        %1471 = vst [vmem:[%s1327 + $0x11c] sm:%s1319] %v1470
        %v1472 = vld [vmem:[%s1326 + $0x120] sm:%s1319]
        %1473 = vst [vmem:[%s1327 + $0x120] sm:%s1319] %v1472
        %v1474 = vld [vmem:[%s1326 + $0x128] sm:%s1319]
        %1475 = vst [vmem:[%s1327 + $0x124] sm:%s1319] %v1474
        %v1476 = vld [vmem:[%s1326 + $0x124] sm:%s1319]
        %1477 = vst [vmem:[%s1327 + $0x128] sm:%s1319] %v1476
        %v1478 = vld [vmem:[%s1326 + $0x12c] sm:%s1319]
        %1479 = vst [vmem:[%s1327 + $0x12c] sm:%s1319] %v1478
        %v1480 = vld [vmem:[%s1326 + $0x130] sm:%s1319]
        %1481 = vst [vmem:[%s1327 + $0x130] sm:%s1319] %v1480
        %v1482 = vld [vmem:[%s1326 + $0x138] sm:%s1319]
        %1483 = vst [vmem:[%s1327 + $0x134] sm:%s1319] %v1482
        %v1484 = vld [vmem:[%s1326 + $0x134] sm:%s1319]
        %1485 = vst [vmem:[%s1327 + $0x138] sm:%s1319] %v1484
        %v1486 = vld [vmem:[%s1326 + $0x13c] sm:%s1319]
        %1487 = vst [vmem:[%s1327 + $0x13c] sm:%s1319] %v1486
        %v1488 = vld [vmem:[%s1326 + $0x140] sm:%s1319]
        %1489 = vst [vmem:[%s1327 + $0x140] sm:%s1319] %v1488
        %v1490 = vld [vmem:[%s1326 + $0x148] sm:%s1319]
        %1491 = vst [vmem:[%s1327 + $0x144] sm:%s1319] %v1490
        %v1492 = vld [vmem:[%s1326 + $0x144] sm:%s1319]
        %1493 = vst [vmem:[%s1327 + $0x148] sm:%s1319] %v1492
        %v1494 = vld [vmem:[%s1326 + $0x14c] sm:%s1319]
        %1495 = vst [vmem:[%s1327 + $0x14c] sm:%s1319] %v1494
        %v1496 = vld [vmem:[%s1326 + $0x150] sm:%s1319]
        %1497 = vst [vmem:[%s1327 + $0x150] sm:%s1319] %v1496
        %v1498 = vld [vmem:[%s1326 + $0x158] sm:%s1319]
        %1499 = vst [vmem:[%s1327 + $0x154] sm:%s1319] %v1498
        %v1500 = vld [vmem:[%s1326 + $0x154] sm:%s1319]
        %1501 = vst [vmem:[%s1327 + $0x158] sm:%s1319] %v1500
        %v1502 = vld [vmem:[%s1326 + $0x15c] sm:%s1319]
        %1503 = vst [vmem:[%s1327 + $0x15c] sm:%s1319] %v1502
        %v1504 = vld [vmem:[%s1326 + $0x160] sm:%s1319]
        %1505 = vst [vmem:[%s1327 + $0x160] sm:%s1319] %v1504
        %v1506 = vld [vmem:[%s1326 + $0x168] sm:%s1319]
        %1507 = vst [vmem:[%s1327 + $0x164] sm:%s1319] %v1506
        %v1508 = vld [vmem:[%s1326 + $0x164] sm:%s1319]
        %1509 = vst [vmem:[%s1327 + $0x168] sm:%s1319] %v1508
        %v1510 = vld [vmem:[%s1326 + $0x16c] sm:%s1319]
        %1511 = vst [vmem:[%s1327 + $0x16c] sm:%s1319] %v1510
        %v1512 = vld [vmem:[%s1326 + $0x170] sm:%s1319]
        %1513 = vst [vmem:[%s1327 + $0x170] sm:%s1319] %v1512
        %v1514 = vld [vmem:[%s1326 + $0x178] sm:%s1319]
        %1515 = vst [vmem:[%s1327 + $0x174] sm:%s1319] %v1514
        %v1516 = vld [vmem:[%s1326 + $0x174] sm:%s1319]
        %1517 = vst [vmem:[%s1327 + $0x178] sm:%s1319] %v1516
        %v1518 = vld [vmem:[%s1326 + $0x17c] sm:%s1319]
        %1519 = vst [vmem:[%s1327 + $0x17c] sm:%s1319] %v1518
        %v1520 = vld [vmem:[%s1326 + $0x180] sm:%s1319]
        %1521 = vst [vmem:[%s1327 + $0x180] sm:%s1319] %v1520
        %v1522 = vld [vmem:[%s1326 + $0x188] sm:%s1319]
        %1523 = vst [vmem:[%s1327 + $0x184] sm:%s1319] %v1522
        %v1524 = vld [vmem:[%s1326 + $0x184] sm:%s1319]
        %1525 = vst [vmem:[%s1327 + $0x188] sm:%s1319] %v1524
        %v1526 = vld [vmem:[%s1326 + $0x18c] sm:%s1319]
        %1527 = vst [vmem:[%s1327 + $0x18c] sm:%s1319] %v1526
        %v1528 = vld [vmem:[%s1326 + $0x190] sm:%s1319]
        %1529 = vst [vmem:[%s1327 + $0x190] sm:%s1319] %v1528
        %v1530 = vld [vmem:[%s1326 + $0x198] sm:%s1319]
        %1531 = vst [vmem:[%s1327 + $0x194] sm:%s1319] %v1530
        %v1532 = vld [vmem:[%s1326 + $0x194] sm:%s1319]
        %1533 = vst [vmem:[%s1327 + $0x198] sm:%s1319] %v1532
        %v1534 = vld [vmem:[%s1326 + $0x19c] sm:%s1319]
        %1535 = vst [vmem:[%s1327 + $0x19c] sm:%s1319] %v1534
        %v1536 = vld [vmem:[%s1326 + $0x1a0] sm:%s1319]
        %1537 = vst [vmem:[%s1327 + $0x1a0] sm:%s1319] %v1536
        %v1538 = vld [vmem:[%s1326 + $0x1a8] sm:%s1319]
        %1539 = vst [vmem:[%s1327 + $0x1a4] sm:%s1319] %v1538
        %v1540 = vld [vmem:[%s1326 + $0x1a4] sm:%s1319]
        %1541 = vst [vmem:[%s1327 + $0x1a8] sm:%s1319] %v1540
        %v1542 = vld [vmem:[%s1326 + $0x1ac] sm:%s1319]
        %1543 = vst [vmem:[%s1327 + $0x1ac] sm:%s1319] %v1542
        %v1544 = vld [vmem:[%s1326 + $0x1b0] sm:%s1319]
        %1545 = vst [vmem:[%s1327 + $0x1b0] sm:%s1319] %v1544
        %v1546 = vld [vmem:[%s1326 + $0x1b8] sm:%s1319]
        %1547 = vst [vmem:[%s1327 + $0x1b4] sm:%s1319] %v1546
        %v1548 = vld [vmem:[%s1326 + $0x1b4] sm:%s1319]
        %1549 = vst [vmem:[%s1327 + $0x1b8] sm:%s1319] %v1548
        %v1550 = vld [vmem:[%s1326 + $0x1bc] sm:%s1319]
        %1551 = vst [vmem:[%s1327 + $0x1bc] sm:%s1319] %v1550
        %v1552 = vld [vmem:[%s1326 + $0x1c0] sm:%s1319]
        %1553 = vst [vmem:[%s1327 + $0x1c0] sm:%s1319] %v1552
        %v1554 = vld [vmem:[%s1326 + $0x1c8] sm:%s1319]
        %1555 = vst [vmem:[%s1327 + $0x1c4] sm:%s1319] %v1554
        %v1556 = vld [vmem:[%s1326 + $0x1c4] sm:%s1319]
        %1557 = vst [vmem:[%s1327 + $0x1c8] sm:%s1319] %v1556
        %v1558 = vld [vmem:[%s1326 + $0x1cc] sm:%s1319]
        %1559 = vst [vmem:[%s1327 + $0x1cc] sm:%s1319] %v1558
        %v1560 = vld [vmem:[%s1326 + $0x1d0] sm:%s1319]
        %1561 = vst [vmem:[%s1327 + $0x1d0] sm:%s1319] %v1560
        %v1562 = vld [vmem:[%s1326 + $0x1d8] sm:%s1319]
        %1563 = vst [vmem:[%s1327 + $0x1d4] sm:%s1319] %v1562
        %v1564 = vld [vmem:[%s1326 + $0x1d4] sm:%s1319]
        %1565 = vst [vmem:[%s1327 + $0x1d8] sm:%s1319] %v1564
        %v1566 = vld [vmem:[%s1326 + $0x1dc] sm:%s1319]
        %1567 = vst [vmem:[%s1327 + $0x1dc] sm:%s1319] %v1566
        %v1568 = vld [vmem:[%s1326 + $0x1e0] sm:%s1319]
        %1569 = vst [vmem:[%s1327 + $0x1e0] sm:%s1319] %v1568
        %v1570 = vld [vmem:[%s1326 + $0x1e8] sm:%s1319]
        %1571 = vst [vmem:[%s1327 + $0x1e4] sm:%s1319] %v1570
        %v1572 = vld [vmem:[%s1326 + $0x1e4] sm:%s1319]
        %1573 = vst [vmem:[%s1327 + $0x1e8] sm:%s1319] %v1572
        %v1574 = vld [vmem:[%s1326 + $0x1ec] sm:%s1319]
        %1575 = vst [vmem:[%s1327 + $0x1ec] sm:%s1319] %v1574
        %v1576 = vld [vmem:[%s1326 + $0x1f0] sm:%s1319]
        %1577 = vst [vmem:[%s1327 + $0x1f0] sm:%s1319] %v1576
        %v1578 = vld [vmem:[%s1326 + $0x1f8] sm:%s1319]
        %1579 = vst [vmem:[%s1327 + $0x1f4] sm:%s1319] %v1578
        %v1580 = vld [vmem:[%s1326 + $0x1f4] sm:%s1319]
        %1581 = vst [vmem:[%s1327 + $0x1f8] sm:%s1319] %v1580
        %v1582 = vld [vmem:[%s1326 + $0x1fc] sm:%s1319]
        %1583 = vst [vmem:[%s1327 + $0x1fc] sm:%s1319] %v1582
        %v1584 = vld [vmem:[%s1326 + $0x200] sm:%s1319]
        %1585 = vst [vmem:[%s1327 + $0x200] sm:%s1319] %v1584
        %v1586 = vld [vmem:[%s1326 + $0x208] sm:%s1319]
        %1587 = vst [vmem:[%s1327 + $0x204] sm:%s1319] %v1586
        %v1588 = vld [vmem:[%s1326 + $0x204] sm:%s1319]
        %1589 = vst [vmem:[%s1327 + $0x208] sm:%s1319] %v1588
        %v1590 = vld [vmem:[%s1326 + $0x20c] sm:%s1319]
        %1591 = vst [vmem:[%s1327 + $0x20c] sm:%s1319] %v1590
        %v1592 = vld [vmem:[%s1326 + $0x210] sm:%s1319]
        %1593 = vst [vmem:[%s1327 + $0x210] sm:%s1319] %v1592
        %v1594 = vld [vmem:[%s1326 + $0x218] sm:%s1319]
        %1595 = vst [vmem:[%s1327 + $0x214] sm:%s1319] %v1594
        %v1596 = vld [vmem:[%s1326 + $0x214] sm:%s1319]
        %1597 = vst [vmem:[%s1327 + $0x218] sm:%s1319] %v1596
        %v1598 = vld [vmem:[%s1326 + $0x21c] sm:%s1319]
        %1599 = vst [vmem:[%s1327 + $0x21c] sm:%s1319] %v1598
        %v1600 = vld [vmem:[%s1326 + $0x220] sm:%s1319]
        %1601 = vst [vmem:[%s1327 + $0x220] sm:%s1319] %v1600
        %v1602 = vld [vmem:[%s1326 + $0x228] sm:%s1319]
        %1603 = vst [vmem:[%s1327 + $0x224] sm:%s1319] %v1602
        %v1604 = vld [vmem:[%s1326 + $0x224] sm:%s1319]
        %1605 = vst [vmem:[%s1327 + $0x228] sm:%s1319] %v1604
        %v1606 = vld [vmem:[%s1326 + $0x22c] sm:%s1319]
        %1607 = vst [vmem:[%s1327 + $0x22c] sm:%s1319] %v1606
        %v1608 = vld [vmem:[%s1326 + $0x230] sm:%s1319]
        %1609 = vst [vmem:[%s1327 + $0x230] sm:%s1319] %v1608
        %v1610 = vld [vmem:[%s1326 + $0x238] sm:%s1319]
        %1611 = vst [vmem:[%s1327 + $0x234] sm:%s1319] %v1610
        %v1612 = vld [vmem:[%s1326 + $0x234] sm:%s1319]
        %1613 = vst [vmem:[%s1327 + $0x238] sm:%s1319] %v1612
        %v1614 = vld [vmem:[%s1326 + $0x23c] sm:%s1319]
        %1615 = vst [vmem:[%s1327 + $0x23c] sm:%s1319] %v1614
        %v1616 = vld [vmem:[%s1326 + $0x240] sm:%s1319]
        %1617 = vst [vmem:[%s1327 + $0x240] sm:%s1319] %v1616
        %v1618 = vld [vmem:[%s1326 + $0x248] sm:%s1319]
        %1619 = vst [vmem:[%s1327 + $0x244] sm:%s1319] %v1618
        %v1620 = vld [vmem:[%s1326 + $0x244] sm:%s1319]
        %1621 = vst [vmem:[%s1327 + $0x248] sm:%s1319] %v1620
        %v1622 = vld [vmem:[%s1326 + $0x24c] sm:%s1319]
        %1623 = vst [vmem:[%s1327 + $0x24c] sm:%s1319] %v1622
        %v1624 = vld [vmem:[%s1326 + $0x250] sm:%s1319]
        %1625 = vst [vmem:[%s1327 + $0x250] sm:%s1319] %v1624
        %v1626 = vld [vmem:[%s1326 + $0x258] sm:%s1319]
        %1627 = vst [vmem:[%s1327 + $0x254] sm:%s1319] %v1626
        %v1628 = vld [vmem:[%s1326 + $0x254] sm:%s1319]
        %1629 = vst [vmem:[%s1327 + $0x258] sm:%s1319] %v1628
        %v1630 = vld [vmem:[%s1326 + $0x25c] sm:%s1319]
        %1631 = vst [vmem:[%s1327 + $0x25c] sm:%s1319] %v1630
        %v1632 = vld [vmem:[%s1326 + $0x260] sm:%s1319]
        %1633 = vst [vmem:[%s1327 + $0x260] sm:%s1319] %v1632
        %v1634 = vld [vmem:[%s1326 + $0x268] sm:%s1319]
        %1635 = vst [vmem:[%s1327 + $0x264] sm:%s1319] %v1634
        %v1636 = vld [vmem:[%s1326 + $0x264] sm:%s1319]
        %1637 = vst [vmem:[%s1327 + $0x268] sm:%s1319] %v1636
        %v1638 = vld [vmem:[%s1326 + $0x26c] sm:%s1319]
        %1639 = vst [vmem:[%s1327 + $0x26c] sm:%s1319] %v1638
        %v1640 = vld [vmem:[%s1326 + $0x270] sm:%s1319]
        %1641 = vst [vmem:[%s1327 + $0x270] sm:%s1319] %v1640
        %v1642 = vld [vmem:[%s1326 + $0x278] sm:%s1319]
        %1643 = vst [vmem:[%s1327 + $0x274] sm:%s1319] %v1642
        %v1644 = vld [vmem:[%s1326 + $0x274] sm:%s1319]
        %1645 = vst [vmem:[%s1327 + $0x278] sm:%s1319] %v1644
        %v1646 = vld [vmem:[%s1326 + $0x27c] sm:%s1319]
        %1647 = vst [vmem:[%s1327 + $0x27c] sm:%s1319] %v1646
        %v1648 = vld [vmem:[%s1326 + $0x280] sm:%s1319]
        %1649 = vst [vmem:[%s1327 + $0x280] sm:%s1319] %v1648
        %v1650 = vld [vmem:[%s1326 + $0x288] sm:%s1319]
        %1651 = vst [vmem:[%s1327 + $0x284] sm:%s1319] %v1650
        %v1652 = vld [vmem:[%s1326 + $0x284] sm:%s1319]
        %1653 = vst [vmem:[%s1327 + $0x288] sm:%s1319] %v1652
        %v1654 = vld [vmem:[%s1326 + $0x28c] sm:%s1319]
        %1655 = vst [vmem:[%s1327 + $0x28c] sm:%s1319] %v1654
        %v1656 = vld [vmem:[%s1326 + $0x290] sm:%s1319]
        %1657 = vst [vmem:[%s1327 + $0x290] sm:%s1319] %v1656
        %v1658 = vld [vmem:[%s1326 + $0x298] sm:%s1319]
        %1659 = vst [vmem:[%s1327 + $0x294] sm:%s1319] %v1658
        %v1660 = vld [vmem:[%s1326 + $0x294] sm:%s1319]
        %1661 = vst [vmem:[%s1327 + $0x298] sm:%s1319] %v1660
        %v1662 = vld [vmem:[%s1326 + $0x29c] sm:%s1319]
        %1663 = vst [vmem:[%s1327 + $0x29c] sm:%s1319] %v1662
        %v1664 = vld [vmem:[%s1326 + $0x2a0] sm:%s1319]
        %1665 = vst [vmem:[%s1327 + $0x2a0] sm:%s1319] %v1664
        %v1666 = vld [vmem:[%s1326 + $0x2a8] sm:%s1319]
        %1667 = vst [vmem:[%s1327 + $0x2a4] sm:%s1319] %v1666
        %v1668 = vld [vmem:[%s1326 + $0x2a4] sm:%s1319]
        %1669 = vst [vmem:[%s1327 + $0x2a8] sm:%s1319] %v1668
        %v1670 = vld [vmem:[%s1326 + $0x2ac] sm:%s1319]
        %1671 = vst [vmem:[%s1327 + $0x2ac] sm:%s1319] %v1670
        %v1672 = vld [vmem:[%s1326 + $0x2b0] sm:%s1319]
        %1673 = vst [vmem:[%s1327 + $0x2b0] sm:%s1319] %v1672
        %v1674 = vld [vmem:[%s1326 + $0x2b8] sm:%s1319]
        %1675 = vst [vmem:[%s1327 + $0x2b4] sm:%s1319] %v1674
        %v1676 = vld [vmem:[%s1326 + $0x2b4] sm:%s1319]
        %1677 = vst [vmem:[%s1327 + $0x2b8] sm:%s1319] %v1676
        %v1678 = vld [vmem:[%s1326 + $0x2bc] sm:%s1319]
        %1679 = vst [vmem:[%s1327 + $0x2bc] sm:%s1319] %v1678
        %v1680 = vld [vmem:[%s1326 + $0x2c0] sm:%s1319]
        %1681 = vst [vmem:[%s1327 + $0x2c0] sm:%s1319] %v1680
        %v1682 = vld [vmem:[%s1326 + $0x2c8] sm:%s1319]
        %1683 = vst [vmem:[%s1327 + $0x2c4] sm:%s1319] %v1682
        %v1684 = vld [vmem:[%s1326 + $0x2c4] sm:%s1319]
        %1685 = vst [vmem:[%s1327 + $0x2c8] sm:%s1319] %v1684
        %v1686 = vld [vmem:[%s1326 + $0x2cc] sm:%s1319]
        %1687 = vst [vmem:[%s1327 + $0x2cc] sm:%s1319] %v1686
        %v1688 = vld [vmem:[%s1326 + $0x2d0] sm:%s1319]
        %1689 = vst [vmem:[%s1327 + $0x2d0] sm:%s1319] %v1688
        %v1690 = vld [vmem:[%s1326 + $0x2d8] sm:%s1319]
        %1691 = vst [vmem:[%s1327 + $0x2d4] sm:%s1319] %v1690
        %v1692 = vld [vmem:[%s1326 + $0x2d4] sm:%s1319]
        %1693 = vst [vmem:[%s1327 + $0x2d8] sm:%s1319] %v1692
        %v1694 = vld [vmem:[%s1326 + $0x2dc] sm:%s1319]
        %1695 = vst [vmem:[%s1327 + $0x2dc] sm:%s1319] %v1694
        %v1696 = vld [vmem:[%s1326 + $0x2e0] sm:%s1319]
        %1697 = vst [vmem:[%s1327 + $0x2e0] sm:%s1319] %v1696
        %v1698 = vld [vmem:[%s1326 + $0x2e8] sm:%s1319]
        %1699 = vst [vmem:[%s1327 + $0x2e4] sm:%s1319] %v1698
        %v1700 = vld [vmem:[%s1326 + $0x2e4] sm:%s1319]
        %1701 = vst [vmem:[%s1327 + $0x2e8] sm:%s1319] %v1700
        %v1702 = vld [vmem:[%s1326 + $0x2ec] sm:%s1319]
        %1703 = vst [vmem:[%s1327 + $0x2ec] sm:%s1319] %v1702
        %v1704 = vld [vmem:[%s1326 + $0x2f0] sm:%s1319]
        %1705 = vst [vmem:[%s1327 + $0x2f0] sm:%s1319] %v1704
        %v1706 = vld [vmem:[%s1326 + $0x2f8] sm:%s1319]
        %1707 = vst [vmem:[%s1327 + $0x2f4] sm:%s1319] %v1706
        %v1708 = vld [vmem:[%s1326 + $0x2f4] sm:%s1319]
        %1709 = vst [vmem:[%s1327 + $0x2f8] sm:%s1319] %v1708
        %v1710 = vld [vmem:[%s1326 + $0x2fc] sm:%s1319]
        %1711 = vst [vmem:[%s1327 + $0x2fc] sm:%s1319] %v1710
      $region77: #{conv_block.1} parent=64 // loop_footer
        %s1325 = sadd.s32 1, %s1321
      $region78: #{conv_block.1} parent=64 // loop_footer_branch
        %1320 = sbr.rel target = $region74
      $region79: #{conv_block.1} parent=64 // loop_exit
        _
    $region65: #{conv_block.1} parent=49 // pred_fallthru
      _
  $region50: #{conv_block.1} parent=0 // pred_fallthru
    _
  // Predicated region
  $region51: #{conv_block.1} parent=0 // pred_check
    %p905 = pneg %p901
  $region52: #{conv_block.1} parent=0 // pred_check_branch
    %907 = sbr.rel (%p905) target = $region54
  $region53: #{conv_block.1} parent=0 // pred_region
    %s908 = sshllo.u32 0, 4
    loop: start=0, step=1, limit=1
    $region55: #{conv_block.1} parent=53 // loop_pre_header
      _
    $region56: #{conv_block.1} parent=53 // loop_header
      %s910 = sphi 0, %s914
      %p911 = scmp.ge.s32.totalorder %s910, 1
      %s915 = sphi %s897, %s897
      %s916 = sphi %s898, %s898
    $region57: #{conv_block.1} parent=53 // loop_header_branch
      %913 = sbr.rel (%p911) target = $region61
    $region58: #{conv_block.1} parent=53 // loop_body
      %v917 = vld [vmem:[%s915] sm:%s908]
      %918 = vst [vmem:[%s916] sm:%s908] %v917
      %v919 = vld [vmem:[%s915 + $0x8] sm:%s908]
      %920 = vst [vmem:[%s916 + $0x4] sm:%s908] %v919
      %v921 = vld [vmem:[%s915 + $0x4] sm:%s908]
      %922 = vst [vmem:[%s916 + $0x8] sm:%s908] %v921
      %v923 = vld [vmem:[%s915 + $0xc] sm:%s908]
      %924 = vst [vmem:[%s916 + $0xc] sm:%s908] %v923
      %v925 = vld [vmem:[%s915 + $0x10] sm:%s908]
      %926 = vst [vmem:[%s916 + $0x10] sm:%s908] %v925
      %v927 = vld [vmem:[%s915 + $0x18] sm:%s908]
      %928 = vst [vmem:[%s916 + $0x14] sm:%s908] %v927
      %v929 = vld [vmem:[%s915 + $0x14] sm:%s908]
      %930 = vst [vmem:[%s916 + $0x18] sm:%s908] %v929
      %v931 = vld [vmem:[%s915 + $0x1c] sm:%s908]
      %932 = vst [vmem:[%s916 + $0x1c] sm:%s908] %v931
      %v933 = vld [vmem:[%s915 + $0x20] sm:%s908]
      %934 = vst [vmem:[%s916 + $0x20] sm:%s908] %v933
      %v935 = vld [vmem:[%s915 + $0x28] sm:%s908]
      %936 = vst [vmem:[%s916 + $0x24] sm:%s908] %v935
      %v937 = vld [vmem:[%s915 + $0x24] sm:%s908]
      %938 = vst [vmem:[%s916 + $0x28] sm:%s908] %v937
      %v939 = vld [vmem:[%s915 + $0x2c] sm:%s908]
      %940 = vst [vmem:[%s916 + $0x2c] sm:%s908] %v939
      %v941 = vld [vmem:[%s915 + $0x30] sm:%s908]
      %942 = vst [vmem:[%s916 + $0x30] sm:%s908] %v941
      %v943 = vld [vmem:[%s915 + $0x38] sm:%s908]
      %944 = vst [vmem:[%s916 + $0x34] sm:%s908] %v943
      %v945 = vld [vmem:[%s915 + $0x34] sm:%s908]
      %946 = vst [vmem:[%s916 + $0x38] sm:%s908] %v945
      %v947 = vld [vmem:[%s915 + $0x3c] sm:%s908]
      %948 = vst [vmem:[%s916 + $0x3c] sm:%s908] %v947
      %v949 = vld [vmem:[%s915 + $0x40] sm:%s908]
      %950 = vst [vmem:[%s916 + $0x40] sm:%s908] %v949
      %v951 = vld [vmem:[%s915 + $0x48] sm:%s908]
      %952 = vst [vmem:[%s916 + $0x44] sm:%s908] %v951
      %v953 = vld [vmem:[%s915 + $0x44] sm:%s908]
      %954 = vst [vmem:[%s916 + $0x48] sm:%s908] %v953
      %v955 = vld [vmem:[%s915 + $0x4c] sm:%s908]
      %956 = vst [vmem:[%s916 + $0x4c] sm:%s908] %v955
      %v957 = vld [vmem:[%s915 + $0x50] sm:%s908]
      %958 = vst [vmem:[%s916 + $0x50] sm:%s908] %v957
      %v959 = vld [vmem:[%s915 + $0x58] sm:%s908]
      %960 = vst [vmem:[%s916 + $0x54] sm:%s908] %v959
      %v961 = vld [vmem:[%s915 + $0x54] sm:%s908]
      %962 = vst [vmem:[%s916 + $0x58] sm:%s908] %v961
      %v963 = vld [vmem:[%s915 + $0x5c] sm:%s908]
      %964 = vst [vmem:[%s916 + $0x5c] sm:%s908] %v963
      %v965 = vld [vmem:[%s915 + $0x60] sm:%s908]
      %966 = vst [vmem:[%s916 + $0x60] sm:%s908] %v965
      %v967 = vld [vmem:[%s915 + $0x68] sm:%s908]
      %968 = vst [vmem:[%s916 + $0x64] sm:%s908] %v967
      %v969 = vld [vmem:[%s915 + $0x64] sm:%s908]
      %970 = vst [vmem:[%s916 + $0x68] sm:%s908] %v969
      %v971 = vld [vmem:[%s915 + $0x6c] sm:%s908]
      %972 = vst [vmem:[%s916 + $0x6c] sm:%s908] %v971
      %v973 = vld [vmem:[%s915 + $0x70] sm:%s908]
      %974 = vst [vmem:[%s916 + $0x70] sm:%s908] %v973
      %v975 = vld [vmem:[%s915 + $0x78] sm:%s908]
      %976 = vst [vmem:[%s916 + $0x74] sm:%s908] %v975
      %v977 = vld [vmem:[%s915 + $0x74] sm:%s908]
      %978 = vst [vmem:[%s916 + $0x78] sm:%s908] %v977
      %v979 = vld [vmem:[%s915 + $0x7c] sm:%s908]
      %980 = vst [vmem:[%s916 + $0x7c] sm:%s908] %v979
      %v981 = vld [vmem:[%s915 + $0x80] sm:%s908]
      %982 = vst [vmem:[%s916 + $0x80] sm:%s908] %v981
      %v983 = vld [vmem:[%s915 + $0x88] sm:%s908]
      %984 = vst [vmem:[%s916 + $0x84] sm:%s908] %v983
      %v985 = vld [vmem:[%s915 + $0x84] sm:%s908]
      %986 = vst [vmem:[%s916 + $0x88] sm:%s908] %v985
      %v987 = vld [vmem:[%s915 + $0x8c] sm:%s908]
      %988 = vst [vmem:[%s916 + $0x8c] sm:%s908] %v987
      %v989 = vld [vmem:[%s915 + $0x90] sm:%s908]
      %990 = vst [vmem:[%s916 + $0x90] sm:%s908] %v989
      %v991 = vld [vmem:[%s915 + $0x98] sm:%s908]
      %992 = vst [vmem:[%s916 + $0x94] sm:%s908] %v991
      %v993 = vld [vmem:[%s915 + $0x94] sm:%s908]
      %994 = vst [vmem:[%s916 + $0x98] sm:%s908] %v993
      %v995 = vld [vmem:[%s915 + $0x9c] sm:%s908]
      %996 = vst [vmem:[%s916 + $0x9c] sm:%s908] %v995
      %v997 = vld [vmem:[%s915 + $0xa0] sm:%s908]
      %998 = vst [vmem:[%s916 + $0xa0] sm:%s908] %v997
      %v999 = vld [vmem:[%s915 + $0xa8] sm:%s908]
      %1000 = vst [vmem:[%s916 + $0xa4] sm:%s908] %v999
      %v1001 = vld [vmem:[%s915 + $0xa4] sm:%s908]
      %1002 = vst [vmem:[%s916 + $0xa8] sm:%s908] %v1001
      %v1003 = vld [vmem:[%s915 + $0xac] sm:%s908]
      %1004 = vst [vmem:[%s916 + $0xac] sm:%s908] %v1003
      %v1005 = vld [vmem:[%s915 + $0xb0] sm:%s908]
      %1006 = vst [vmem:[%s916 + $0xb0] sm:%s908] %v1005
      %v1007 = vld [vmem:[%s915 + $0xb8] sm:%s908]
      %1008 = vst [vmem:[%s916 + $0xb4] sm:%s908] %v1007
      %v1009 = vld [vmem:[%s915 + $0xb4] sm:%s908]
      %1010 = vst [vmem:[%s916 + $0xb8] sm:%s908] %v1009
      %v1011 = vld [vmem:[%s915 + $0xbc] sm:%s908]
      %1012 = vst [vmem:[%s916 + $0xbc] sm:%s908] %v1011
      %v1013 = vld [vmem:[%s915 + $0xc0] sm:%s908]
      %1014 = vst [vmem:[%s916 + $0xc0] sm:%s908] %v1013
      %v1015 = vld [vmem:[%s915 + $0xc8] sm:%s908]
      %1016 = vst [vmem:[%s916 + $0xc4] sm:%s908] %v1015
      %v1017 = vld [vmem:[%s915 + $0xc4] sm:%s908]
      %1018 = vst [vmem:[%s916 + $0xc8] sm:%s908] %v1017
      %v1019 = vld [vmem:[%s915 + $0xcc] sm:%s908]
      %1020 = vst [vmem:[%s916 + $0xcc] sm:%s908] %v1019
      %v1021 = vld [vmem:[%s915 + $0xd0] sm:%s908]
      %1022 = vst [vmem:[%s916 + $0xd0] sm:%s908] %v1021
      %v1023 = vld [vmem:[%s915 + $0xd8] sm:%s908]
      %1024 = vst [vmem:[%s916 + $0xd4] sm:%s908] %v1023
      %v1025 = vld [vmem:[%s915 + $0xd4] sm:%s908]
      %1026 = vst [vmem:[%s916 + $0xd8] sm:%s908] %v1025
      %v1027 = vld [vmem:[%s915 + $0xdc] sm:%s908]
      %1028 = vst [vmem:[%s916 + $0xdc] sm:%s908] %v1027
      %v1029 = vld [vmem:[%s915 + $0xe0] sm:%s908]
      %1030 = vst [vmem:[%s916 + $0xe0] sm:%s908] %v1029
      %v1031 = vld [vmem:[%s915 + $0xe8] sm:%s908]
      %1032 = vst [vmem:[%s916 + $0xe4] sm:%s908] %v1031
      %v1033 = vld [vmem:[%s915 + $0xe4] sm:%s908]
      %1034 = vst [vmem:[%s916 + $0xe8] sm:%s908] %v1033
      %v1035 = vld [vmem:[%s915 + $0xec] sm:%s908]
      %1036 = vst [vmem:[%s916 + $0xec] sm:%s908] %v1035
      %v1037 = vld [vmem:[%s915 + $0xf0] sm:%s908]
      %1038 = vst [vmem:[%s916 + $0xf0] sm:%s908] %v1037
      %v1039 = vld [vmem:[%s915 + $0xf8] sm:%s908]
      %1040 = vst [vmem:[%s916 + $0xf4] sm:%s908] %v1039
      %v1041 = vld [vmem:[%s915 + $0xf4] sm:%s908]
      %1042 = vst [vmem:[%s916 + $0xf8] sm:%s908] %v1041
      %v1043 = vld [vmem:[%s915 + $0xfc] sm:%s908]
      %1044 = vst [vmem:[%s916 + $0xfc] sm:%s908] %v1043
      %v1045 = vld [vmem:[%s915 + $0x100] sm:%s908]
      %1046 = vst [vmem:[%s916 + $0x100] sm:%s908] %v1045
      %v1047 = vld [vmem:[%s915 + $0x108] sm:%s908]
      %1048 = vst [vmem:[%s916 + $0x104] sm:%s908] %v1047
      %v1049 = vld [vmem:[%s915 + $0x104] sm:%s908]
      %1050 = vst [vmem:[%s916 + $0x108] sm:%s908] %v1049
      %v1051 = vld [vmem:[%s915 + $0x10c] sm:%s908]
      %1052 = vst [vmem:[%s916 + $0x10c] sm:%s908] %v1051
      %v1053 = vld [vmem:[%s915 + $0x110] sm:%s908]
      %1054 = vst [vmem:[%s916 + $0x110] sm:%s908] %v1053
      %v1055 = vld [vmem:[%s915 + $0x118] sm:%s908]
      %1056 = vst [vmem:[%s916 + $0x114] sm:%s908] %v1055
      %v1057 = vld [vmem:[%s915 + $0x114] sm:%s908]
      %1058 = vst [vmem:[%s916 + $0x118] sm:%s908] %v1057
      %v1059 = vld [vmem:[%s915 + $0x11c] sm:%s908]
      %1060 = vst [vmem:[%s916 + $0x11c] sm:%s908] %v1059
      %v1061 = vld [vmem:[%s915 + $0x120] sm:%s908]
      %1062 = vst [vmem:[%s916 + $0x120] sm:%s908] %v1061
      %v1063 = vld [vmem:[%s915 + $0x128] sm:%s908]
      %1064 = vst [vmem:[%s916 + $0x124] sm:%s908] %v1063
      %v1065 = vld [vmem:[%s915 + $0x124] sm:%s908]
      %1066 = vst [vmem:[%s916 + $0x128] sm:%s908] %v1065
      %v1067 = vld [vmem:[%s915 + $0x12c] sm:%s908]
      %1068 = vst [vmem:[%s916 + $0x12c] sm:%s908] %v1067
      %v1069 = vld [vmem:[%s915 + $0x130] sm:%s908]
      %1070 = vst [vmem:[%s916 + $0x130] sm:%s908] %v1069
      %v1071 = vld [vmem:[%s915 + $0x138] sm:%s908]
      %1072 = vst [vmem:[%s916 + $0x134] sm:%s908] %v1071
      %v1073 = vld [vmem:[%s915 + $0x134] sm:%s908]
      %1074 = vst [vmem:[%s916 + $0x138] sm:%s908] %v1073
      %v1075 = vld [vmem:[%s915 + $0x13c] sm:%s908]
      %1076 = vst [vmem:[%s916 + $0x13c] sm:%s908] %v1075
      %v1077 = vld [vmem:[%s915 + $0x140] sm:%s908]
      %1078 = vst [vmem:[%s916 + $0x140] sm:%s908] %v1077
      %v1079 = vld [vmem:[%s915 + $0x148] sm:%s908]
      %1080 = vst [vmem:[%s916 + $0x144] sm:%s908] %v1079
      %v1081 = vld [vmem:[%s915 + $0x144] sm:%s908]
      %1082 = vst [vmem:[%s916 + $0x148] sm:%s908] %v1081
      %v1083 = vld [vmem:[%s915 + $0x14c] sm:%s908]
      %1084 = vst [vmem:[%s916 + $0x14c] sm:%s908] %v1083
      %v1085 = vld [vmem:[%s915 + $0x150] sm:%s908]
      %1086 = vst [vmem:[%s916 + $0x150] sm:%s908] %v1085
      %v1087 = vld [vmem:[%s915 + $0x158] sm:%s908]
      %1088 = vst [vmem:[%s916 + $0x154] sm:%s908] %v1087
      %v1089 = vld [vmem:[%s915 + $0x154] sm:%s908]
      %1090 = vst [vmem:[%s916 + $0x158] sm:%s908] %v1089
      %v1091 = vld [vmem:[%s915 + $0x15c] sm:%s908]
      %1092 = vst [vmem:[%s916 + $0x15c] sm:%s908] %v1091
      %v1093 = vld [vmem:[%s915 + $0x160] sm:%s908]
      %1094 = vst [vmem:[%s916 + $0x160] sm:%s908] %v1093
      %v1095 = vld [vmem:[%s915 + $0x168] sm:%s908]
      %1096 = vst [vmem:[%s916 + $0x164] sm:%s908] %v1095
      %v1097 = vld [vmem:[%s915 + $0x164] sm:%s908]
      %1098 = vst [vmem:[%s916 + $0x168] sm:%s908] %v1097
      %v1099 = vld [vmem:[%s915 + $0x16c] sm:%s908]
      %1100 = vst [vmem:[%s916 + $0x16c] sm:%s908] %v1099
      %v1101 = vld [vmem:[%s915 + $0x170] sm:%s908]
      %1102 = vst [vmem:[%s916 + $0x170] sm:%s908] %v1101
      %v1103 = vld [vmem:[%s915 + $0x178] sm:%s908]
      %1104 = vst [vmem:[%s916 + $0x174] sm:%s908] %v1103
      %v1105 = vld [vmem:[%s915 + $0x174] sm:%s908]
      %1106 = vst [vmem:[%s916 + $0x178] sm:%s908] %v1105
      %v1107 = vld [vmem:[%s915 + $0x17c] sm:%s908]
      %1108 = vst [vmem:[%s916 + $0x17c] sm:%s908] %v1107
      %v1109 = vld [vmem:[%s915 + $0x180] sm:%s908]
      %1110 = vst [vmem:[%s916 + $0x180] sm:%s908] %v1109
      %v1111 = vld [vmem:[%s915 + $0x188] sm:%s908]
      %1112 = vst [vmem:[%s916 + $0x184] sm:%s908] %v1111
      %v1113 = vld [vmem:[%s915 + $0x184] sm:%s908]
      %1114 = vst [vmem:[%s916 + $0x188] sm:%s908] %v1113
      %v1115 = vld [vmem:[%s915 + $0x18c] sm:%s908]
      %1116 = vst [vmem:[%s916 + $0x18c] sm:%s908] %v1115
      %v1117 = vld [vmem:[%s915 + $0x190] sm:%s908]
      %1118 = vst [vmem:[%s916 + $0x190] sm:%s908] %v1117
      %v1119 = vld [vmem:[%s915 + $0x198] sm:%s908]
      %1120 = vst [vmem:[%s916 + $0x194] sm:%s908] %v1119
      %v1121 = vld [vmem:[%s915 + $0x194] sm:%s908]
      %1122 = vst [vmem:[%s916 + $0x198] sm:%s908] %v1121
      %v1123 = vld [vmem:[%s915 + $0x19c] sm:%s908]
      %1124 = vst [vmem:[%s916 + $0x19c] sm:%s908] %v1123
      %v1125 = vld [vmem:[%s915 + $0x1a0] sm:%s908]
      %1126 = vst [vmem:[%s916 + $0x1a0] sm:%s908] %v1125
      %v1127 = vld [vmem:[%s915 + $0x1a8] sm:%s908]
      %1128 = vst [vmem:[%s916 + $0x1a4] sm:%s908] %v1127
      %v1129 = vld [vmem:[%s915 + $0x1a4] sm:%s908]
      %1130 = vst [vmem:[%s916 + $0x1a8] sm:%s908] %v1129
      %v1131 = vld [vmem:[%s915 + $0x1ac] sm:%s908]
      %1132 = vst [vmem:[%s916 + $0x1ac] sm:%s908] %v1131
      %v1133 = vld [vmem:[%s915 + $0x1b0] sm:%s908]
      %1134 = vst [vmem:[%s916 + $0x1b0] sm:%s908] %v1133
      %v1135 = vld [vmem:[%s915 + $0x1b8] sm:%s908]
      %1136 = vst [vmem:[%s916 + $0x1b4] sm:%s908] %v1135
      %v1137 = vld [vmem:[%s915 + $0x1b4] sm:%s908]
      %1138 = vst [vmem:[%s916 + $0x1b8] sm:%s908] %v1137
      %v1139 = vld [vmem:[%s915 + $0x1bc] sm:%s908]
      %1140 = vst [vmem:[%s916 + $0x1bc] sm:%s908] %v1139
      %v1141 = vld [vmem:[%s915 + $0x1c0] sm:%s908]
      %1142 = vst [vmem:[%s916 + $0x1c0] sm:%s908] %v1141
      %v1143 = vld [vmem:[%s915 + $0x1c8] sm:%s908]
      %1144 = vst [vmem:[%s916 + $0x1c4] sm:%s908] %v1143
      %v1145 = vld [vmem:[%s915 + $0x1c4] sm:%s908]
      %1146 = vst [vmem:[%s916 + $0x1c8] sm:%s908] %v1145
      %v1147 = vld [vmem:[%s915 + $0x1cc] sm:%s908]
      %1148 = vst [vmem:[%s916 + $0x1cc] sm:%s908] %v1147
      %v1149 = vld [vmem:[%s915 + $0x1d0] sm:%s908]
      %1150 = vst [vmem:[%s916 + $0x1d0] sm:%s908] %v1149
      %v1151 = vld [vmem:[%s915 + $0x1d8] sm:%s908]
      %1152 = vst [vmem:[%s916 + $0x1d4] sm:%s908] %v1151
      %v1153 = vld [vmem:[%s915 + $0x1d4] sm:%s908]
      %1154 = vst [vmem:[%s916 + $0x1d8] sm:%s908] %v1153
      %v1155 = vld [vmem:[%s915 + $0x1dc] sm:%s908]
      %1156 = vst [vmem:[%s916 + $0x1dc] sm:%s908] %v1155
      %v1157 = vld [vmem:[%s915 + $0x1e0] sm:%s908]
      %1158 = vst [vmem:[%s916 + $0x1e0] sm:%s908] %v1157
      %v1159 = vld [vmem:[%s915 + $0x1e8] sm:%s908]
      %1160 = vst [vmem:[%s916 + $0x1e4] sm:%s908] %v1159
      %v1161 = vld [vmem:[%s915 + $0x1e4] sm:%s908]
      %1162 = vst [vmem:[%s916 + $0x1e8] sm:%s908] %v1161
      %v1163 = vld [vmem:[%s915 + $0x1ec] sm:%s908]
      %1164 = vst [vmem:[%s916 + $0x1ec] sm:%s908] %v1163
      %v1165 = vld [vmem:[%s915 + $0x1f0] sm:%s908]
      %1166 = vst [vmem:[%s916 + $0x1f0] sm:%s908] %v1165
      %v1167 = vld [vmem:[%s915 + $0x1f8] sm:%s908]
      %1168 = vst [vmem:[%s916 + $0x1f4] sm:%s908] %v1167
      %v1169 = vld [vmem:[%s915 + $0x1f4] sm:%s908]
      %1170 = vst [vmem:[%s916 + $0x1f8] sm:%s908] %v1169
      %v1171 = vld [vmem:[%s915 + $0x1fc] sm:%s908]
      %1172 = vst [vmem:[%s916 + $0x1fc] sm:%s908] %v1171
      %v1173 = vld [vmem:[%s915 + $0x200] sm:%s908]
      %1174 = vst [vmem:[%s916 + $0x200] sm:%s908] %v1173
      %v1175 = vld [vmem:[%s915 + $0x208] sm:%s908]
      %1176 = vst [vmem:[%s916 + $0x204] sm:%s908] %v1175
      %v1177 = vld [vmem:[%s915 + $0x204] sm:%s908]
      %1178 = vst [vmem:[%s916 + $0x208] sm:%s908] %v1177
      %v1179 = vld [vmem:[%s915 + $0x20c] sm:%s908]
      %1180 = vst [vmem:[%s916 + $0x20c] sm:%s908] %v1179
      %v1181 = vld [vmem:[%s915 + $0x210] sm:%s908]
      %1182 = vst [vmem:[%s916 + $0x210] sm:%s908] %v1181
      %v1183 = vld [vmem:[%s915 + $0x218] sm:%s908]
      %1184 = vst [vmem:[%s916 + $0x214] sm:%s908] %v1183
      %v1185 = vld [vmem:[%s915 + $0x214] sm:%s908]
      %1186 = vst [vmem:[%s916 + $0x218] sm:%s908] %v1185
      %v1187 = vld [vmem:[%s915 + $0x21c] sm:%s908]
      %1188 = vst [vmem:[%s916 + $0x21c] sm:%s908] %v1187
      %v1189 = vld [vmem:[%s915 + $0x220] sm:%s908]
      %1190 = vst [vmem:[%s916 + $0x220] sm:%s908] %v1189
      %v1191 = vld [vmem:[%s915 + $0x228] sm:%s908]
      %1192 = vst [vmem:[%s916 + $0x224] sm:%s908] %v1191
      %v1193 = vld [vmem:[%s915 + $0x224] sm:%s908]
      %1194 = vst [vmem:[%s916 + $0x228] sm:%s908] %v1193
      %v1195 = vld [vmem:[%s915 + $0x22c] sm:%s908]
      %1196 = vst [vmem:[%s916 + $0x22c] sm:%s908] %v1195
      %v1197 = vld [vmem:[%s915 + $0x230] sm:%s908]
      %1198 = vst [vmem:[%s916 + $0x230] sm:%s908] %v1197
      %v1199 = vld [vmem:[%s915 + $0x238] sm:%s908]
      %1200 = vst [vmem:[%s916 + $0x234] sm:%s908] %v1199
      %v1201 = vld [vmem:[%s915 + $0x234] sm:%s908]
      %1202 = vst [vmem:[%s916 + $0x238] sm:%s908] %v1201
      %v1203 = vld [vmem:[%s915 + $0x23c] sm:%s908]
      %1204 = vst [vmem:[%s916 + $0x23c] sm:%s908] %v1203
      %v1205 = vld [vmem:[%s915 + $0x240] sm:%s908]
      %1206 = vst [vmem:[%s916 + $0x240] sm:%s908] %v1205
      %v1207 = vld [vmem:[%s915 + $0x248] sm:%s908]
      %1208 = vst [vmem:[%s916 + $0x244] sm:%s908] %v1207
      %v1209 = vld [vmem:[%s915 + $0x244] sm:%s908]
      %1210 = vst [vmem:[%s916 + $0x248] sm:%s908] %v1209
      %v1211 = vld [vmem:[%s915 + $0x24c] sm:%s908]
      %1212 = vst [vmem:[%s916 + $0x24c] sm:%s908] %v1211
      %v1213 = vld [vmem:[%s915 + $0x250] sm:%s908]
      %1214 = vst [vmem:[%s916 + $0x250] sm:%s908] %v1213
      %v1215 = vld [vmem:[%s915 + $0x258] sm:%s908]
      %1216 = vst [vmem:[%s916 + $0x254] sm:%s908] %v1215
      %v1217 = vld [vmem:[%s915 + $0x254] sm:%s908]
      %1218 = vst [vmem:[%s916 + $0x258] sm:%s908] %v1217
      %v1219 = vld [vmem:[%s915 + $0x25c] sm:%s908]
      %1220 = vst [vmem:[%s916 + $0x25c] sm:%s908] %v1219
      %v1221 = vld [vmem:[%s915 + $0x260] sm:%s908]
      %1222 = vst [vmem:[%s916 + $0x260] sm:%s908] %v1221
      %v1223 = vld [vmem:[%s915 + $0x268] sm:%s908]
      %1224 = vst [vmem:[%s916 + $0x264] sm:%s908] %v1223
      %v1225 = vld [vmem:[%s915 + $0x264] sm:%s908]
      %1226 = vst [vmem:[%s916 + $0x268] sm:%s908] %v1225
      %v1227 = vld [vmem:[%s915 + $0x26c] sm:%s908]
      %1228 = vst [vmem:[%s916 + $0x26c] sm:%s908] %v1227
      %v1229 = vld [vmem:[%s915 + $0x270] sm:%s908]
      %1230 = vst [vmem:[%s916 + $0x270] sm:%s908] %v1229
      %v1231 = vld [vmem:[%s915 + $0x278] sm:%s908]
      %1232 = vst [vmem:[%s916 + $0x274] sm:%s908] %v1231
      %v1233 = vld [vmem:[%s915 + $0x274] sm:%s908]
      %1234 = vst [vmem:[%s916 + $0x278] sm:%s908] %v1233
      %v1235 = vld [vmem:[%s915 + $0x27c] sm:%s908]
      %1236 = vst [vmem:[%s916 + $0x27c] sm:%s908] %v1235
      %v1237 = vld [vmem:[%s915 + $0x280] sm:%s908]
      %1238 = vst [vmem:[%s916 + $0x280] sm:%s908] %v1237
      %v1239 = vld [vmem:[%s915 + $0x288] sm:%s908]
      %1240 = vst [vmem:[%s916 + $0x284] sm:%s908] %v1239
      %v1241 = vld [vmem:[%s915 + $0x284] sm:%s908]
      %1242 = vst [vmem:[%s916 + $0x288] sm:%s908] %v1241
      %v1243 = vld [vmem:[%s915 + $0x28c] sm:%s908]
      %1244 = vst [vmem:[%s916 + $0x28c] sm:%s908] %v1243
      %v1245 = vld [vmem:[%s915 + $0x290] sm:%s908]
      %1246 = vst [vmem:[%s916 + $0x290] sm:%s908] %v1245
      %v1247 = vld [vmem:[%s915 + $0x298] sm:%s908]
      %1248 = vst [vmem:[%s916 + $0x294] sm:%s908] %v1247
      %v1249 = vld [vmem:[%s915 + $0x294] sm:%s908]
      %1250 = vst [vmem:[%s916 + $0x298] sm:%s908] %v1249
      %v1251 = vld [vmem:[%s915 + $0x29c] sm:%s908]
      %1252 = vst [vmem:[%s916 + $0x29c] sm:%s908] %v1251
      %v1253 = vld [vmem:[%s915 + $0x2a0] sm:%s908]
      %1254 = vst [vmem:[%s916 + $0x2a0] sm:%s908] %v1253
      %v1255 = vld [vmem:[%s915 + $0x2a8] sm:%s908]
      %1256 = vst [vmem:[%s916 + $0x2a4] sm:%s908] %v1255
      %v1257 = vld [vmem:[%s915 + $0x2a4] sm:%s908]
      %1258 = vst [vmem:[%s916 + $0x2a8] sm:%s908] %v1257
      %v1259 = vld [vmem:[%s915 + $0x2ac] sm:%s908]
      %1260 = vst [vmem:[%s916 + $0x2ac] sm:%s908] %v1259
      %v1261 = vld [vmem:[%s915 + $0x2b0] sm:%s908]
      %1262 = vst [vmem:[%s916 + $0x2b0] sm:%s908] %v1261
      %v1263 = vld [vmem:[%s915 + $0x2b8] sm:%s908]
      %1264 = vst [vmem:[%s916 + $0x2b4] sm:%s908] %v1263
      %v1265 = vld [vmem:[%s915 + $0x2b4] sm:%s908]
      %1266 = vst [vmem:[%s916 + $0x2b8] sm:%s908] %v1265
      %v1267 = vld [vmem:[%s915 + $0x2bc] sm:%s908]
      %1268 = vst [vmem:[%s916 + $0x2bc] sm:%s908] %v1267
      %v1269 = vld [vmem:[%s915 + $0x2c0] sm:%s908]
      %1270 = vst [vmem:[%s916 + $0x2c0] sm:%s908] %v1269
      %v1271 = vld [vmem:[%s915 + $0x2c8] sm:%s908]
      %1272 = vst [vmem:[%s916 + $0x2c4] sm:%s908] %v1271
      %v1273 = vld [vmem:[%s915 + $0x2c4] sm:%s908]
      %1274 = vst [vmem:[%s916 + $0x2c8] sm:%s908] %v1273
      %v1275 = vld [vmem:[%s915 + $0x2cc] sm:%s908]
      %1276 = vst [vmem:[%s916 + $0x2cc] sm:%s908] %v1275
      %v1277 = vld [vmem:[%s915 + $0x2d0] sm:%s908]
      %1278 = vst [vmem:[%s916 + $0x2d0] sm:%s908] %v1277
      %v1279 = vld [vmem:[%s915 + $0x2d8] sm:%s908]
      %1280 = vst [vmem:[%s916 + $0x2d4] sm:%s908] %v1279
      %v1281 = vld [vmem:[%s915 + $0x2d4] sm:%s908]
      %1282 = vst [vmem:[%s916 + $0x2d8] sm:%s908] %v1281
      %v1283 = vld [vmem:[%s915 + $0x2dc] sm:%s908]
      %1284 = vst [vmem:[%s916 + $0x2dc] sm:%s908] %v1283
      %v1285 = vld [vmem:[%s915 + $0x2e0] sm:%s908]
      %1286 = vst [vmem:[%s916 + $0x2e0] sm:%s908] %v1285
      %v1287 = vld [vmem:[%s915 + $0x2e8] sm:%s908]
      %1288 = vst [vmem:[%s916 + $0x2e4] sm:%s908] %v1287
      %v1289 = vld [vmem:[%s915 + $0x2e4] sm:%s908]
      %1290 = vst [vmem:[%s916 + $0x2e8] sm:%s908] %v1289
      %v1291 = vld [vmem:[%s915 + $0x2ec] sm:%s908]
      %1292 = vst [vmem:[%s916 + $0x2ec] sm:%s908] %v1291
      %v1293 = vld [vmem:[%s915 + $0x2f0] sm:%s908]
      %1294 = vst [vmem:[%s916 + $0x2f0] sm:%s908] %v1293
      %v1295 = vld [vmem:[%s915 + $0x2f8] sm:%s908]
      %1296 = vst [vmem:[%s916 + $0x2f4] sm:%s908] %v1295
      %v1297 = vld [vmem:[%s915 + $0x2f4] sm:%s908]
      %1298 = vst [vmem:[%s916 + $0x2f8] sm:%s908] %v1297
      %v1299 = vld [vmem:[%s915 + $0x2fc] sm:%s908]
      %1300 = vst [vmem:[%s916 + $0x2fc] sm:%s908] %v1299
    $region59: #{conv_block.1} parent=53 // loop_footer
      %s914 = sadd.s32 1, %s910
    $region60: #{conv_block.1} parent=53 // loop_footer_branch
      %909 = sbr.rel target = $region56
    $region61: #{conv_block.1} parent=53 // loop_exit
      _
  $region54: #{conv_block.1} parent=0 // pred_fallthru
    _
  // Predicated region
  $region80: #{conv_block.1} parent=0 // pred_check
    _
  $region81: #{conv_block.1} parent=0 // pred_check_branch
    %1714 = sbr.rel (0) target = $region83
  $region82: #{conv_block.1} parent=0 // pred_region
    %1715 = vsyncadd %s899, 12288
  $region83: #{conv_block.1} parent=0 // pred_fallthru
    _
  %s1716 = smul.u32 4, 96
  %s1717 = smul.u32 %s1716, 2
  %s1718 = sshll.u32 %s1717, 4
  %1719 = dma.done [#allocation3], %s1718
  %v1720 = vrot.slane %v889, 7
  %v1721 = vrot.slane %v890, 7
  %v1722 = vrot.slane %v891, 7
  %v1723 = vrot.slane %v892, 7
  %v1724 = vrot.slane %v893, 7
  %v1725 = vrot.slane %v894, 7
  %v1726 = vrot.slane %v895, 7
  %v1727 = vrot.slane %v896, 7
  %vm1728 = vcmp.lt.s32.totalorder %v829, 1
  %v1729 = vsel %vm1728, %v1724, %v1726
  %v1730 = vsel %vm1728, %v1725, %v1727
  %v1731 = vsel %vm1728, %v1722, %v1724
  %v1732 = vsel %vm1728, %v1723, %v1725
  %v1733 = vsel %vm1728, %v1720, %v1722
  %v1734 = vsel %vm1728, %v1721, %v1723
  %v1735 = vsel %vm1728, %v1726, %v1720
  %v1736 = vsel %vm1728, %v1727, %v1721
  %v1737 = vsel %vm881, 1, 0
  %v1738 = vsel %vm882, 1, 0
  %v1739 = vsel %vm883, 1, 0
  %v1740 = vsel %vm884, 1, 0
  %vm1741 = vcmp.eq.s32.totalorder %v1737, 1
  %vm1742 = vcmp.eq.s32.totalorder %v1738, 1
  %vm1743 = vcmp.eq.s32.totalorder %v1739, 1
  %vm1744 = vcmp.eq.s32.totalorder %v1740, 1
  %v1745 = vsel %vm1741, %v1735, 0.0
  %v1746 = vsel %vm1741, %v1736, 0.0
  %v1747 = vsel %vm1742, %v1733, 0.0
  %v1748 = vsel %vm1742, %v1734, 0.0
  %v1749 = vsel %vm1743, %v1731, 0.0
  %v1750 = vsel %vm1743, %v1732, 0.0
  %v1751 = vsel %vm1744, %v1729, 0.0
  %v1752 = vsel %vm1744, %v1730, 0.0
  %v1753 = vrot.slane %v889, 1
  %v1754 = vrot.slane %v890, 1
  %v1755 = vrot.slane %v891, 1
  %v1756 = vrot.slane %v892, 1
  %v1757 = vrot.slane %v893, 1
  %v1758 = vrot.slane %v894, 1
  %v1759 = vrot.slane %v895, 1
  %v1760 = vrot.slane %v896, 1
  %vm1761 = vcmp.lt.s32.totalorder %v829, 7
  %v1762 = vsel %vm1761, %v1757, %v1759
  %v1763 = vsel %vm1761, %v1758, %v1760
  %v1764 = vsel %vm1761, %v1755, %v1757
  %v1765 = vsel %vm1761, %v1756, %v1758
  %v1766 = vsel %vm1761, %v1753, %v1755
  %v1767 = vsel %vm1761, %v1754, %v1756
  %v1768 = vsel %vm1761, %v1759, %v1753
  %v1769 = vsel %vm1761, %v1760, %v1754
  %v1770 = vsel %vm885, 1, 0
  %v1771 = vsel %vm886, 1, 0
  %v1772 = vsel %vm887, 1, 0
  %v1773 = vsel %vm888, 1, 0
  %vm1774 = vcmp.eq.s32.totalorder %v1770, 1
  %vm1775 = vcmp.eq.s32.totalorder %v1771, 1
  %vm1776 = vcmp.eq.s32.totalorder %v1772, 1
  %vm1777 = vcmp.eq.s32.totalorder %v1773, 1
  %v1778 = vsel %vm1774, %v1766, 0.0
  %v1779 = vsel %vm1774, %v1767, 0.0
  %v1780 = vsel %vm1775, %v1764, 0.0
  %v1781 = vsel %vm1775, %v1765, 0.0
  %v1782 = vsel %vm1776, %v1762, 0.0
  %v1783 = vsel %vm1776, %v1763, 0.0
  %v1784 = vsel %vm1777, %v1768, 0.0
  %v1785 = vsel %vm1777, %v1769, 0.0
  %v1786 = vpack.c.bf16 %v1747, %v1745
  %v1787 = vpack.c.bf16 %v1748, %v1746
  %v1788 = vpack.c.bf16 %v891, %v889
  %v1789 = vpack.c.bf16 %v892, %v890
  %v1790 = vpack.c.bf16 %v1780, %v1778
  %v1791 = vpack.c.bf16 %v1781, %v1779
  %v1792 = vpack.c.bf16 %v1751, %v1749
  %v1793 = vpack.c.bf16 %v1752, %v1750
  %v1794 = vpack.c.bf16 %v895, %v893
  %v1795 = vpack.c.bf16 %v896, %v894
  %v1796 = vpack.c.bf16 %v1784, %v1782
  %v1797 = vpack.c.bf16 %v1785, %v1783
  %v1798 = vld [vmem:[#allocation2] sm:$0xff]
  %v1799 = vld [vmem:[#allocation2 + $0x8] sm:$0xff]
  %v1800 = vld [vmem:[#allocation2 + $0x10] sm:$0xff]
  %v1801 = vld [vmem:[#allocation2 + $0x18] sm:$0xff]
  %v1802 = vld [vmem:[#allocation2 + $0x20] sm:$0xff]
  %v1803 = vld [vmem:[#allocation2 + $0x28] sm:$0xff]
  %v1804 = vld [vmem:[#allocation2 + $0x30] sm:$0xff]
  %v1805 = vld [vmem:[#allocation2 + $0x38] sm:$0xff]
  %v1806 = vld [vmem:[#allocation2 + $0x40] sm:$0xff]
  %v1807 = vld [vmem:[#allocation2 + $0x48] sm:$0xff]
  %v1808 = vld [vmem:[#allocation2 + $0x50] sm:$0xff]
  %v1809 = vld [vmem:[#allocation2 + $0x58] sm:$0xff]
  %v1810 = vld [vmem:[#allocation2 + $0x60] sm:$0xff]
  %v1811 = vld [vmem:[#allocation2 + $0x68] sm:$0xff]
  %v1812 = vld [vmem:[#allocation2 + $0x70] sm:$0xff]
  %v1813 = vld [vmem:[#allocation2 + $0x78] sm:$0xff]
  %v1814 = vld [vmem:[#allocation2 + $0x80] sm:$0xff]
  %v1815 = vld [vmem:[#allocation2 + $0x88] sm:$0xff]
  %v1816 = vld [vmem:[#allocation2 + $0x90] sm:$0xff]
  %v1817 = vld [vmem:[#allocation2 + $0x98] sm:$0xff]
  %v1818 = vld [vmem:[#allocation2 + $0xa0] sm:$0xff]
  %v1819 = vld [vmem:[#allocation2 + $0xa8] sm:$0xff]
  %v1820 = vld [vmem:[#allocation2 + $0xb0] sm:$0xff]
  %v1821 = vld [vmem:[#allocation2 + $0xb8] sm:$0xff]
  %v1822 = vld [vmem:[#allocation2 + $0xc0] sm:$0xff]
  %v1823 = vld [vmem:[#allocation2 + $0xc8] sm:$0xff]
  %v1824 = vld [vmem:[#allocation2 + $0xd0] sm:$0xff]
  %v1825 = vld [vmem:[#allocation2 + $0xd8] sm:$0xff]
  %v1826 = vld [vmem:[#allocation2 + $0xe0] sm:$0xff]
  %v1827 = vld [vmem:[#allocation2 + $0xe8] sm:$0xff]
  %v1828 = vld [vmem:[#allocation2 + $0xf0] sm:$0xff]
  %v1829 = vld [vmem:[#allocation2 + $0xf8] sm:$0xff]
  %v1830 = vld [vmem:[#allocation2 + $0x100] sm:$0xff]
  %v1831 = vld [vmem:[#allocation2 + $0x108] sm:$0xff]
  %v1832 = vld [vmem:[#allocation2 + $0x110] sm:$0xff]
  %v1833 = vld [vmem:[#allocation2 + $0x118] sm:$0xff]
  %v1834 = vld [vmem:[#allocation2 + $0x120] sm:$0xff]
  %v1835 = vld [vmem:[#allocation2 + $0x128] sm:$0xff]
  %v1836 = vld [vmem:[#allocation2 + $0x130] sm:$0xff]
  %v1837 = vld [vmem:[#allocation2 + $0x138] sm:$0xff]
  %v1838 = vld [vmem:[#allocation2 + $0x140] sm:$0xff]
  %v1839 = vld [vmem:[#allocation2 + $0x148] sm:$0xff]
  %v1840 = vld [vmem:[#allocation2 + $0x150] sm:$0xff]
  %v1841 = vld [vmem:[#allocation2 + $0x158] sm:$0xff]
  %v1842 = vld [vmem:[#allocation2 + $0x160] sm:$0xff]
  %v1843 = vld [vmem:[#allocation2 + $0x168] sm:$0xff]
  %v1844 = vld [vmem:[#allocation2 + $0x170] sm:$0xff]
  %v1845 = vld [vmem:[#allocation2 + $0x178] sm:$0xff]
  %v1846 = vld [vmem:[#allocation2 + $0x180] sm:$0xff]
  %v1847 = vld [vmem:[#allocation2 + $0x188] sm:$0xff]
  %v1848 = vld [vmem:[#allocation2 + $0x190] sm:$0xff]
  %v1849 = vld [vmem:[#allocation2 + $0x198] sm:$0xff]
  %v1850 = vld [vmem:[#allocation2 + $0x1a0] sm:$0xff]
  %v1851 = vld [vmem:[#allocation2 + $0x1a8] sm:$0xff]
  %v1852 = vld [vmem:[#allocation2 + $0x1b0] sm:$0xff]
  %v1853 = vld [vmem:[#allocation2 + $0x1b8] sm:$0xff]
  %v1854 = vld [vmem:[#allocation2 + $0x1c0] sm:$0xff]
  %v1855 = vld [vmem:[#allocation2 + $0x1c8] sm:$0xff]
  %v1856 = vld [vmem:[#allocation2 + $0x1d0] sm:$0xff]
  %v1857 = vld [vmem:[#allocation2 + $0x1d8] sm:$0xff]
  %v1858 = vld [vmem:[#allocation2 + $0x1e0] sm:$0xff]
  %v1859 = vld [vmem:[#allocation2 + $0x1e8] sm:$0xff]
  %v1860 = vld [vmem:[#allocation2 + $0x1f0] sm:$0xff]
  %v1861 = vld [vmem:[#allocation2 + $0x1f8] sm:$0xff]
  %v1862 = vld [vmem:[#allocation2 + $0x200] sm:$0xff]
  %v1863 = vld [vmem:[#allocation2 + $0x208] sm:$0xff]
  %v1864 = vld [vmem:[#allocation2 + $0x210] sm:$0xff]
  %v1865 = vld [vmem:[#allocation2 + $0x218] sm:$0xff]
  %v1866 = vld [vmem:[#allocation2 + $0x220] sm:$0xff]
  %v1867 = vld [vmem:[#allocation2 + $0x228] sm:$0xff]
  %v1868 = vld [vmem:[#allocation2 + $0x230] sm:$0xff]
  %v1869 = vld [vmem:[#allocation2 + $0x238] sm:$0xff]
  %v1870 = vld [vmem:[#allocation2 + $0x240] sm:$0xff]
  %v1871 = vld [vmem:[#allocation2 + $0x248] sm:$0xff]
  %v1872 = vld [vmem:[#allocation2 + $0x250] sm:$0xff]
  %v1873 = vld [vmem:[#allocation2 + $0x258] sm:$0xff]
  %v1874 = vld [vmem:[#allocation2 + $0x260] sm:$0xff]
  %v1875 = vld [vmem:[#allocation2 + $0x268] sm:$0xff]
  %v1876 = vld [vmem:[#allocation2 + $0x270] sm:$0xff]
  %v1877 = vld [vmem:[#allocation2 + $0x278] sm:$0xff]
  %v1878 = vld [vmem:[#allocation2 + $0x280] sm:$0xff]
  %v1879 = vld [vmem:[#allocation2 + $0x288] sm:$0xff]
  %v1880 = vld [vmem:[#allocation2 + $0x290] sm:$0xff]
  %v1881 = vld [vmem:[#allocation2 + $0x298] sm:$0xff]
  %v1882 = vld [vmem:[#allocation2 + $0x2a0] sm:$0xff]
  %v1883 = vld [vmem:[#allocation2 + $0x2a8] sm:$0xff]
  %v1884 = vld [vmem:[#allocation2 + $0x2b0] sm:$0xff]
  %v1885 = vld [vmem:[#allocation2 + $0x2b8] sm:$0xff]
  %v1886 = vld [vmem:[#allocation2 + $0x2c0] sm:$0xff]
  %v1887 = vld [vmem:[#allocation2 + $0x2c8] sm:$0xff]
  %v1888 = vld [vmem:[#allocation2 + $0x2d0] sm:$0xff]
  %v1889 = vld [vmem:[#allocation2 + $0x2d8] sm:$0xff]
  %v1890 = vld [vmem:[#allocation2 + $0x2e0] sm:$0xff]
  %v1891 = vld [vmem:[#allocation2 + $0x2e8] sm:$0xff]
  %v1892 = vld [vmem:[#allocation2 + $0x2f0] sm:$0xff]
  %v1893 = vld [vmem:[#allocation2 + $0x2f8] sm:$0xff]
  %v1894 = vld [vmem:[%s1] sm:$0x3]
  %v1896 = vlaneseq
  %v1897 = vshrl.u32 %v1896, 7
  %v1898 = vsub.s32 0, %v1897
  %v1899 = vrot.slane %v1894, %v1898
  %v1900 = vlaneseq
  %v1901 = vshrl.u32 %v1900, 7
  %v1902 = vsub.s32 1, %v1901
  %v1903 = vrot.slane %v1894, %v1902
  %1906 = vmatprep.subr.bf16.mxu0 %v1799
  %1907 = vmatpush1.bf16.msra.mxu0 %v1798
  %1908 = vmatprep.subr.bf16.mxu0 %v1801
  %1909 = vmatpush1.bf16.msra.mxu0 %v1800
  %1910 = vmatprep.subr.bf16.mxu0 %v1803
  %1911 = vmatpush1.bf16.msra.mxu0 %v1802
  %1912 = vmatprep.subr.bf16.mxu0 %v1805
  %1913 = vmatpush1.bf16.msra.mxu0 %v1804
  %1914 = vmatprep.subr.bf16.mxu0 %v1807
  %1915 = vmatpush1.bf16.msra.mxu0 %v1806
  %1916 = vmatprep.subr.bf16.mxu0 %v1809
  %1917 = vmatpush1.bf16.msra.mxu0 %v1808
  %1918 = vmatprep.subr.bf16.mxu0 %v1811
  %1919 = vmatpush1.bf16.msra.mxu0 %v1810
  %1920 = vmatprep.subr.bf16.mxu0 %v1813
  %1921 = vmatpush1.bf16.msra.mxu0 %v1812
  %1922 = vmatprep.subr.bf16.mxu0 %v1815
  %1923 = vmatpush1.bf16.msra.mxu0 %v1814
  %1924 = vmatprep.subr.bf16.mxu0 %v1817
  %1925 = vmatpush1.bf16.msra.mxu0 %v1816
  %1926 = vmatprep.subr.bf16.mxu0 %v1819
  %1927 = vmatpush1.bf16.msra.mxu0 %v1818
  %1928 = vmatprep.subr.bf16.mxu0 %v1821
  %1929 = vmatpush1.bf16.msra.mxu0 %v1820
  %1930 = vmatprep.subr.bf16.mxu0 %v1823
  %1931 = vmatpush1.bf16.msra.mxu0 %v1822
  %1932 = vmatprep.subr.bf16.mxu0 %v1825
  %1933 = vmatpush1.bf16.msra.mxu0 %v1824
  %1934 = vmatprep.subr.bf16.mxu0 %v1827
  %1935 = vmatpush1.bf16.msra.mxu0 %v1826
  %1936 = vmatprep.subr.bf16.mxu0 %v1829
  %1937 = vmatpush1.bf16.msra.mxu0 %v1828
  %1938 = vmatprep.mubr.bf16.mxu0 %v1787
  %1939 = vmatmul.mubr.bf16.gmra.mrb[0].mxu0 %v1786
  %v1940 = vpop.f32.mrb[0].mxu0
  %v1941 = vadd.f32 %v1899, %v1940
  %v1942 = vpop.f32.mrb[0].mxu0
  %v1943 = vadd.f32 %v1903, %v1942
  %v1944 = vpop.f32.mrb[0].mxu0
  %v1945 = vadd.f32 %v1899, %v1944
  %v1946 = vpop.f32.mrb[0].mxu0
  %v1947 = vadd.f32 %v1903, %v1946
  %1948 = vmatprep.mubr.bf16.mxu0 %v1793
  %1949 = vmatmul.mubr.bf16.gmra.mrb[0].mxu0 %v1792
  %v1950 = vpop.f32.mrb[0].mxu0
  %v1951 = vadd.f32 %v1899, %v1950
  %v1952 = vpop.f32.mrb[0].mxu0
  %v1953 = vadd.f32 %v1903, %v1952
  %v1954 = vpop.f32.mrb[0].mxu0
  %v1955 = vadd.f32 %v1899, %v1954
  %v1956 = vpop.f32.mrb[0].mxu0
  %v1957 = vadd.f32 %v1903, %v1956
  %1958 = vdwg.mxu0
  %1959 = vmatprep.subr.bf16.mxu0 %v1831
  %1960 = vmatpush1.bf16.msra.mxu0 %v1830
  %1961 = vmatprep.subr.bf16.mxu0 %v1833
  %1962 = vmatpush1.bf16.msra.mxu0 %v1832
  %1963 = vmatprep.subr.bf16.mxu0 %v1835
  %1964 = vmatpush1.bf16.msra.mxu0 %v1834
  %1965 = vmatprep.subr.bf16.mxu0 %v1837
  %1966 = vmatpush1.bf16.msra.mxu0 %v1836
  %1967 = vmatprep.subr.bf16.mxu0 %v1839
  %1968 = vmatpush1.bf16.msra.mxu0 %v1838
  %1969 = vmatprep.subr.bf16.mxu0 %v1841
  %1970 = vmatpush1.bf16.msra.mxu0 %v1840
  %1971 = vmatprep.subr.bf16.mxu0 %v1843
  %1972 = vmatpush1.bf16.msra.mxu0 %v1842
  %1973 = vmatprep.subr.bf16.mxu0 %v1845
  %1974 = vmatpush1.bf16.msra.mxu0 %v1844
  %1975 = vmatprep.subr.bf16.mxu0 %v1847
  %1976 = vmatpush1.bf16.msra.mxu0 %v1846
  %1977 = vmatprep.subr.bf16.mxu0 %v1849
  %1978 = vmatpush1.bf16.msra.mxu0 %v1848
  %1979 = vmatprep.subr.bf16.mxu0 %v1851
  %1980 = vmatpush1.bf16.msra.mxu0 %v1850
  %1981 = vmatprep.subr.bf16.mxu0 %v1853
  %1982 = vmatpush1.bf16.msra.mxu0 %v1852
  %1983 = vmatprep.subr.bf16.mxu0 %v1855
  %1984 = vmatpush1.bf16.msra.mxu0 %v1854
  %1985 = vmatprep.subr.bf16.mxu0 %v1857
  %1986 = vmatpush1.bf16.msra.mxu0 %v1856
  %1987 = vmatprep.subr.bf16.mxu0 %v1859
  %1988 = vmatpush1.bf16.msra.mxu0 %v1858
  %1989 = vmatprep.subr.bf16.mxu0 %v1861
  %1990 = vmatpush1.bf16.msra.mxu0 %v1860
  %1991 = vmatprep.mubr.bf16.mxu0 %v1789
  %1992 = vmatmul.mubr.bf16.gmra.mrb[0].mxu0 %v1788
  %v1993 = vpop.f32.mrb[0].mxu0
  %v1994 = vadd.f32 %v1941, %v1993
  %v1995 = vpop.f32.mrb[0].mxu0
  %v1996 = vadd.f32 %v1943, %v1995
  %v1997 = vpop.f32.mrb[0].mxu0
  %v1998 = vadd.f32 %v1945, %v1997
  %v1999 = vpop.f32.mrb[0].mxu0
  %v2000 = vadd.f32 %v1947, %v1999
  %2001 = vmatprep.mubr.bf16.mxu0 %v1795
  %2002 = vmatmul.mubr.bf16.gmra.mrb[0].mxu0 %v1794
  %v2003 = vpop.f32.mrb[0].mxu0
  %v2004 = vadd.f32 %v1951, %v2003
  %v2005 = vpop.f32.mrb[0].mxu0
  %v2006 = vadd.f32 %v1953, %v2005
  %v2007 = vpop.f32.mrb[0].mxu0
  %v2008 = vadd.f32 %v1955, %v2007
  %v2009 = vpop.f32.mrb[0].mxu0
  %v2010 = vadd.f32 %v1957, %v2009
  %2011 = vdwg.mxu0
  %2012 = vmatprep.subr.bf16.mxu0 %v1863
  %2013 = vmatpush1.bf16.msra.mxu0 %v1862
  %2014 = vmatprep.subr.bf16.mxu0 %v1865
  %2015 = vmatpush1.bf16.msra.mxu0 %v1864
  %2016 = vmatprep.subr.bf16.mxu0 %v1867
  %2017 = vmatpush1.bf16.msra.mxu0 %v1866
  %2018 = vmatprep.subr.bf16.mxu0 %v1869
  %2019 = vmatpush1.bf16.msra.mxu0 %v1868
  %2020 = vmatprep.subr.bf16.mxu0 %v1871
  %2021 = vmatpush1.bf16.msra.mxu0 %v1870
  %2022 = vmatprep.subr.bf16.mxu0 %v1873
  %2023 = vmatpush1.bf16.msra.mxu0 %v1872
  %2024 = vmatprep.subr.bf16.mxu0 %v1875
  %2025 = vmatpush1.bf16.msra.mxu0 %v1874
  %2026 = vmatprep.subr.bf16.mxu0 %v1877
  %2027 = vmatpush1.bf16.msra.mxu0 %v1876
  %2028 = vmatprep.subr.bf16.mxu0 %v1879
  %2029 = vmatpush1.bf16.msra.mxu0 %v1878
  %2030 = vmatprep.subr.bf16.mxu0 %v1881
  %2031 = vmatpush1.bf16.msra.mxu0 %v1880
  %2032 = vmatprep.subr.bf16.mxu0 %v1883
  %2033 = vmatpush1.bf16.msra.mxu0 %v1882
  %2034 = vmatprep.subr.bf16.mxu0 %v1885
  %2035 = vmatpush1.bf16.msra.mxu0 %v1884
  %2036 = vmatprep.subr.bf16.mxu0 %v1887
  %2037 = vmatpush1.bf16.msra.mxu0 %v1886
  %2038 = vmatprep.subr.bf16.mxu0 %v1889
  %2039 = vmatpush1.bf16.msra.mxu0 %v1888
  %2040 = vmatprep.subr.bf16.mxu0 %v1891
  %2041 = vmatpush1.bf16.msra.mxu0 %v1890
  %2042 = vmatprep.subr.bf16.mxu0 %v1893
  %2043 = vmatpush1.bf16.msra.mxu0 %v1892
  %2044 = vmatprep.mubr.bf16.mxu0 %v1791
  %2045 = vmatmul.mubr.bf16.gmra.mrb[0].mxu0 %v1790
  %v2046 = vpop.f32.mrb[0].mxu0
  %v2047 = vadd.f32 %v1994, %v2046
  %v2048 = vpop.f32.mrb[0].mxu0
  %v2049 = vadd.f32 %v1996, %v2048
  %v2050 = vpop.f32.mrb[0].mxu0
  %v2051 = vadd.f32 %v1998, %v2050
  %v2052 = vpop.f32.mrb[0].mxu0
  %v2053 = vadd.f32 %v2000, %v2052
  %2054 = vmatprep.mubr.bf16.mxu0 %v1797
  %2055 = vmatmul.mubr.bf16.gmra.mrb[0].mxu0 %v1796
  %v2056 = vpop.f32.mrb[0].mxu0
  %v2057 = vadd.f32 %v2004, %v2056
  %v2058 = vpop.f32.mrb[0].mxu0
  %v2059 = vadd.f32 %v2006, %v2058
  %v2060 = vpop.f32.mrb[0].mxu0
  %v2061 = vadd.f32 %v2008, %v2060
  %v2062 = vpop.f32.mrb[0].mxu0
  %v2063 = vadd.f32 %v2010, %v2062
  %2064 = vdwg.mxu0
  %v2065 = vadd.f32 %v2047, %v2051
  %v2066 = vadd.f32 %v2065, %v2057
  %v2067 = vadd.f32 %v2066, %v2061
  %v2068 = vrot.slane %v2067, 4
  %v2069 = vadd.f32 %v2067, %v2068
  %v2070 = vrot.slane %v2069, 2
  %v2071 = vadd.f32 %v2069, %v2070
  %v2072 = vrot.slane %v2071, 1
  %v2073 = vadd.f32 %v2071, %v2072
  %v2074 = vadd.f32 %v2049, %v2053
  %v2075 = vadd.f32 %v2074, %v2059
  %v2076 = vadd.f32 %v2075, %v2063
  %v2077 = vrot.slane %v2076, 4
  %v2078 = vadd.f32 %v2076, %v2077
  %v2079 = vrot.slane %v2078, 2
  %v2080 = vadd.f32 %v2078, %v2079
  %v2081 = vrot.slane %v2080, 1
  %v2082 = vadd.f32 %v2080, %v2081
  %2083 = vrot.lane.b32.xlu0 %v2073, 16
  %v2084 = vpop.permute.xlu0 %2083
  %2085 = vrot.lane.b32.xlu0 %v2082, 16
  %v2086 = vpop.permute.xlu0 %2085
  %v2087 = vlaneseq
  %v2088 = vand.u32 %v2087, 127
  %vm2089 = vcmp.lt.s32.totalorder %v2088, 16
  %v2090 = vsel %vm2089, %v2084, %v2086
  %v2091 = vsel %vm2089, %v2086, %v2084
  %v2092 = vadd.f32 %v2073, %v2091
  %v2093 = vadd.f32 %v2082, %v2090
  %2094 = vrot.lane.b32.xlu0 %v2092, 32
  %v2095 = vpop.permute.xlu0 %2094
  %2096 = vrot.lane.b32.xlu0 %v2093, 32
  %v2097 = vpop.permute.xlu0 %2096
  %vm2098 = vcmp.lt.s32.totalorder %v2088, 32
  %v2099 = vsel %vm2098, %v2095, %v2097
  %v2100 = vsel %vm2098, %v2097, %v2095
  %v2101 = vadd.f32 %v2092, %v2100
  %v2102 = vadd.f32 %v2093, %v2099
  %2103 = vrot.lane.b32.xlu0 %v2101, 64
  %v2104 = vpop.permute.xlu0 %2103
  %2105 = vrot.lane.b32.xlu0 %v2102, 64
  %v2106 = vpop.permute.xlu0 %2105
  %vm2107 = vcmp.lt.s32.totalorder %v2088, 64
  %v2108 = vsel %vm2107, %v2104, %v2106
  %v2109 = vsel %vm2107, %v2106, %v2104
  %v2110 = vadd.f32 %v2101, %v2109
  %v2111 = vadd.f32 %v2102, %v2108
  %v2112 = vadd.f32 %v2110, %v2111
  %v2113 = vmul.f32 %v2112, 0.001953125
  %v2114 = vlaneseq
  %v2115 = vshrl.u32 %v2114, 7
  %v2116 = vsub.s32 0, %v2115
  %v2117 = vrot.slane %v2113, %v2116
  %v2118 = vsub.f32 %v2047, %v2117
  %v2119 = vsub.f32 %v2049, %v2117
  %v2120 = vsub.f32 %v2051, %v2117
  %v2121 = vsub.f32 %v2053, %v2117
  %v2122 = vsub.f32 %v2057, %v2117
  %v2123 = vsub.f32 %v2059, %v2117
  %v2124 = vsub.f32 %v2061, %v2117
  %v2125 = vsub.f32 %v2063, %v2117
  %v2126 = vmul.f32 %v2118, %v2118
  %v2127 = vmul.f32 %v2119, %v2119
  %v2128 = vmul.f32 %v2120, %v2120
  %v2129 = vmul.f32 %v2121, %v2121
  %v2130 = vmul.f32 %v2122, %v2122
  %v2131 = vmul.f32 %v2123, %v2123
  %v2132 = vmul.f32 %v2124, %v2124
  %v2133 = vmul.f32 %v2125, %v2125
  %v2134 = vadd.f32 %v2126, %v2128
  %v2135 = vadd.f32 %v2134, %v2130
  %v2136 = vadd.f32 %v2135, %v2132
  %v2137 = vrot.slane %v2136, 4
  %v2138 = vadd.f32 %v2136, %v2137
  %v2139 = vrot.slane %v2138, 2
  %v2140 = vadd.f32 %v2138, %v2139
  %v2141 = vrot.slane %v2140, 1
  %v2142 = vadd.f32 %v2140, %v2141
  %v2143 = vadd.f32 %v2127, %v2129
  %v2144 = vadd.f32 %v2143, %v2131
  %v2145 = vadd.f32 %v2144, %v2133
  %v2146 = vrot.slane %v2145, 4
  %v2147 = vadd.f32 %v2145, %v2146
  %v2148 = vrot.slane %v2147, 2
  %v2149 = vadd.f32 %v2147, %v2148
  %v2150 = vrot.slane %v2149, 1
  %v2151 = vadd.f32 %v2149, %v2150
  %2152 = vrot.lane.b32.xlu0 %v2142, 16
  %v2153 = vpop.permute.xlu0 %2152
  %2154 = vrot.lane.b32.xlu0 %v2151, 16
  %v2155 = vpop.permute.xlu0 %2154
  %v2156 = vsel %vm2089, %v2153, %v2155
  %v2157 = vsel %vm2089, %v2155, %v2153
  %v2158 = vadd.f32 %v2142, %v2157
  %v2159 = vadd.f32 %v2151, %v2156
  %2160 = vrot.lane.b32.xlu0 %v2158, 32
  %v2161 = vpop.permute.xlu0 %2160
  %2162 = vrot.lane.b32.xlu0 %v2159, 32
  %v2163 = vpop.permute.xlu0 %2162
  %v2164 = vsel %vm2098, %v2161, %v2163
  %v2165 = vsel %vm2098, %v2163, %v2161
  %v2166 = vadd.f32 %v2158, %v2165
  %v2167 = vadd.f32 %v2159, %v2164
  %2168 = vrot.lane.b32.xlu0 %v2166, 64
  %v2169 = vpop.permute.xlu0 %2168
  %2170 = vrot.lane.b32.xlu0 %v2167, 64
  %v2171 = vpop.permute.xlu0 %2170
  %v2172 = vsel %vm2107, %v2169, %v2171
  %v2173 = vsel %vm2107, %v2171, %v2169
  %v2174 = vadd.f32 %v2166, %v2173
  %v2175 = vadd.f32 %v2167, %v2172
  %v2176 = vadd.f32 %v2174, %v2175
  %v2177 = vmul.f32 %v2176, 0.001953125
  %v2178 = vadd.f32 %v2177, 1e-05
  %v2179 = vrsqrt.pop %v2178
  %v2180 = vlaneseq
  %v2181 = vshrl.u32 %v2180, 7
  %v2182 = vsub.s32 0, %v2181
  %v2183 = vrot.slane %v2179, %v2182
  %v2184 = vmul.f32 %v2118, %v2183
  %v2185 = vmul.f32 %v2119, %v2183
  %v2186 = vmul.f32 %v2120, %v2183
  %v2187 = vmul.f32 %v2121, %v2183
  %v2188 = vmul.f32 %v2122, %v2183
  %v2189 = vmul.f32 %v2123, %v2183
  %v2190 = vmul.f32 %v2124, %v2183
  %v2191 = vmul.f32 %v2125, %v2183
  %v2192 = vmax.f32 %v2184, 0.0
  %v2193 = vmax.f32 %v2185, 0.0
  %v2194 = vmax.f32 %v2186, 0.0
  %v2195 = vmax.f32 %v2187, 0.0
  %v2196 = vmax.f32 %v2188, 0.0
  %v2197 = vmax.f32 %v2189, 0.0
  %v2198 = vmax.f32 %v2190, 0.0
  %v2199 = vmax.f32 %v2191, 0.0
  %s2200 = scalar_lea.vmem %s2, 1536
  %p2202 = scmp.lt.u32.totalorder 4, 8
  %p2203 = pneg %p2202
  // Predicated region
  $region84: #{conv_block.1} parent=0 // pred_check
    _
  $region85: #{conv_block.1} parent=0 // pred_check_branch
    %2205 = sbr.rel (%p2202) target = $region87
  $region86: #{conv_block.1} parent=0 // pred_region
    %s2602 = sand.u32 4, 7
    %p2603 = scmp.eq.s32.totalorder %s2602, 0
    %p2604 = pneg %p2603
    // Predicated region
    $region99: #{conv_block.1} parent=86 // pred_check
      _
    $region100: #{conv_block.1} parent=86 // pred_check_branch
      %2606 = sbr.rel (%p2603) target = $region102
    $region101: #{conv_block.1} parent=86 // pred_region
      %s2607 = sand.u32 4, 7
      %s2608 = ssub.s32 4, %s2607
      %s2609 = scalar_lea.vmem %s2200, %s2608
      %s2610 = ssub.s32 4, %s2607
      %s2611 = scalar_lea.vmem [#allocation2], %s2610
      loop: start=0, step=1, limit=1
      $region103: #{conv_block.1} parent=101 // loop_pre_header
        _
      $region104: #{conv_block.1} parent=101 // loop_header
        %s2613 = sphi 0, %s2617
        %p2614 = scmp.ge.s32.totalorder %s2613, 1
        %s2618 = sphi %s2200, %s2200
        %s2619 = sphi [#allocation2], [#allocation2]
      $region105: #{conv_block.1} parent=101 // loop_header_branch
        %2616 = sbr.rel (%p2614) target = $region109
      $region106: #{conv_block.1} parent=101 // loop_body
        _
      $region107: #{conv_block.1} parent=101 // loop_footer
        %s2617 = sadd.s32 1, %s2613
      $region108: #{conv_block.1} parent=101 // loop_footer_branch
        %2612 = sbr.rel target = $region104
      $region109: #{conv_block.1} parent=101 // loop_exit
        _
      %s2620 = sshllo.u32 0, %s2607
      loop: start=0, step=1, limit=1
      $region110: #{conv_block.1} parent=101 // loop_pre_header
        _
      $region111: #{conv_block.1} parent=101 // loop_header
        %s2622 = sphi 0, %s2626
        %p2623 = scmp.ge.s32.totalorder %s2622, 1
        %s2627 = sphi %s2609, %s2609
        %s2628 = sphi %s2611, %s2611
      $region112: #{conv_block.1} parent=101 // loop_header_branch
        %2625 = sbr.rel (%p2623) target = $region116
      $region113: #{conv_block.1} parent=101 // loop_body
        %v2629 = vld [vmem:[%s2627] sm:%s2620]
        %2630 = vst [vmem:[%s2628] sm:%s2620] %v2629
        %v2631 = vld [vmem:[%s2627 + $0x8] sm:%s2620]
        %2632 = vst [vmem:[%s2628 + $0x4] sm:%s2620] %v2631
        %v2633 = vld [vmem:[%s2627 + $0x4] sm:%s2620]
        %2634 = vst [vmem:[%s2628 + $0x8] sm:%s2620] %v2633
        %v2635 = vld [vmem:[%s2627 + $0xc] sm:%s2620]
        %2636 = vst [vmem:[%s2628 + $0xc] sm:%s2620] %v2635
        %v2637 = vld [vmem:[%s2627 + $0x10] sm:%s2620]
        %2638 = vst [vmem:[%s2628 + $0x10] sm:%s2620] %v2637
        %v2639 = vld [vmem:[%s2627 + $0x18] sm:%s2620]
        %2640 = vst [vmem:[%s2628 + $0x14] sm:%s2620] %v2639
        %v2641 = vld [vmem:[%s2627 + $0x14] sm:%s2620]
        %2642 = vst [vmem:[%s2628 + $0x18] sm:%s2620] %v2641
        %v2643 = vld [vmem:[%s2627 + $0x1c] sm:%s2620]
        %2644 = vst [vmem:[%s2628 + $0x1c] sm:%s2620] %v2643
        %v2645 = vld [vmem:[%s2627 + $0x20] sm:%s2620]
        %2646 = vst [vmem:[%s2628 + $0x20] sm:%s2620] %v2645
        %v2647 = vld [vmem:[%s2627 + $0x28] sm:%s2620]
        %2648 = vst [vmem:[%s2628 + $0x24] sm:%s2620] %v2647
        %v2649 = vld [vmem:[%s2627 + $0x24] sm:%s2620]
        %2650 = vst [vmem:[%s2628 + $0x28] sm:%s2620] %v2649
        %v2651 = vld [vmem:[%s2627 + $0x2c] sm:%s2620]
        %2652 = vst [vmem:[%s2628 + $0x2c] sm:%s2620] %v2651
        %v2653 = vld [vmem:[%s2627 + $0x30] sm:%s2620]
        %2654 = vst [vmem:[%s2628 + $0x30] sm:%s2620] %v2653
        %v2655 = vld [vmem:[%s2627 + $0x38] sm:%s2620]
        %2656 = vst [vmem:[%s2628 + $0x34] sm:%s2620] %v2655
        %v2657 = vld [vmem:[%s2627 + $0x34] sm:%s2620]
        %2658 = vst [vmem:[%s2628 + $0x38] sm:%s2620] %v2657
        %v2659 = vld [vmem:[%s2627 + $0x3c] sm:%s2620]
        %2660 = vst [vmem:[%s2628 + $0x3c] sm:%s2620] %v2659
        %v2661 = vld [vmem:[%s2627 + $0x40] sm:%s2620]
        %2662 = vst [vmem:[%s2628 + $0x40] sm:%s2620] %v2661
        %v2663 = vld [vmem:[%s2627 + $0x48] sm:%s2620]
        %2664 = vst [vmem:[%s2628 + $0x44] sm:%s2620] %v2663
        %v2665 = vld [vmem:[%s2627 + $0x44] sm:%s2620]
        %2666 = vst [vmem:[%s2628 + $0x48] sm:%s2620] %v2665
        %v2667 = vld [vmem:[%s2627 + $0x4c] sm:%s2620]
        %2668 = vst [vmem:[%s2628 + $0x4c] sm:%s2620] %v2667
        %v2669 = vld [vmem:[%s2627 + $0x50] sm:%s2620]
        %2670 = vst [vmem:[%s2628 + $0x50] sm:%s2620] %v2669
        %v2671 = vld [vmem:[%s2627 + $0x58] sm:%s2620]
        %2672 = vst [vmem:[%s2628 + $0x54] sm:%s2620] %v2671
        %v2673 = vld [vmem:[%s2627 + $0x54] sm:%s2620]
        %2674 = vst [vmem:[%s2628 + $0x58] sm:%s2620] %v2673
        %v2675 = vld [vmem:[%s2627 + $0x5c] sm:%s2620]
        %2676 = vst [vmem:[%s2628 + $0x5c] sm:%s2620] %v2675
        %v2677 = vld [vmem:[%s2627 + $0x60] sm:%s2620]
        %2678 = vst [vmem:[%s2628 + $0x60] sm:%s2620] %v2677
        %v2679 = vld [vmem:[%s2627 + $0x68] sm:%s2620]
        %2680 = vst [vmem:[%s2628 + $0x64] sm:%s2620] %v2679
        %v2681 = vld [vmem:[%s2627 + $0x64] sm:%s2620]
        %2682 = vst [vmem:[%s2628 + $0x68] sm:%s2620] %v2681
        %v2683 = vld [vmem:[%s2627 + $0x6c] sm:%s2620]
        %2684 = vst [vmem:[%s2628 + $0x6c] sm:%s2620] %v2683
        %v2685 = vld [vmem:[%s2627 + $0x70] sm:%s2620]
        %2686 = vst [vmem:[%s2628 + $0x70] sm:%s2620] %v2685
        %v2687 = vld [vmem:[%s2627 + $0x78] sm:%s2620]
        %2688 = vst [vmem:[%s2628 + $0x74] sm:%s2620] %v2687
        %v2689 = vld [vmem:[%s2627 + $0x74] sm:%s2620]
        %2690 = vst [vmem:[%s2628 + $0x78] sm:%s2620] %v2689
        %v2691 = vld [vmem:[%s2627 + $0x7c] sm:%s2620]
        %2692 = vst [vmem:[%s2628 + $0x7c] sm:%s2620] %v2691
        %v2693 = vld [vmem:[%s2627 + $0x80] sm:%s2620]
        %2694 = vst [vmem:[%s2628 + $0x80] sm:%s2620] %v2693
        %v2695 = vld [vmem:[%s2627 + $0x88] sm:%s2620]
        %2696 = vst [vmem:[%s2628 + $0x84] sm:%s2620] %v2695
        %v2697 = vld [vmem:[%s2627 + $0x84] sm:%s2620]
        %2698 = vst [vmem:[%s2628 + $0x88] sm:%s2620] %v2697
        %v2699 = vld [vmem:[%s2627 + $0x8c] sm:%s2620]
        %2700 = vst [vmem:[%s2628 + $0x8c] sm:%s2620] %v2699
        %v2701 = vld [vmem:[%s2627 + $0x90] sm:%s2620]
        %2702 = vst [vmem:[%s2628 + $0x90] sm:%s2620] %v2701
        %v2703 = vld [vmem:[%s2627 + $0x98] sm:%s2620]
        %2704 = vst [vmem:[%s2628 + $0x94] sm:%s2620] %v2703
        %v2705 = vld [vmem:[%s2627 + $0x94] sm:%s2620]
        %2706 = vst [vmem:[%s2628 + $0x98] sm:%s2620] %v2705
        %v2707 = vld [vmem:[%s2627 + $0x9c] sm:%s2620]
        %2708 = vst [vmem:[%s2628 + $0x9c] sm:%s2620] %v2707
        %v2709 = vld [vmem:[%s2627 + $0xa0] sm:%s2620]
        %2710 = vst [vmem:[%s2628 + $0xa0] sm:%s2620] %v2709
        %v2711 = vld [vmem:[%s2627 + $0xa8] sm:%s2620]
        %2712 = vst [vmem:[%s2628 + $0xa4] sm:%s2620] %v2711
        %v2713 = vld [vmem:[%s2627 + $0xa4] sm:%s2620]
        %2714 = vst [vmem:[%s2628 + $0xa8] sm:%s2620] %v2713
        %v2715 = vld [vmem:[%s2627 + $0xac] sm:%s2620]
        %2716 = vst [vmem:[%s2628 + $0xac] sm:%s2620] %v2715
        %v2717 = vld [vmem:[%s2627 + $0xb0] sm:%s2620]
        %2718 = vst [vmem:[%s2628 + $0xb0] sm:%s2620] %v2717
        %v2719 = vld [vmem:[%s2627 + $0xb8] sm:%s2620]
        %2720 = vst [vmem:[%s2628 + $0xb4] sm:%s2620] %v2719
        %v2721 = vld [vmem:[%s2627 + $0xb4] sm:%s2620]
        %2722 = vst [vmem:[%s2628 + $0xb8] sm:%s2620] %v2721
        %v2723 = vld [vmem:[%s2627 + $0xbc] sm:%s2620]
        %2724 = vst [vmem:[%s2628 + $0xbc] sm:%s2620] %v2723
        %v2725 = vld [vmem:[%s2627 + $0xc0] sm:%s2620]
        %2726 = vst [vmem:[%s2628 + $0xc0] sm:%s2620] %v2725
        %v2727 = vld [vmem:[%s2627 + $0xc8] sm:%s2620]
        %2728 = vst [vmem:[%s2628 + $0xc4] sm:%s2620] %v2727
        %v2729 = vld [vmem:[%s2627 + $0xc4] sm:%s2620]
        %2730 = vst [vmem:[%s2628 + $0xc8] sm:%s2620] %v2729
        %v2731 = vld [vmem:[%s2627 + $0xcc] sm:%s2620]
        %2732 = vst [vmem:[%s2628 + $0xcc] sm:%s2620] %v2731
        %v2733 = vld [vmem:[%s2627 + $0xd0] sm:%s2620]
        %2734 = vst [vmem:[%s2628 + $0xd0] sm:%s2620] %v2733
        %v2735 = vld [vmem:[%s2627 + $0xd8] sm:%s2620]
        %2736 = vst [vmem:[%s2628 + $0xd4] sm:%s2620] %v2735
        %v2737 = vld [vmem:[%s2627 + $0xd4] sm:%s2620]
        %2738 = vst [vmem:[%s2628 + $0xd8] sm:%s2620] %v2737
        %v2739 = vld [vmem:[%s2627 + $0xdc] sm:%s2620]
        %2740 = vst [vmem:[%s2628 + $0xdc] sm:%s2620] %v2739
        %v2741 = vld [vmem:[%s2627 + $0xe0] sm:%s2620]
        %2742 = vst [vmem:[%s2628 + $0xe0] sm:%s2620] %v2741
        %v2743 = vld [vmem:[%s2627 + $0xe8] sm:%s2620]
        %2744 = vst [vmem:[%s2628 + $0xe4] sm:%s2620] %v2743
        %v2745 = vld [vmem:[%s2627 + $0xe4] sm:%s2620]
        %2746 = vst [vmem:[%s2628 + $0xe8] sm:%s2620] %v2745
        %v2747 = vld [vmem:[%s2627 + $0xec] sm:%s2620]
        %2748 = vst [vmem:[%s2628 + $0xec] sm:%s2620] %v2747
        %v2749 = vld [vmem:[%s2627 + $0xf0] sm:%s2620]
        %2750 = vst [vmem:[%s2628 + $0xf0] sm:%s2620] %v2749
        %v2751 = vld [vmem:[%s2627 + $0xf8] sm:%s2620]
        %2752 = vst [vmem:[%s2628 + $0xf4] sm:%s2620] %v2751
        %v2753 = vld [vmem:[%s2627 + $0xf4] sm:%s2620]
        %2754 = vst [vmem:[%s2628 + $0xf8] sm:%s2620] %v2753
        %v2755 = vld [vmem:[%s2627 + $0xfc] sm:%s2620]
        %2756 = vst [vmem:[%s2628 + $0xfc] sm:%s2620] %v2755
        %v2757 = vld [vmem:[%s2627 + $0x100] sm:%s2620]
        %2758 = vst [vmem:[%s2628 + $0x100] sm:%s2620] %v2757
        %v2759 = vld [vmem:[%s2627 + $0x108] sm:%s2620]
        %2760 = vst [vmem:[%s2628 + $0x104] sm:%s2620] %v2759
        %v2761 = vld [vmem:[%s2627 + $0x104] sm:%s2620]
        %2762 = vst [vmem:[%s2628 + $0x108] sm:%s2620] %v2761
        %v2763 = vld [vmem:[%s2627 + $0x10c] sm:%s2620]
        %2764 = vst [vmem:[%s2628 + $0x10c] sm:%s2620] %v2763
        %v2765 = vld [vmem:[%s2627 + $0x110] sm:%s2620]
        %2766 = vst [vmem:[%s2628 + $0x110] sm:%s2620] %v2765
        %v2767 = vld [vmem:[%s2627 + $0x118] sm:%s2620]
        %2768 = vst [vmem:[%s2628 + $0x114] sm:%s2620] %v2767
        %v2769 = vld [vmem:[%s2627 + $0x114] sm:%s2620]
        %2770 = vst [vmem:[%s2628 + $0x118] sm:%s2620] %v2769
        %v2771 = vld [vmem:[%s2627 + $0x11c] sm:%s2620]
        %2772 = vst [vmem:[%s2628 + $0x11c] sm:%s2620] %v2771
        %v2773 = vld [vmem:[%s2627 + $0x120] sm:%s2620]
        %2774 = vst [vmem:[%s2628 + $0x120] sm:%s2620] %v2773
        %v2775 = vld [vmem:[%s2627 + $0x128] sm:%s2620]
        %2776 = vst [vmem:[%s2628 + $0x124] sm:%s2620] %v2775
        %v2777 = vld [vmem:[%s2627 + $0x124] sm:%s2620]
        %2778 = vst [vmem:[%s2628 + $0x128] sm:%s2620] %v2777
        %v2779 = vld [vmem:[%s2627 + $0x12c] sm:%s2620]
        %2780 = vst [vmem:[%s2628 + $0x12c] sm:%s2620] %v2779
        %v2781 = vld [vmem:[%s2627 + $0x130] sm:%s2620]
        %2782 = vst [vmem:[%s2628 + $0x130] sm:%s2620] %v2781
        %v2783 = vld [vmem:[%s2627 + $0x138] sm:%s2620]
        %2784 = vst [vmem:[%s2628 + $0x134] sm:%s2620] %v2783
        %v2785 = vld [vmem:[%s2627 + $0x134] sm:%s2620]
        %2786 = vst [vmem:[%s2628 + $0x138] sm:%s2620] %v2785
        %v2787 = vld [vmem:[%s2627 + $0x13c] sm:%s2620]
        %2788 = vst [vmem:[%s2628 + $0x13c] sm:%s2620] %v2787
        %v2789 = vld [vmem:[%s2627 + $0x140] sm:%s2620]
        %2790 = vst [vmem:[%s2628 + $0x140] sm:%s2620] %v2789
        %v2791 = vld [vmem:[%s2627 + $0x148] sm:%s2620]
        %2792 = vst [vmem:[%s2628 + $0x144] sm:%s2620] %v2791
        %v2793 = vld [vmem:[%s2627 + $0x144] sm:%s2620]
        %2794 = vst [vmem:[%s2628 + $0x148] sm:%s2620] %v2793
        %v2795 = vld [vmem:[%s2627 + $0x14c] sm:%s2620]
        %2796 = vst [vmem:[%s2628 + $0x14c] sm:%s2620] %v2795
        %v2797 = vld [vmem:[%s2627 + $0x150] sm:%s2620]
        %2798 = vst [vmem:[%s2628 + $0x150] sm:%s2620] %v2797
        %v2799 = vld [vmem:[%s2627 + $0x158] sm:%s2620]
        %2800 = vst [vmem:[%s2628 + $0x154] sm:%s2620] %v2799
        %v2801 = vld [vmem:[%s2627 + $0x154] sm:%s2620]
        %2802 = vst [vmem:[%s2628 + $0x158] sm:%s2620] %v2801
        %v2803 = vld [vmem:[%s2627 + $0x15c] sm:%s2620]
        %2804 = vst [vmem:[%s2628 + $0x15c] sm:%s2620] %v2803
        %v2805 = vld [vmem:[%s2627 + $0x160] sm:%s2620]
        %2806 = vst [vmem:[%s2628 + $0x160] sm:%s2620] %v2805
        %v2807 = vld [vmem:[%s2627 + $0x168] sm:%s2620]
        %2808 = vst [vmem:[%s2628 + $0x164] sm:%s2620] %v2807
        %v2809 = vld [vmem:[%s2627 + $0x164] sm:%s2620]
        %2810 = vst [vmem:[%s2628 + $0x168] sm:%s2620] %v2809
        %v2811 = vld [vmem:[%s2627 + $0x16c] sm:%s2620]
        %2812 = vst [vmem:[%s2628 + $0x16c] sm:%s2620] %v2811
        %v2813 = vld [vmem:[%s2627 + $0x170] sm:%s2620]
        %2814 = vst [vmem:[%s2628 + $0x170] sm:%s2620] %v2813
        %v2815 = vld [vmem:[%s2627 + $0x178] sm:%s2620]
        %2816 = vst [vmem:[%s2628 + $0x174] sm:%s2620] %v2815
        %v2817 = vld [vmem:[%s2627 + $0x174] sm:%s2620]
        %2818 = vst [vmem:[%s2628 + $0x178] sm:%s2620] %v2817
        %v2819 = vld [vmem:[%s2627 + $0x17c] sm:%s2620]
        %2820 = vst [vmem:[%s2628 + $0x17c] sm:%s2620] %v2819
        %v2821 = vld [vmem:[%s2627 + $0x180] sm:%s2620]
        %2822 = vst [vmem:[%s2628 + $0x180] sm:%s2620] %v2821
        %v2823 = vld [vmem:[%s2627 + $0x188] sm:%s2620]
        %2824 = vst [vmem:[%s2628 + $0x184] sm:%s2620] %v2823
        %v2825 = vld [vmem:[%s2627 + $0x184] sm:%s2620]
        %2826 = vst [vmem:[%s2628 + $0x188] sm:%s2620] %v2825
        %v2827 = vld [vmem:[%s2627 + $0x18c] sm:%s2620]
        %2828 = vst [vmem:[%s2628 + $0x18c] sm:%s2620] %v2827
        %v2829 = vld [vmem:[%s2627 + $0x190] sm:%s2620]
        %2830 = vst [vmem:[%s2628 + $0x190] sm:%s2620] %v2829
        %v2831 = vld [vmem:[%s2627 + $0x198] sm:%s2620]
        %2832 = vst [vmem:[%s2628 + $0x194] sm:%s2620] %v2831
        %v2833 = vld [vmem:[%s2627 + $0x194] sm:%s2620]
        %2834 = vst [vmem:[%s2628 + $0x198] sm:%s2620] %v2833
        %v2835 = vld [vmem:[%s2627 + $0x19c] sm:%s2620]
        %2836 = vst [vmem:[%s2628 + $0x19c] sm:%s2620] %v2835
        %v2837 = vld [vmem:[%s2627 + $0x1a0] sm:%s2620]
        %2838 = vst [vmem:[%s2628 + $0x1a0] sm:%s2620] %v2837
        %v2839 = vld [vmem:[%s2627 + $0x1a8] sm:%s2620]
        %2840 = vst [vmem:[%s2628 + $0x1a4] sm:%s2620] %v2839
        %v2841 = vld [vmem:[%s2627 + $0x1a4] sm:%s2620]
        %2842 = vst [vmem:[%s2628 + $0x1a8] sm:%s2620] %v2841
        %v2843 = vld [vmem:[%s2627 + $0x1ac] sm:%s2620]
        %2844 = vst [vmem:[%s2628 + $0x1ac] sm:%s2620] %v2843
        %v2845 = vld [vmem:[%s2627 + $0x1b0] sm:%s2620]
        %2846 = vst [vmem:[%s2628 + $0x1b0] sm:%s2620] %v2845
        %v2847 = vld [vmem:[%s2627 + $0x1b8] sm:%s2620]
        %2848 = vst [vmem:[%s2628 + $0x1b4] sm:%s2620] %v2847
        %v2849 = vld [vmem:[%s2627 + $0x1b4] sm:%s2620]
        %2850 = vst [vmem:[%s2628 + $0x1b8] sm:%s2620] %v2849
        %v2851 = vld [vmem:[%s2627 + $0x1bc] sm:%s2620]
        %2852 = vst [vmem:[%s2628 + $0x1bc] sm:%s2620] %v2851
        %v2853 = vld [vmem:[%s2627 + $0x1c0] sm:%s2620]
        %2854 = vst [vmem:[%s2628 + $0x1c0] sm:%s2620] %v2853
        %v2855 = vld [vmem:[%s2627 + $0x1c8] sm:%s2620]
        %2856 = vst [vmem:[%s2628 + $0x1c4] sm:%s2620] %v2855
        %v2857 = vld [vmem:[%s2627 + $0x1c4] sm:%s2620]
        %2858 = vst [vmem:[%s2628 + $0x1c8] sm:%s2620] %v2857
        %v2859 = vld [vmem:[%s2627 + $0x1cc] sm:%s2620]
        %2860 = vst [vmem:[%s2628 + $0x1cc] sm:%s2620] %v2859
        %v2861 = vld [vmem:[%s2627 + $0x1d0] sm:%s2620]
        %2862 = vst [vmem:[%s2628 + $0x1d0] sm:%s2620] %v2861
        %v2863 = vld [vmem:[%s2627 + $0x1d8] sm:%s2620]
        %2864 = vst [vmem:[%s2628 + $0x1d4] sm:%s2620] %v2863
        %v2865 = vld [vmem:[%s2627 + $0x1d4] sm:%s2620]
        %2866 = vst [vmem:[%s2628 + $0x1d8] sm:%s2620] %v2865
        %v2867 = vld [vmem:[%s2627 + $0x1dc] sm:%s2620]
        %2868 = vst [vmem:[%s2628 + $0x1dc] sm:%s2620] %v2867
        %v2869 = vld [vmem:[%s2627 + $0x1e0] sm:%s2620]
        %2870 = vst [vmem:[%s2628 + $0x1e0] sm:%s2620] %v2869
        %v2871 = vld [vmem:[%s2627 + $0x1e8] sm:%s2620]
        %2872 = vst [vmem:[%s2628 + $0x1e4] sm:%s2620] %v2871
        %v2873 = vld [vmem:[%s2627 + $0x1e4] sm:%s2620]
        %2874 = vst [vmem:[%s2628 + $0x1e8] sm:%s2620] %v2873
        %v2875 = vld [vmem:[%s2627 + $0x1ec] sm:%s2620]
        %2876 = vst [vmem:[%s2628 + $0x1ec] sm:%s2620] %v2875
        %v2877 = vld [vmem:[%s2627 + $0x1f0] sm:%s2620]
        %2878 = vst [vmem:[%s2628 + $0x1f0] sm:%s2620] %v2877
        %v2879 = vld [vmem:[%s2627 + $0x1f8] sm:%s2620]
        %2880 = vst [vmem:[%s2628 + $0x1f4] sm:%s2620] %v2879
        %v2881 = vld [vmem:[%s2627 + $0x1f4] sm:%s2620]
        %2882 = vst [vmem:[%s2628 + $0x1f8] sm:%s2620] %v2881
        %v2883 = vld [vmem:[%s2627 + $0x1fc] sm:%s2620]
        %2884 = vst [vmem:[%s2628 + $0x1fc] sm:%s2620] %v2883
        %v2885 = vld [vmem:[%s2627 + $0x200] sm:%s2620]
        %2886 = vst [vmem:[%s2628 + $0x200] sm:%s2620] %v2885
        %v2887 = vld [vmem:[%s2627 + $0x208] sm:%s2620]
        %2888 = vst [vmem:[%s2628 + $0x204] sm:%s2620] %v2887
        %v2889 = vld [vmem:[%s2627 + $0x204] sm:%s2620]
        %2890 = vst [vmem:[%s2628 + $0x208] sm:%s2620] %v2889
        %v2891 = vld [vmem:[%s2627 + $0x20c] sm:%s2620]
        %2892 = vst [vmem:[%s2628 + $0x20c] sm:%s2620] %v2891
        %v2893 = vld [vmem:[%s2627 + $0x210] sm:%s2620]
        %2894 = vst [vmem:[%s2628 + $0x210] sm:%s2620] %v2893
        %v2895 = vld [vmem:[%s2627 + $0x218] sm:%s2620]
        %2896 = vst [vmem:[%s2628 + $0x214] sm:%s2620] %v2895
        %v2897 = vld [vmem:[%s2627 + $0x214] sm:%s2620]
        %2898 = vst [vmem:[%s2628 + $0x218] sm:%s2620] %v2897
        %v2899 = vld [vmem:[%s2627 + $0x21c] sm:%s2620]
        %2900 = vst [vmem:[%s2628 + $0x21c] sm:%s2620] %v2899
        %v2901 = vld [vmem:[%s2627 + $0x220] sm:%s2620]
        %2902 = vst [vmem:[%s2628 + $0x220] sm:%s2620] %v2901
        %v2903 = vld [vmem:[%s2627 + $0x228] sm:%s2620]
        %2904 = vst [vmem:[%s2628 + $0x224] sm:%s2620] %v2903
        %v2905 = vld [vmem:[%s2627 + $0x224] sm:%s2620]
        %2906 = vst [vmem:[%s2628 + $0x228] sm:%s2620] %v2905
        %v2907 = vld [vmem:[%s2627 + $0x22c] sm:%s2620]
        %2908 = vst [vmem:[%s2628 + $0x22c] sm:%s2620] %v2907
        %v2909 = vld [vmem:[%s2627 + $0x230] sm:%s2620]
        %2910 = vst [vmem:[%s2628 + $0x230] sm:%s2620] %v2909
        %v2911 = vld [vmem:[%s2627 + $0x238] sm:%s2620]
        %2912 = vst [vmem:[%s2628 + $0x234] sm:%s2620] %v2911
        %v2913 = vld [vmem:[%s2627 + $0x234] sm:%s2620]
        %2914 = vst [vmem:[%s2628 + $0x238] sm:%s2620] %v2913
        %v2915 = vld [vmem:[%s2627 + $0x23c] sm:%s2620]
        %2916 = vst [vmem:[%s2628 + $0x23c] sm:%s2620] %v2915
        %v2917 = vld [vmem:[%s2627 + $0x240] sm:%s2620]
        %2918 = vst [vmem:[%s2628 + $0x240] sm:%s2620] %v2917
        %v2919 = vld [vmem:[%s2627 + $0x248] sm:%s2620]
        %2920 = vst [vmem:[%s2628 + $0x244] sm:%s2620] %v2919
        %v2921 = vld [vmem:[%s2627 + $0x244] sm:%s2620]
        %2922 = vst [vmem:[%s2628 + $0x248] sm:%s2620] %v2921
        %v2923 = vld [vmem:[%s2627 + $0x24c] sm:%s2620]
        %2924 = vst [vmem:[%s2628 + $0x24c] sm:%s2620] %v2923
        %v2925 = vld [vmem:[%s2627 + $0x250] sm:%s2620]
        %2926 = vst [vmem:[%s2628 + $0x250] sm:%s2620] %v2925
        %v2927 = vld [vmem:[%s2627 + $0x258] sm:%s2620]
        %2928 = vst [vmem:[%s2628 + $0x254] sm:%s2620] %v2927
        %v2929 = vld [vmem:[%s2627 + $0x254] sm:%s2620]
        %2930 = vst [vmem:[%s2628 + $0x258] sm:%s2620] %v2929
        %v2931 = vld [vmem:[%s2627 + $0x25c] sm:%s2620]
        %2932 = vst [vmem:[%s2628 + $0x25c] sm:%s2620] %v2931
        %v2933 = vld [vmem:[%s2627 + $0x260] sm:%s2620]
        %2934 = vst [vmem:[%s2628 + $0x260] sm:%s2620] %v2933
        %v2935 = vld [vmem:[%s2627 + $0x268] sm:%s2620]
        %2936 = vst [vmem:[%s2628 + $0x264] sm:%s2620] %v2935
        %v2937 = vld [vmem:[%s2627 + $0x264] sm:%s2620]
        %2938 = vst [vmem:[%s2628 + $0x268] sm:%s2620] %v2937
        %v2939 = vld [vmem:[%s2627 + $0x26c] sm:%s2620]
        %2940 = vst [vmem:[%s2628 + $0x26c] sm:%s2620] %v2939
        %v2941 = vld [vmem:[%s2627 + $0x270] sm:%s2620]
        %2942 = vst [vmem:[%s2628 + $0x270] sm:%s2620] %v2941
        %v2943 = vld [vmem:[%s2627 + $0x278] sm:%s2620]
        %2944 = vst [vmem:[%s2628 + $0x274] sm:%s2620] %v2943
        %v2945 = vld [vmem:[%s2627 + $0x274] sm:%s2620]
        %2946 = vst [vmem:[%s2628 + $0x278] sm:%s2620] %v2945
        %v2947 = vld [vmem:[%s2627 + $0x27c] sm:%s2620]
        %2948 = vst [vmem:[%s2628 + $0x27c] sm:%s2620] %v2947
        %v2949 = vld [vmem:[%s2627 + $0x280] sm:%s2620]
        %2950 = vst [vmem:[%s2628 + $0x280] sm:%s2620] %v2949
        %v2951 = vld [vmem:[%s2627 + $0x288] sm:%s2620]
        %2952 = vst [vmem:[%s2628 + $0x284] sm:%s2620] %v2951
        %v2953 = vld [vmem:[%s2627 + $0x284] sm:%s2620]
        %2954 = vst [vmem:[%s2628 + $0x288] sm:%s2620] %v2953
        %v2955 = vld [vmem:[%s2627 + $0x28c] sm:%s2620]
        %2956 = vst [vmem:[%s2628 + $0x28c] sm:%s2620] %v2955
        %v2957 = vld [vmem:[%s2627 + $0x290] sm:%s2620]
        %2958 = vst [vmem:[%s2628 + $0x290] sm:%s2620] %v2957
        %v2959 = vld [vmem:[%s2627 + $0x298] sm:%s2620]
        %2960 = vst [vmem:[%s2628 + $0x294] sm:%s2620] %v2959
        %v2961 = vld [vmem:[%s2627 + $0x294] sm:%s2620]
        %2962 = vst [vmem:[%s2628 + $0x298] sm:%s2620] %v2961
        %v2963 = vld [vmem:[%s2627 + $0x29c] sm:%s2620]
        %2964 = vst [vmem:[%s2628 + $0x29c] sm:%s2620] %v2963
        %v2965 = vld [vmem:[%s2627 + $0x2a0] sm:%s2620]
        %2966 = vst [vmem:[%s2628 + $0x2a0] sm:%s2620] %v2965
        %v2967 = vld [vmem:[%s2627 + $0x2a8] sm:%s2620]
        %2968 = vst [vmem:[%s2628 + $0x2a4] sm:%s2620] %v2967
        %v2969 = vld [vmem:[%s2627 + $0x2a4] sm:%s2620]
        %2970 = vst [vmem:[%s2628 + $0x2a8] sm:%s2620] %v2969
        %v2971 = vld [vmem:[%s2627 + $0x2ac] sm:%s2620]
        %2972 = vst [vmem:[%s2628 + $0x2ac] sm:%s2620] %v2971
        %v2973 = vld [vmem:[%s2627 + $0x2b0] sm:%s2620]
        %2974 = vst [vmem:[%s2628 + $0x2b0] sm:%s2620] %v2973
        %v2975 = vld [vmem:[%s2627 + $0x2b8] sm:%s2620]
        %2976 = vst [vmem:[%s2628 + $0x2b4] sm:%s2620] %v2975
        %v2977 = vld [vmem:[%s2627 + $0x2b4] sm:%s2620]
        %2978 = vst [vmem:[%s2628 + $0x2b8] sm:%s2620] %v2977
        %v2979 = vld [vmem:[%s2627 + $0x2bc] sm:%s2620]
        %2980 = vst [vmem:[%s2628 + $0x2bc] sm:%s2620] %v2979
        %v2981 = vld [vmem:[%s2627 + $0x2c0] sm:%s2620]
        %2982 = vst [vmem:[%s2628 + $0x2c0] sm:%s2620] %v2981
        %v2983 = vld [vmem:[%s2627 + $0x2c8] sm:%s2620]
        %2984 = vst [vmem:[%s2628 + $0x2c4] sm:%s2620] %v2983
        %v2985 = vld [vmem:[%s2627 + $0x2c4] sm:%s2620]
        %2986 = vst [vmem:[%s2628 + $0x2c8] sm:%s2620] %v2985
        %v2987 = vld [vmem:[%s2627 + $0x2cc] sm:%s2620]
        %2988 = vst [vmem:[%s2628 + $0x2cc] sm:%s2620] %v2987
        %v2989 = vld [vmem:[%s2627 + $0x2d0] sm:%s2620]
        %2990 = vst [vmem:[%s2628 + $0x2d0] sm:%s2620] %v2989
        %v2991 = vld [vmem:[%s2627 + $0x2d8] sm:%s2620]
        %2992 = vst [vmem:[%s2628 + $0x2d4] sm:%s2620] %v2991
        %v2993 = vld [vmem:[%s2627 + $0x2d4] sm:%s2620]
        %2994 = vst [vmem:[%s2628 + $0x2d8] sm:%s2620] %v2993
        %v2995 = vld [vmem:[%s2627 + $0x2dc] sm:%s2620]
        %2996 = vst [vmem:[%s2628 + $0x2dc] sm:%s2620] %v2995
        %v2997 = vld [vmem:[%s2627 + $0x2e0] sm:%s2620]
        %2998 = vst [vmem:[%s2628 + $0x2e0] sm:%s2620] %v2997
        %v2999 = vld [vmem:[%s2627 + $0x2e8] sm:%s2620]
        %3000 = vst [vmem:[%s2628 + $0x2e4] sm:%s2620] %v2999
        %v3001 = vld [vmem:[%s2627 + $0x2e4] sm:%s2620]
        %3002 = vst [vmem:[%s2628 + $0x2e8] sm:%s2620] %v3001
        %v3003 = vld [vmem:[%s2627 + $0x2ec] sm:%s2620]
        %3004 = vst [vmem:[%s2628 + $0x2ec] sm:%s2620] %v3003
        %v3005 = vld [vmem:[%s2627 + $0x2f0] sm:%s2620]
        %3006 = vst [vmem:[%s2628 + $0x2f0] sm:%s2620] %v3005
        %v3007 = vld [vmem:[%s2627 + $0x2f8] sm:%s2620]
        %3008 = vst [vmem:[%s2628 + $0x2f4] sm:%s2620] %v3007
        %v3009 = vld [vmem:[%s2627 + $0x2f4] sm:%s2620]
        %3010 = vst [vmem:[%s2628 + $0x2f8] sm:%s2620] %v3009
        %v3011 = vld [vmem:[%s2627 + $0x2fc] sm:%s2620]
        %3012 = vst [vmem:[%s2628 + $0x2fc] sm:%s2620] %v3011
      $region114: #{conv_block.1} parent=101 // loop_footer
        %s2626 = sadd.s32 1, %s2622
      $region115: #{conv_block.1} parent=101 // loop_footer_branch
        %2621 = sbr.rel target = $region111
      $region116: #{conv_block.1} parent=101 // loop_exit
        _
    $region102: #{conv_block.1} parent=86 // pred_fallthru
      _
  $region87: #{conv_block.1} parent=0 // pred_fallthru
    _
  // Predicated region
  $region88: #{conv_block.1} parent=0 // pred_check
    %p2206 = pneg %p2202
  $region89: #{conv_block.1} parent=0 // pred_check_branch
    %2208 = sbr.rel (%p2206) target = $region91
  $region90: #{conv_block.1} parent=0 // pred_region
    %s2209 = sshllo.u32 0, 4
    loop: start=0, step=1, limit=1
    $region92: #{conv_block.1} parent=90 // loop_pre_header
      _
    $region93: #{conv_block.1} parent=90 // loop_header
      %s2211 = sphi 0, %s2215
      %p2212 = scmp.ge.s32.totalorder %s2211, 1
      %s2216 = sphi %s2200, %s2200
      %s2217 = sphi [#allocation2], [#allocation2]
    $region94: #{conv_block.1} parent=90 // loop_header_branch
      %2214 = sbr.rel (%p2212) target = $region98
    $region95: #{conv_block.1} parent=90 // loop_body
      %v2218 = vld [vmem:[%s2216] sm:%s2209]
      %2219 = vst [vmem:[%s2217] sm:%s2209] %v2218
      %v2220 = vld [vmem:[%s2216 + $0x8] sm:%s2209]
      %2221 = vst [vmem:[%s2217 + $0x4] sm:%s2209] %v2220
      %v2222 = vld [vmem:[%s2216 + $0x4] sm:%s2209]
      %2223 = vst [vmem:[%s2217 + $0x8] sm:%s2209] %v2222
      %v2224 = vld [vmem:[%s2216 + $0xc] sm:%s2209]
      %2225 = vst [vmem:[%s2217 + $0xc] sm:%s2209] %v2224
      %v2226 = vld [vmem:[%s2216 + $0x10] sm:%s2209]
      %2227 = vst [vmem:[%s2217 + $0x10] sm:%s2209] %v2226
      %v2228 = vld [vmem:[%s2216 + $0x18] sm:%s2209]
      %2229 = vst [vmem:[%s2217 + $0x14] sm:%s2209] %v2228
      %v2230 = vld [vmem:[%s2216 + $0x14] sm:%s2209]
      %2231 = vst [vmem:[%s2217 + $0x18] sm:%s2209] %v2230
      %v2232 = vld [vmem:[%s2216 + $0x1c] sm:%s2209]
      %2233 = vst [vmem:[%s2217 + $0x1c] sm:%s2209] %v2232
      %v2234 = vld [vmem:[%s2216 + $0x20] sm:%s2209]
      %2235 = vst [vmem:[%s2217 + $0x20] sm:%s2209] %v2234
      %v2236 = vld [vmem:[%s2216 + $0x28] sm:%s2209]
      %2237 = vst [vmem:[%s2217 + $0x24] sm:%s2209] %v2236
      %v2238 = vld [vmem:[%s2216 + $0x24] sm:%s2209]
      %2239 = vst [vmem:[%s2217 + $0x28] sm:%s2209] %v2238
      %v2240 = vld [vmem:[%s2216 + $0x2c] sm:%s2209]
      %2241 = vst [vmem:[%s2217 + $0x2c] sm:%s2209] %v2240
      %v2242 = vld [vmem:[%s2216 + $0x30] sm:%s2209]
      %2243 = vst [vmem:[%s2217 + $0x30] sm:%s2209] %v2242
      %v2244 = vld [vmem:[%s2216 + $0x38] sm:%s2209]
      %2245 = vst [vmem:[%s2217 + $0x34] sm:%s2209] %v2244
      %v2246 = vld [vmem:[%s2216 + $0x34] sm:%s2209]
      %2247 = vst [vmem:[%s2217 + $0x38] sm:%s2209] %v2246
      %v2248 = vld [vmem:[%s2216 + $0x3c] sm:%s2209]
      %2249 = vst [vmem:[%s2217 + $0x3c] sm:%s2209] %v2248
      %v2250 = vld [vmem:[%s2216 + $0x40] sm:%s2209]
      %2251 = vst [vmem:[%s2217 + $0x40] sm:%s2209] %v2250
      %v2252 = vld [vmem:[%s2216 + $0x48] sm:%s2209]
      %2253 = vst [vmem:[%s2217 + $0x44] sm:%s2209] %v2252
      %v2254 = vld [vmem:[%s2216 + $0x44] sm:%s2209]
      %2255 = vst [vmem:[%s2217 + $0x48] sm:%s2209] %v2254
      %v2256 = vld [vmem:[%s2216 + $0x4c] sm:%s2209]
      %2257 = vst [vmem:[%s2217 + $0x4c] sm:%s2209] %v2256
      %v2258 = vld [vmem:[%s2216 + $0x50] sm:%s2209]
      %2259 = vst [vmem:[%s2217 + $0x50] sm:%s2209] %v2258
      %v2260 = vld [vmem:[%s2216 + $0x58] sm:%s2209]
      %2261 = vst [vmem:[%s2217 + $0x54] sm:%s2209] %v2260
      %v2262 = vld [vmem:[%s2216 + $0x54] sm:%s2209]
      %2263 = vst [vmem:[%s2217 + $0x58] sm:%s2209] %v2262
      %v2264 = vld [vmem:[%s2216 + $0x5c] sm:%s2209]
      %2265 = vst [vmem:[%s2217 + $0x5c] sm:%s2209] %v2264
      %v2266 = vld [vmem:[%s2216 + $0x60] sm:%s2209]
      %2267 = vst [vmem:[%s2217 + $0x60] sm:%s2209] %v2266
      %v2268 = vld [vmem:[%s2216 + $0x68] sm:%s2209]
      %2269 = vst [vmem:[%s2217 + $0x64] sm:%s2209] %v2268
      %v2270 = vld [vmem:[%s2216 + $0x64] sm:%s2209]
      %2271 = vst [vmem:[%s2217 + $0x68] sm:%s2209] %v2270
      %v2272 = vld [vmem:[%s2216 + $0x6c] sm:%s2209]
      %2273 = vst [vmem:[%s2217 + $0x6c] sm:%s2209] %v2272
      %v2274 = vld [vmem:[%s2216 + $0x70] sm:%s2209]
      %2275 = vst [vmem:[%s2217 + $0x70] sm:%s2209] %v2274
      %v2276 = vld [vmem:[%s2216 + $0x78] sm:%s2209]
      %2277 = vst [vmem:[%s2217 + $0x74] sm:%s2209] %v2276
      %v2278 = vld [vmem:[%s2216 + $0x74] sm:%s2209]
      %2279 = vst [vmem:[%s2217 + $0x78] sm:%s2209] %v2278
      %v2280 = vld [vmem:[%s2216 + $0x7c] sm:%s2209]
      %2281 = vst [vmem:[%s2217 + $0x7c] sm:%s2209] %v2280
      %v2282 = vld [vmem:[%s2216 + $0x80] sm:%s2209]
      %2283 = vst [vmem:[%s2217 + $0x80] sm:%s2209] %v2282
      %v2284 = vld [vmem:[%s2216 + $0x88] sm:%s2209]
      %2285 = vst [vmem:[%s2217 + $0x84] sm:%s2209] %v2284
      %v2286 = vld [vmem:[%s2216 + $0x84] sm:%s2209]
      %2287 = vst [vmem:[%s2217 + $0x88] sm:%s2209] %v2286
      %v2288 = vld [vmem:[%s2216 + $0x8c] sm:%s2209]
      %2289 = vst [vmem:[%s2217 + $0x8c] sm:%s2209] %v2288
      %v2290 = vld [vmem:[%s2216 + $0x90] sm:%s2209]
      %2291 = vst [vmem:[%s2217 + $0x90] sm:%s2209] %v2290
      %v2292 = vld [vmem:[%s2216 + $0x98] sm:%s2209]
      %2293 = vst [vmem:[%s2217 + $0x94] sm:%s2209] %v2292
      %v2294 = vld [vmem:[%s2216 + $0x94] sm:%s2209]
      %2295 = vst [vmem:[%s2217 + $0x98] sm:%s2209] %v2294
      %v2296 = vld [vmem:[%s2216 + $0x9c] sm:%s2209]
      %2297 = vst [vmem:[%s2217 + $0x9c] sm:%s2209] %v2296
      %v2298 = vld [vmem:[%s2216 + $0xa0] sm:%s2209]
      %2299 = vst [vmem:[%s2217 + $0xa0] sm:%s2209] %v2298
      %v2300 = vld [vmem:[%s2216 + $0xa8] sm:%s2209]
      %2301 = vst [vmem:[%s2217 + $0xa4] sm:%s2209] %v2300
      %v2302 = vld [vmem:[%s2216 + $0xa4] sm:%s2209]
      %2303 = vst [vmem:[%s2217 + $0xa8] sm:%s2209] %v2302
      %v2304 = vld [vmem:[%s2216 + $0xac] sm:%s2209]
      %2305 = vst [vmem:[%s2217 + $0xac] sm:%s2209] %v2304
      %v2306 = vld [vmem:[%s2216 + $0xb0] sm:%s2209]
      %2307 = vst [vmem:[%s2217 + $0xb0] sm:%s2209] %v2306
      %v2308 = vld [vmem:[%s2216 + $0xb8] sm:%s2209]
      %2309 = vst [vmem:[%s2217 + $0xb4] sm:%s2209] %v2308
      %v2310 = vld [vmem:[%s2216 + $0xb4] sm:%s2209]
      %2311 = vst [vmem:[%s2217 + $0xb8] sm:%s2209] %v2310
      %v2312 = vld [vmem:[%s2216 + $0xbc] sm:%s2209]
      %2313 = vst [vmem:[%s2217 + $0xbc] sm:%s2209] %v2312
      %v2314 = vld [vmem:[%s2216 + $0xc0] sm:%s2209]
      %2315 = vst [vmem:[%s2217 + $0xc0] sm:%s2209] %v2314
      %v2316 = vld [vmem:[%s2216 + $0xc8] sm:%s2209]
      %2317 = vst [vmem:[%s2217 + $0xc4] sm:%s2209] %v2316
      %v2318 = vld [vmem:[%s2216 + $0xc4] sm:%s2209]
      %2319 = vst [vmem:[%s2217 + $0xc8] sm:%s2209] %v2318
      %v2320 = vld [vmem:[%s2216 + $0xcc] sm:%s2209]
      %2321 = vst [vmem:[%s2217 + $0xcc] sm:%s2209] %v2320
      %v2322 = vld [vmem:[%s2216 + $0xd0] sm:%s2209]
      %2323 = vst [vmem:[%s2217 + $0xd0] sm:%s2209] %v2322
      %v2324 = vld [vmem:[%s2216 + $0xd8] sm:%s2209]
      %2325 = vst [vmem:[%s2217 + $0xd4] sm:%s2209] %v2324
      %v2326 = vld [vmem:[%s2216 + $0xd4] sm:%s2209]
      %2327 = vst [vmem:[%s2217 + $0xd8] sm:%s2209] %v2326
      %v2328 = vld [vmem:[%s2216 + $0xdc] sm:%s2209]
      %2329 = vst [vmem:[%s2217 + $0xdc] sm:%s2209] %v2328
      %v2330 = vld [vmem:[%s2216 + $0xe0] sm:%s2209]
      %2331 = vst [vmem:[%s2217 + $0xe0] sm:%s2209] %v2330
      %v2332 = vld [vmem:[%s2216 + $0xe8] sm:%s2209]
      %2333 = vst [vmem:[%s2217 + $0xe4] sm:%s2209] %v2332
      %v2334 = vld [vmem:[%s2216 + $0xe4] sm:%s2209]
      %2335 = vst [vmem:[%s2217 + $0xe8] sm:%s2209] %v2334
      %v2336 = vld [vmem:[%s2216 + $0xec] sm:%s2209]
      %2337 = vst [vmem:[%s2217 + $0xec] sm:%s2209] %v2336
      %v2338 = vld [vmem:[%s2216 + $0xf0] sm:%s2209]
      %2339 = vst [vmem:[%s2217 + $0xf0] sm:%s2209] %v2338
      %v2340 = vld [vmem:[%s2216 + $0xf8] sm:%s2209]
      %2341 = vst [vmem:[%s2217 + $0xf4] sm:%s2209] %v2340
      %v2342 = vld [vmem:[%s2216 + $0xf4] sm:%s2209]
      %2343 = vst [vmem:[%s2217 + $0xf8] sm:%s2209] %v2342
      %v2344 = vld [vmem:[%s2216 + $0xfc] sm:%s2209]
      %2345 = vst [vmem:[%s2217 + $0xfc] sm:%s2209] %v2344
      %v2346 = vld [vmem:[%s2216 + $0x100] sm:%s2209]
      %2347 = vst [vmem:[%s2217 + $0x100] sm:%s2209] %v2346
      %v2348 = vld [vmem:[%s2216 + $0x108] sm:%s2209]
      %2349 = vst [vmem:[%s2217 + $0x104] sm:%s2209] %v2348
      %v2350 = vld [vmem:[%s2216 + $0x104] sm:%s2209]
      %2351 = vst [vmem:[%s2217 + $0x108] sm:%s2209] %v2350
      %v2352 = vld [vmem:[%s2216 + $0x10c] sm:%s2209]
      %2353 = vst [vmem:[%s2217 + $0x10c] sm:%s2209] %v2352
      %v2354 = vld [vmem:[%s2216 + $0x110] sm:%s2209]
      %2355 = vst [vmem:[%s2217 + $0x110] sm:%s2209] %v2354
      %v2356 = vld [vmem:[%s2216 + $0x118] sm:%s2209]
      %2357 = vst [vmem:[%s2217 + $0x114] sm:%s2209] %v2356
      %v2358 = vld [vmem:[%s2216 + $0x114] sm:%s2209]
      %2359 = vst [vmem:[%s2217 + $0x118] sm:%s2209] %v2358
      %v2360 = vld [vmem:[%s2216 + $0x11c] sm:%s2209]
      %2361 = vst [vmem:[%s2217 + $0x11c] sm:%s2209] %v2360
      %v2362 = vld [vmem:[%s2216 + $0x120] sm:%s2209]
      %2363 = vst [vmem:[%s2217 + $0x120] sm:%s2209] %v2362
      %v2364 = vld [vmem:[%s2216 + $0x128] sm:%s2209]
      %2365 = vst [vmem:[%s2217 + $0x124] sm:%s2209] %v2364
      %v2366 = vld [vmem:[%s2216 + $0x124] sm:%s2209]
      %2367 = vst [vmem:[%s2217 + $0x128] sm:%s2209] %v2366
      %v2368 = vld [vmem:[%s2216 + $0x12c] sm:%s2209]
      %2369 = vst [vmem:[%s2217 + $0x12c] sm:%s2209] %v2368
      %v2370 = vld [vmem:[%s2216 + $0x130] sm:%s2209]
      %2371 = vst [vmem:[%s2217 + $0x130] sm:%s2209] %v2370
      %v2372 = vld [vmem:[%s2216 + $0x138] sm:%s2209]
      %2373 = vst [vmem:[%s2217 + $0x134] sm:%s2209] %v2372
      %v2374 = vld [vmem:[%s2216 + $0x134] sm:%s2209]
      %2375 = vst [vmem:[%s2217 + $0x138] sm:%s2209] %v2374
      %v2376 = vld [vmem:[%s2216 + $0x13c] sm:%s2209]
      %2377 = vst [vmem:[%s2217 + $0x13c] sm:%s2209] %v2376
      %v2378 = vld [vmem:[%s2216 + $0x140] sm:%s2209]
      %2379 = vst [vmem:[%s2217 + $0x140] sm:%s2209] %v2378
      %v2380 = vld [vmem:[%s2216 + $0x148] sm:%s2209]
      %2381 = vst [vmem:[%s2217 + $0x144] sm:%s2209] %v2380
      %v2382 = vld [vmem:[%s2216 + $0x144] sm:%s2209]
      %2383 = vst [vmem:[%s2217 + $0x148] sm:%s2209] %v2382
      %v2384 = vld [vmem:[%s2216 + $0x14c] sm:%s2209]
      %2385 = vst [vmem:[%s2217 + $0x14c] sm:%s2209] %v2384
      %v2386 = vld [vmem:[%s2216 + $0x150] sm:%s2209]
      %2387 = vst [vmem:[%s2217 + $0x150] sm:%s2209] %v2386
      %v2388 = vld [vmem:[%s2216 + $0x158] sm:%s2209]
      %2389 = vst [vmem:[%s2217 + $0x154] sm:%s2209] %v2388
      %v2390 = vld [vmem:[%s2216 + $0x154] sm:%s2209]
      %2391 = vst [vmem:[%s2217 + $0x158] sm:%s2209] %v2390
      %v2392 = vld [vmem:[%s2216 + $0x15c] sm:%s2209]
      %2393 = vst [vmem:[%s2217 + $0x15c] sm:%s2209] %v2392
      %v2394 = vld [vmem:[%s2216 + $0x160] sm:%s2209]
      %2395 = vst [vmem:[%s2217 + $0x160] sm:%s2209] %v2394
      %v2396 = vld [vmem:[%s2216 + $0x168] sm:%s2209]
      %2397 = vst [vmem:[%s2217 + $0x164] sm:%s2209] %v2396
      %v2398 = vld [vmem:[%s2216 + $0x164] sm:%s2209]
      %2399 = vst [vmem:[%s2217 + $0x168] sm:%s2209] %v2398
      %v2400 = vld [vmem:[%s2216 + $0x16c] sm:%s2209]
      %2401 = vst [vmem:[%s2217 + $0x16c] sm:%s2209] %v2400
      %v2402 = vld [vmem:[%s2216 + $0x170] sm:%s2209]
      %2403 = vst [vmem:[%s2217 + $0x170] sm:%s2209] %v2402
      %v2404 = vld [vmem:[%s2216 + $0x178] sm:%s2209]
      %2405 = vst [vmem:[%s2217 + $0x174] sm:%s2209] %v2404
      %v2406 = vld [vmem:[%s2216 + $0x174] sm:%s2209]
      %2407 = vst [vmem:[%s2217 + $0x178] sm:%s2209] %v2406
      %v2408 = vld [vmem:[%s2216 + $0x17c] sm:%s2209]
      %2409 = vst [vmem:[%s2217 + $0x17c] sm:%s2209] %v2408
      %v2410 = vld [vmem:[%s2216 + $0x180] sm:%s2209]
      %2411 = vst [vmem:[%s2217 + $0x180] sm:%s2209] %v2410
      %v2412 = vld [vmem:[%s2216 + $0x188] sm:%s2209]
      %2413 = vst [vmem:[%s2217 + $0x184] sm:%s2209] %v2412
      %v2414 = vld [vmem:[%s2216 + $0x184] sm:%s2209]
      %2415 = vst [vmem:[%s2217 + $0x188] sm:%s2209] %v2414
      %v2416 = vld [vmem:[%s2216 + $0x18c] sm:%s2209]
      %2417 = vst [vmem:[%s2217 + $0x18c] sm:%s2209] %v2416
      %v2418 = vld [vmem:[%s2216 + $0x190] sm:%s2209]
      %2419 = vst [vmem:[%s2217 + $0x190] sm:%s2209] %v2418
      %v2420 = vld [vmem:[%s2216 + $0x198] sm:%s2209]
      %2421 = vst [vmem:[%s2217 + $0x194] sm:%s2209] %v2420
      %v2422 = vld [vmem:[%s2216 + $0x194] sm:%s2209]
      %2423 = vst [vmem:[%s2217 + $0x198] sm:%s2209] %v2422
      %v2424 = vld [vmem:[%s2216 + $0x19c] sm:%s2209]
      %2425 = vst [vmem:[%s2217 + $0x19c] sm:%s2209] %v2424
      %v2426 = vld [vmem:[%s2216 + $0x1a0] sm:%s2209]
      %2427 = vst [vmem:[%s2217 + $0x1a0] sm:%s2209] %v2426
      %v2428 = vld [vmem:[%s2216 + $0x1a8] sm:%s2209]
      %2429 = vst [vmem:[%s2217 + $0x1a4] sm:%s2209] %v2428
      %v2430 = vld [vmem:[%s2216 + $0x1a4] sm:%s2209]
      %2431 = vst [vmem:[%s2217 + $0x1a8] sm:%s2209] %v2430
      %v2432 = vld [vmem:[%s2216 + $0x1ac] sm:%s2209]
      %2433 = vst [vmem:[%s2217 + $0x1ac] sm:%s2209] %v2432
      %v2434 = vld [vmem:[%s2216 + $0x1b0] sm:%s2209]
      %2435 = vst [vmem:[%s2217 + $0x1b0] sm:%s2209] %v2434
      %v2436 = vld [vmem:[%s2216 + $0x1b8] sm:%s2209]
      %2437 = vst [vmem:[%s2217 + $0x1b4] sm:%s2209] %v2436
      %v2438 = vld [vmem:[%s2216 + $0x1b4] sm:%s2209]
      %2439 = vst [vmem:[%s2217 + $0x1b8] sm:%s2209] %v2438
      %v2440 = vld [vmem:[%s2216 + $0x1bc] sm:%s2209]
      %2441 = vst [vmem:[%s2217 + $0x1bc] sm:%s2209] %v2440
      %v2442 = vld [vmem:[%s2216 + $0x1c0] sm:%s2209]
      %2443 = vst [vmem:[%s2217 + $0x1c0] sm:%s2209] %v2442
      %v2444 = vld [vmem:[%s2216 + $0x1c8] sm:%s2209]
      %2445 = vst [vmem:[%s2217 + $0x1c4] sm:%s2209] %v2444
      %v2446 = vld [vmem:[%s2216 + $0x1c4] sm:%s2209]
      %2447 = vst [vmem:[%s2217 + $0x1c8] sm:%s2209] %v2446
      %v2448 = vld [vmem:[%s2216 + $0x1cc] sm:%s2209]
      %2449 = vst [vmem:[%s2217 + $0x1cc] sm:%s2209] %v2448
      %v2450 = vld [vmem:[%s2216 + $0x1d0] sm:%s2209]
      %2451 = vst [vmem:[%s2217 + $0x1d0] sm:%s2209] %v2450
      %v2452 = vld [vmem:[%s2216 + $0x1d8] sm:%s2209]
      %2453 = vst [vmem:[%s2217 + $0x1d4] sm:%s2209] %v2452
      %v2454 = vld [vmem:[%s2216 + $0x1d4] sm:%s2209]
      %2455 = vst [vmem:[%s2217 + $0x1d8] sm:%s2209] %v2454
      %v2456 = vld [vmem:[%s2216 + $0x1dc] sm:%s2209]
      %2457 = vst [vmem:[%s2217 + $0x1dc] sm:%s2209] %v2456
      %v2458 = vld [vmem:[%s2216 + $0x1e0] sm:%s2209]
      %2459 = vst [vmem:[%s2217 + $0x1e0] sm:%s2209] %v2458
      %v2460 = vld [vmem:[%s2216 + $0x1e8] sm:%s2209]
      %2461 = vst [vmem:[%s2217 + $0x1e4] sm:%s2209] %v2460
      %v2462 = vld [vmem:[%s2216 + $0x1e4] sm:%s2209]
      %2463 = vst [vmem:[%s2217 + $0x1e8] sm:%s2209] %v2462
      %v2464 = vld [vmem:[%s2216 + $0x1ec] sm:%s2209]
      %2465 = vst [vmem:[%s2217 + $0x1ec] sm:%s2209] %v2464
      %v2466 = vld [vmem:[%s2216 + $0x1f0] sm:%s2209]
      %2467 = vst [vmem:[%s2217 + $0x1f0] sm:%s2209] %v2466
      %v2468 = vld [vmem:[%s2216 + $0x1f8] sm:%s2209]
      %2469 = vst [vmem:[%s2217 + $0x1f4] sm:%s2209] %v2468
      %v2470 = vld [vmem:[%s2216 + $0x1f4] sm:%s2209]
      %2471 = vst [vmem:[%s2217 + $0x1f8] sm:%s2209] %v2470
      %v2472 = vld [vmem:[%s2216 + $0x1fc] sm:%s2209]
      %2473 = vst [vmem:[%s2217 + $0x1fc] sm:%s2209] %v2472
      %v2474 = vld [vmem:[%s2216 + $0x200] sm:%s2209]
      %2475 = vst [vmem:[%s2217 + $0x200] sm:%s2209] %v2474
      %v2476 = vld [vmem:[%s2216 + $0x208] sm:%s2209]
      %2477 = vst [vmem:[%s2217 + $0x204] sm:%s2209] %v2476
      %v2478 = vld [vmem:[%s2216 + $0x204] sm:%s2209]
      %2479 = vst [vmem:[%s2217 + $0x208] sm:%s2209] %v2478
      %v2480 = vld [vmem:[%s2216 + $0x20c] sm:%s2209]
      %2481 = vst [vmem:[%s2217 + $0x20c] sm:%s2209] %v2480
      %v2482 = vld [vmem:[%s2216 + $0x210] sm:%s2209]
      %2483 = vst [vmem:[%s2217 + $0x210] sm:%s2209] %v2482
      %v2484 = vld [vmem:[%s2216 + $0x218] sm:%s2209]
      %2485 = vst [vmem:[%s2217 + $0x214] sm:%s2209] %v2484
      %v2486 = vld [vmem:[%s2216 + $0x214] sm:%s2209]
      %2487 = vst [vmem:[%s2217 + $0x218] sm:%s2209] %v2486
      %v2488 = vld [vmem:[%s2216 + $0x21c] sm:%s2209]
      %2489 = vst [vmem:[%s2217 + $0x21c] sm:%s2209] %v2488
      %v2490 = vld [vmem:[%s2216 + $0x220] sm:%s2209]
      %2491 = vst [vmem:[%s2217 + $0x220] sm:%s2209] %v2490
      %v2492 = vld [vmem:[%s2216 + $0x228] sm:%s2209]
      %2493 = vst [vmem:[%s2217 + $0x224] sm:%s2209] %v2492
      %v2494 = vld [vmem:[%s2216 + $0x224] sm:%s2209]
      %2495 = vst [vmem:[%s2217 + $0x228] sm:%s2209] %v2494
      %v2496 = vld [vmem:[%s2216 + $0x22c] sm:%s2209]
      %2497 = vst [vmem:[%s2217 + $0x22c] sm:%s2209] %v2496
      %v2498 = vld [vmem:[%s2216 + $0x230] sm:%s2209]
      %2499 = vst [vmem:[%s2217 + $0x230] sm:%s2209] %v2498
      %v2500 = vld [vmem:[%s2216 + $0x238] sm:%s2209]
      %2501 = vst [vmem:[%s2217 + $0x234] sm:%s2209] %v2500
      %v2502 = vld [vmem:[%s2216 + $0x234] sm:%s2209]
      %2503 = vst [vmem:[%s2217 + $0x238] sm:%s2209] %v2502
      %v2504 = vld [vmem:[%s2216 + $0x23c] sm:%s2209]
      %2505 = vst [vmem:[%s2217 + $0x23c] sm:%s2209] %v2504
      %v2506 = vld [vmem:[%s2216 + $0x240] sm:%s2209]
      %2507 = vst [vmem:[%s2217 + $0x240] sm:%s2209] %v2506
      %v2508 = vld [vmem:[%s2216 + $0x248] sm:%s2209]
      %2509 = vst [vmem:[%s2217 + $0x244] sm:%s2209] %v2508
      %v2510 = vld [vmem:[%s2216 + $0x244] sm:%s2209]
      %2511 = vst [vmem:[%s2217 + $0x248] sm:%s2209] %v2510
      %v2512 = vld [vmem:[%s2216 + $0x24c] sm:%s2209]
      %2513 = vst [vmem:[%s2217 + $0x24c] sm:%s2209] %v2512
      %v2514 = vld [vmem:[%s2216 + $0x250] sm:%s2209]
      %2515 = vst [vmem:[%s2217 + $0x250] sm:%s2209] %v2514
      %v2516 = vld [vmem:[%s2216 + $0x258] sm:%s2209]
      %2517 = vst [vmem:[%s2217 + $0x254] sm:%s2209] %v2516
      %v2518 = vld [vmem:[%s2216 + $0x254] sm:%s2209]
      %2519 = vst [vmem:[%s2217 + $0x258] sm:%s2209] %v2518
      %v2520 = vld [vmem:[%s2216 + $0x25c] sm:%s2209]
      %2521 = vst [vmem:[%s2217 + $0x25c] sm:%s2209] %v2520
      %v2522 = vld [vmem:[%s2216 + $0x260] sm:%s2209]
      %2523 = vst [vmem:[%s2217 + $0x260] sm:%s2209] %v2522
      %v2524 = vld [vmem:[%s2216 + $0x268] sm:%s2209]
      %2525 = vst [vmem:[%s2217 + $0x264] sm:%s2209] %v2524
      %v2526 = vld [vmem:[%s2216 + $0x264] sm:%s2209]
      %2527 = vst [vmem:[%s2217 + $0x268] sm:%s2209] %v2526
      %v2528 = vld [vmem:[%s2216 + $0x26c] sm:%s2209]
      %2529 = vst [vmem:[%s2217 + $0x26c] sm:%s2209] %v2528
      %v2530 = vld [vmem:[%s2216 + $0x270] sm:%s2209]
      %2531 = vst [vmem:[%s2217 + $0x270] sm:%s2209] %v2530
      %v2532 = vld [vmem:[%s2216 + $0x278] sm:%s2209]
      %2533 = vst [vmem:[%s2217 + $0x274] sm:%s2209] %v2532
      %v2534 = vld [vmem:[%s2216 + $0x274] sm:%s2209]
      %2535 = vst [vmem:[%s2217 + $0x278] sm:%s2209] %v2534
      %v2536 = vld [vmem:[%s2216 + $0x27c] sm:%s2209]
      %2537 = vst [vmem:[%s2217 + $0x27c] sm:%s2209] %v2536
      %v2538 = vld [vmem:[%s2216 + $0x280] sm:%s2209]
      %2539 = vst [vmem:[%s2217 + $0x280] sm:%s2209] %v2538
      %v2540 = vld [vmem:[%s2216 + $0x288] sm:%s2209]
      %2541 = vst [vmem:[%s2217 + $0x284] sm:%s2209] %v2540
      %v2542 = vld [vmem:[%s2216 + $0x284] sm:%s2209]
      %2543 = vst [vmem:[%s2217 + $0x288] sm:%s2209] %v2542
      %v2544 = vld [vmem:[%s2216 + $0x28c] sm:%s2209]
      %2545 = vst [vmem:[%s2217 + $0x28c] sm:%s2209] %v2544
      %v2546 = vld [vmem:[%s2216 + $0x290] sm:%s2209]
      %2547 = vst [vmem:[%s2217 + $0x290] sm:%s2209] %v2546
      %v2548 = vld [vmem:[%s2216 + $0x298] sm:%s2209]
      %2549 = vst [vmem:[%s2217 + $0x294] sm:%s2209] %v2548
      %v2550 = vld [vmem:[%s2216 + $0x294] sm:%s2209]
      %2551 = vst [vmem:[%s2217 + $0x298] sm:%s2209] %v2550
      %v2552 = vld [vmem:[%s2216 + $0x29c] sm:%s2209]
      %2553 = vst [vmem:[%s2217 + $0x29c] sm:%s2209] %v2552
      %v2554 = vld [vmem:[%s2216 + $0x2a0] sm:%s2209]
      %2555 = vst [vmem:[%s2217 + $0x2a0] sm:%s2209] %v2554
      %v2556 = vld [vmem:[%s2216 + $0x2a8] sm:%s2209]
      %2557 = vst [vmem:[%s2217 + $0x2a4] sm:%s2209] %v2556
      %v2558 = vld [vmem:[%s2216 + $0x2a4] sm:%s2209]
      %2559 = vst [vmem:[%s2217 + $0x2a8] sm:%s2209] %v2558
      %v2560 = vld [vmem:[%s2216 + $0x2ac] sm:%s2209]
      %2561 = vst [vmem:[%s2217 + $0x2ac] sm:%s2209] %v2560
      %v2562 = vld [vmem:[%s2216 + $0x2b0] sm:%s2209]
      %2563 = vst [vmem:[%s2217 + $0x2b0] sm:%s2209] %v2562
      %v2564 = vld [vmem:[%s2216 + $0x2b8] sm:%s2209]
      %2565 = vst [vmem:[%s2217 + $0x2b4] sm:%s2209] %v2564
      %v2566 = vld [vmem:[%s2216 + $0x2b4] sm:%s2209]
      %2567 = vst [vmem:[%s2217 + $0x2b8] sm:%s2209] %v2566
      %v2568 = vld [vmem:[%s2216 + $0x2bc] sm:%s2209]
      %2569 = vst [vmem:[%s2217 + $0x2bc] sm:%s2209] %v2568
      %v2570 = vld [vmem:[%s2216 + $0x2c0] sm:%s2209]
      %2571 = vst [vmem:[%s2217 + $0x2c0] sm:%s2209] %v2570
      %v2572 = vld [vmem:[%s2216 + $0x2c8] sm:%s2209]
      %2573 = vst [vmem:[%s2217 + $0x2c4] sm:%s2209] %v2572
      %v2574 = vld [vmem:[%s2216 + $0x2c4] sm:%s2209]
      %2575 = vst [vmem:[%s2217 + $0x2c8] sm:%s2209] %v2574
      %v2576 = vld [vmem:[%s2216 + $0x2cc] sm:%s2209]
      %2577 = vst [vmem:[%s2217 + $0x2cc] sm:%s2209] %v2576
      %v2578 = vld [vmem:[%s2216 + $0x2d0] sm:%s2209]
      %2579 = vst [vmem:[%s2217 + $0x2d0] sm:%s2209] %v2578
      %v2580 = vld [vmem:[%s2216 + $0x2d8] sm:%s2209]
      %2581 = vst [vmem:[%s2217 + $0x2d4] sm:%s2209] %v2580
      %v2582 = vld [vmem:[%s2216 + $0x2d4] sm:%s2209]
      %2583 = vst [vmem:[%s2217 + $0x2d8] sm:%s2209] %v2582
      %v2584 = vld [vmem:[%s2216 + $0x2dc] sm:%s2209]
      %2585 = vst [vmem:[%s2217 + $0x2dc] sm:%s2209] %v2584
      %v2586 = vld [vmem:[%s2216 + $0x2e0] sm:%s2209]
      %2587 = vst [vmem:[%s2217 + $0x2e0] sm:%s2209] %v2586
      %v2588 = vld [vmem:[%s2216 + $0x2e8] sm:%s2209]
      %2589 = vst [vmem:[%s2217 + $0x2e4] sm:%s2209] %v2588
      %v2590 = vld [vmem:[%s2216 + $0x2e4] sm:%s2209]
      %2591 = vst [vmem:[%s2217 + $0x2e8] sm:%s2209] %v2590
      %v2592 = vld [vmem:[%s2216 + $0x2ec] sm:%s2209]
      %2593 = vst [vmem:[%s2217 + $0x2ec] sm:%s2209] %v2592
      %v2594 = vld [vmem:[%s2216 + $0x2f0] sm:%s2209]
      %2595 = vst [vmem:[%s2217 + $0x2f0] sm:%s2209] %v2594
      %v2596 = vld [vmem:[%s2216 + $0x2f8] sm:%s2209]
      %2597 = vst [vmem:[%s2217 + $0x2f4] sm:%s2209] %v2596
      %v2598 = vld [vmem:[%s2216 + $0x2f4] sm:%s2209]
      %2599 = vst [vmem:[%s2217 + $0x2f8] sm:%s2209] %v2598
      %v2600 = vld [vmem:[%s2216 + $0x2fc] sm:%s2209]
      %2601 = vst [vmem:[%s2217 + $0x2fc] sm:%s2209] %v2600
    $region96: #{conv_block.1} parent=90 // loop_footer
      %s2215 = sadd.s32 1, %s2211
    $region97: #{conv_block.1} parent=90 // loop_footer_branch
      %2210 = sbr.rel target = $region93
    $region98: #{conv_block.1} parent=90 // loop_exit
      _
  $region91: #{conv_block.1} parent=0 // pred_fallthru
    _
  // Predicated region
  $region117: #{conv_block.1} parent=0 // pred_check
    _
  $region118: #{conv_block.1} parent=0 // pred_check_branch
    %3015 = sbr.rel (0) target = $region120
  $region119: #{conv_block.1} parent=0 // pred_region
    %3016 = vsyncadd [#allocation3], 12288
  $region120: #{conv_block.1} parent=0 // pred_fallthru
    _
  %s3017 = sshll.u32 %s1717, 4
  %3018 = dma.done %s899, %s3017
  %v3019 = vrot.slane %v2192, 7
  %v3020 = vrot.slane %v2193, 7
  %v3021 = vrot.slane %v2194, 7
  %v3022 = vrot.slane %v2195, 7
  %v3023 = vrot.slane %v2196, 7
  %v3024 = vrot.slane %v2197, 7
  %v3025 = vrot.slane %v2198, 7
  %v3026 = vrot.slane %v2199, 7
  %v3027 = vsel %vm1728, %v3023, %v3025
  %v3028 = vsel %vm1728, %v3024, %v3026
  %v3029 = vsel %vm1728, %v3021, %v3023
  %v3030 = vsel %vm1728, %v3022, %v3024
  %v3031 = vsel %vm1728, %v3019, %v3021
  %v3032 = vsel %vm1728, %v3020, %v3022
  %v3033 = vsel %vm1728, %v3025, %v3019
  %v3034 = vsel %vm1728, %v3026, %v3020
  %v3035 = vsel %vm1741, %v3033, 0.0
  %v3036 = vsel %vm1741, %v3034, 0.0
  %v3037 = vsel %vm1742, %v3031, 0.0
  %v3038 = vsel %vm1742, %v3032, 0.0
  %v3039 = vsel %vm1743, %v3029, 0.0
  %v3040 = vsel %vm1743, %v3030, 0.0
  %v3041 = vsel %vm1744, %v3027, 0.0
  %v3042 = vsel %vm1744, %v3028, 0.0
  %v3043 = vrot.slane %v2192, 1
  %v3044 = vrot.slane %v2193, 1
  %v3045 = vrot.slane %v2194, 1
  %v3046 = vrot.slane %v2195, 1
  %v3047 = vrot.slane %v2196, 1
  %v3048 = vrot.slane %v2197, 1
  %v3049 = vrot.slane %v2198, 1
  %v3050 = vrot.slane %v2199, 1
  %v3051 = vsel %vm1761, %v3047, %v3049
  %v3052 = vsel %vm1761, %v3048, %v3050
  %v3053 = vsel %vm1761, %v3045, %v3047
  %v3054 = vsel %vm1761, %v3046, %v3048
  %v3055 = vsel %vm1761, %v3043, %v3045
  %v3056 = vsel %vm1761, %v3044, %v3046
  %v3057 = vsel %vm1761, %v3049, %v3043
  %v3058 = vsel %vm1761, %v3050, %v3044
  %v3059 = vsel %vm1774, %v3055, 0.0
  %v3060 = vsel %vm1774, %v3056, 0.0
  %v3061 = vsel %vm1775, %v3053, 0.0
  %v3062 = vsel %vm1775, %v3054, 0.0
  %v3063 = vsel %vm1776, %v3051, 0.0
  %v3064 = vsel %vm1776, %v3052, 0.0
  %v3065 = vsel %vm1777, %v3057, 0.0
  %v3066 = vsel %vm1777, %v3058, 0.0
  %v3067 = vpack.c.bf16 %v3037, %v3035
  %v3068 = vpack.c.bf16 %v3038, %v3036
  %v3069 = vpack.c.bf16 %v2194, %v2192
  %v3070 = vpack.c.bf16 %v2195, %v2193
  %v3071 = vpack.c.bf16 %v3061, %v3059
  %v3072 = vpack.c.bf16 %v3062, %v3060
  %v3073 = vpack.c.bf16 %v3041, %v3039
  %v3074 = vpack.c.bf16 %v3042, %v3040
  %v3075 = vpack.c.bf16 %v2198, %v2196
  %v3076 = vpack.c.bf16 %v2199, %v2197
  %v3077 = vpack.c.bf16 %v3065, %v3063
  %v3078 = vpack.c.bf16 %v3066, %v3064
  %v3079 = vld [vmem:[%s898] sm:$0xff]
  %v3080 = vld [vmem:[%s898 + $0x8] sm:$0xff]
  %v3081 = vld [vmem:[%s898 + $0x10] sm:$0xff]
  %v3082 = vld [vmem:[%s898 + $0x18] sm:$0xff]
  %v3083 = vld [vmem:[%s898 + $0x20] sm:$0xff]
  %v3084 = vld [vmem:[%s898 + $0x28] sm:$0xff]
  %v3085 = vld [vmem:[%s898 + $0x30] sm:$0xff]
  %v3086 = vld [vmem:[%s898 + $0x38] sm:$0xff]
  %v3087 = vld [vmem:[%s898 + $0x40] sm:$0xff]
  %v3088 = vld [vmem:[%s898 + $0x48] sm:$0xff]
  %v3089 = vld [vmem:[%s898 + $0x50] sm:$0xff]
  %v3090 = vld [vmem:[%s898 + $0x58] sm:$0xff]
  %v3091 = vld [vmem:[%s898 + $0x60] sm:$0xff]
  %v3092 = vld [vmem:[%s898 + $0x68] sm:$0xff]
  %v3093 = vld [vmem:[%s898 + $0x70] sm:$0xff]
  %v3094 = vld [vmem:[%s898 + $0x78] sm:$0xff]
  %v3095 = vld [vmem:[%s898 + $0x80] sm:$0xff]
  %v3096 = vld [vmem:[%s898 + $0x88] sm:$0xff]
  %v3097 = vld [vmem:[%s898 + $0x90] sm:$0xff]
  %v3098 = vld [vmem:[%s898 + $0x98] sm:$0xff]
  %v3099 = vld [vmem:[%s898 + $0xa0] sm:$0xff]
  %v3100 = vld [vmem:[%s898 + $0xa8] sm:$0xff]
  %v3101 = vld [vmem:[%s898 + $0xb0] sm:$0xff]
  %v3102 = vld [vmem:[%s898 + $0xb8] sm:$0xff]
  %v3103 = vld [vmem:[%s898 + $0xc0] sm:$0xff]
  %v3104 = vld [vmem:[%s898 + $0xc8] sm:$0xff]
  %v3105 = vld [vmem:[%s898 + $0xd0] sm:$0xff]
  %v3106 = vld [vmem:[%s898 + $0xd8] sm:$0xff]
  %v3107 = vld [vmem:[%s898 + $0xe0] sm:$0xff]
  %v3108 = vld [vmem:[%s898 + $0xe8] sm:$0xff]
  %v3109 = vld [vmem:[%s898 + $0xf0] sm:$0xff]
  %v3110 = vld [vmem:[%s898 + $0xf8] sm:$0xff]
  %v3111 = vld [vmem:[%s898 + $0x100] sm:$0xff]
  %v3112 = vld [vmem:[%s898 + $0x108] sm:$0xff]
  %v3113 = vld [vmem:[%s898 + $0x110] sm:$0xff]
  %v3114 = vld [vmem:[%s898 + $0x118] sm:$0xff]
  %v3115 = vld [vmem:[%s898 + $0x120] sm:$0xff]
  %v3116 = vld [vmem:[%s898 + $0x128] sm:$0xff]
  %v3117 = vld [vmem:[%s898 + $0x130] sm:$0xff]
  %v3118 = vld [vmem:[%s898 + $0x138] sm:$0xff]
  %v3119 = vld [vmem:[%s898 + $0x140] sm:$0xff]
  %v3120 = vld [vmem:[%s898 + $0x148] sm:$0xff]
  %v3121 = vld [vmem:[%s898 + $0x150] sm:$0xff]
  %v3122 = vld [vmem:[%s898 + $0x158] sm:$0xff]
  %v3123 = vld [vmem:[%s898 + $0x160] sm:$0xff]
  %v3124 = vld [vmem:[%s898 + $0x168] sm:$0xff]
  %v3125 = vld [vmem:[%s898 + $0x170] sm:$0xff]
  %v3126 = vld [vmem:[%s898 + $0x178] sm:$0xff]
  %v3127 = vld [vmem:[%s898 + $0x180] sm:$0xff]
  %v3128 = vld [vmem:[%s898 + $0x188] sm:$0xff]
  %v3129 = vld [vmem:[%s898 + $0x190] sm:$0xff]
  %v3130 = vld [vmem:[%s898 + $0x198] sm:$0xff]
  %v3131 = vld [vmem:[%s898 + $0x1a0] sm:$0xff]
  %v3132 = vld [vmem:[%s898 + $0x1a8] sm:$0xff]
  %v3133 = vld [vmem:[%s898 + $0x1b0] sm:$0xff]
  %v3134 = vld [vmem:[%s898 + $0x1b8] sm:$0xff]
  %v3135 = vld [vmem:[%s898 + $0x1c0] sm:$0xff]
  %v3136 = vld [vmem:[%s898 + $0x1c8] sm:$0xff]
  %v3137 = vld [vmem:[%s898 + $0x1d0] sm:$0xff]
  %v3138 = vld [vmem:[%s898 + $0x1d8] sm:$0xff]
  %v3139 = vld [vmem:[%s898 + $0x1e0] sm:$0xff]
  %v3140 = vld [vmem:[%s898 + $0x1e8] sm:$0xff]
  %v3141 = vld [vmem:[%s898 + $0x1f0] sm:$0xff]
  %v3142 = vld [vmem:[%s898 + $0x1f8] sm:$0xff]
  %v3143 = vld [vmem:[%s898 + $0x200] sm:$0xff]
  %v3144 = vld [vmem:[%s898 + $0x208] sm:$0xff]
  %v3145 = vld [vmem:[%s898 + $0x210] sm:$0xff]
  %v3146 = vld [vmem:[%s898 + $0x218] sm:$0xff]
  %v3147 = vld [vmem:[%s898 + $0x220] sm:$0xff]
  %v3148 = vld [vmem:[%s898 + $0x228] sm:$0xff]
  %v3149 = vld [vmem:[%s898 + $0x230] sm:$0xff]
  %v3150 = vld [vmem:[%s898 + $0x238] sm:$0xff]
  %v3151 = vld [vmem:[%s898 + $0x240] sm:$0xff]
  %v3152 = vld [vmem:[%s898 + $0x248] sm:$0xff]
  %v3153 = vld [vmem:[%s898 + $0x250] sm:$0xff]
  %v3154 = vld [vmem:[%s898 + $0x258] sm:$0xff]
  %v3155 = vld [vmem:[%s898 + $0x260] sm:$0xff]
  %v3156 = vld [vmem:[%s898 + $0x268] sm:$0xff]
  %v3157 = vld [vmem:[%s898 + $0x270] sm:$0xff]
  %v3158 = vld [vmem:[%s898 + $0x278] sm:$0xff]
  %v3159 = vld [vmem:[%s898 + $0x280] sm:$0xff]
  %v3160 = vld [vmem:[%s898 + $0x288] sm:$0xff]
  %v3161 = vld [vmem:[%s898 + $0x290] sm:$0xff]
  %v3162 = vld [vmem:[%s898 + $0x298] sm:$0xff]
  %v3163 = vld [vmem:[%s898 + $0x2a0] sm:$0xff]
  %v3164 = vld [vmem:[%s898 + $0x2a8] sm:$0xff]
  %v3165 = vld [vmem:[%s898 + $0x2b0] sm:$0xff]
  %v3166 = vld [vmem:[%s898 + $0x2b8] sm:$0xff]
  %v3167 = vld [vmem:[%s898 + $0x2c0] sm:$0xff]
  %v3168 = vld [vmem:[%s898 + $0x2c8] sm:$0xff]
  %v3169 = vld [vmem:[%s898 + $0x2d0] sm:$0xff]
  %v3170 = vld [vmem:[%s898 + $0x2d8] sm:$0xff]
  %v3171 = vld [vmem:[%s898 + $0x2e0] sm:$0xff]
  %v3172 = vld [vmem:[%s898 + $0x2e8] sm:$0xff]
  %v3173 = vld [vmem:[%s898 + $0x2f0] sm:$0xff]
  %v3174 = vld [vmem:[%s898 + $0x2f8] sm:$0xff]
  %s3175 = scalar_lea.vmem %s1, 2
  %v3176 = vld [vmem:[%s3175] sm:$0x3]
  %v3178 = vlaneseq
  %v3179 = vshrl.u32 %v3178, 7
  %v3180 = vsub.s32 0, %v3179
  %v3181 = vrot.slane %v3176, %v3180
  %v3182 = vlaneseq
  %v3183 = vshrl.u32 %v3182, 7
  %v3184 = vsub.s32 1, %v3183
  %v3185 = vrot.slane %v3176, %v3184
  %3188 = vmatprep.subr.bf16.mxu0 %v3080
  %3189 = vmatpush1.bf16.msra.mxu0 %v3079
  %3190 = vmatprep.subr.bf16.mxu0 %v3082
  %3191 = vmatpush1.bf16.msra.mxu0 %v3081
  %3192 = vmatprep.subr.bf16.mxu0 %v3084
  %3193 = vmatpush1.bf16.msra.mxu0 %v3083
  %3194 = vmatprep.subr.bf16.mxu0 %v3086
  %3195 = vmatpush1.bf16.msra.mxu0 %v3085
  %3196 = vmatprep.subr.bf16.mxu0 %v3088
  %3197 = vmatpush1.bf16.msra.mxu0 %v3087
  %3198 = vmatprep.subr.bf16.mxu0 %v3090
  %3199 = vmatpush1.bf16.msra.mxu0 %v3089
  %3200 = vmatprep.subr.bf16.mxu0 %v3092
  %3201 = vmatpush1.bf16.msra.mxu0 %v3091
  %3202 = vmatprep.subr.bf16.mxu0 %v3094
  %3203 = vmatpush1.bf16.msra.mxu0 %v3093
  %3204 = vmatprep.subr.bf16.mxu0 %v3096
  %3205 = vmatpush1.bf16.msra.mxu0 %v3095
  %3206 = vmatprep.subr.bf16.mxu0 %v3098
  %3207 = vmatpush1.bf16.msra.mxu0 %v3097
  %3208 = vmatprep.subr.bf16.mxu0 %v3100
  %3209 = vmatpush1.bf16.msra.mxu0 %v3099
  %3210 = vmatprep.subr.bf16.mxu0 %v3102
  %3211 = vmatpush1.bf16.msra.mxu0 %v3101
  %3212 = vmatprep.subr.bf16.mxu0 %v3104
  %3213 = vmatpush1.bf16.msra.mxu0 %v3103
  %3214 = vmatprep.subr.bf16.mxu0 %v3106
  %3215 = vmatpush1.bf16.msra.mxu0 %v3105
  %3216 = vmatprep.subr.bf16.mxu0 %v3108
  %3217 = vmatpush1.bf16.msra.mxu0 %v3107
  %3218 = vmatprep.subr.bf16.mxu0 %v3110
  %3219 = vmatpush1.bf16.msra.mxu0 %v3109
  %3220 = vmatprep.mubr.bf16.mxu0 %v3068
  %3221 = vmatmul.mubr.bf16.gmra.mrb[0].mxu0 %v3067
  %v3222 = vpop.f32.mrb[0].mxu0
  %v3223 = vadd.f32 %v3181, %v3222
  %v3224 = vpop.f32.mrb[0].mxu0
  %v3225 = vadd.f32 %v3185, %v3224
  %v3226 = vpop.f32.mrb[0].mxu0
  %v3227 = vadd.f32 %v3181, %v3226
  %v3228 = vpop.f32.mrb[0].mxu0
  %v3229 = vadd.f32 %v3185, %v3228
  %3230 = vmatprep.mubr.bf16.mxu0 %v3074
  %3231 = vmatmul.mubr.bf16.gmra.mrb[0].mxu0 %v3073
  %v3232 = vpop.f32.mrb[0].mxu0
  %v3233 = vadd.f32 %v3181, %v3232
  %v3234 = vpop.f32.mrb[0].mxu0
  %v3235 = vadd.f32 %v3185, %v3234
  %v3236 = vpop.f32.mrb[0].mxu0
  %v3237 = vadd.f32 %v3181, %v3236
  %v3238 = vpop.f32.mrb[0].mxu0
  %v3239 = vadd.f32 %v3185, %v3238
  %3240 = vdwg.mxu0
  %3241 = vmatprep.subr.bf16.mxu0 %v3112
  %3242 = vmatpush1.bf16.msra.mxu0 %v3111
  %3243 = vmatprep.subr.bf16.mxu0 %v3114
  %3244 = vmatpush1.bf16.msra.mxu0 %v3113
  %3245 = vmatprep.subr.bf16.mxu0 %v3116
  %3246 = vmatpush1.bf16.msra.mxu0 %v3115
  %3247 = vmatprep.subr.bf16.mxu0 %v3118
  %3248 = vmatpush1.bf16.msra.mxu0 %v3117
  %3249 = vmatprep.subr.bf16.mxu0 %v3120
  %3250 = vmatpush1.bf16.msra.mxu0 %v3119
  %3251 = vmatprep.subr.bf16.mxu0 %v3122
  %3252 = vmatpush1.bf16.msra.mxu0 %v3121
  %3253 = vmatprep.subr.bf16.mxu0 %v3124
  %3254 = vmatpush1.bf16.msra.mxu0 %v3123
  %3255 = vmatprep.subr.bf16.mxu0 %v3126
  %3256 = vmatpush1.bf16.msra.mxu0 %v3125
  %3257 = vmatprep.subr.bf16.mxu0 %v3128
  %3258 = vmatpush1.bf16.msra.mxu0 %v3127
  %3259 = vmatprep.subr.bf16.mxu0 %v3130
  %3260 = vmatpush1.bf16.msra.mxu0 %v3129
  %3261 = vmatprep.subr.bf16.mxu0 %v3132
  %3262 = vmatpush1.bf16.msra.mxu0 %v3131
  %3263 = vmatprep.subr.bf16.mxu0 %v3134
  %3264 = vmatpush1.bf16.msra.mxu0 %v3133
  %3265 = vmatprep.subr.bf16.mxu0 %v3136
  %3266 = vmatpush1.bf16.msra.mxu0 %v3135
  %3267 = vmatprep.subr.bf16.mxu0 %v3138
  %3268 = vmatpush1.bf16.msra.mxu0 %v3137
  %3269 = vmatprep.subr.bf16.mxu0 %v3140
  %3270 = vmatpush1.bf16.msra.mxu0 %v3139
  %3271 = vmatprep.subr.bf16.mxu0 %v3142
  %3272 = vmatpush1.bf16.msra.mxu0 %v3141
  %3273 = vmatprep.mubr.bf16.mxu0 %v3070
  %3274 = vmatmul.mubr.bf16.gmra.mrb[0].mxu0 %v3069
  %v3275 = vpop.f32.mrb[0].mxu0
  %v3276 = vadd.f32 %v3223, %v3275
  %v3277 = vpop.f32.mrb[0].mxu0
  %v3278 = vadd.f32 %v3225, %v3277
  %v3279 = vpop.f32.mrb[0].mxu0
  %v3280 = vadd.f32 %v3227, %v3279
  %v3281 = vpop.f32.mrb[0].mxu0
  %v3282 = vadd.f32 %v3229, %v3281
  %3283 = vmatprep.mubr.bf16.mxu0 %v3076
  %3284 = vmatmul.mubr.bf16.gmra.mrb[0].mxu0 %v3075
  %v3285 = vpop.f32.mrb[0].mxu0
  %v3286 = vadd.f32 %v3233, %v3285
  %v3287 = vpop.f32.mrb[0].mxu0
  %v3288 = vadd.f32 %v3235, %v3287
  %v3289 = vpop.f32.mrb[0].mxu0
  %v3290 = vadd.f32 %v3237, %v3289
  %v3291 = vpop.f32.mrb[0].mxu0
  %v3292 = vadd.f32 %v3239, %v3291
  %3293 = vdwg.mxu0
  %3294 = vmatprep.subr.bf16.mxu0 %v3144
  %3295 = vmatpush1.bf16.msra.mxu0 %v3143
  %3296 = vmatprep.subr.bf16.mxu0 %v3146
  %3297 = vmatpush1.bf16.msra.mxu0 %v3145
  %3298 = vmatprep.subr.bf16.mxu0 %v3148
  %3299 = vmatpush1.bf16.msra.mxu0 %v3147
  %3300 = vmatprep.subr.bf16.mxu0 %v3150
  %3301 = vmatpush1.bf16.msra.mxu0 %v3149
  %3302 = vmatprep.subr.bf16.mxu0 %v3152
  %3303 = vmatpush1.bf16.msra.mxu0 %v3151
  %3304 = vmatprep.subr.bf16.mxu0 %v3154
  %3305 = vmatpush1.bf16.msra.mxu0 %v3153
  %3306 = vmatprep.subr.bf16.mxu0 %v3156
  %3307 = vmatpush1.bf16.msra.mxu0 %v3155
  %3308 = vmatprep.subr.bf16.mxu0 %v3158
  %3309 = vmatpush1.bf16.msra.mxu0 %v3157
  %3310 = vmatprep.subr.bf16.mxu0 %v3160
  %3311 = vmatpush1.bf16.msra.mxu0 %v3159
  %3312 = vmatprep.subr.bf16.mxu0 %v3162
  %3313 = vmatpush1.bf16.msra.mxu0 %v3161
  %3314 = vmatprep.subr.bf16.mxu0 %v3164
  %3315 = vmatpush1.bf16.msra.mxu0 %v3163
  %3316 = vmatprep.subr.bf16.mxu0 %v3166
  %3317 = vmatpush1.bf16.msra.mxu0 %v3165
  %3318 = vmatprep.subr.bf16.mxu0 %v3168
  %3319 = vmatpush1.bf16.msra.mxu0 %v3167
  %3320 = vmatprep.subr.bf16.mxu0 %v3170
  %3321 = vmatpush1.bf16.msra.mxu0 %v3169
  %3322 = vmatprep.subr.bf16.mxu0 %v3172
  %3323 = vmatpush1.bf16.msra.mxu0 %v3171
  %3324 = vmatprep.subr.bf16.mxu0 %v3174
  %3325 = vmatpush1.bf16.msra.mxu0 %v3173
  %3326 = vmatprep.mubr.bf16.mxu0 %v3072
  %3327 = vmatmul.mubr.bf16.gmra.mrb[0].mxu0 %v3071
  %v3328 = vpop.f32.mrb[0].mxu0
  %v3329 = vadd.f32 %v3276, %v3328
  %v3330 = vpop.f32.mrb[0].mxu0
  %v3331 = vadd.f32 %v3278, %v3330
  %v3332 = vpop.f32.mrb[0].mxu0
  %v3333 = vadd.f32 %v3280, %v3332
  %v3334 = vpop.f32.mrb[0].mxu0
  %v3335 = vadd.f32 %v3282, %v3334
  %3336 = vmatprep.mubr.bf16.mxu0 %v3078
  %3337 = vmatmul.mubr.bf16.gmra.mrb[0].mxu0 %v3077
  %v3338 = vpop.f32.mrb[0].mxu0
  %v3339 = vadd.f32 %v3286, %v3338
  %v3340 = vpop.f32.mrb[0].mxu0
  %v3341 = vadd.f32 %v3288, %v3340
  %v3342 = vpop.f32.mrb[0].mxu0
  %v3343 = vadd.f32 %v3290, %v3342
  %v3344 = vpop.f32.mrb[0].mxu0
  %v3345 = vadd.f32 %v3292, %v3344
  %3346 = vdwg.mxu0
  %v3347 = vadd.f32 %v3329, %v3333
  %v3348 = vadd.f32 %v3347, %v3339
  %v3349 = vadd.f32 %v3348, %v3343
  %v3350 = vrot.slane %v3349, 4
  %v3351 = vadd.f32 %v3349, %v3350
  %v3352 = vrot.slane %v3351, 2
  %v3353 = vadd.f32 %v3351, %v3352
  %v3354 = vrot.slane %v3353, 1
  %v3355 = vadd.f32 %v3353, %v3354
  %v3356 = vadd.f32 %v3331, %v3335
  %v3357 = vadd.f32 %v3356, %v3341
  %v3358 = vadd.f32 %v3357, %v3345
  %v3359 = vrot.slane %v3358, 4
  %v3360 = vadd.f32 %v3358, %v3359
  %v3361 = vrot.slane %v3360, 2
  %v3362 = vadd.f32 %v3360, %v3361
  %v3363 = vrot.slane %v3362, 1
  %v3364 = vadd.f32 %v3362, %v3363
  %3365 = vrot.lane.b32.xlu0 %v3355, 16
  %v3366 = vpop.permute.xlu0 %3365
  %3367 = vrot.lane.b32.xlu0 %v3364, 16
  %v3368 = vpop.permute.xlu0 %3367
  %v3369 = vsel %vm2089, %v3366, %v3368
  %v3370 = vsel %vm2089, %v3368, %v3366
  %v3371 = vadd.f32 %v3355, %v3370
  %v3372 = vadd.f32 %v3364, %v3369
  %3373 = vrot.lane.b32.xlu0 %v3371, 32
  %v3374 = vpop.permute.xlu0 %3373
  %3375 = vrot.lane.b32.xlu0 %v3372, 32
  %v3376 = vpop.permute.xlu0 %3375
  %v3377 = vsel %vm2098, %v3374, %v3376
  %v3378 = vsel %vm2098, %v3376, %v3374
  %v3379 = vadd.f32 %v3371, %v3378
  %v3380 = vadd.f32 %v3372, %v3377
  %3381 = vrot.lane.b32.xlu0 %v3379, 64
  %v3382 = vpop.permute.xlu0 %3381
  %3383 = vrot.lane.b32.xlu0 %v3380, 64
  %v3384 = vpop.permute.xlu0 %3383
  %v3385 = vsel %vm2107, %v3382, %v3384
  %v3386 = vsel %vm2107, %v3384, %v3382
  %v3387 = vadd.f32 %v3379, %v3386
  %v3388 = vadd.f32 %v3380, %v3385
  %v3389 = vadd.f32 %v3387, %v3388
  %v3390 = vmul.f32 %v3389, 0.001953125
  %v3391 = vlaneseq
  %v3392 = vshrl.u32 %v3391, 7
  %v3393 = vsub.s32 0, %v3392
  %v3394 = vrot.slane %v3390, %v3393
  %v3395 = vsub.f32 %v3329, %v3394
  %v3396 = vsub.f32 %v3331, %v3394
  %v3397 = vsub.f32 %v3333, %v3394
  %v3398 = vsub.f32 %v3335, %v3394
  %v3399 = vsub.f32 %v3339, %v3394
  %v3400 = vsub.f32 %v3341, %v3394
  %v3401 = vsub.f32 %v3343, %v3394
  %v3402 = vsub.f32 %v3345, %v3394
  %v3403 = vmul.f32 %v3395, %v3395
  %v3404 = vmul.f32 %v3396, %v3396
  %v3405 = vmul.f32 %v3397, %v3397
  %v3406 = vmul.f32 %v3398, %v3398
  %v3407 = vmul.f32 %v3399, %v3399
  %v3408 = vmul.f32 %v3400, %v3400
  %v3409 = vmul.f32 %v3401, %v3401
  %v3410 = vmul.f32 %v3402, %v3402
  %v3411 = vadd.f32 %v3403, %v3405
  %v3412 = vadd.f32 %v3411, %v3407
  %v3413 = vadd.f32 %v3412, %v3409
  %v3414 = vrot.slane %v3413, 4
  %v3415 = vadd.f32 %v3413, %v3414
  %v3416 = vrot.slane %v3415, 2
  %v3417 = vadd.f32 %v3415, %v3416
  %v3418 = vrot.slane %v3417, 1
  %v3419 = vadd.f32 %v3417, %v3418
  %v3420 = vadd.f32 %v3404, %v3406
  %v3421 = vadd.f32 %v3420, %v3408
  %v3422 = vadd.f32 %v3421, %v3410
  %v3423 = vrot.slane %v3422, 4
  %v3424 = vadd.f32 %v3422, %v3423
  %v3425 = vrot.slane %v3424, 2
  %v3426 = vadd.f32 %v3424, %v3425
  %v3427 = vrot.slane %v3426, 1
  %v3428 = vadd.f32 %v3426, %v3427
  %3429 = vrot.lane.b32.xlu0 %v3419, 16
  %v3430 = vpop.permute.xlu0 %3429
  %3431 = vrot.lane.b32.xlu0 %v3428, 16
  %v3432 = vpop.permute.xlu0 %3431
  %v3433 = vsel %vm2089, %v3430, %v3432
  %v3434 = vsel %vm2089, %v3432, %v3430
  %v3435 = vadd.f32 %v3419, %v3434
  %v3436 = vadd.f32 %v3428, %v3433
  %3437 = vrot.lane.b32.xlu0 %v3435, 32
  %v3438 = vpop.permute.xlu0 %3437
  %3439 = vrot.lane.b32.xlu0 %v3436, 32
  %v3440 = vpop.permute.xlu0 %3439
  %v3441 = vsel %vm2098, %v3438, %v3440
  %v3442 = vsel %vm2098, %v3440, %v3438
  %v3443 = vadd.f32 %v3435, %v3442
  %v3444 = vadd.f32 %v3436, %v3441
  %3445 = vrot.lane.b32.xlu0 %v3443, 64
  %v3446 = vpop.permute.xlu0 %3445
  %3447 = vrot.lane.b32.xlu0 %v3444, 64
  %v3448 = vpop.permute.xlu0 %3447
  %v3449 = vsel %vm2107, %v3446, %v3448
  %v3450 = vsel %vm2107, %v3448, %v3446
  %v3451 = vadd.f32 %v3443, %v3450
  %v3452 = vadd.f32 %v3444, %v3449
  %v3453 = vadd.f32 %v3451, %v3452
  %v3454 = vmul.f32 %v3453, 0.001953125
  %v3455 = vadd.f32 %v3454, 1e-05
  %v3456 = vrsqrt.pop %v3455
  %v3457 = vlaneseq
  %v3458 = vshrl.u32 %v3457, 7
  %v3459 = vsub.s32 0, %v3458
  %v3460 = vrot.slane %v3456, %v3459
  %v3461 = vmul.f32 %v3395, %v3460
  %v3462 = vmul.f32 %v3396, %v3460
  %v3463 = vmul.f32 %v3397, %v3460
  %v3464 = vmul.f32 %v3398, %v3460
  %v3465 = vmul.f32 %v3399, %v3460
  %v3466 = vmul.f32 %v3400, %v3460
  %v3467 = vmul.f32 %v3401, %v3460
  %v3468 = vmul.f32 %v3402, %v3460
  %v3469 = vmax.f32 %v3461, 0.0
  %v3470 = vmax.f32 %v3462, 0.0
  %v3471 = vmax.f32 %v3463, 0.0
  %v3472 = vmax.f32 %v3464, 0.0
  %v3473 = vmax.f32 %v3465, 0.0
  %v3474 = vmax.f32 %v3466, 0.0
  %v3475 = vmax.f32 %v3467, 0.0
  %v3476 = vmax.f32 %v3468, 0.0
  %s3477 = scalar_lea.vmem %s2, 2304
  %p3479 = scmp.lt.u32.totalorder 4, 8
  %p3480 = pneg %p3479
  // Predicated region
  $region121: #{conv_block.1} parent=0 // pred_check
    _
  $region122: #{conv_block.1} parent=0 // pred_check_branch
    %3482 = sbr.rel (%p3479) target = $region124
  $region123: #{conv_block.1} parent=0 // pred_region
    %s3879 = sand.u32 4, 7
    %p3880 = scmp.eq.s32.totalorder %s3879, 0
    %p3881 = pneg %p3880
    // Predicated region
    $region136: #{conv_block.1} parent=123 // pred_check
      _
    $region137: #{conv_block.1} parent=123 // pred_check_branch
      %3883 = sbr.rel (%p3880) target = $region139
    $region138: #{conv_block.1} parent=123 // pred_region
      %s3884 = sand.u32 4, 7
      %s3885 = ssub.s32 4, %s3884
      %s3886 = scalar_lea.vmem %s3477, %s3885
      %s3887 = ssub.s32 4, %s3884
      %s3888 = scalar_lea.vmem %s898, %s3887 [#allocation2]
      loop: start=0, step=1, limit=1
      $region140: #{conv_block.1} parent=138 // loop_pre_header
        _
      $region141: #{conv_block.1} parent=138 // loop_header
        %s3890 = sphi 0, %s3894
        %p3891 = scmp.ge.s32.totalorder %s3890, 1
        %s3895 = sphi %s3477, %s3477
        %s3896 = sphi %s898, %s898
      $region142: #{conv_block.1} parent=138 // loop_header_branch
        %3893 = sbr.rel (%p3891) target = $region146
      $region143: #{conv_block.1} parent=138 // loop_body
        _
      $region144: #{conv_block.1} parent=138 // loop_footer
        %s3894 = sadd.s32 1, %s3890
      $region145: #{conv_block.1} parent=138 // loop_footer_branch
        %3889 = sbr.rel target = $region141
      $region146: #{conv_block.1} parent=138 // loop_exit
        _
      %s3897 = sshllo.u32 0, %s3884
      loop: start=0, step=1, limit=1
      $region147: #{conv_block.1} parent=138 // loop_pre_header
        _
      $region148: #{conv_block.1} parent=138 // loop_header
        %s3899 = sphi 0, %s3903
        %p3900 = scmp.ge.s32.totalorder %s3899, 1
        %s3904 = sphi %s3886, %s3886
        %s3905 = sphi %s3888, %s3888
      $region149: #{conv_block.1} parent=138 // loop_header_branch
        %3902 = sbr.rel (%p3900) target = $region153
      $region150: #{conv_block.1} parent=138 // loop_body
        %v3906 = vld [vmem:[%s3904] sm:%s3897]
        %3907 = vst [vmem:[%s3905] sm:%s3897] %v3906
        %v3908 = vld [vmem:[%s3904 + $0x8] sm:%s3897]
        %3909 = vst [vmem:[%s3905 + $0x4] sm:%s3897] %v3908
        %v3910 = vld [vmem:[%s3904 + $0x4] sm:%s3897]
        %3911 = vst [vmem:[%s3905 + $0x8] sm:%s3897] %v3910
        %v3912 = vld [vmem:[%s3904 + $0xc] sm:%s3897]
        %3913 = vst [vmem:[%s3905 + $0xc] sm:%s3897] %v3912
        %v3914 = vld [vmem:[%s3904 + $0x10] sm:%s3897]
        %3915 = vst [vmem:[%s3905 + $0x10] sm:%s3897] %v3914
        %v3916 = vld [vmem:[%s3904 + $0x18] sm:%s3897]
        %3917 = vst [vmem:[%s3905 + $0x14] sm:%s3897] %v3916
        %v3918 = vld [vmem:[%s3904 + $0x14] sm:%s3897]
        %3919 = vst [vmem:[%s3905 + $0x18] sm:%s3897] %v3918
        %v3920 = vld [vmem:[%s3904 + $0x1c] sm:%s3897]
        %3921 = vst [vmem:[%s3905 + $0x1c] sm:%s3897] %v3920
        %v3922 = vld [vmem:[%s3904 + $0x20] sm:%s3897]
        %3923 = vst [vmem:[%s3905 + $0x20] sm:%s3897] %v3922
        %v3924 = vld [vmem:[%s3904 + $0x28] sm:%s3897]
        %3925 = vst [vmem:[%s3905 + $0x24] sm:%s3897] %v3924
        %v3926 = vld [vmem:[%s3904 + $0x24] sm:%s3897]
        %3927 = vst [vmem:[%s3905 + $0x28] sm:%s3897] %v3926
        %v3928 = vld [vmem:[%s3904 + $0x2c] sm:%s3897]
        %3929 = vst [vmem:[%s3905 + $0x2c] sm:%s3897] %v3928
        %v3930 = vld [vmem:[%s3904 + $0x30] sm:%s3897]
        %3931 = vst [vmem:[%s3905 + $0x30] sm:%s3897] %v3930
        %v3932 = vld [vmem:[%s3904 + $0x38] sm:%s3897]
        %3933 = vst [vmem:[%s3905 + $0x34] sm:%s3897] %v3932
        %v3934 = vld [vmem:[%s3904 + $0x34] sm:%s3897]
        %3935 = vst [vmem:[%s3905 + $0x38] sm:%s3897] %v3934
        %v3936 = vld [vmem:[%s3904 + $0x3c] sm:%s3897]
        %3937 = vst [vmem:[%s3905 + $0x3c] sm:%s3897] %v3936
        %v3938 = vld [vmem:[%s3904 + $0x40] sm:%s3897]
        %3939 = vst [vmem:[%s3905 + $0x40] sm:%s3897] %v3938
        %v3940 = vld [vmem:[%s3904 + $0x48] sm:%s3897]
        %3941 = vst [vmem:[%s3905 + $0x44] sm:%s3897] %v3940
        %v3942 = vld [vmem:[%s3904 + $0x44] sm:%s3897]
        %3943 = vst [vmem:[%s3905 + $0x48] sm:%s3897] %v3942
        %v3944 = vld [vmem:[%s3904 + $0x4c] sm:%s3897]
        %3945 = vst [vmem:[%s3905 + $0x4c] sm:%s3897] %v3944
        %v3946 = vld [vmem:[%s3904 + $0x50] sm:%s3897]
        %3947 = vst [vmem:[%s3905 + $0x50] sm:%s3897] %v3946
        %v3948 = vld [vmem:[%s3904 + $0x58] sm:%s3897]
        %3949 = vst [vmem:[%s3905 + $0x54] sm:%s3897] %v3948
        %v3950 = vld [vmem:[%s3904 + $0x54] sm:%s3897]
        %3951 = vst [vmem:[%s3905 + $0x58] sm:%s3897] %v3950
        %v3952 = vld [vmem:[%s3904 + $0x5c] sm:%s3897]
        %3953 = vst [vmem:[%s3905 + $0x5c] sm:%s3897] %v3952
        %v3954 = vld [vmem:[%s3904 + $0x60] sm:%s3897]
        %3955 = vst [vmem:[%s3905 + $0x60] sm:%s3897] %v3954
        %v3956 = vld [vmem:[%s3904 + $0x68] sm:%s3897]
        %3957 = vst [vmem:[%s3905 + $0x64] sm:%s3897] %v3956
        %v3958 = vld [vmem:[%s3904 + $0x64] sm:%s3897]
        %3959 = vst [vmem:[%s3905 + $0x68] sm:%s3897] %v3958
        %v3960 = vld [vmem:[%s3904 + $0x6c] sm:%s3897]
        %3961 = vst [vmem:[%s3905 + $0x6c] sm:%s3897] %v3960
        %v3962 = vld [vmem:[%s3904 + $0x70] sm:%s3897]
        %3963 = vst [vmem:[%s3905 + $0x70] sm:%s3897] %v3962
        %v3964 = vld [vmem:[%s3904 + $0x78] sm:%s3897]
        %3965 = vst [vmem:[%s3905 + $0x74] sm:%s3897] %v3964
        %v3966 = vld [vmem:[%s3904 + $0x74] sm:%s3897]
        %3967 = vst [vmem:[%s3905 + $0x78] sm:%s3897] %v3966
        %v3968 = vld [vmem:[%s3904 + $0x7c] sm:%s3897]
        %3969 = vst [vmem:[%s3905 + $0x7c] sm:%s3897] %v3968
        %v3970 = vld [vmem:[%s3904 + $0x80] sm:%s3897]
        %3971 = vst [vmem:[%s3905 + $0x80] sm:%s3897] %v3970
        %v3972 = vld [vmem:[%s3904 + $0x88] sm:%s3897]
        %3973 = vst [vmem:[%s3905 + $0x84] sm:%s3897] %v3972
        %v3974 = vld [vmem:[%s3904 + $0x84] sm:%s3897]
        %3975 = vst [vmem:[%s3905 + $0x88] sm:%s3897] %v3974
        %v3976 = vld [vmem:[%s3904 + $0x8c] sm:%s3897]
        %3977 = vst [vmem:[%s3905 + $0x8c] sm:%s3897] %v3976
        %v3978 = vld [vmem:[%s3904 + $0x90] sm:%s3897]
        %3979 = vst [vmem:[%s3905 + $0x90] sm:%s3897] %v3978
        %v3980 = vld [vmem:[%s3904 + $0x98] sm:%s3897]
        %3981 = vst [vmem:[%s3905 + $0x94] sm:%s3897] %v3980
        %v3982 = vld [vmem:[%s3904 + $0x94] sm:%s3897]
        %3983 = vst [vmem:[%s3905 + $0x98] sm:%s3897] %v3982
        %v3984 = vld [vmem:[%s3904 + $0x9c] sm:%s3897]
        %3985 = vst [vmem:[%s3905 + $0x9c] sm:%s3897] %v3984
        %v3986 = vld [vmem:[%s3904 + $0xa0] sm:%s3897]
        %3987 = vst [vmem:[%s3905 + $0xa0] sm:%s3897] %v3986
        %v3988 = vld [vmem:[%s3904 + $0xa8] sm:%s3897]
        %3989 = vst [vmem:[%s3905 + $0xa4] sm:%s3897] %v3988
        %v3990 = vld [vmem:[%s3904 + $0xa4] sm:%s3897]
        %3991 = vst [vmem:[%s3905 + $0xa8] sm:%s3897] %v3990
        %v3992 = vld [vmem:[%s3904 + $0xac] sm:%s3897]
        %3993 = vst [vmem:[%s3905 + $0xac] sm:%s3897] %v3992
        %v3994 = vld [vmem:[%s3904 + $0xb0] sm:%s3897]
        %3995 = vst [vmem:[%s3905 + $0xb0] sm:%s3897] %v3994
        %v3996 = vld [vmem:[%s3904 + $0xb8] sm:%s3897]
        %3997 = vst [vmem:[%s3905 + $0xb4] sm:%s3897] %v3996
        %v3998 = vld [vmem:[%s3904 + $0xb4] sm:%s3897]
        %3999 = vst [vmem:[%s3905 + $0xb8] sm:%s3897] %v3998
        %v4000 = vld [vmem:[%s3904 + $0xbc] sm:%s3897]
        %4001 = vst [vmem:[%s3905 + $0xbc] sm:%s3897] %v4000
        %v4002 = vld [vmem:[%s3904 + $0xc0] sm:%s3897]
        %4003 = vst [vmem:[%s3905 + $0xc0] sm:%s3897] %v4002
        %v4004 = vld [vmem:[%s3904 + $0xc8] sm:%s3897]
        %4005 = vst [vmem:[%s3905 + $0xc4] sm:%s3897] %v4004
        %v4006 = vld [vmem:[%s3904 + $0xc4] sm:%s3897]
        %4007 = vst [vmem:[%s3905 + $0xc8] sm:%s3897] %v4006
        %v4008 = vld [vmem:[%s3904 + $0xcc] sm:%s3897]
        %4009 = vst [vmem:[%s3905 + $0xcc] sm:%s3897] %v4008
        %v4010 = vld [vmem:[%s3904 + $0xd0] sm:%s3897]
        %4011 = vst [vmem:[%s3905 + $0xd0] sm:%s3897] %v4010
        %v4012 = vld [vmem:[%s3904 + $0xd8] sm:%s3897]
        %4013 = vst [vmem:[%s3905 + $0xd4] sm:%s3897] %v4012
        %v4014 = vld [vmem:[%s3904 + $0xd4] sm:%s3897]
        %4015 = vst [vmem:[%s3905 + $0xd8] sm:%s3897] %v4014
        %v4016 = vld [vmem:[%s3904 + $0xdc] sm:%s3897]
        %4017 = vst [vmem:[%s3905 + $0xdc] sm:%s3897] %v4016
        %v4018 = vld [vmem:[%s3904 + $0xe0] sm:%s3897]
        %4019 = vst [vmem:[%s3905 + $0xe0] sm:%s3897] %v4018
        %v4020 = vld [vmem:[%s3904 + $0xe8] sm:%s3897]
        %4021 = vst [vmem:[%s3905 + $0xe4] sm:%s3897] %v4020
        %v4022 = vld [vmem:[%s3904 + $0xe4] sm:%s3897]
        %4023 = vst [vmem:[%s3905 + $0xe8] sm:%s3897] %v4022
        %v4024 = vld [vmem:[%s3904 + $0xec] sm:%s3897]
        %4025 = vst [vmem:[%s3905 + $0xec] sm:%s3897] %v4024
        %v4026 = vld [vmem:[%s3904 + $0xf0] sm:%s3897]
        %4027 = vst [vmem:[%s3905 + $0xf0] sm:%s3897] %v4026
        %v4028 = vld [vmem:[%s3904 + $0xf8] sm:%s3897]
        %4029 = vst [vmem:[%s3905 + $0xf4] sm:%s3897] %v4028
        %v4030 = vld [vmem:[%s3904 + $0xf4] sm:%s3897]
        %4031 = vst [vmem:[%s3905 + $0xf8] sm:%s3897] %v4030
        %v4032 = vld [vmem:[%s3904 + $0xfc] sm:%s3897]
        %4033 = vst [vmem:[%s3905 + $0xfc] sm:%s3897] %v4032
        %v4034 = vld [vmem:[%s3904 + $0x100] sm:%s3897]
        %4035 = vst [vmem:[%s3905 + $0x100] sm:%s3897] %v4034
        %v4036 = vld [vmem:[%s3904 + $0x108] sm:%s3897]
        %4037 = vst [vmem:[%s3905 + $0x104] sm:%s3897] %v4036
        %v4038 = vld [vmem:[%s3904 + $0x104] sm:%s3897]
        %4039 = vst [vmem:[%s3905 + $0x108] sm:%s3897] %v4038
        %v4040 = vld [vmem:[%s3904 + $0x10c] sm:%s3897]
        %4041 = vst [vmem:[%s3905 + $0x10c] sm:%s3897] %v4040
        %v4042 = vld [vmem:[%s3904 + $0x110] sm:%s3897]
        %4043 = vst [vmem:[%s3905 + $0x110] sm:%s3897] %v4042
        %v4044 = vld [vmem:[%s3904 + $0x118] sm:%s3897]
        %4045 = vst [vmem:[%s3905 + $0x114] sm:%s3897] %v4044
        %v4046 = vld [vmem:[%s3904 + $0x114] sm:%s3897]
        %4047 = vst [vmem:[%s3905 + $0x118] sm:%s3897] %v4046
        %v4048 = vld [vmem:[%s3904 + $0x11c] sm:%s3897]
        %4049 = vst [vmem:[%s3905 + $0x11c] sm:%s3897] %v4048
        %v4050 = vld [vmem:[%s3904 + $0x120] sm:%s3897]
        %4051 = vst [vmem:[%s3905 + $0x120] sm:%s3897] %v4050
        %v4052 = vld [vmem:[%s3904 + $0x128] sm:%s3897]
        %4053 = vst [vmem:[%s3905 + $0x124] sm:%s3897] %v4052
        %v4054 = vld [vmem:[%s3904 + $0x124] sm:%s3897]
        %4055 = vst [vmem:[%s3905 + $0x128] sm:%s3897] %v4054
        %v4056 = vld [vmem:[%s3904 + $0x12c] sm:%s3897]
        %4057 = vst [vmem:[%s3905 + $0x12c] sm:%s3897] %v4056
        %v4058 = vld [vmem:[%s3904 + $0x130] sm:%s3897]
        %4059 = vst [vmem:[%s3905 + $0x130] sm:%s3897] %v4058
        %v4060 = vld [vmem:[%s3904 + $0x138] sm:%s3897]
        %4061 = vst [vmem:[%s3905 + $0x134] sm:%s3897] %v4060
        %v4062 = vld [vmem:[%s3904 + $0x134] sm:%s3897]
        %4063 = vst [vmem:[%s3905 + $0x138] sm:%s3897] %v4062
        %v4064 = vld [vmem:[%s3904 + $0x13c] sm:%s3897]
        %4065 = vst [vmem:[%s3905 + $0x13c] sm:%s3897] %v4064
        %v4066 = vld [vmem:[%s3904 + $0x140] sm:%s3897]
        %4067 = vst [vmem:[%s3905 + $0x140] sm:%s3897] %v4066
        %v4068 = vld [vmem:[%s3904 + $0x148] sm:%s3897]
        %4069 = vst [vmem:[%s3905 + $0x144] sm:%s3897] %v4068
        %v4070 = vld [vmem:[%s3904 + $0x144] sm:%s3897]
        %4071 = vst [vmem:[%s3905 + $0x148] sm:%s3897] %v4070
        %v4072 = vld [vmem:[%s3904 + $0x14c] sm:%s3897]
        %4073 = vst [vmem:[%s3905 + $0x14c] sm:%s3897] %v4072
        %v4074 = vld [vmem:[%s3904 + $0x150] sm:%s3897]
        %4075 = vst [vmem:[%s3905 + $0x150] sm:%s3897] %v4074
        %v4076 = vld [vmem:[%s3904 + $0x158] sm:%s3897]
        %4077 = vst [vmem:[%s3905 + $0x154] sm:%s3897] %v4076
        %v4078 = vld [vmem:[%s3904 + $0x154] sm:%s3897]
        %4079 = vst [vmem:[%s3905 + $0x158] sm:%s3897] %v4078
        %v4080 = vld [vmem:[%s3904 + $0x15c] sm:%s3897]
        %4081 = vst [vmem:[%s3905 + $0x15c] sm:%s3897] %v4080
        %v4082 = vld [vmem:[%s3904 + $0x160] sm:%s3897]
        %4083 = vst [vmem:[%s3905 + $0x160] sm:%s3897] %v4082
        %v4084 = vld [vmem:[%s3904 + $0x168] sm:%s3897]
        %4085 = vst [vmem:[%s3905 + $0x164] sm:%s3897] %v4084
        %v4086 = vld [vmem:[%s3904 + $0x164] sm:%s3897]
        %4087 = vst [vmem:[%s3905 + $0x168] sm:%s3897] %v4086
        %v4088 = vld [vmem:[%s3904 + $0x16c] sm:%s3897]
        %4089 = vst [vmem:[%s3905 + $0x16c] sm:%s3897] %v4088
        %v4090 = vld [vmem:[%s3904 + $0x170] sm:%s3897]
        %4091 = vst [vmem:[%s3905 + $0x170] sm:%s3897] %v4090
        %v4092 = vld [vmem:[%s3904 + $0x178] sm:%s3897]
        %4093 = vst [vmem:[%s3905 + $0x174] sm:%s3897] %v4092
        %v4094 = vld [vmem:[%s3904 + $0x174] sm:%s3897]
        %4095 = vst [vmem:[%s3905 + $0x178] sm:%s3897] %v4094
        %v4096 = vld [vmem:[%s3904 + $0x17c] sm:%s3897]
        %4097 = vst [vmem:[%s3905 + $0x17c] sm:%s3897] %v4096
        %v4098 = vld [vmem:[%s3904 + $0x180] sm:%s3897]
        %4099 = vst [vmem:[%s3905 + $0x180] sm:%s3897] %v4098
        %v4100 = vld [vmem:[%s3904 + $0x188] sm:%s3897]
        %4101 = vst [vmem:[%s3905 + $0x184] sm:%s3897] %v4100
        %v4102 = vld [vmem:[%s3904 + $0x184] sm:%s3897]
        %4103 = vst [vmem:[%s3905 + $0x188] sm:%s3897] %v4102
        %v4104 = vld [vmem:[%s3904 + $0x18c] sm:%s3897]
        %4105 = vst [vmem:[%s3905 + $0x18c] sm:%s3897] %v4104
        %v4106 = vld [vmem:[%s3904 + $0x190] sm:%s3897]
        %4107 = vst [vmem:[%s3905 + $0x190] sm:%s3897] %v4106
        %v4108 = vld [vmem:[%s3904 + $0x198] sm:%s3897]
        %4109 = vst [vmem:[%s3905 + $0x194] sm:%s3897] %v4108
        %v4110 = vld [vmem:[%s3904 + $0x194] sm:%s3897]
        %4111 = vst [vmem:[%s3905 + $0x198] sm:%s3897] %v4110
        %v4112 = vld [vmem:[%s3904 + $0x19c] sm:%s3897]
        %4113 = vst [vmem:[%s3905 + $0x19c] sm:%s3897] %v4112
        %v4114 = vld [vmem:[%s3904 + $0x1a0] sm:%s3897]
        %4115 = vst [vmem:[%s3905 + $0x1a0] sm:%s3897] %v4114
        %v4116 = vld [vmem:[%s3904 + $0x1a8] sm:%s3897]
        %4117 = vst [vmem:[%s3905 + $0x1a4] sm:%s3897] %v4116
        %v4118 = vld [vmem:[%s3904 + $0x1a4] sm:%s3897]
        %4119 = vst [vmem:[%s3905 + $0x1a8] sm:%s3897] %v4118
        %v4120 = vld [vmem:[%s3904 + $0x1ac] sm:%s3897]
        %4121 = vst [vmem:[%s3905 + $0x1ac] sm:%s3897] %v4120
        %v4122 = vld [vmem:[%s3904 + $0x1b0] sm:%s3897]
        %4123 = vst [vmem:[%s3905 + $0x1b0] sm:%s3897] %v4122
        %v4124 = vld [vmem:[%s3904 + $0x1b8] sm:%s3897]
        %4125 = vst [vmem:[%s3905 + $0x1b4] sm:%s3897] %v4124
        %v4126 = vld [vmem:[%s3904 + $0x1b4] sm:%s3897]
        %4127 = vst [vmem:[%s3905 + $0x1b8] sm:%s3897] %v4126
        %v4128 = vld [vmem:[%s3904 + $0x1bc] sm:%s3897]
        %4129 = vst [vmem:[%s3905 + $0x1bc] sm:%s3897] %v4128
        %v4130 = vld [vmem:[%s3904 + $0x1c0] sm:%s3897]
        %4131 = vst [vmem:[%s3905 + $0x1c0] sm:%s3897] %v4130
        %v4132 = vld [vmem:[%s3904 + $0x1c8] sm:%s3897]
        %4133 = vst [vmem:[%s3905 + $0x1c4] sm:%s3897] %v4132
        %v4134 = vld [vmem:[%s3904 + $0x1c4] sm:%s3897]
        %4135 = vst [vmem:[%s3905 + $0x1c8] sm:%s3897] %v4134
        %v4136 = vld [vmem:[%s3904 + $0x1cc] sm:%s3897]
        %4137 = vst [vmem:[%s3905 + $0x1cc] sm:%s3897] %v4136
        %v4138 = vld [vmem:[%s3904 + $0x1d0] sm:%s3897]
        %4139 = vst [vmem:[%s3905 + $0x1d0] sm:%s3897] %v4138
        %v4140 = vld [vmem:[%s3904 + $0x1d8] sm:%s3897]
        %4141 = vst [vmem:[%s3905 + $0x1d4] sm:%s3897] %v4140
        %v4142 = vld [vmem:[%s3904 + $0x1d4] sm:%s3897]
        %4143 = vst [vmem:[%s3905 + $0x1d8] sm:%s3897] %v4142
        %v4144 = vld [vmem:[%s3904 + $0x1dc] sm:%s3897]
        %4145 = vst [vmem:[%s3905 + $0x1dc] sm:%s3897] %v4144
        %v4146 = vld [vmem:[%s3904 + $0x1e0] sm:%s3897]
        %4147 = vst [vmem:[%s3905 + $0x1e0] sm:%s3897] %v4146
        %v4148 = vld [vmem:[%s3904 + $0x1e8] sm:%s3897]
        %4149 = vst [vmem:[%s3905 + $0x1e4] sm:%s3897] %v4148
        %v4150 = vld [vmem:[%s3904 + $0x1e4] sm:%s3897]
        %4151 = vst [vmem:[%s3905 + $0x1e8] sm:%s3897] %v4150
        %v4152 = vld [vmem:[%s3904 + $0x1ec] sm:%s3897]
        %4153 = vst [vmem:[%s3905 + $0x1ec] sm:%s3897] %v4152
        %v4154 = vld [vmem:[%s3904 + $0x1f0] sm:%s3897]
        %4155 = vst [vmem:[%s3905 + $0x1f0] sm:%s3897] %v4154
        %v4156 = vld [vmem:[%s3904 + $0x1f8] sm:%s3897]
        %4157 = vst [vmem:[%s3905 + $0x1f4] sm:%s3897] %v4156
        %v4158 = vld [vmem:[%s3904 + $0x1f4] sm:%s3897]
        %4159 = vst [vmem:[%s3905 + $0x1f8] sm:%s3897] %v4158
        %v4160 = vld [vmem:[%s3904 + $0x1fc] sm:%s3897]
        %4161 = vst [vmem:[%s3905 + $0x1fc] sm:%s3897] %v4160
        %v4162 = vld [vmem:[%s3904 + $0x200] sm:%s3897]
        %4163 = vst [vmem:[%s3905 + $0x200] sm:%s3897] %v4162
        %v4164 = vld [vmem:[%s3904 + $0x208] sm:%s3897]
        %4165 = vst [vmem:[%s3905 + $0x204] sm:%s3897] %v4164
        %v4166 = vld [vmem:[%s3904 + $0x204] sm:%s3897]
        %4167 = vst [vmem:[%s3905 + $0x208] sm:%s3897] %v4166
        %v4168 = vld [vmem:[%s3904 + $0x20c] sm:%s3897]
        %4169 = vst [vmem:[%s3905 + $0x20c] sm:%s3897] %v4168
        %v4170 = vld [vmem:[%s3904 + $0x210] sm:%s3897]
        %4171 = vst [vmem:[%s3905 + $0x210] sm:%s3897] %v4170
        %v4172 = vld [vmem:[%s3904 + $0x218] sm:%s3897]
        %4173 = vst [vmem:[%s3905 + $0x214] sm:%s3897] %v4172
        %v4174 = vld [vmem:[%s3904 + $0x214] sm:%s3897]
        %4175 = vst [vmem:[%s3905 + $0x218] sm:%s3897] %v4174
        %v4176 = vld [vmem:[%s3904 + $0x21c] sm:%s3897]
        %4177 = vst [vmem:[%s3905 + $0x21c] sm:%s3897] %v4176
        %v4178 = vld [vmem:[%s3904 + $0x220] sm:%s3897]
        %4179 = vst [vmem:[%s3905 + $0x220] sm:%s3897] %v4178
        %v4180 = vld [vmem:[%s3904 + $0x228] sm:%s3897]
        %4181 = vst [vmem:[%s3905 + $0x224] sm:%s3897] %v4180
        %v4182 = vld [vmem:[%s3904 + $0x224] sm:%s3897]
        %4183 = vst [vmem:[%s3905 + $0x228] sm:%s3897] %v4182
        %v4184 = vld [vmem:[%s3904 + $0x22c] sm:%s3897]
        %4185 = vst [vmem:[%s3905 + $0x22c] sm:%s3897] %v4184
        %v4186 = vld [vmem:[%s3904 + $0x230] sm:%s3897]
        %4187 = vst [vmem:[%s3905 + $0x230] sm:%s3897] %v4186
        %v4188 = vld [vmem:[%s3904 + $0x238] sm:%s3897]
        %4189 = vst [vmem:[%s3905 + $0x234] sm:%s3897] %v4188
        %v4190 = vld [vmem:[%s3904 + $0x234] sm:%s3897]
        %4191 = vst [vmem:[%s3905 + $0x238] sm:%s3897] %v4190
        %v4192 = vld [vmem:[%s3904 + $0x23c] sm:%s3897]
        %4193 = vst [vmem:[%s3905 + $0x23c] sm:%s3897] %v4192
        %v4194 = vld [vmem:[%s3904 + $0x240] sm:%s3897]
        %4195 = vst [vmem:[%s3905 + $0x240] sm:%s3897] %v4194
        %v4196 = vld [vmem:[%s3904 + $0x248] sm:%s3897]
        %4197 = vst [vmem:[%s3905 + $0x244] sm:%s3897] %v4196
        %v4198 = vld [vmem:[%s3904 + $0x244] sm:%s3897]
        %4199 = vst [vmem:[%s3905 + $0x248] sm:%s3897] %v4198
        %v4200 = vld [vmem:[%s3904 + $0x24c] sm:%s3897]
        %4201 = vst [vmem:[%s3905 + $0x24c] sm:%s3897] %v4200
        %v4202 = vld [vmem:[%s3904 + $0x250] sm:%s3897]
        %4203 = vst [vmem:[%s3905 + $0x250] sm:%s3897] %v4202
        %v4204 = vld [vmem:[%s3904 + $0x258] sm:%s3897]
        %4205 = vst [vmem:[%s3905 + $0x254] sm:%s3897] %v4204
        %v4206 = vld [vmem:[%s3904 + $0x254] sm:%s3897]
        %4207 = vst [vmem:[%s3905 + $0x258] sm:%s3897] %v4206
        %v4208 = vld [vmem:[%s3904 + $0x25c] sm:%s3897]
        %4209 = vst [vmem:[%s3905 + $0x25c] sm:%s3897] %v4208
        %v4210 = vld [vmem:[%s3904 + $0x260] sm:%s3897]
        %4211 = vst [vmem:[%s3905 + $0x260] sm:%s3897] %v4210
        %v4212 = vld [vmem:[%s3904 + $0x268] sm:%s3897]
        %4213 = vst [vmem:[%s3905 + $0x264] sm:%s3897] %v4212
        %v4214 = vld [vmem:[%s3904 + $0x264] sm:%s3897]
        %4215 = vst [vmem:[%s3905 + $0x268] sm:%s3897] %v4214
        %v4216 = vld [vmem:[%s3904 + $0x26c] sm:%s3897]
        %4217 = vst [vmem:[%s3905 + $0x26c] sm:%s3897] %v4216
        %v4218 = vld [vmem:[%s3904 + $0x270] sm:%s3897]
        %4219 = vst [vmem:[%s3905 + $0x270] sm:%s3897] %v4218
        %v4220 = vld [vmem:[%s3904 + $0x278] sm:%s3897]
        %4221 = vst [vmem:[%s3905 + $0x274] sm:%s3897] %v4220
        %v4222 = vld [vmem:[%s3904 + $0x274] sm:%s3897]
        %4223 = vst [vmem:[%s3905 + $0x278] sm:%s3897] %v4222
        %v4224 = vld [vmem:[%s3904 + $0x27c] sm:%s3897]
        %4225 = vst [vmem:[%s3905 + $0x27c] sm:%s3897] %v4224
        %v4226 = vld [vmem:[%s3904 + $0x280] sm:%s3897]
        %4227 = vst [vmem:[%s3905 + $0x280] sm:%s3897] %v4226
        %v4228 = vld [vmem:[%s3904 + $0x288] sm:%s3897]
        %4229 = vst [vmem:[%s3905 + $0x284] sm:%s3897] %v4228
        %v4230 = vld [vmem:[%s3904 + $0x284] sm:%s3897]
        %4231 = vst [vmem:[%s3905 + $0x288] sm:%s3897] %v4230
        %v4232 = vld [vmem:[%s3904 + $0x28c] sm:%s3897]
        %4233 = vst [vmem:[%s3905 + $0x28c] sm:%s3897] %v4232
        %v4234 = vld [vmem:[%s3904 + $0x290] sm:%s3897]
        %4235 = vst [vmem:[%s3905 + $0x290] sm:%s3897] %v4234
        %v4236 = vld [vmem:[%s3904 + $0x298] sm:%s3897]
        %4237 = vst [vmem:[%s3905 + $0x294] sm:%s3897] %v4236
        %v4238 = vld [vmem:[%s3904 + $0x294] sm:%s3897]
        %4239 = vst [vmem:[%s3905 + $0x298] sm:%s3897] %v4238
        %v4240 = vld [vmem:[%s3904 + $0x29c] sm:%s3897]
        %4241 = vst [vmem:[%s3905 + $0x29c] sm:%s3897] %v4240
        %v4242 = vld [vmem:[%s3904 + $0x2a0] sm:%s3897]
        %4243 = vst [vmem:[%s3905 + $0x2a0] sm:%s3897] %v4242
        %v4244 = vld [vmem:[%s3904 + $0x2a8] sm:%s3897]
        %4245 = vst [vmem:[%s3905 + $0x2a4] sm:%s3897] %v4244
        %v4246 = vld [vmem:[%s3904 + $0x2a4] sm:%s3897]
        %4247 = vst [vmem:[%s3905 + $0x2a8] sm:%s3897] %v4246
        %v4248 = vld [vmem:[%s3904 + $0x2ac] sm:%s3897]
        %4249 = vst [vmem:[%s3905 + $0x2ac] sm:%s3897] %v4248
        %v4250 = vld [vmem:[%s3904 + $0x2b0] sm:%s3897]
        %4251 = vst [vmem:[%s3905 + $0x2b0] sm:%s3897] %v4250
        %v4252 = vld [vmem:[%s3904 + $0x2b8] sm:%s3897]
        %4253 = vst [vmem:[%s3905 + $0x2b4] sm:%s3897] %v4252
        %v4254 = vld [vmem:[%s3904 + $0x2b4] sm:%s3897]
        %4255 = vst [vmem:[%s3905 + $0x2b8] sm:%s3897] %v4254
        %v4256 = vld [vmem:[%s3904 + $0x2bc] sm:%s3897]
        %4257 = vst [vmem:[%s3905 + $0x2bc] sm:%s3897] %v4256
        %v4258 = vld [vmem:[%s3904 + $0x2c0] sm:%s3897]
        %4259 = vst [vmem:[%s3905 + $0x2c0] sm:%s3897] %v4258
        %v4260 = vld [vmem:[%s3904 + $0x2c8] sm:%s3897]
        %4261 = vst [vmem:[%s3905 + $0x2c4] sm:%s3897] %v4260
        %v4262 = vld [vmem:[%s3904 + $0x2c4] sm:%s3897]
        %4263 = vst [vmem:[%s3905 + $0x2c8] sm:%s3897] %v4262
        %v4264 = vld [vmem:[%s3904 + $0x2cc] sm:%s3897]
        %4265 = vst [vmem:[%s3905 + $0x2cc] sm:%s3897] %v4264
        %v4266 = vld [vmem:[%s3904 + $0x2d0] sm:%s3897]
        %4267 = vst [vmem:[%s3905 + $0x2d0] sm:%s3897] %v4266
        %v4268 = vld [vmem:[%s3904 + $0x2d8] sm:%s3897]
        %4269 = vst [vmem:[%s3905 + $0x2d4] sm:%s3897] %v4268
        %v4270 = vld [vmem:[%s3904 + $0x2d4] sm:%s3897]
        %4271 = vst [vmem:[%s3905 + $0x2d8] sm:%s3897] %v4270
        %v4272 = vld [vmem:[%s3904 + $0x2dc] sm:%s3897]
        %4273 = vst [vmem:[%s3905 + $0x2dc] sm:%s3897] %v4272
        %v4274 = vld [vmem:[%s3904 + $0x2e0] sm:%s3897]
        %4275 = vst [vmem:[%s3905 + $0x2e0] sm:%s3897] %v4274
        %v4276 = vld [vmem:[%s3904 + $0x2e8] sm:%s3897]
        %4277 = vst [vmem:[%s3905 + $0x2e4] sm:%s3897] %v4276
        %v4278 = vld [vmem:[%s3904 + $0x2e4] sm:%s3897]
        %4279 = vst [vmem:[%s3905 + $0x2e8] sm:%s3897] %v4278
        %v4280 = vld [vmem:[%s3904 + $0x2ec] sm:%s3897]
        %4281 = vst [vmem:[%s3905 + $0x2ec] sm:%s3897] %v4280
        %v4282 = vld [vmem:[%s3904 + $0x2f0] sm:%s3897]
        %4283 = vst [vmem:[%s3905 + $0x2f0] sm:%s3897] %v4282
        %v4284 = vld [vmem:[%s3904 + $0x2f8] sm:%s3897]
        %4285 = vst [vmem:[%s3905 + $0x2f4] sm:%s3897] %v4284
        %v4286 = vld [vmem:[%s3904 + $0x2f4] sm:%s3897]
        %4287 = vst [vmem:[%s3905 + $0x2f8] sm:%s3897] %v4286
        %v4288 = vld [vmem:[%s3904 + $0x2fc] sm:%s3897]
        %4289 = vst [vmem:[%s3905 + $0x2fc] sm:%s3897] %v4288
      $region151: #{conv_block.1} parent=138 // loop_footer
        %s3903 = sadd.s32 1, %s3899
      $region152: #{conv_block.1} parent=138 // loop_footer_branch
        %3898 = sbr.rel target = $region148
      $region153: #{conv_block.1} parent=138 // loop_exit
        _
    $region139: #{conv_block.1} parent=123 // pred_fallthru
      _
  $region124: #{conv_block.1} parent=0 // pred_fallthru
    _
  // Predicated region
  $region125: #{conv_block.1} parent=0 // pred_check
    %p3483 = pneg %p3479
  $region126: #{conv_block.1} parent=0 // pred_check_branch
    %3485 = sbr.rel (%p3483) target = $region128
  $region127: #{conv_block.1} parent=0 // pred_region
    %s3486 = sshllo.u32 0, 4
    loop: start=0, step=1, limit=1
    $region129: #{conv_block.1} parent=127 // loop_pre_header
      _
    $region130: #{conv_block.1} parent=127 // loop_header
      %s3488 = sphi 0, %s3492
      %p3489 = scmp.ge.s32.totalorder %s3488, 1
      %s3493 = sphi %s3477, %s3477
      %s3494 = sphi %s898, %s898
    $region131: #{conv_block.1} parent=127 // loop_header_branch
      %3491 = sbr.rel (%p3489) target = $region135
    $region132: #{conv_block.1} parent=127 // loop_body
      %v3495 = vld [vmem:[%s3493] sm:%s3486]
      %3496 = vst [vmem:[%s3494] sm:%s3486] %v3495
      %v3497 = vld [vmem:[%s3493 + $0x8] sm:%s3486]
      %3498 = vst [vmem:[%s3494 + $0x4] sm:%s3486] %v3497
      %v3499 = vld [vmem:[%s3493 + $0x4] sm:%s3486]
      %3500 = vst [vmem:[%s3494 + $0x8] sm:%s3486] %v3499
      %v3501 = vld [vmem:[%s3493 + $0xc] sm:%s3486]
      %3502 = vst [vmem:[%s3494 + $0xc] sm:%s3486] %v3501
      %v3503 = vld [vmem:[%s3493 + $0x10] sm:%s3486]
      %3504 = vst [vmem:[%s3494 + $0x10] sm:%s3486] %v3503
      %v3505 = vld [vmem:[%s3493 + $0x18] sm:%s3486]
      %3506 = vst [vmem:[%s3494 + $0x14] sm:%s3486] %v3505
      %v3507 = vld [vmem:[%s3493 + $0x14] sm:%s3486]
      %3508 = vst [vmem:[%s3494 + $0x18] sm:%s3486] %v3507
      %v3509 = vld [vmem:[%s3493 + $0x1c] sm:%s3486]
      %3510 = vst [vmem:[%s3494 + $0x1c] sm:%s3486] %v3509
      %v3511 = vld [vmem:[%s3493 + $0x20] sm:%s3486]
      %3512 = vst [vmem:[%s3494 + $0x20] sm:%s3486] %v3511
      %v3513 = vld [vmem:[%s3493 + $0x28] sm:%s3486]
      %3514 = vst [vmem:[%s3494 + $0x24] sm:%s3486] %v3513
      %v3515 = vld [vmem:[%s3493 + $0x24] sm:%s3486]
      %3516 = vst [vmem:[%s3494 + $0x28] sm:%s3486] %v3515
      %v3517 = vld [vmem:[%s3493 + $0x2c] sm:%s3486]
      %3518 = vst [vmem:[%s3494 + $0x2c] sm:%s3486] %v3517
      %v3519 = vld [vmem:[%s3493 + $0x30] sm:%s3486]
      %3520 = vst [vmem:[%s3494 + $0x30] sm:%s3486] %v3519
      %v3521 = vld [vmem:[%s3493 + $0x38] sm:%s3486]
      %3522 = vst [vmem:[%s3494 + $0x34] sm:%s3486] %v3521
      %v3523 = vld [vmem:[%s3493 + $0x34] sm:%s3486]
      %3524 = vst [vmem:[%s3494 + $0x38] sm:%s3486] %v3523
      %v3525 = vld [vmem:[%s3493 + $0x3c] sm:%s3486]
      %3526 = vst [vmem:[%s3494 + $0x3c] sm:%s3486] %v3525
      %v3527 = vld [vmem:[%s3493 + $0x40] sm:%s3486]
      %3528 = vst [vmem:[%s3494 + $0x40] sm:%s3486] %v3527
      %v3529 = vld [vmem:[%s3493 + $0x48] sm:%s3486]
      %3530 = vst [vmem:[%s3494 + $0x44] sm:%s3486] %v3529
      %v3531 = vld [vmem:[%s3493 + $0x44] sm:%s3486]
      %3532 = vst [vmem:[%s3494 + $0x48] sm:%s3486] %v3531
      %v3533 = vld [vmem:[%s3493 + $0x4c] sm:%s3486]
      %3534 = vst [vmem:[%s3494 + $0x4c] sm:%s3486] %v3533
      %v3535 = vld [vmem:[%s3493 + $0x50] sm:%s3486]
      %3536 = vst [vmem:[%s3494 + $0x50] sm:%s3486] %v3535
      %v3537 = vld [vmem:[%s3493 + $0x58] sm:%s3486]
      %3538 = vst [vmem:[%s3494 + $0x54] sm:%s3486] %v3537
      %v3539 = vld [vmem:[%s3493 + $0x54] sm:%s3486]
      %3540 = vst [vmem:[%s3494 + $0x58] sm:%s3486] %v3539
      %v3541 = vld [vmem:[%s3493 + $0x5c] sm:%s3486]
      %3542 = vst [vmem:[%s3494 + $0x5c] sm:%s3486] %v3541
      %v3543 = vld [vmem:[%s3493 + $0x60] sm:%s3486]
      %3544 = vst [vmem:[%s3494 + $0x60] sm:%s3486] %v3543
      %v3545 = vld [vmem:[%s3493 + $0x68] sm:%s3486]
      %3546 = vst [vmem:[%s3494 + $0x64] sm:%s3486] %v3545
      %v3547 = vld [vmem:[%s3493 + $0x64] sm:%s3486]
      %3548 = vst [vmem:[%s3494 + $0x68] sm:%s3486] %v3547
      %v3549 = vld [vmem:[%s3493 + $0x6c] sm:%s3486]
      %3550 = vst [vmem:[%s3494 + $0x6c] sm:%s3486] %v3549
      %v3551 = vld [vmem:[%s3493 + $0x70] sm:%s3486]
      %3552 = vst [vmem:[%s3494 + $0x70] sm:%s3486] %v3551
      %v3553 = vld [vmem:[%s3493 + $0x78] sm:%s3486]
      %3554 = vst [vmem:[%s3494 + $0x74] sm:%s3486] %v3553
      %v3555 = vld [vmem:[%s3493 + $0x74] sm:%s3486]
      %3556 = vst [vmem:[%s3494 + $0x78] sm:%s3486] %v3555
      %v3557 = vld [vmem:[%s3493 + $0x7c] sm:%s3486]
      %3558 = vst [vmem:[%s3494 + $0x7c] sm:%s3486] %v3557
      %v3559 = vld [vmem:[%s3493 + $0x80] sm:%s3486]
      %3560 = vst [vmem:[%s3494 + $0x80] sm:%s3486] %v3559
      %v3561 = vld [vmem:[%s3493 + $0x88] sm:%s3486]
      %3562 = vst [vmem:[%s3494 + $0x84] sm:%s3486] %v3561
      %v3563 = vld [vmem:[%s3493 + $0x84] sm:%s3486]
      %3564 = vst [vmem:[%s3494 + $0x88] sm:%s3486] %v3563
      %v3565 = vld [vmem:[%s3493 + $0x8c] sm:%s3486]
      %3566 = vst [vmem:[%s3494 + $0x8c] sm:%s3486] %v3565
      %v3567 = vld [vmem:[%s3493 + $0x90] sm:%s3486]
      %3568 = vst [vmem:[%s3494 + $0x90] sm:%s3486] %v3567
      %v3569 = vld [vmem:[%s3493 + $0x98] sm:%s3486]
      %3570 = vst [vmem:[%s3494 + $0x94] sm:%s3486] %v3569
      %v3571 = vld [vmem:[%s3493 + $0x94] sm:%s3486]
      %3572 = vst [vmem:[%s3494 + $0x98] sm:%s3486] %v3571
      %v3573 = vld [vmem:[%s3493 + $0x9c] sm:%s3486]
      %3574 = vst [vmem:[%s3494 + $0x9c] sm:%s3486] %v3573
      %v3575 = vld [vmem:[%s3493 + $0xa0] sm:%s3486]
      %3576 = vst [vmem:[%s3494 + $0xa0] sm:%s3486] %v3575
      %v3577 = vld [vmem:[%s3493 + $0xa8] sm:%s3486]
      %3578 = vst [vmem:[%s3494 + $0xa4] sm:%s3486] %v3577
      %v3579 = vld [vmem:[%s3493 + $0xa4] sm:%s3486]
      %3580 = vst [vmem:[%s3494 + $0xa8] sm:%s3486] %v3579
      %v3581 = vld [vmem:[%s3493 + $0xac] sm:%s3486]
      %3582 = vst [vmem:[%s3494 + $0xac] sm:%s3486] %v3581
      %v3583 = vld [vmem:[%s3493 + $0xb0] sm:%s3486]
      %3584 = vst [vmem:[%s3494 + $0xb0] sm:%s3486] %v3583
      %v3585 = vld [vmem:[%s3493 + $0xb8] sm:%s3486]
      %3586 = vst [vmem:[%s3494 + $0xb4] sm:%s3486] %v3585
      %v3587 = vld [vmem:[%s3493 + $0xb4] sm:%s3486]
      %3588 = vst [vmem:[%s3494 + $0xb8] sm:%s3486] %v3587
      %v3589 = vld [vmem:[%s3493 + $0xbc] sm:%s3486]
      %3590 = vst [vmem:[%s3494 + $0xbc] sm:%s3486] %v3589
      %v3591 = vld [vmem:[%s3493 + $0xc0] sm:%s3486]
      %3592 = vst [vmem:[%s3494 + $0xc0] sm:%s3486] %v3591
      %v3593 = vld [vmem:[%s3493 + $0xc8] sm:%s3486]
      %3594 = vst [vmem:[%s3494 + $0xc4] sm:%s3486] %v3593
      %v3595 = vld [vmem:[%s3493 + $0xc4] sm:%s3486]
      %3596 = vst [vmem:[%s3494 + $0xc8] sm:%s3486] %v3595
      %v3597 = vld [vmem:[%s3493 + $0xcc] sm:%s3486]
      %3598 = vst [vmem:[%s3494 + $0xcc] sm:%s3486] %v3597
      %v3599 = vld [vmem:[%s3493 + $0xd0] sm:%s3486]
      %3600 = vst [vmem:[%s3494 + $0xd0] sm:%s3486] %v3599
      %v3601 = vld [vmem:[%s3493 + $0xd8] sm:%s3486]
      %3602 = vst [vmem:[%s3494 + $0xd4] sm:%s3486] %v3601
      %v3603 = vld [vmem:[%s3493 + $0xd4] sm:%s3486]
      %3604 = vst [vmem:[%s3494 + $0xd8] sm:%s3486] %v3603
      %v3605 = vld [vmem:[%s3493 + $0xdc] sm:%s3486]
      %3606 = vst [vmem:[%s3494 + $0xdc] sm:%s3486] %v3605
      %v3607 = vld [vmem:[%s3493 + $0xe0] sm:%s3486]
      %3608 = vst [vmem:[%s3494 + $0xe0] sm:%s3486] %v3607
      %v3609 = vld [vmem:[%s3493 + $0xe8] sm:%s3486]
      %3610 = vst [vmem:[%s3494 + $0xe4] sm:%s3486] %v3609
      %v3611 = vld [vmem:[%s3493 + $0xe4] sm:%s3486]
      %3612 = vst [vmem:[%s3494 + $0xe8] sm:%s3486] %v3611
      %v3613 = vld [vmem:[%s3493 + $0xec] sm:%s3486]
      %3614 = vst [vmem:[%s3494 + $0xec] sm:%s3486] %v3613
      %v3615 = vld [vmem:[%s3493 + $0xf0] sm:%s3486]
      %3616 = vst [vmem:[%s3494 + $0xf0] sm:%s3486] %v3615
      %v3617 = vld [vmem:[%s3493 + $0xf8] sm:%s3486]
      %3618 = vst [vmem:[%s3494 + $0xf4] sm:%s3486] %v3617
      %v3619 = vld [vmem:[%s3493 + $0xf4] sm:%s3486]
      %3620 = vst [vmem:[%s3494 + $0xf8] sm:%s3486] %v3619
      %v3621 = vld [vmem:[%s3493 + $0xfc] sm:%s3486]
      %3622 = vst [vmem:[%s3494 + $0xfc] sm:%s3486] %v3621
      %v3623 = vld [vmem:[%s3493 + $0x100] sm:%s3486]
      %3624 = vst [vmem:[%s3494 + $0x100] sm:%s3486] %v3623
      %v3625 = vld [vmem:[%s3493 + $0x108] sm:%s3486]
      %3626 = vst [vmem:[%s3494 + $0x104] sm:%s3486] %v3625
      %v3627 = vld [vmem:[%s3493 + $0x104] sm:%s3486]
      %3628 = vst [vmem:[%s3494 + $0x108] sm:%s3486] %v3627
      %v3629 = vld [vmem:[%s3493 + $0x10c] sm:%s3486]
      %3630 = vst [vmem:[%s3494 + $0x10c] sm:%s3486] %v3629
      %v3631 = vld [vmem:[%s3493 + $0x110] sm:%s3486]
      %3632 = vst [vmem:[%s3494 + $0x110] sm:%s3486] %v3631
      %v3633 = vld [vmem:[%s3493 + $0x118] sm:%s3486]
      %3634 = vst [vmem:[%s3494 + $0x114] sm:%s3486] %v3633
      %v3635 = vld [vmem:[%s3493 + $0x114] sm:%s3486]
      %3636 = vst [vmem:[%s3494 + $0x118] sm:%s3486] %v3635
      %v3637 = vld [vmem:[%s3493 + $0x11c] sm:%s3486]
      %3638 = vst [vmem:[%s3494 + $0x11c] sm:%s3486] %v3637
      %v3639 = vld [vmem:[%s3493 + $0x120] sm:%s3486]
      %3640 = vst [vmem:[%s3494 + $0x120] sm:%s3486] %v3639
      %v3641 = vld [vmem:[%s3493 + $0x128] sm:%s3486]
      %3642 = vst [vmem:[%s3494 + $0x124] sm:%s3486] %v3641
      %v3643 = vld [vmem:[%s3493 + $0x124] sm:%s3486]
      %3644 = vst [vmem:[%s3494 + $0x128] sm:%s3486] %v3643
      %v3645 = vld [vmem:[%s3493 + $0x12c] sm:%s3486]
      %3646 = vst [vmem:[%s3494 + $0x12c] sm:%s3486] %v3645
      %v3647 = vld [vmem:[%s3493 + $0x130] sm:%s3486]
      %3648 = vst [vmem:[%s3494 + $0x130] sm:%s3486] %v3647
      %v3649 = vld [vmem:[%s3493 + $0x138] sm:%s3486]
      %3650 = vst [vmem:[%s3494 + $0x134] sm:%s3486] %v3649
      %v3651 = vld [vmem:[%s3493 + $0x134] sm:%s3486]
      %3652 = vst [vmem:[%s3494 + $0x138] sm:%s3486] %v3651
      %v3653 = vld [vmem:[%s3493 + $0x13c] sm:%s3486]
      %3654 = vst [vmem:[%s3494 + $0x13c] sm:%s3486] %v3653
      %v3655 = vld [vmem:[%s3493 + $0x140] sm:%s3486]
      %3656 = vst [vmem:[%s3494 + $0x140] sm:%s3486] %v3655
      %v3657 = vld [vmem:[%s3493 + $0x148] sm:%s3486]
      %3658 = vst [vmem:[%s3494 + $0x144] sm:%s3486] %v3657
      %v3659 = vld [vmem:[%s3493 + $0x144] sm:%s3486]
      %3660 = vst [vmem:[%s3494 + $0x148] sm:%s3486] %v3659
      %v3661 = vld [vmem:[%s3493 + $0x14c] sm:%s3486]
      %3662 = vst [vmem:[%s3494 + $0x14c] sm:%s3486] %v3661
      %v3663 = vld [vmem:[%s3493 + $0x150] sm:%s3486]
      %3664 = vst [vmem:[%s3494 + $0x150] sm:%s3486] %v3663
      %v3665 = vld [vmem:[%s3493 + $0x158] sm:%s3486]
      %3666 = vst [vmem:[%s3494 + $0x154] sm:%s3486] %v3665
      %v3667 = vld [vmem:[%s3493 + $0x154] sm:%s3486]
      %3668 = vst [vmem:[%s3494 + $0x158] sm:%s3486] %v3667
      %v3669 = vld [vmem:[%s3493 + $0x15c] sm:%s3486]
      %3670 = vst [vmem:[%s3494 + $0x15c] sm:%s3486] %v3669
      %v3671 = vld [vmem:[%s3493 + $0x160] sm:%s3486]
      %3672 = vst [vmem:[%s3494 + $0x160] sm:%s3486] %v3671
      %v3673 = vld [vmem:[%s3493 + $0x168] sm:%s3486]
      %3674 = vst [vmem:[%s3494 + $0x164] sm:%s3486] %v3673
      %v3675 = vld [vmem:[%s3493 + $0x164] sm:%s3486]
      %3676 = vst [vmem:[%s3494 + $0x168] sm:%s3486] %v3675
      %v3677 = vld [vmem:[%s3493 + $0x16c] sm:%s3486]
      %3678 = vst [vmem:[%s3494 + $0x16c] sm:%s3486] %v3677
      %v3679 = vld [vmem:[%s3493 + $0x170] sm:%s3486]
      %3680 = vst [vmem:[%s3494 + $0x170] sm:%s3486] %v3679
      %v3681 = vld [vmem:[%s3493 + $0x178] sm:%s3486]
      %3682 = vst [vmem:[%s3494 + $0x174] sm:%s3486] %v3681
      %v3683 = vld [vmem:[%s3493 + $0x174] sm:%s3486]
      %3684 = vst [vmem:[%s3494 + $0x178] sm:%s3486] %v3683
      %v3685 = vld [vmem:[%s3493 + $0x17c] sm:%s3486]
      %3686 = vst [vmem:[%s3494 + $0x17c] sm:%s3486] %v3685
      %v3687 = vld [vmem:[%s3493 + $0x180] sm:%s3486]
      %3688 = vst [vmem:[%s3494 + $0x180] sm:%s3486] %v3687
      %v3689 = vld [vmem:[%s3493 + $0x188] sm:%s3486]
      %3690 = vst [vmem:[%s3494 + $0x184] sm:%s3486] %v3689
      %v3691 = vld [vmem:[%s3493 + $0x184] sm:%s3486]
      %3692 = vst [vmem:[%s3494 + $0x188] sm:%s3486] %v3691
      %v3693 = vld [vmem:[%s3493 + $0x18c] sm:%s3486]
      %3694 = vst [vmem:[%s3494 + $0x18c] sm:%s3486] %v3693
      %v3695 = vld [vmem:[%s3493 + $0x190] sm:%s3486]
      %3696 = vst [vmem:[%s3494 + $0x190] sm:%s3486] %v3695
      %v3697 = vld [vmem:[%s3493 + $0x198] sm:%s3486]
      %3698 = vst [vmem:[%s3494 + $0x194] sm:%s3486] %v3697
      %v3699 = vld [vmem:[%s3493 + $0x194] sm:%s3486]
      %3700 = vst [vmem:[%s3494 + $0x198] sm:%s3486] %v3699
      %v3701 = vld [vmem:[%s3493 + $0x19c] sm:%s3486]
      %3702 = vst [vmem:[%s3494 + $0x19c] sm:%s3486] %v3701
      %v3703 = vld [vmem:[%s3493 + $0x1a0] sm:%s3486]
      %3704 = vst [vmem:[%s3494 + $0x1a0] sm:%s3486] %v3703
      %v3705 = vld [vmem:[%s3493 + $0x1a8] sm:%s3486]
      %3706 = vst [vmem:[%s3494 + $0x1a4] sm:%s3486] %v3705
      %v3707 = vld [vmem:[%s3493 + $0x1a4] sm:%s3486]
      %3708 = vst [vmem:[%s3494 + $0x1a8] sm:%s3486] %v3707
      %v3709 = vld [vmem:[%s3493 + $0x1ac] sm:%s3486]
      %3710 = vst [vmem:[%s3494 + $0x1ac] sm:%s3486] %v3709
      %v3711 = vld [vmem:[%s3493 + $0x1b0] sm:%s3486]
      %3712 = vst [vmem:[%s3494 + $0x1b0] sm:%s3486] %v3711
      %v3713 = vld [vmem:[%s3493 + $0x1b8] sm:%s3486]
      %3714 = vst [vmem:[%s3494 + $0x1b4] sm:%s3486] %v3713
      %v3715 = vld [vmem:[%s3493 + $0x1b4] sm:%s3486]
      %3716 = vst [vmem:[%s3494 + $0x1b8] sm:%s3486] %v3715
      %v3717 = vld [vmem:[%s3493 + $0x1bc] sm:%s3486]
      %3718 = vst [vmem:[%s3494 + $0x1bc] sm:%s3486] %v3717
      %v3719 = vld [vmem:[%s3493 + $0x1c0] sm:%s3486]
      %3720 = vst [vmem:[%s3494 + $0x1c0] sm:%s3486] %v3719
      %v3721 = vld [vmem:[%s3493 + $0x1c8] sm:%s3486]
      %3722 = vst [vmem:[%s3494 + $0x1c4] sm:%s3486] %v3721
      %v3723 = vld [vmem:[%s3493 + $0x1c4] sm:%s3486]
      %3724 = vst [vmem:[%s3494 + $0x1c8] sm:%s3486] %v3723
      %v3725 = vld [vmem:[%s3493 + $0x1cc] sm:%s3486]
      %3726 = vst [vmem:[%s3494 + $0x1cc] sm:%s3486] %v3725
      %v3727 = vld [vmem:[%s3493 + $0x1d0] sm:%s3486]
      %3728 = vst [vmem:[%s3494 + $0x1d0] sm:%s3486] %v3727
      %v3729 = vld [vmem:[%s3493 + $0x1d8] sm:%s3486]
      %3730 = vst [vmem:[%s3494 + $0x1d4] sm:%s3486] %v3729
      %v3731 = vld [vmem:[%s3493 + $0x1d4] sm:%s3486]
      %3732 = vst [vmem:[%s3494 + $0x1d8] sm:%s3486] %v3731
      %v3733 = vld [vmem:[%s3493 + $0x1dc] sm:%s3486]
      %3734 = vst [vmem:[%s3494 + $0x1dc] sm:%s3486] %v3733
      %v3735 = vld [vmem:[%s3493 + $0x1e0] sm:%s3486]
      %3736 = vst [vmem:[%s3494 + $0x1e0] sm:%s3486] %v3735
      %v3737 = vld [vmem:[%s3493 + $0x1e8] sm:%s3486]
      %3738 = vst [vmem:[%s3494 + $0x1e4] sm:%s3486] %v3737
      %v3739 = vld [vmem:[%s3493 + $0x1e4] sm:%s3486]
      %3740 = vst [vmem:[%s3494 + $0x1e8] sm:%s3486] %v3739
      %v3741 = vld [vmem:[%s3493 + $0x1ec] sm:%s3486]
      %3742 = vst [vmem:[%s3494 + $0x1ec] sm:%s3486] %v3741
      %v3743 = vld [vmem:[%s3493 + $0x1f0] sm:%s3486]
      %3744 = vst [vmem:[%s3494 + $0x1f0] sm:%s3486] %v3743
      %v3745 = vld [vmem:[%s3493 + $0x1f8] sm:%s3486]
      %3746 = vst [vmem:[%s3494 + $0x1f4] sm:%s3486] %v3745
      %v3747 = vld [vmem:[%s3493 + $0x1f4] sm:%s3486]
      %3748 = vst [vmem:[%s3494 + $0x1f8] sm:%s3486] %v3747
      %v3749 = vld [vmem:[%s3493 + $0x1fc] sm:%s3486]
      %3750 = vst [vmem:[%s3494 + $0x1fc] sm:%s3486] %v3749
      %v3751 = vld [vmem:[%s3493 + $0x200] sm:%s3486]
      %3752 = vst [vmem:[%s3494 + $0x200] sm:%s3486] %v3751
      %v3753 = vld [vmem:[%s3493 + $0x208] sm:%s3486]
      %3754 = vst [vmem:[%s3494 + $0x204] sm:%s3486] %v3753
      %v3755 = vld [vmem:[%s3493 + $0x204] sm:%s3486]
      %3756 = vst [vmem:[%s3494 + $0x208] sm:%s3486] %v3755
      %v3757 = vld [vmem:[%s3493 + $0x20c] sm:%s3486]
      %3758 = vst [vmem:[%s3494 + $0x20c] sm:%s3486] %v3757
      %v3759 = vld [vmem:[%s3493 + $0x210] sm:%s3486]
      %3760 = vst [vmem:[%s3494 + $0x210] sm:%s3486] %v3759
      %v3761 = vld [vmem:[%s3493 + $0x218] sm:%s3486]
      %3762 = vst [vmem:[%s3494 + $0x214] sm:%s3486] %v3761
      %v3763 = vld [vmem:[%s3493 + $0x214] sm:%s3486]
      %3764 = vst [vmem:[%s3494 + $0x218] sm:%s3486] %v3763
      %v3765 = vld [vmem:[%s3493 + $0x21c] sm:%s3486]
      %3766 = vst [vmem:[%s3494 + $0x21c] sm:%s3486] %v3765
      %v3767 = vld [vmem:[%s3493 + $0x220] sm:%s3486]
      %3768 = vst [vmem:[%s3494 + $0x220] sm:%s3486] %v3767
      %v3769 = vld [vmem:[%s3493 + $0x228] sm:%s3486]
      %3770 = vst [vmem:[%s3494 + $0x224] sm:%s3486] %v3769
      %v3771 = vld [vmem:[%s3493 + $0x224] sm:%s3486]
      %3772 = vst [vmem:[%s3494 + $0x228] sm:%s3486] %v3771
      %v3773 = vld [vmem:[%s3493 + $0x22c] sm:%s3486]
      %3774 = vst [vmem:[%s3494 + $0x22c] sm:%s3486] %v3773
      %v3775 = vld [vmem:[%s3493 + $0x230] sm:%s3486]
      %3776 = vst [vmem:[%s3494 + $0x230] sm:%s3486] %v3775
      %v3777 = vld [vmem:[%s3493 + $0x238] sm:%s3486]
      %3778 = vst [vmem:[%s3494 + $0x234] sm:%s3486] %v3777
      %v3779 = vld [vmem:[%s3493 + $0x234] sm:%s3486]
      %3780 = vst [vmem:[%s3494 + $0x238] sm:%s3486] %v3779
      %v3781 = vld [vmem:[%s3493 + $0x23c] sm:%s3486]
      %3782 = vst [vmem:[%s3494 + $0x23c] sm:%s3486] %v3781
      %v3783 = vld [vmem:[%s3493 + $0x240] sm:%s3486]
      %3784 = vst [vmem:[%s3494 + $0x240] sm:%s3486] %v3783
      %v3785 = vld [vmem:[%s3493 + $0x248] sm:%s3486]
      %3786 = vst [vmem:[%s3494 + $0x244] sm:%s3486] %v3785
      %v3787 = vld [vmem:[%s3493 + $0x244] sm:%s3486]
      %3788 = vst [vmem:[%s3494 + $0x248] sm:%s3486] %v3787
      %v3789 = vld [vmem:[%s3493 + $0x24c] sm:%s3486]
      %3790 = vst [vmem:[%s3494 + $0x24c] sm:%s3486] %v3789
      %v3791 = vld [vmem:[%s3493 + $0x250] sm:%s3486]
      %3792 = vst [vmem:[%s3494 + $0x250] sm:%s3486] %v3791
      %v3793 = vld [vmem:[%s3493 + $0x258] sm:%s3486]
      %3794 = vst [vmem:[%s3494 + $0x254] sm:%s3486] %v3793
      %v3795 = vld [vmem:[%s3493 + $0x254] sm:%s3486]
      %3796 = vst [vmem:[%s3494 + $0x258] sm:%s3486] %v3795
      %v3797 = vld [vmem:[%s3493 + $0x25c] sm:%s3486]
      %3798 = vst [vmem:[%s3494 + $0x25c] sm:%s3486] %v3797
      %v3799 = vld [vmem:[%s3493 + $0x260] sm:%s3486]
      %3800 = vst [vmem:[%s3494 + $0x260] sm:%s3486] %v3799
      %v3801 = vld [vmem:[%s3493 + $0x268] sm:%s3486]
      %3802 = vst [vmem:[%s3494 + $0x264] sm:%s3486] %v3801
      %v3803 = vld [vmem:[%s3493 + $0x264] sm:%s3486]
      %3804 = vst [vmem:[%s3494 + $0x268] sm:%s3486] %v3803
      %v3805 = vld [vmem:[%s3493 + $0x26c] sm:%s3486]
      %3806 = vst [vmem:[%s3494 + $0x26c] sm:%s3486] %v3805
      %v3807 = vld [vmem:[%s3493 + $0x270] sm:%s3486]
      %3808 = vst [vmem:[%s3494 + $0x270] sm:%s3486] %v3807
      %v3809 = vld [vmem:[%s3493 + $0x278] sm:%s3486]
      %3810 = vst [vmem:[%s3494 + $0x274] sm:%s3486] %v3809
      %v3811 = vld [vmem:[%s3493 + $0x274] sm:%s3486]
      %3812 = vst [vmem:[%s3494 + $0x278] sm:%s3486] %v3811
      %v3813 = vld [vmem:[%s3493 + $0x27c] sm:%s3486]
      %3814 = vst [vmem:[%s3494 + $0x27c] sm:%s3486] %v3813
      %v3815 = vld [vmem:[%s3493 + $0x280] sm:%s3486]
      %3816 = vst [vmem:[%s3494 + $0x280] sm:%s3486] %v3815
      %v3817 = vld [vmem:[%s3493 + $0x288] sm:%s3486]
      %3818 = vst [vmem:[%s3494 + $0x284] sm:%s3486] %v3817
      %v3819 = vld [vmem:[%s3493 + $0x284] sm:%s3486]
      %3820 = vst [vmem:[%s3494 + $0x288] sm:%s3486] %v3819
      %v3821 = vld [vmem:[%s3493 + $0x28c] sm:%s3486]
      %3822 = vst [vmem:[%s3494 + $0x28c] sm:%s3486] %v3821
      %v3823 = vld [vmem:[%s3493 + $0x290] sm:%s3486]
      %3824 = vst [vmem:[%s3494 + $0x290] sm:%s3486] %v3823
      %v3825 = vld [vmem:[%s3493 + $0x298] sm:%s3486]
      %3826 = vst [vmem:[%s3494 + $0x294] sm:%s3486] %v3825
      %v3827 = vld [vmem:[%s3493 + $0x294] sm:%s3486]
      %3828 = vst [vmem:[%s3494 + $0x298] sm:%s3486] %v3827
      %v3829 = vld [vmem:[%s3493 + $0x29c] sm:%s3486]
      %3830 = vst [vmem:[%s3494 + $0x29c] sm:%s3486] %v3829
      %v3831 = vld [vmem:[%s3493 + $0x2a0] sm:%s3486]
      %3832 = vst [vmem:[%s3494 + $0x2a0] sm:%s3486] %v3831
      %v3833 = vld [vmem:[%s3493 + $0x2a8] sm:%s3486]
      %3834 = vst [vmem:[%s3494 + $0x2a4] sm:%s3486] %v3833
      %v3835 = vld [vmem:[%s3493 + $0x2a4] sm:%s3486]
      %3836 = vst [vmem:[%s3494 + $0x2a8] sm:%s3486] %v3835
      %v3837 = vld [vmem:[%s3493 + $0x2ac] sm:%s3486]
      %3838 = vst [vmem:[%s3494 + $0x2ac] sm:%s3486] %v3837
      %v3839 = vld [vmem:[%s3493 + $0x2b0] sm:%s3486]
      %3840 = vst [vmem:[%s3494 + $0x2b0] sm:%s3486] %v3839
      %v3841 = vld [vmem:[%s3493 + $0x2b8] sm:%s3486]
      %3842 = vst [vmem:[%s3494 + $0x2b4] sm:%s3486] %v3841
      %v3843 = vld [vmem:[%s3493 + $0x2b4] sm:%s3486]
      %3844 = vst [vmem:[%s3494 + $0x2b8] sm:%s3486] %v3843
      %v3845 = vld [vmem:[%s3493 + $0x2bc] sm:%s3486]
      %3846 = vst [vmem:[%s3494 + $0x2bc] sm:%s3486] %v3845
      %v3847 = vld [vmem:[%s3493 + $0x2c0] sm:%s3486]
      %3848 = vst [vmem:[%s3494 + $0x2c0] sm:%s3486] %v3847
      %v3849 = vld [vmem:[%s3493 + $0x2c8] sm:%s3486]
      %3850 = vst [vmem:[%s3494 + $0x2c4] sm:%s3486] %v3849
      %v3851 = vld [vmem:[%s3493 + $0x2c4] sm:%s3486]
      %3852 = vst [vmem:[%s3494 + $0x2c8] sm:%s3486] %v3851
      %v3853 = vld [vmem:[%s3493 + $0x2cc] sm:%s3486]
      %3854 = vst [vmem:[%s3494 + $0x2cc] sm:%s3486] %v3853
      %v3855 = vld [vmem:[%s3493 + $0x2d0] sm:%s3486]
      %3856 = vst [vmem:[%s3494 + $0x2d0] sm:%s3486] %v3855
      %v3857 = vld [vmem:[%s3493 + $0x2d8] sm:%s3486]
      %3858 = vst [vmem:[%s3494 + $0x2d4] sm:%s3486] %v3857
      %v3859 = vld [vmem:[%s3493 + $0x2d4] sm:%s3486]
      %3860 = vst [vmem:[%s3494 + $0x2d8] sm:%s3486] %v3859
      %v3861 = vld [vmem:[%s3493 + $0x2dc] sm:%s3486]
      %3862 = vst [vmem:[%s3494 + $0x2dc] sm:%s3486] %v3861
      %v3863 = vld [vmem:[%s3493 + $0x2e0] sm:%s3486]
      %3864 = vst [vmem:[%s3494 + $0x2e0] sm:%s3486] %v3863
      %v3865 = vld [vmem:[%s3493 + $0x2e8] sm:%s3486]
      %3866 = vst [vmem:[%s3494 + $0x2e4] sm:%s3486] %v3865
      %v3867 = vld [vmem:[%s3493 + $0x2e4] sm:%s3486]
      %3868 = vst [vmem:[%s3494 + $0x2e8] sm:%s3486] %v3867
      %v3869 = vld [vmem:[%s3493 + $0x2ec] sm:%s3486]
      %3870 = vst [vmem:[%s3494 + $0x2ec] sm:%s3486] %v3869
      %v3871 = vld [vmem:[%s3493 + $0x2f0] sm:%s3486]
      %3872 = vst [vmem:[%s3494 + $0x2f0] sm:%s3486] %v3871
      %v3873 = vld [vmem:[%s3493 + $0x2f8] sm:%s3486]
      %3874 = vst [vmem:[%s3494 + $0x2f4] sm:%s3486] %v3873
      %v3875 = vld [vmem:[%s3493 + $0x2f4] sm:%s3486]
      %3876 = vst [vmem:[%s3494 + $0x2f8] sm:%s3486] %v3875
      %v3877 = vld [vmem:[%s3493 + $0x2fc] sm:%s3486]
      %3878 = vst [vmem:[%s3494 + $0x2fc] sm:%s3486] %v3877
    $region133: #{conv_block.1} parent=127 // loop_footer
      %s3492 = sadd.s32 1, %s3488
    $region134: #{conv_block.1} parent=127 // loop_footer_branch
      %3487 = sbr.rel target = $region130
    $region135: #{conv_block.1} parent=127 // loop_exit
      _
  $region128: #{conv_block.1} parent=0 // pred_fallthru
    _
  // Predicated region
  $region154: #{conv_block.1} parent=0 // pred_check
    _
  $region155: #{conv_block.1} parent=0 // pred_check_branch
    %4292 = sbr.rel (0) target = $region157
  $region156: #{conv_block.1} parent=0 // pred_region
    %4293 = vsyncadd %s899, 12288
  $region157: #{conv_block.1} parent=0 // pred_fallthru
    _
  %s4294 = sshll.u32 %s1717, 4
  %4295 = dma.done [#allocation3], %s4294
  %v4296 = vrot.slane %v3469, 7
  %v4297 = vrot.slane %v3470, 7
  %v4298 = vrot.slane %v3471, 7
  %v4299 = vrot.slane %v3472, 7
  %v4300 = vrot.slane %v3473, 7
  %v4301 = vrot.slane %v3474, 7
  %v4302 = vrot.slane %v3475, 7
  %v4303 = vrot.slane %v3476, 7
  %v4304 = vsel %vm1728, %v4300, %v4302
  %v4305 = vsel %vm1728, %v4301, %v4303
  %v4306 = vsel %vm1728, %v4298, %v4300
  %v4307 = vsel %vm1728, %v4299, %v4301
  %v4308 = vsel %vm1728, %v4296, %v4298
  %v4309 = vsel %vm1728, %v4297, %v4299
  %v4310 = vsel %vm1728, %v4302, %v4296
  %v4311 = vsel %vm1728, %v4303, %v4297
  %v4312 = vsel %vm1741, %v4310, 0.0
  %v4313 = vsel %vm1741, %v4311, 0.0
  %v4314 = vsel %vm1742, %v4308, 0.0
  %v4315 = vsel %vm1742, %v4309, 0.0
  %v4316 = vsel %vm1743, %v4306, 0.0
  %v4317 = vsel %vm1743, %v4307, 0.0
  %v4318 = vsel %vm1744, %v4304, 0.0
  %v4319 = vsel %vm1744, %v4305, 0.0
  %v4320 = vrot.slane %v3469, 1
  %v4321 = vrot.slane %v3470, 1
  %v4322 = vrot.slane %v3471, 1
  %v4323 = vrot.slane %v3472, 1
  %v4324 = vrot.slane %v3473, 1
  %v4325 = vrot.slane %v3474, 1
  %v4326 = vrot.slane %v3475, 1
  %v4327 = vrot.slane %v3476, 1
  %v4328 = vsel %vm1761, %v4324, %v4326
  %v4329 = vsel %vm1761, %v4325, %v4327
  %v4330 = vsel %vm1761, %v4322, %v4324
  %v4331 = vsel %vm1761, %v4323, %v4325
  %v4332 = vsel %vm1761, %v4320, %v4322
  %v4333 = vsel %vm1761, %v4321, %v4323
  %v4334 = vsel %vm1761, %v4326, %v4320
  %v4335 = vsel %vm1761, %v4327, %v4321
  %v4336 = vsel %vm1774, %v4332, 0.0
  %v4337 = vsel %vm1774, %v4333, 0.0
  %v4338 = vsel %vm1775, %v4330, 0.0
  %v4339 = vsel %vm1775, %v4331, 0.0
  %v4340 = vsel %vm1776, %v4328, 0.0
  %v4341 = vsel %vm1776, %v4329, 0.0
  %v4342 = vsel %vm1777, %v4334, 0.0
  %v4343 = vsel %vm1777, %v4335, 0.0
  %v4344 = vpack.c.bf16 %v4314, %v4312
  %v4345 = vpack.c.bf16 %v4315, %v4313
  %v4346 = vpack.c.bf16 %v3471, %v3469
  %v4347 = vpack.c.bf16 %v3472, %v3470
  %v4348 = vpack.c.bf16 %v4338, %v4336
  %v4349 = vpack.c.bf16 %v4339, %v4337
  %v4350 = vpack.c.bf16 %v4318, %v4316
  %v4351 = vpack.c.bf16 %v4319, %v4317
  %v4352 = vpack.c.bf16 %v3475, %v3473
  %v4353 = vpack.c.bf16 %v3476, %v3474
  %v4354 = vpack.c.bf16 %v4342, %v4340
  %v4355 = vpack.c.bf16 %v4343, %v4341
  %v4356 = vld [vmem:[#allocation2] sm:$0xff]
  %v4357 = vld [vmem:[#allocation2 + $0x8] sm:$0xff]
  %v4358 = vld [vmem:[#allocation2 + $0x10] sm:$0xff]
  %v4359 = vld [vmem:[#allocation2 + $0x18] sm:$0xff]
  %v4360 = vld [vmem:[#allocation2 + $0x20] sm:$0xff]
  %v4361 = vld [vmem:[#allocation2 + $0x28] sm:$0xff]
  %v4362 = vld [vmem:[#allocation2 + $0x30] sm:$0xff]
  %v4363 = vld [vmem:[#allocation2 + $0x38] sm:$0xff]
  %v4364 = vld [vmem:[#allocation2 + $0x40] sm:$0xff]
  %v4365 = vld [vmem:[#allocation2 + $0x48] sm:$0xff]
  %v4366 = vld [vmem:[#allocation2 + $0x50] sm:$0xff]
  %v4367 = vld [vmem:[#allocation2 + $0x58] sm:$0xff]
  %v4368 = vld [vmem:[#allocation2 + $0x60] sm:$0xff]
  %v4369 = vld [vmem:[#allocation2 + $0x68] sm:$0xff]
  %v4370 = vld [vmem:[#allocation2 + $0x70] sm:$0xff]
  %v4371 = vld [vmem:[#allocation2 + $0x78] sm:$0xff]
  %v4372 = vld [vmem:[#allocation2 + $0x80] sm:$0xff]
  %v4373 = vld [vmem:[#allocation2 + $0x88] sm:$0xff]
  %v4374 = vld [vmem:[#allocation2 + $0x90] sm:$0xff]
  %v4375 = vld [vmem:[#allocation2 + $0x98] sm:$0xff]
  %v4376 = vld [vmem:[#allocation2 + $0xa0] sm:$0xff]
  %v4377 = vld [vmem:[#allocation2 + $0xa8] sm:$0xff]
  %v4378 = vld [vmem:[#allocation2 + $0xb0] sm:$0xff]
  %v4379 = vld [vmem:[#allocation2 + $0xb8] sm:$0xff]
  %v4380 = vld [vmem:[#allocation2 + $0xc0] sm:$0xff]
  %v4381 = vld [vmem:[#allocation2 + $0xc8] sm:$0xff]
  %v4382 = vld [vmem:[#allocation2 + $0xd0] sm:$0xff]
  %v4383 = vld [vmem:[#allocation2 + $0xd8] sm:$0xff]
  %v4384 = vld [vmem:[#allocation2 + $0xe0] sm:$0xff]
  %v4385 = vld [vmem:[#allocation2 + $0xe8] sm:$0xff]
  %v4386 = vld [vmem:[#allocation2 + $0xf0] sm:$0xff]
  %v4387 = vld [vmem:[#allocation2 + $0xf8] sm:$0xff]
  %v4388 = vld [vmem:[#allocation2 + $0x100] sm:$0xff]
  %v4389 = vld [vmem:[#allocation2 + $0x108] sm:$0xff]
  %v4390 = vld [vmem:[#allocation2 + $0x110] sm:$0xff]
  %v4391 = vld [vmem:[#allocation2 + $0x118] sm:$0xff]
  %v4392 = vld [vmem:[#allocation2 + $0x120] sm:$0xff]
  %v4393 = vld [vmem:[#allocation2 + $0x128] sm:$0xff]
  %v4394 = vld [vmem:[#allocation2 + $0x130] sm:$0xff]
  %v4395 = vld [vmem:[#allocation2 + $0x138] sm:$0xff]
  %v4396 = vld [vmem:[#allocation2 + $0x140] sm:$0xff]
  %v4397 = vld [vmem:[#allocation2 + $0x148] sm:$0xff]
  %v4398 = vld [vmem:[#allocation2 + $0x150] sm:$0xff]
  %v4399 = vld [vmem:[#allocation2 + $0x158] sm:$0xff]
  %v4400 = vld [vmem:[#allocation2 + $0x160] sm:$0xff]
  %v4401 = vld [vmem:[#allocation2 + $0x168] sm:$0xff]
  %v4402 = vld [vmem:[#allocation2 + $0x170] sm:$0xff]
  %v4403 = vld [vmem:[#allocation2 + $0x178] sm:$0xff]
  %v4404 = vld [vmem:[#allocation2 + $0x180] sm:$0xff]
  %v4405 = vld [vmem:[#allocation2 + $0x188] sm:$0xff]
  %v4406 = vld [vmem:[#allocation2 + $0x190] sm:$0xff]
  %v4407 = vld [vmem:[#allocation2 + $0x198] sm:$0xff]
  %v4408 = vld [vmem:[#allocation2 + $0x1a0] sm:$0xff]
  %v4409 = vld [vmem:[#allocation2 + $0x1a8] sm:$0xff]
  %v4410 = vld [vmem:[#allocation2 + $0x1b0] sm:$0xff]
  %v4411 = vld [vmem:[#allocation2 + $0x1b8] sm:$0xff]
  %v4412 = vld [vmem:[#allocation2 + $0x1c0] sm:$0xff]
  %v4413 = vld [vmem:[#allocation2 + $0x1c8] sm:$0xff]
  %v4414 = vld [vmem:[#allocation2 + $0x1d0] sm:$0xff]
  %v4415 = vld [vmem:[#allocation2 + $0x1d8] sm:$0xff]
  %v4416 = vld [vmem:[#allocation2 + $0x1e0] sm:$0xff]
  %v4417 = vld [vmem:[#allocation2 + $0x1e8] sm:$0xff]
  %v4418 = vld [vmem:[#allocation2 + $0x1f0] sm:$0xff]
  %v4419 = vld [vmem:[#allocation2 + $0x1f8] sm:$0xff]
  %v4420 = vld [vmem:[#allocation2 + $0x200] sm:$0xff]
  %v4421 = vld [vmem:[#allocation2 + $0x208] sm:$0xff]
  %v4422 = vld [vmem:[#allocation2 + $0x210] sm:$0xff]
  %v4423 = vld [vmem:[#allocation2 + $0x218] sm:$0xff]
  %v4424 = vld [vmem:[#allocation2 + $0x220] sm:$0xff]
  %v4425 = vld [vmem:[#allocation2 + $0x228] sm:$0xff]
  %v4426 = vld [vmem:[#allocation2 + $0x230] sm:$0xff]
  %v4427 = vld [vmem:[#allocation2 + $0x238] sm:$0xff]
  %v4428 = vld [vmem:[#allocation2 + $0x240] sm:$0xff]
  %v4429 = vld [vmem:[#allocation2 + $0x248] sm:$0xff]
  %v4430 = vld [vmem:[#allocation2 + $0x250] sm:$0xff]
  %v4431 = vld [vmem:[#allocation2 + $0x258] sm:$0xff]
  %v4432 = vld [vmem:[#allocation2 + $0x260] sm:$0xff]
  %v4433 = vld [vmem:[#allocation2 + $0x268] sm:$0xff]
  %v4434 = vld [vmem:[#allocation2 + $0x270] sm:$0xff]
  %v4435 = vld [vmem:[#allocation2 + $0x278] sm:$0xff]
  %v4436 = vld [vmem:[#allocation2 + $0x280] sm:$0xff]
  %v4437 = vld [vmem:[#allocation2 + $0x288] sm:$0xff]
  %v4438 = vld [vmem:[#allocation2 + $0x290] sm:$0xff]
  %v4439 = vld [vmem:[#allocation2 + $0x298] sm:$0xff]
  %v4440 = vld [vmem:[#allocation2 + $0x2a0] sm:$0xff]
  %v4441 = vld [vmem:[#allocation2 + $0x2a8] sm:$0xff]
  %v4442 = vld [vmem:[#allocation2 + $0x2b0] sm:$0xff]
  %v4443 = vld [vmem:[#allocation2 + $0x2b8] sm:$0xff]
  %v4444 = vld [vmem:[#allocation2 + $0x2c0] sm:$0xff]
  %v4445 = vld [vmem:[#allocation2 + $0x2c8] sm:$0xff]
  %v4446 = vld [vmem:[#allocation2 + $0x2d0] sm:$0xff]
  %v4447 = vld [vmem:[#allocation2 + $0x2d8] sm:$0xff]
  %v4448 = vld [vmem:[#allocation2 + $0x2e0] sm:$0xff]
  %v4449 = vld [vmem:[#allocation2 + $0x2e8] sm:$0xff]
  %v4450 = vld [vmem:[#allocation2 + $0x2f0] sm:$0xff]
  %v4451 = vld [vmem:[#allocation2 + $0x2f8] sm:$0xff]
  %s4452 = scalar_lea.vmem %s1, 4
  %v4453 = vld [vmem:[%s4452] sm:$0x3]
  %v4455 = vlaneseq
  %v4456 = vshrl.u32 %v4455, 7
  %v4457 = vsub.s32 0, %v4456
  %v4458 = vrot.slane %v4453, %v4457
  %v4459 = vlaneseq
  %v4460 = vshrl.u32 %v4459, 7
  %v4461 = vsub.s32 1, %v4460
  %v4462 = vrot.slane %v4453, %v4461
  %4465 = vmatprep.subr.bf16.mxu0 %v4357
  %4466 = vmatpush1.bf16.msra.mxu0 %v4356
  %4467 = vmatprep.subr.bf16.mxu0 %v4359
  %4468 = vmatpush1.bf16.msra.mxu0 %v4358
  %4469 = vmatprep.subr.bf16.mxu0 %v4361
  %4470 = vmatpush1.bf16.msra.mxu0 %v4360
  %4471 = vmatprep.subr.bf16.mxu0 %v4363
  %4472 = vmatpush1.bf16.msra.mxu0 %v4362
  %4473 = vmatprep.subr.bf16.mxu0 %v4365
  %4474 = vmatpush1.bf16.msra.mxu0 %v4364
  %4475 = vmatprep.subr.bf16.mxu0 %v4367
  %4476 = vmatpush1.bf16.msra.mxu0 %v4366
  %4477 = vmatprep.subr.bf16.mxu0 %v4369
  %4478 = vmatpush1.bf16.msra.mxu0 %v4368
  %4479 = vmatprep.subr.bf16.mxu0 %v4371
  %4480 = vmatpush1.bf16.msra.mxu0 %v4370
  %4481 = vmatprep.subr.bf16.mxu0 %v4373
  %4482 = vmatpush1.bf16.msra.mxu0 %v4372
  %4483 = vmatprep.subr.bf16.mxu0 %v4375
  %4484 = vmatpush1.bf16.msra.mxu0 %v4374
  %4485 = vmatprep.subr.bf16.mxu0 %v4377
  %4486 = vmatpush1.bf16.msra.mxu0 %v4376
  %4487 = vmatprep.subr.bf16.mxu0 %v4379
  %4488 = vmatpush1.bf16.msra.mxu0 %v4378
  %4489 = vmatprep.subr.bf16.mxu0 %v4381
  %4490 = vmatpush1.bf16.msra.mxu0 %v4380
  %4491 = vmatprep.subr.bf16.mxu0 %v4383
  %4492 = vmatpush1.bf16.msra.mxu0 %v4382
  %4493 = vmatprep.subr.bf16.mxu0 %v4385
  %4494 = vmatpush1.bf16.msra.mxu0 %v4384
  %4495 = vmatprep.subr.bf16.mxu0 %v4387
  %4496 = vmatpush1.bf16.msra.mxu0 %v4386
  %4497 = vmatprep.mubr.bf16.mxu0 %v4345
  %4498 = vmatmul.mubr.bf16.gmra.mrb[0].mxu0 %v4344
  %v4499 = vpop.f32.mrb[0].mxu0
  %v4500 = vadd.f32 %v4458, %v4499
  %v4501 = vpop.f32.mrb[0].mxu0
  %v4502 = vadd.f32 %v4462, %v4501
  %v4503 = vpop.f32.mrb[0].mxu0
  %v4504 = vadd.f32 %v4458, %v4503
  %v4505 = vpop.f32.mrb[0].mxu0
  %v4506 = vadd.f32 %v4462, %v4505
  %4507 = vmatprep.mubr.bf16.mxu0 %v4351
  %4508 = vmatmul.mubr.bf16.gmra.mrb[0].mxu0 %v4350
  %v4509 = vpop.f32.mrb[0].mxu0
  %v4510 = vadd.f32 %v4458, %v4509
  %v4511 = vpop.f32.mrb[0].mxu0
  %v4512 = vadd.f32 %v4462, %v4511
  %v4513 = vpop.f32.mrb[0].mxu0
  %v4514 = vadd.f32 %v4458, %v4513
  %v4515 = vpop.f32.mrb[0].mxu0
  %v4516 = vadd.f32 %v4462, %v4515
  %4517 = vdwg.mxu0
  %4518 = vmatprep.subr.bf16.mxu0 %v4389
  %4519 = vmatpush1.bf16.msra.mxu0 %v4388
  %4520 = vmatprep.subr.bf16.mxu0 %v4391
  %4521 = vmatpush1.bf16.msra.mxu0 %v4390
  %4522 = vmatprep.subr.bf16.mxu0 %v4393
  %4523 = vmatpush1.bf16.msra.mxu0 %v4392
  %4524 = vmatprep.subr.bf16.mxu0 %v4395
  %4525 = vmatpush1.bf16.msra.mxu0 %v4394
  %4526 = vmatprep.subr.bf16.mxu0 %v4397
  %4527 = vmatpush1.bf16.msra.mxu0 %v4396
  %4528 = vmatprep.subr.bf16.mxu0 %v4399
  %4529 = vmatpush1.bf16.msra.mxu0 %v4398
  %4530 = vmatprep.subr.bf16.mxu0 %v4401
  %4531 = vmatpush1.bf16.msra.mxu0 %v4400
  %4532 = vmatprep.subr.bf16.mxu0 %v4403
  %4533 = vmatpush1.bf16.msra.mxu0 %v4402
  %4534 = vmatprep.subr.bf16.mxu0 %v4405
  %4535 = vmatpush1.bf16.msra.mxu0 %v4404
  %4536 = vmatprep.subr.bf16.mxu0 %v4407
  %4537 = vmatpush1.bf16.msra.mxu0 %v4406
  %4538 = vmatprep.subr.bf16.mxu0 %v4409
  %4539 = vmatpush1.bf16.msra.mxu0 %v4408
  %4540 = vmatprep.subr.bf16.mxu0 %v4411
  %4541 = vmatpush1.bf16.msra.mxu0 %v4410
  %4542 = vmatprep.subr.bf16.mxu0 %v4413
  %4543 = vmatpush1.bf16.msra.mxu0 %v4412
  %4544 = vmatprep.subr.bf16.mxu0 %v4415
  %4545 = vmatpush1.bf16.msra.mxu0 %v4414
  %4546 = vmatprep.subr.bf16.mxu0 %v4417
  %4547 = vmatpush1.bf16.msra.mxu0 %v4416
  %4548 = vmatprep.subr.bf16.mxu0 %v4419
  %4549 = vmatpush1.bf16.msra.mxu0 %v4418
  %4550 = vmatprep.mubr.bf16.mxu0 %v4347
  %4551 = vmatmul.mubr.bf16.gmra.mrb[0].mxu0 %v4346
  %v4552 = vpop.f32.mrb[0].mxu0
  %v4553 = vadd.f32 %v4500, %v4552
  %v4554 = vpop.f32.mrb[0].mxu0
  %v4555 = vadd.f32 %v4502, %v4554
  %v4556 = vpop.f32.mrb[0].mxu0
  %v4557 = vadd.f32 %v4504, %v4556
  %v4558 = vpop.f32.mrb[0].mxu0
  %v4559 = vadd.f32 %v4506, %v4558
  %4560 = vmatprep.mubr.bf16.mxu0 %v4353
  %4561 = vmatmul.mubr.bf16.gmra.mrb[0].mxu0 %v4352
  %v4562 = vpop.f32.mrb[0].mxu0
  %v4563 = vadd.f32 %v4510, %v4562
  %v4564 = vpop.f32.mrb[0].mxu0
  %v4565 = vadd.f32 %v4512, %v4564
  %v4566 = vpop.f32.mrb[0].mxu0
  %v4567 = vadd.f32 %v4514, %v4566
  %v4568 = vpop.f32.mrb[0].mxu0
  %v4569 = vadd.f32 %v4516, %v4568
  %4570 = vdwg.mxu0
  %4571 = vmatprep.subr.bf16.mxu0 %v4421
  %4572 = vmatpush1.bf16.msra.mxu0 %v4420
  %4573 = vmatprep.subr.bf16.mxu0 %v4423
  %4574 = vmatpush1.bf16.msra.mxu0 %v4422
  %4575 = vmatprep.subr.bf16.mxu0 %v4425
  %4576 = vmatpush1.bf16.msra.mxu0 %v4424
  %4577 = vmatprep.subr.bf16.mxu0 %v4427
  %4578 = vmatpush1.bf16.msra.mxu0 %v4426
  %4579 = vmatprep.subr.bf16.mxu0 %v4429
  %4580 = vmatpush1.bf16.msra.mxu0 %v4428
  %4581 = vmatprep.subr.bf16.mxu0 %v4431
  %4582 = vmatpush1.bf16.msra.mxu0 %v4430
  %4583 = vmatprep.subr.bf16.mxu0 %v4433
  %4584 = vmatpush1.bf16.msra.mxu0 %v4432
  %4585 = vmatprep.subr.bf16.mxu0 %v4435
  %4586 = vmatpush1.bf16.msra.mxu0 %v4434
  %4587 = vmatprep.subr.bf16.mxu0 %v4437
  %4588 = vmatpush1.bf16.msra.mxu0 %v4436
  %4589 = vmatprep.subr.bf16.mxu0 %v4439
  %4590 = vmatpush1.bf16.msra.mxu0 %v4438
  %4591 = vmatprep.subr.bf16.mxu0 %v4441
  %4592 = vmatpush1.bf16.msra.mxu0 %v4440
  %4593 = vmatprep.subr.bf16.mxu0 %v4443
  %4594 = vmatpush1.bf16.msra.mxu0 %v4442
  %4595 = vmatprep.subr.bf16.mxu0 %v4445
  %4596 = vmatpush1.bf16.msra.mxu0 %v4444
  %4597 = vmatprep.subr.bf16.mxu0 %v4447
  %4598 = vmatpush1.bf16.msra.mxu0 %v4446
  %4599 = vmatprep.subr.bf16.mxu0 %v4449
  %4600 = vmatpush1.bf16.msra.mxu0 %v4448
  %4601 = vmatprep.subr.bf16.mxu0 %v4451
  %4602 = vmatpush1.bf16.msra.mxu0 %v4450
  %4603 = vmatprep.mubr.bf16.mxu0 %v4349
  %4604 = vmatmul.mubr.bf16.gmra.mrb[0].mxu0 %v4348
  %v4605 = vpop.f32.mrb[0].mxu0
  %v4606 = vadd.f32 %v4553, %v4605
  %v4607 = vpop.f32.mrb[0].mxu0
  %v4608 = vadd.f32 %v4555, %v4607
  %v4609 = vpop.f32.mrb[0].mxu0
  %v4610 = vadd.f32 %v4557, %v4609
  %v4611 = vpop.f32.mrb[0].mxu0
  %v4612 = vadd.f32 %v4559, %v4611
  %4613 = vmatprep.mubr.bf16.mxu0 %v4355
  %4614 = vmatmul.mubr.bf16.gmra.mrb[0].mxu0 %v4354
  %v4615 = vpop.f32.mrb[0].mxu0
  %v4616 = vadd.f32 %v4563, %v4615
  %v4617 = vpop.f32.mrb[0].mxu0
  %v4618 = vadd.f32 %v4565, %v4617
  %v4619 = vpop.f32.mrb[0].mxu0
  %v4620 = vadd.f32 %v4567, %v4619
  %v4621 = vpop.f32.mrb[0].mxu0
  %v4622 = vadd.f32 %v4569, %v4621
  %4623 = vdwg.mxu0
  %v4624 = vmax.f32 %v4606, 0.0
  %v4625 = vmax.f32 %v4608, 0.0
  %v4626 = vmax.f32 %v4610, 0.0
  %v4627 = vmax.f32 %v4612, 0.0
  %v4628 = vmax.f32 %v4616, 0.0
  %v4629 = vmax.f32 %v4618, 0.0
  %v4630 = vmax.f32 %v4620, 0.0
  %v4631 = vmax.f32 %v4622, 0.0
  %s4632 = scalar_lea.vmem %s2, 3072
  %p4634 = scmp.lt.u32.totalorder 4, 8
  %p4635 = pneg %p4634
  // Predicated region
  $region158: #{conv_block.1} parent=0 // pred_check
    _
  $region159: #{conv_block.1} parent=0 // pred_check_branch
    %4637 = sbr.rel (%p4634) target = $region161
  $region160: #{conv_block.1} parent=0 // pred_region
    %s5034 = sand.u32 4, 7
    %p5035 = scmp.eq.s32.totalorder %s5034, 0
    %p5036 = pneg %p5035
    // Predicated region
    $region173: #{conv_block.1} parent=160 // pred_check
      _
    $region174: #{conv_block.1} parent=160 // pred_check_branch
      %5038 = sbr.rel (%p5035) target = $region176
    $region175: #{conv_block.1} parent=160 // pred_region
      %s5039 = sand.u32 4, 7
      %s5040 = ssub.s32 4, %s5039
      %s5041 = scalar_lea.vmem %s4632, %s5040
      %s5042 = ssub.s32 4, %s5039
      %s5043 = scalar_lea.vmem [#allocation2], %s5042
      loop: start=0, step=1, limit=1
      $region177: #{conv_block.1} parent=175 // loop_pre_header
        _
      $region178: #{conv_block.1} parent=175 // loop_header
        %s5045 = sphi 0, %s5049
        %p5046 = scmp.ge.s32.totalorder %s5045, 1
        %s5050 = sphi %s4632, %s4632
        %s5051 = sphi [#allocation2], [#allocation2]
      $region179: #{conv_block.1} parent=175 // loop_header_branch
        %5048 = sbr.rel (%p5046) target = $region183
      $region180: #{conv_block.1} parent=175 // loop_body
        _
      $region181: #{conv_block.1} parent=175 // loop_footer
        %s5049 = sadd.s32 1, %s5045
      $region182: #{conv_block.1} parent=175 // loop_footer_branch
        %5044 = sbr.rel target = $region178
      $region183: #{conv_block.1} parent=175 // loop_exit
        _
      %s5052 = sshllo.u32 0, %s5039
      loop: start=0, step=1, limit=1
      $region184: #{conv_block.1} parent=175 // loop_pre_header
        _
      $region185: #{conv_block.1} parent=175 // loop_header
        %s5054 = sphi 0, %s5058
        %p5055 = scmp.ge.s32.totalorder %s5054, 1
        %s5059 = sphi %s5041, %s5041
        %s5060 = sphi %s5043, %s5043
      $region186: #{conv_block.1} parent=175 // loop_header_branch
        %5057 = sbr.rel (%p5055) target = $region190
      $region187: #{conv_block.1} parent=175 // loop_body
        %v5061 = vld [vmem:[%s5059] sm:%s5052]
        %5062 = vst [vmem:[%s5060] sm:%s5052] %v5061
        %v5063 = vld [vmem:[%s5059 + $0x8] sm:%s5052]
        %5064 = vst [vmem:[%s5060 + $0x4] sm:%s5052] %v5063
        %v5065 = vld [vmem:[%s5059 + $0x4] sm:%s5052]
        %5066 = vst [vmem:[%s5060 + $0x8] sm:%s5052] %v5065
        %v5067 = vld [vmem:[%s5059 + $0xc] sm:%s5052]
        %5068 = vst [vmem:[%s5060 + $0xc] sm:%s5052] %v5067
        %v5069 = vld [vmem:[%s5059 + $0x10] sm:%s5052]
        %5070 = vst [vmem:[%s5060 + $0x10] sm:%s5052] %v5069
        %v5071 = vld [vmem:[%s5059 + $0x18] sm:%s5052]
        %5072 = vst [vmem:[%s5060 + $0x14] sm:%s5052] %v5071
        %v5073 = vld [vmem:[%s5059 + $0x14] sm:%s5052]
        %5074 = vst [vmem:[%s5060 + $0x18] sm:%s5052] %v5073
        %v5075 = vld [vmem:[%s5059 + $0x1c] sm:%s5052]
        %5076 = vst [vmem:[%s5060 + $0x1c] sm:%s5052] %v5075
        %v5077 = vld [vmem:[%s5059 + $0x20] sm:%s5052]
        %5078 = vst [vmem:[%s5060 + $0x20] sm:%s5052] %v5077
        %v5079 = vld [vmem:[%s5059 + $0x28] sm:%s5052]
        %5080 = vst [vmem:[%s5060 + $0x24] sm:%s5052] %v5079
        %v5081 = vld [vmem:[%s5059 + $0x24] sm:%s5052]
        %5082 = vst [vmem:[%s5060 + $0x28] sm:%s5052] %v5081
        %v5083 = vld [vmem:[%s5059 + $0x2c] sm:%s5052]
        %5084 = vst [vmem:[%s5060 + $0x2c] sm:%s5052] %v5083
        %v5085 = vld [vmem:[%s5059 + $0x30] sm:%s5052]
        %5086 = vst [vmem:[%s5060 + $0x30] sm:%s5052] %v5085
        %v5087 = vld [vmem:[%s5059 + $0x38] sm:%s5052]
        %5088 = vst [vmem:[%s5060 + $0x34] sm:%s5052] %v5087
        %v5089 = vld [vmem:[%s5059 + $0x34] sm:%s5052]
        %5090 = vst [vmem:[%s5060 + $0x38] sm:%s5052] %v5089
        %v5091 = vld [vmem:[%s5059 + $0x3c] sm:%s5052]
        %5092 = vst [vmem:[%s5060 + $0x3c] sm:%s5052] %v5091
        %v5093 = vld [vmem:[%s5059 + $0x40] sm:%s5052]
        %5094 = vst [vmem:[%s5060 + $0x40] sm:%s5052] %v5093
        %v5095 = vld [vmem:[%s5059 + $0x48] sm:%s5052]
        %5096 = vst [vmem:[%s5060 + $0x44] sm:%s5052] %v5095
        %v5097 = vld [vmem:[%s5059 + $0x44] sm:%s5052]
        %5098 = vst [vmem:[%s5060 + $0x48] sm:%s5052] %v5097
        %v5099 = vld [vmem:[%s5059 + $0x4c] sm:%s5052]
        %5100 = vst [vmem:[%s5060 + $0x4c] sm:%s5052] %v5099
        %v5101 = vld [vmem:[%s5059 + $0x50] sm:%s5052]
        %5102 = vst [vmem:[%s5060 + $0x50] sm:%s5052] %v5101
        %v5103 = vld [vmem:[%s5059 + $0x58] sm:%s5052]
        %5104 = vst [vmem:[%s5060 + $0x54] sm:%s5052] %v5103
        %v5105 = vld [vmem:[%s5059 + $0x54] sm:%s5052]
        %5106 = vst [vmem:[%s5060 + $0x58] sm:%s5052] %v5105
        %v5107 = vld [vmem:[%s5059 + $0x5c] sm:%s5052]
        %5108 = vst [vmem:[%s5060 + $0x5c] sm:%s5052] %v5107
        %v5109 = vld [vmem:[%s5059 + $0x60] sm:%s5052]
        %5110 = vst [vmem:[%s5060 + $0x60] sm:%s5052] %v5109
        %v5111 = vld [vmem:[%s5059 + $0x68] sm:%s5052]
        %5112 = vst [vmem:[%s5060 + $0x64] sm:%s5052] %v5111
        %v5113 = vld [vmem:[%s5059 + $0x64] sm:%s5052]
        %5114 = vst [vmem:[%s5060 + $0x68] sm:%s5052] %v5113
        %v5115 = vld [vmem:[%s5059 + $0x6c] sm:%s5052]
        %5116 = vst [vmem:[%s5060 + $0x6c] sm:%s5052] %v5115
        %v5117 = vld [vmem:[%s5059 + $0x70] sm:%s5052]
        %5118 = vst [vmem:[%s5060 + $0x70] sm:%s5052] %v5117
        %v5119 = vld [vmem:[%s5059 + $0x78] sm:%s5052]
        %5120 = vst [vmem:[%s5060 + $0x74] sm:%s5052] %v5119
        %v5121 = vld [vmem:[%s5059 + $0x74] sm:%s5052]
        %5122 = vst [vmem:[%s5060 + $0x78] sm:%s5052] %v5121
        %v5123 = vld [vmem:[%s5059 + $0x7c] sm:%s5052]
        %5124 = vst [vmem:[%s5060 + $0x7c] sm:%s5052] %v5123
        %v5125 = vld [vmem:[%s5059 + $0x80] sm:%s5052]
        %5126 = vst [vmem:[%s5060 + $0x80] sm:%s5052] %v5125
        %v5127 = vld [vmem:[%s5059 + $0x88] sm:%s5052]
        %5128 = vst [vmem:[%s5060 + $0x84] sm:%s5052] %v5127
        %v5129 = vld [vmem:[%s5059 + $0x84] sm:%s5052]
        %5130 = vst [vmem:[%s5060 + $0x88] sm:%s5052] %v5129
        %v5131 = vld [vmem:[%s5059 + $0x8c] sm:%s5052]
        %5132 = vst [vmem:[%s5060 + $0x8c] sm:%s5052] %v5131
        %v5133 = vld [vmem:[%s5059 + $0x90] sm:%s5052]
        %5134 = vst [vmem:[%s5060 + $0x90] sm:%s5052] %v5133
        %v5135 = vld [vmem:[%s5059 + $0x98] sm:%s5052]
        %5136 = vst [vmem:[%s5060 + $0x94] sm:%s5052] %v5135
        %v5137 = vld [vmem:[%s5059 + $0x94] sm:%s5052]
        %5138 = vst [vmem:[%s5060 + $0x98] sm:%s5052] %v5137
        %v5139 = vld [vmem:[%s5059 + $0x9c] sm:%s5052]
        %5140 = vst [vmem:[%s5060 + $0x9c] sm:%s5052] %v5139
        %v5141 = vld [vmem:[%s5059 + $0xa0] sm:%s5052]
        %5142 = vst [vmem:[%s5060 + $0xa0] sm:%s5052] %v5141
        %v5143 = vld [vmem:[%s5059 + $0xa8] sm:%s5052]
        %5144 = vst [vmem:[%s5060 + $0xa4] sm:%s5052] %v5143
        %v5145 = vld [vmem:[%s5059 + $0xa4] sm:%s5052]
        %5146 = vst [vmem:[%s5060 + $0xa8] sm:%s5052] %v5145
        %v5147 = vld [vmem:[%s5059 + $0xac] sm:%s5052]
        %5148 = vst [vmem:[%s5060 + $0xac] sm:%s5052] %v5147
        %v5149 = vld [vmem:[%s5059 + $0xb0] sm:%s5052]
        %5150 = vst [vmem:[%s5060 + $0xb0] sm:%s5052] %v5149
        %v5151 = vld [vmem:[%s5059 + $0xb8] sm:%s5052]
        %5152 = vst [vmem:[%s5060 + $0xb4] sm:%s5052] %v5151
        %v5153 = vld [vmem:[%s5059 + $0xb4] sm:%s5052]
        %5154 = vst [vmem:[%s5060 + $0xb8] sm:%s5052] %v5153
        %v5155 = vld [vmem:[%s5059 + $0xbc] sm:%s5052]
        %5156 = vst [vmem:[%s5060 + $0xbc] sm:%s5052] %v5155
        %v5157 = vld [vmem:[%s5059 + $0xc0] sm:%s5052]
        %5158 = vst [vmem:[%s5060 + $0xc0] sm:%s5052] %v5157
        %v5159 = vld [vmem:[%s5059 + $0xc8] sm:%s5052]
        %5160 = vst [vmem:[%s5060 + $0xc4] sm:%s5052] %v5159
        %v5161 = vld [vmem:[%s5059 + $0xc4] sm:%s5052]
        %5162 = vst [vmem:[%s5060 + $0xc8] sm:%s5052] %v5161
        %v5163 = vld [vmem:[%s5059 + $0xcc] sm:%s5052]
        %5164 = vst [vmem:[%s5060 + $0xcc] sm:%s5052] %v5163
        %v5165 = vld [vmem:[%s5059 + $0xd0] sm:%s5052]
        %5166 = vst [vmem:[%s5060 + $0xd0] sm:%s5052] %v5165
        %v5167 = vld [vmem:[%s5059 + $0xd8] sm:%s5052]
        %5168 = vst [vmem:[%s5060 + $0xd4] sm:%s5052] %v5167
        %v5169 = vld [vmem:[%s5059 + $0xd4] sm:%s5052]
        %5170 = vst [vmem:[%s5060 + $0xd8] sm:%s5052] %v5169
        %v5171 = vld [vmem:[%s5059 + $0xdc] sm:%s5052]
        %5172 = vst [vmem:[%s5060 + $0xdc] sm:%s5052] %v5171
        %v5173 = vld [vmem:[%s5059 + $0xe0] sm:%s5052]
        %5174 = vst [vmem:[%s5060 + $0xe0] sm:%s5052] %v5173
        %v5175 = vld [vmem:[%s5059 + $0xe8] sm:%s5052]
        %5176 = vst [vmem:[%s5060 + $0xe4] sm:%s5052] %v5175
        %v5177 = vld [vmem:[%s5059 + $0xe4] sm:%s5052]
        %5178 = vst [vmem:[%s5060 + $0xe8] sm:%s5052] %v5177
        %v5179 = vld [vmem:[%s5059 + $0xec] sm:%s5052]
        %5180 = vst [vmem:[%s5060 + $0xec] sm:%s5052] %v5179
        %v5181 = vld [vmem:[%s5059 + $0xf0] sm:%s5052]
        %5182 = vst [vmem:[%s5060 + $0xf0] sm:%s5052] %v5181
        %v5183 = vld [vmem:[%s5059 + $0xf8] sm:%s5052]
        %5184 = vst [vmem:[%s5060 + $0xf4] sm:%s5052] %v5183
        %v5185 = vld [vmem:[%s5059 + $0xf4] sm:%s5052]
        %5186 = vst [vmem:[%s5060 + $0xf8] sm:%s5052] %v5185
        %v5187 = vld [vmem:[%s5059 + $0xfc] sm:%s5052]
        %5188 = vst [vmem:[%s5060 + $0xfc] sm:%s5052] %v5187
        %v5189 = vld [vmem:[%s5059 + $0x100] sm:%s5052]
        %5190 = vst [vmem:[%s5060 + $0x100] sm:%s5052] %v5189
        %v5191 = vld [vmem:[%s5059 + $0x108] sm:%s5052]
        %5192 = vst [vmem:[%s5060 + $0x104] sm:%s5052] %v5191
        %v5193 = vld [vmem:[%s5059 + $0x104] sm:%s5052]
        %5194 = vst [vmem:[%s5060 + $0x108] sm:%s5052] %v5193
        %v5195 = vld [vmem:[%s5059 + $0x10c] sm:%s5052]
        %5196 = vst [vmem:[%s5060 + $0x10c] sm:%s5052] %v5195
        %v5197 = vld [vmem:[%s5059 + $0x110] sm:%s5052]
        %5198 = vst [vmem:[%s5060 + $0x110] sm:%s5052] %v5197
        %v5199 = vld [vmem:[%s5059 + $0x118] sm:%s5052]
        %5200 = vst [vmem:[%s5060 + $0x114] sm:%s5052] %v5199
        %v5201 = vld [vmem:[%s5059 + $0x114] sm:%s5052]
        %5202 = vst [vmem:[%s5060 + $0x118] sm:%s5052] %v5201
        %v5203 = vld [vmem:[%s5059 + $0x11c] sm:%s5052]
        %5204 = vst [vmem:[%s5060 + $0x11c] sm:%s5052] %v5203
        %v5205 = vld [vmem:[%s5059 + $0x120] sm:%s5052]
        %5206 = vst [vmem:[%s5060 + $0x120] sm:%s5052] %v5205
        %v5207 = vld [vmem:[%s5059 + $0x128] sm:%s5052]
        %5208 = vst [vmem:[%s5060 + $0x124] sm:%s5052] %v5207
        %v5209 = vld [vmem:[%s5059 + $0x124] sm:%s5052]
        %5210 = vst [vmem:[%s5060 + $0x128] sm:%s5052] %v5209
        %v5211 = vld [vmem:[%s5059 + $0x12c] sm:%s5052]
        %5212 = vst [vmem:[%s5060 + $0x12c] sm:%s5052] %v5211
        %v5213 = vld [vmem:[%s5059 + $0x130] sm:%s5052]
        %5214 = vst [vmem:[%s5060 + $0x130] sm:%s5052] %v5213
        %v5215 = vld [vmem:[%s5059 + $0x138] sm:%s5052]
        %5216 = vst [vmem:[%s5060 + $0x134] sm:%s5052] %v5215
        %v5217 = vld [vmem:[%s5059 + $0x134] sm:%s5052]
        %5218 = vst [vmem:[%s5060 + $0x138] sm:%s5052] %v5217
        %v5219 = vld [vmem:[%s5059 + $0x13c] sm:%s5052]
        %5220 = vst [vmem:[%s5060 + $0x13c] sm:%s5052] %v5219
        %v5221 = vld [vmem:[%s5059 + $0x140] sm:%s5052]
        %5222 = vst [vmem:[%s5060 + $0x140] sm:%s5052] %v5221
        %v5223 = vld [vmem:[%s5059 + $0x148] sm:%s5052]
        %5224 = vst [vmem:[%s5060 + $0x144] sm:%s5052] %v5223
        %v5225 = vld [vmem:[%s5059 + $0x144] sm:%s5052]
        %5226 = vst [vmem:[%s5060 + $0x148] sm:%s5052] %v5225
        %v5227 = vld [vmem:[%s5059 + $0x14c] sm:%s5052]
        %5228 = vst [vmem:[%s5060 + $0x14c] sm:%s5052] %v5227
        %v5229 = vld [vmem:[%s5059 + $0x150] sm:%s5052]
        %5230 = vst [vmem:[%s5060 + $0x150] sm:%s5052] %v5229
        %v5231 = vld [vmem:[%s5059 + $0x158] sm:%s5052]
        %5232 = vst [vmem:[%s5060 + $0x154] sm:%s5052] %v5231
        %v5233 = vld [vmem:[%s5059 + $0x154] sm:%s5052]
        %5234 = vst [vmem:[%s5060 + $0x158] sm:%s5052] %v5233
        %v5235 = vld [vmem:[%s5059 + $0x15c] sm:%s5052]
        %5236 = vst [vmem:[%s5060 + $0x15c] sm:%s5052] %v5235
        %v5237 = vld [vmem:[%s5059 + $0x160] sm:%s5052]
        %5238 = vst [vmem:[%s5060 + $0x160] sm:%s5052] %v5237
        %v5239 = vld [vmem:[%s5059 + $0x168] sm:%s5052]
        %5240 = vst [vmem:[%s5060 + $0x164] sm:%s5052] %v5239
        %v5241 = vld [vmem:[%s5059 + $0x164] sm:%s5052]
        %5242 = vst [vmem:[%s5060 + $0x168] sm:%s5052] %v5241
        %v5243 = vld [vmem:[%s5059 + $0x16c] sm:%s5052]
        %5244 = vst [vmem:[%s5060 + $0x16c] sm:%s5052] %v5243
        %v5245 = vld [vmem:[%s5059 + $0x170] sm:%s5052]
        %5246 = vst [vmem:[%s5060 + $0x170] sm:%s5052] %v5245
        %v5247 = vld [vmem:[%s5059 + $0x178] sm:%s5052]
        %5248 = vst [vmem:[%s5060 + $0x174] sm:%s5052] %v5247
        %v5249 = vld [vmem:[%s5059 + $0x174] sm:%s5052]
        %5250 = vst [vmem:[%s5060 + $0x178] sm:%s5052] %v5249
        %v5251 = vld [vmem:[%s5059 + $0x17c] sm:%s5052]
        %5252 = vst [vmem:[%s5060 + $0x17c] sm:%s5052] %v5251
        %v5253 = vld [vmem:[%s5059 + $0x180] sm:%s5052]
        %5254 = vst [vmem:[%s5060 + $0x180] sm:%s5052] %v5253
        %v5255 = vld [vmem:[%s5059 + $0x188] sm:%s5052]
        %5256 = vst [vmem:[%s5060 + $0x184] sm:%s5052] %v5255
        %v5257 = vld [vmem:[%s5059 + $0x184] sm:%s5052]
        %5258 = vst [vmem:[%s5060 + $0x188] sm:%s5052] %v5257
        %v5259 = vld [vmem:[%s5059 + $0x18c] sm:%s5052]
        %5260 = vst [vmem:[%s5060 + $0x18c] sm:%s5052] %v5259
        %v5261 = vld [vmem:[%s5059 + $0x190] sm:%s5052]
        %5262 = vst [vmem:[%s5060 + $0x190] sm:%s5052] %v5261
        %v5263 = vld [vmem:[%s5059 + $0x198] sm:%s5052]
        %5264 = vst [vmem:[%s5060 + $0x194] sm:%s5052] %v5263
        %v5265 = vld [vmem:[%s5059 + $0x194] sm:%s5052]
        %5266 = vst [vmem:[%s5060 + $0x198] sm:%s5052] %v5265
        %v5267 = vld [vmem:[%s5059 + $0x19c] sm:%s5052]
        %5268 = vst [vmem:[%s5060 + $0x19c] sm:%s5052] %v5267
        %v5269 = vld [vmem:[%s5059 + $0x1a0] sm:%s5052]
        %5270 = vst [vmem:[%s5060 + $0x1a0] sm:%s5052] %v5269
        %v5271 = vld [vmem:[%s5059 + $0x1a8] sm:%s5052]
        %5272 = vst [vmem:[%s5060 + $0x1a4] sm:%s5052] %v5271
        %v5273 = vld [vmem:[%s5059 + $0x1a4] sm:%s5052]
        %5274 = vst [vmem:[%s5060 + $0x1a8] sm:%s5052] %v5273
        %v5275 = vld [vmem:[%s5059 + $0x1ac] sm:%s5052]
        %5276 = vst [vmem:[%s5060 + $0x1ac] sm:%s5052] %v5275
        %v5277 = vld [vmem:[%s5059 + $0x1b0] sm:%s5052]
        %5278 = vst [vmem:[%s5060 + $0x1b0] sm:%s5052] %v5277
        %v5279 = vld [vmem:[%s5059 + $0x1b8] sm:%s5052]
        %5280 = vst [vmem:[%s5060 + $0x1b4] sm:%s5052] %v5279
        %v5281 = vld [vmem:[%s5059 + $0x1b4] sm:%s5052]
        %5282 = vst [vmem:[%s5060 + $0x1b8] sm:%s5052] %v5281
        %v5283 = vld [vmem:[%s5059 + $0x1bc] sm:%s5052]
        %5284 = vst [vmem:[%s5060 + $0x1bc] sm:%s5052] %v5283
        %v5285 = vld [vmem:[%s5059 + $0x1c0] sm:%s5052]
        %5286 = vst [vmem:[%s5060 + $0x1c0] sm:%s5052] %v5285
        %v5287 = vld [vmem:[%s5059 + $0x1c8] sm:%s5052]
        %5288 = vst [vmem:[%s5060 + $0x1c4] sm:%s5052] %v5287
        %v5289 = vld [vmem:[%s5059 + $0x1c4] sm:%s5052]
        %5290 = vst [vmem:[%s5060 + $0x1c8] sm:%s5052] %v5289
        %v5291 = vld [vmem:[%s5059 + $0x1cc] sm:%s5052]
        %5292 = vst [vmem:[%s5060 + $0x1cc] sm:%s5052] %v5291
        %v5293 = vld [vmem:[%s5059 + $0x1d0] sm:%s5052]
        %5294 = vst [vmem:[%s5060 + $0x1d0] sm:%s5052] %v5293
        %v5295 = vld [vmem:[%s5059 + $0x1d8] sm:%s5052]
        %5296 = vst [vmem:[%s5060 + $0x1d4] sm:%s5052] %v5295
        %v5297 = vld [vmem:[%s5059 + $0x1d4] sm:%s5052]
        %5298 = vst [vmem:[%s5060 + $0x1d8] sm:%s5052] %v5297
        %v5299 = vld [vmem:[%s5059 + $0x1dc] sm:%s5052]
        %5300 = vst [vmem:[%s5060 + $0x1dc] sm:%s5052] %v5299
        %v5301 = vld [vmem:[%s5059 + $0x1e0] sm:%s5052]
        %5302 = vst [vmem:[%s5060 + $0x1e0] sm:%s5052] %v5301
        %v5303 = vld [vmem:[%s5059 + $0x1e8] sm:%s5052]
        %5304 = vst [vmem:[%s5060 + $0x1e4] sm:%s5052] %v5303
        %v5305 = vld [vmem:[%s5059 + $0x1e4] sm:%s5052]
        %5306 = vst [vmem:[%s5060 + $0x1e8] sm:%s5052] %v5305
        %v5307 = vld [vmem:[%s5059 + $0x1ec] sm:%s5052]
        %5308 = vst [vmem:[%s5060 + $0x1ec] sm:%s5052] %v5307
        %v5309 = vld [vmem:[%s5059 + $0x1f0] sm:%s5052]
        %5310 = vst [vmem:[%s5060 + $0x1f0] sm:%s5052] %v5309
        %v5311 = vld [vmem:[%s5059 + $0x1f8] sm:%s5052]
        %5312 = vst [vmem:[%s5060 + $0x1f4] sm:%s5052] %v5311
        %v5313 = vld [vmem:[%s5059 + $0x1f4] sm:%s5052]
        %5314 = vst [vmem:[%s5060 + $0x1f8] sm:%s5052] %v5313
        %v5315 = vld [vmem:[%s5059 + $0x1fc] sm:%s5052]
        %5316 = vst [vmem:[%s5060 + $0x1fc] sm:%s5052] %v5315
        %v5317 = vld [vmem:[%s5059 + $0x200] sm:%s5052]
        %5318 = vst [vmem:[%s5060 + $0x200] sm:%s5052] %v5317
        %v5319 = vld [vmem:[%s5059 + $0x208] sm:%s5052]
        %5320 = vst [vmem:[%s5060 + $0x204] sm:%s5052] %v5319
        %v5321 = vld [vmem:[%s5059 + $0x204] sm:%s5052]
        %5322 = vst [vmem:[%s5060 + $0x208] sm:%s5052] %v5321
        %v5323 = vld [vmem:[%s5059 + $0x20c] sm:%s5052]
        %5324 = vst [vmem:[%s5060 + $0x20c] sm:%s5052] %v5323
        %v5325 = vld [vmem:[%s5059 + $0x210] sm:%s5052]
        %5326 = vst [vmem:[%s5060 + $0x210] sm:%s5052] %v5325
        %v5327 = vld [vmem:[%s5059 + $0x218] sm:%s5052]
        %5328 = vst [vmem:[%s5060 + $0x214] sm:%s5052] %v5327
        %v5329 = vld [vmem:[%s5059 + $0x214] sm:%s5052]
        %5330 = vst [vmem:[%s5060 + $0x218] sm:%s5052] %v5329
        %v5331 = vld [vmem:[%s5059 + $0x21c] sm:%s5052]
        %5332 = vst [vmem:[%s5060 + $0x21c] sm:%s5052] %v5331
        %v5333 = vld [vmem:[%s5059 + $0x220] sm:%s5052]
        %5334 = vst [vmem:[%s5060 + $0x220] sm:%s5052] %v5333
        %v5335 = vld [vmem:[%s5059 + $0x228] sm:%s5052]
        %5336 = vst [vmem:[%s5060 + $0x224] sm:%s5052] %v5335
        %v5337 = vld [vmem:[%s5059 + $0x224] sm:%s5052]
        %5338 = vst [vmem:[%s5060 + $0x228] sm:%s5052] %v5337
        %v5339 = vld [vmem:[%s5059 + $0x22c] sm:%s5052]
        %5340 = vst [vmem:[%s5060 + $0x22c] sm:%s5052] %v5339
        %v5341 = vld [vmem:[%s5059 + $0x230] sm:%s5052]
        %5342 = vst [vmem:[%s5060 + $0x230] sm:%s5052] %v5341
        %v5343 = vld [vmem:[%s5059 + $0x238] sm:%s5052]
        %5344 = vst [vmem:[%s5060 + $0x234] sm:%s5052] %v5343
        %v5345 = vld [vmem:[%s5059 + $0x234] sm:%s5052]
        %5346 = vst [vmem:[%s5060 + $0x238] sm:%s5052] %v5345
        %v5347 = vld [vmem:[%s5059 + $0x23c] sm:%s5052]
        %5348 = vst [vmem:[%s5060 + $0x23c] sm:%s5052] %v5347
        %v5349 = vld [vmem:[%s5059 + $0x240] sm:%s5052]
        %5350 = vst [vmem:[%s5060 + $0x240] sm:%s5052] %v5349
        %v5351 = vld [vmem:[%s5059 + $0x248] sm:%s5052]
        %5352 = vst [vmem:[%s5060 + $0x244] sm:%s5052] %v5351
        %v5353 = vld [vmem:[%s5059 + $0x244] sm:%s5052]
        %5354 = vst [vmem:[%s5060 + $0x248] sm:%s5052] %v5353
        %v5355 = vld [vmem:[%s5059 + $0x24c] sm:%s5052]
        %5356 = vst [vmem:[%s5060 + $0x24c] sm:%s5052] %v5355
        %v5357 = vld [vmem:[%s5059 + $0x250] sm:%s5052]
        %5358 = vst [vmem:[%s5060 + $0x250] sm:%s5052] %v5357
        %v5359 = vld [vmem:[%s5059 + $0x258] sm:%s5052]
        %5360 = vst [vmem:[%s5060 + $0x254] sm:%s5052] %v5359
        %v5361 = vld [vmem:[%s5059 + $0x254] sm:%s5052]
        %5362 = vst [vmem:[%s5060 + $0x258] sm:%s5052] %v5361
        %v5363 = vld [vmem:[%s5059 + $0x25c] sm:%s5052]
        %5364 = vst [vmem:[%s5060 + $0x25c] sm:%s5052] %v5363
        %v5365 = vld [vmem:[%s5059 + $0x260] sm:%s5052]
        %5366 = vst [vmem:[%s5060 + $0x260] sm:%s5052] %v5365
        %v5367 = vld [vmem:[%s5059 + $0x268] sm:%s5052]
        %5368 = vst [vmem:[%s5060 + $0x264] sm:%s5052] %v5367
        %v5369 = vld [vmem:[%s5059 + $0x264] sm:%s5052]
        %5370 = vst [vmem:[%s5060 + $0x268] sm:%s5052] %v5369
        %v5371 = vld [vmem:[%s5059 + $0x26c] sm:%s5052]
        %5372 = vst [vmem:[%s5060 + $0x26c] sm:%s5052] %v5371
        %v5373 = vld [vmem:[%s5059 + $0x270] sm:%s5052]
        %5374 = vst [vmem:[%s5060 + $0x270] sm:%s5052] %v5373
        %v5375 = vld [vmem:[%s5059 + $0x278] sm:%s5052]
        %5376 = vst [vmem:[%s5060 + $0x274] sm:%s5052] %v5375
        %v5377 = vld [vmem:[%s5059 + $0x274] sm:%s5052]
        %5378 = vst [vmem:[%s5060 + $0x278] sm:%s5052] %v5377
        %v5379 = vld [vmem:[%s5059 + $0x27c] sm:%s5052]
        %5380 = vst [vmem:[%s5060 + $0x27c] sm:%s5052] %v5379
        %v5381 = vld [vmem:[%s5059 + $0x280] sm:%s5052]
        %5382 = vst [vmem:[%s5060 + $0x280] sm:%s5052] %v5381
        %v5383 = vld [vmem:[%s5059 + $0x288] sm:%s5052]
        %5384 = vst [vmem:[%s5060 + $0x284] sm:%s5052] %v5383
        %v5385 = vld [vmem:[%s5059 + $0x284] sm:%s5052]
        %5386 = vst [vmem:[%s5060 + $0x288] sm:%s5052] %v5385
        %v5387 = vld [vmem:[%s5059 + $0x28c] sm:%s5052]
        %5388 = vst [vmem:[%s5060 + $0x28c] sm:%s5052] %v5387
        %v5389 = vld [vmem:[%s5059 + $0x290] sm:%s5052]
        %5390 = vst [vmem:[%s5060 + $0x290] sm:%s5052] %v5389
        %v5391 = vld [vmem:[%s5059 + $0x298] sm:%s5052]
        %5392 = vst [vmem:[%s5060 + $0x294] sm:%s5052] %v5391
        %v5393 = vld [vmem:[%s5059 + $0x294] sm:%s5052]
        %5394 = vst [vmem:[%s5060 + $0x298] sm:%s5052] %v5393
        %v5395 = vld [vmem:[%s5059 + $0x29c] sm:%s5052]
        %5396 = vst [vmem:[%s5060 + $0x29c] sm:%s5052] %v5395
        %v5397 = vld [vmem:[%s5059 + $0x2a0] sm:%s5052]
        %5398 = vst [vmem:[%s5060 + $0x2a0] sm:%s5052] %v5397
        %v5399 = vld [vmem:[%s5059 + $0x2a8] sm:%s5052]
        %5400 = vst [vmem:[%s5060 + $0x2a4] sm:%s5052] %v5399
        %v5401 = vld [vmem:[%s5059 + $0x2a4] sm:%s5052]
        %5402 = vst [vmem:[%s5060 + $0x2a8] sm:%s5052] %v5401
        %v5403 = vld [vmem:[%s5059 + $0x2ac] sm:%s5052]
        %5404 = vst [vmem:[%s5060 + $0x2ac] sm:%s5052] %v5403
        %v5405 = vld [vmem:[%s5059 + $0x2b0] sm:%s5052]
        %5406 = vst [vmem:[%s5060 + $0x2b0] sm:%s5052] %v5405
        %v5407 = vld [vmem:[%s5059 + $0x2b8] sm:%s5052]
        %5408 = vst [vmem:[%s5060 + $0x2b4] sm:%s5052] %v5407
        %v5409 = vld [vmem:[%s5059 + $0x2b4] sm:%s5052]
        %5410 = vst [vmem:[%s5060 + $0x2b8] sm:%s5052] %v5409
        %v5411 = vld [vmem:[%s5059 + $0x2bc] sm:%s5052]
        %5412 = vst [vmem:[%s5060 + $0x2bc] sm:%s5052] %v5411
        %v5413 = vld [vmem:[%s5059 + $0x2c0] sm:%s5052]
        %5414 = vst [vmem:[%s5060 + $0x2c0] sm:%s5052] %v5413
        %v5415 = vld [vmem:[%s5059 + $0x2c8] sm:%s5052]
        %5416 = vst [vmem:[%s5060 + $0x2c4] sm:%s5052] %v5415
        %v5417 = vld [vmem:[%s5059 + $0x2c4] sm:%s5052]
        %5418 = vst [vmem:[%s5060 + $0x2c8] sm:%s5052] %v5417
        %v5419 = vld [vmem:[%s5059 + $0x2cc] sm:%s5052]
        %5420 = vst [vmem:[%s5060 + $0x2cc] sm:%s5052] %v5419
        %v5421 = vld [vmem:[%s5059 + $0x2d0] sm:%s5052]
        %5422 = vst [vmem:[%s5060 + $0x2d0] sm:%s5052] %v5421
        %v5423 = vld [vmem:[%s5059 + $0x2d8] sm:%s5052]
        %5424 = vst [vmem:[%s5060 + $0x2d4] sm:%s5052] %v5423
        %v5425 = vld [vmem:[%s5059 + $0x2d4] sm:%s5052]
        %5426 = vst [vmem:[%s5060 + $0x2d8] sm:%s5052] %v5425
        %v5427 = vld [vmem:[%s5059 + $0x2dc] sm:%s5052]
        %5428 = vst [vmem:[%s5060 + $0x2dc] sm:%s5052] %v5427
        %v5429 = vld [vmem:[%s5059 + $0x2e0] sm:%s5052]
        %5430 = vst [vmem:[%s5060 + $0x2e0] sm:%s5052] %v5429
        %v5431 = vld [vmem:[%s5059 + $0x2e8] sm:%s5052]
        %5432 = vst [vmem:[%s5060 + $0x2e4] sm:%s5052] %v5431
        %v5433 = vld [vmem:[%s5059 + $0x2e4] sm:%s5052]
        %5434 = vst [vmem:[%s5060 + $0x2e8] sm:%s5052] %v5433
        %v5435 = vld [vmem:[%s5059 + $0x2ec] sm:%s5052]
        %5436 = vst [vmem:[%s5060 + $0x2ec] sm:%s5052] %v5435
        %v5437 = vld [vmem:[%s5059 + $0x2f0] sm:%s5052]
        %5438 = vst [vmem:[%s5060 + $0x2f0] sm:%s5052] %v5437
        %v5439 = vld [vmem:[%s5059 + $0x2f8] sm:%s5052]
        %5440 = vst [vmem:[%s5060 + $0x2f4] sm:%s5052] %v5439
        %v5441 = vld [vmem:[%s5059 + $0x2f4] sm:%s5052]
        %5442 = vst [vmem:[%s5060 + $0x2f8] sm:%s5052] %v5441
        %v5443 = vld [vmem:[%s5059 + $0x2fc] sm:%s5052]
        %5444 = vst [vmem:[%s5060 + $0x2fc] sm:%s5052] %v5443
      $region188: #{conv_block.1} parent=175 // loop_footer
        %s5058 = sadd.s32 1, %s5054
      $region189: #{conv_block.1} parent=175 // loop_footer_branch
        %5053 = sbr.rel target = $region185
      $region190: #{conv_block.1} parent=175 // loop_exit
        _
    $region176: #{conv_block.1} parent=160 // pred_fallthru
      _
  $region161: #{conv_block.1} parent=0 // pred_fallthru
    _
  // Predicated region
  $region162: #{conv_block.1} parent=0 // pred_check
    %p4638 = pneg %p4634
  $region163: #{conv_block.1} parent=0 // pred_check_branch
    %4640 = sbr.rel (%p4638) target = $region165
  $region164: #{conv_block.1} parent=0 // pred_region
    %s4641 = sshllo.u32 0, 4
    loop: start=0, step=1, limit=1
    $region166: #{conv_block.1} parent=164 // loop_pre_header
      _
    $region167: #{conv_block.1} parent=164 // loop_header
      %s4643 = sphi 0, %s4647
      %p4644 = scmp.ge.s32.totalorder %s4643, 1
      %s4648 = sphi %s4632, %s4632
      %s4649 = sphi [#allocation2], [#allocation2]
    $region168: #{conv_block.1} parent=164 // loop_header_branch
      %4646 = sbr.rel (%p4644) target = $region172
    $region169: #{conv_block.1} parent=164 // loop_body
      %v4650 = vld [vmem:[%s4648] sm:%s4641]
      %4651 = vst [vmem:[%s4649] sm:%s4641] %v4650
      %v4652 = vld [vmem:[%s4648 + $0x8] sm:%s4641]
      %4653 = vst [vmem:[%s4649 + $0x4] sm:%s4641] %v4652
      %v4654 = vld [vmem:[%s4648 + $0x4] sm:%s4641]
      %4655 = vst [vmem:[%s4649 + $0x8] sm:%s4641] %v4654
      %v4656 = vld [vmem:[%s4648 + $0xc] sm:%s4641]
      %4657 = vst [vmem:[%s4649 + $0xc] sm:%s4641] %v4656
      %v4658 = vld [vmem:[%s4648 + $0x10] sm:%s4641]
      %4659 = vst [vmem:[%s4649 + $0x10] sm:%s4641] %v4658
      %v4660 = vld [vmem:[%s4648 + $0x18] sm:%s4641]
      %4661 = vst [vmem:[%s4649 + $0x14] sm:%s4641] %v4660
      %v4662 = vld [vmem:[%s4648 + $0x14] sm:%s4641]
      %4663 = vst [vmem:[%s4649 + $0x18] sm:%s4641] %v4662
      %v4664 = vld [vmem:[%s4648 + $0x1c] sm:%s4641]
      %4665 = vst [vmem:[%s4649 + $0x1c] sm:%s4641] %v4664
      %v4666 = vld [vmem:[%s4648 + $0x20] sm:%s4641]
      %4667 = vst [vmem:[%s4649 + $0x20] sm:%s4641] %v4666
      %v4668 = vld [vmem:[%s4648 + $0x28] sm:%s4641]
      %4669 = vst [vmem:[%s4649 + $0x24] sm:%s4641] %v4668
      %v4670 = vld [vmem:[%s4648 + $0x24] sm:%s4641]
      %4671 = vst [vmem:[%s4649 + $0x28] sm:%s4641] %v4670
      %v4672 = vld [vmem:[%s4648 + $0x2c] sm:%s4641]
      %4673 = vst [vmem:[%s4649 + $0x2c] sm:%s4641] %v4672
      %v4674 = vld [vmem:[%s4648 + $0x30] sm:%s4641]
      %4675 = vst [vmem:[%s4649 + $0x30] sm:%s4641] %v4674
      %v4676 = vld [vmem:[%s4648 + $0x38] sm:%s4641]
      %4677 = vst [vmem:[%s4649 + $0x34] sm:%s4641] %v4676
      %v4678 = vld [vmem:[%s4648 + $0x34] sm:%s4641]
      %4679 = vst [vmem:[%s4649 + $0x38] sm:%s4641] %v4678
      %v4680 = vld [vmem:[%s4648 + $0x3c] sm:%s4641]
      %4681 = vst [vmem:[%s4649 + $0x3c] sm:%s4641] %v4680
      %v4682 = vld [vmem:[%s4648 + $0x40] sm:%s4641]
      %4683 = vst [vmem:[%s4649 + $0x40] sm:%s4641] %v4682
      %v4684 = vld [vmem:[%s4648 + $0x48] sm:%s4641]
      %4685 = vst [vmem:[%s4649 + $0x44] sm:%s4641] %v4684
      %v4686 = vld [vmem:[%s4648 + $0x44] sm:%s4641]
      %4687 = vst [vmem:[%s4649 + $0x48] sm:%s4641] %v4686
      %v4688 = vld [vmem:[%s4648 + $0x4c] sm:%s4641]
      %4689 = vst [vmem:[%s4649 + $0x4c] sm:%s4641] %v4688
      %v4690 = vld [vmem:[%s4648 + $0x50] sm:%s4641]
      %4691 = vst [vmem:[%s4649 + $0x50] sm:%s4641] %v4690
      %v4692 = vld [vmem:[%s4648 + $0x58] sm:%s4641]
      %4693 = vst [vmem:[%s4649 + $0x54] sm:%s4641] %v4692
      %v4694 = vld [vmem:[%s4648 + $0x54] sm:%s4641]
      %4695 = vst [vmem:[%s4649 + $0x58] sm:%s4641] %v4694
      %v4696 = vld [vmem:[%s4648 + $0x5c] sm:%s4641]
      %4697 = vst [vmem:[%s4649 + $0x5c] sm:%s4641] %v4696
      %v4698 = vld [vmem:[%s4648 + $0x60] sm:%s4641]
      %4699 = vst [vmem:[%s4649 + $0x60] sm:%s4641] %v4698
      %v4700 = vld [vmem:[%s4648 + $0x68] sm:%s4641]
      %4701 = vst [vmem:[%s4649 + $0x64] sm:%s4641] %v4700
      %v4702 = vld [vmem:[%s4648 + $0x64] sm:%s4641]
      %4703 = vst [vmem:[%s4649 + $0x68] sm:%s4641] %v4702
      %v4704 = vld [vmem:[%s4648 + $0x6c] sm:%s4641]
      %4705 = vst [vmem:[%s4649 + $0x6c] sm:%s4641] %v4704
      %v4706 = vld [vmem:[%s4648 + $0x70] sm:%s4641]
      %4707 = vst [vmem:[%s4649 + $0x70] sm:%s4641] %v4706
      %v4708 = vld [vmem:[%s4648 + $0x78] sm:%s4641]
      %4709 = vst [vmem:[%s4649 + $0x74] sm:%s4641] %v4708
      %v4710 = vld [vmem:[%s4648 + $0x74] sm:%s4641]
      %4711 = vst [vmem:[%s4649 + $0x78] sm:%s4641] %v4710
      %v4712 = vld [vmem:[%s4648 + $0x7c] sm:%s4641]
      %4713 = vst [vmem:[%s4649 + $0x7c] sm:%s4641] %v4712
      %v4714 = vld [vmem:[%s4648 + $0x80] sm:%s4641]
      %4715 = vst [vmem:[%s4649 + $0x80] sm:%s4641] %v4714
      %v4716 = vld [vmem:[%s4648 + $0x88] sm:%s4641]
      %4717 = vst [vmem:[%s4649 + $0x84] sm:%s4641] %v4716
      %v4718 = vld [vmem:[%s4648 + $0x84] sm:%s4641]
      %4719 = vst [vmem:[%s4649 + $0x88] sm:%s4641] %v4718
      %v4720 = vld [vmem:[%s4648 + $0x8c] sm:%s4641]
      %4721 = vst [vmem:[%s4649 + $0x8c] sm:%s4641] %v4720
      %v4722 = vld [vmem:[%s4648 + $0x90] sm:%s4641]
      %4723 = vst [vmem:[%s4649 + $0x90] sm:%s4641] %v4722
      %v4724 = vld [vmem:[%s4648 + $0x98] sm:%s4641]
      %4725 = vst [vmem:[%s4649 + $0x94] sm:%s4641] %v4724
      %v4726 = vld [vmem:[%s4648 + $0x94] sm:%s4641]
      %4727 = vst [vmem:[%s4649 + $0x98] sm:%s4641] %v4726
      %v4728 = vld [vmem:[%s4648 + $0x9c] sm:%s4641]
      %4729 = vst [vmem:[%s4649 + $0x9c] sm:%s4641] %v4728
      %v4730 = vld [vmem:[%s4648 + $0xa0] sm:%s4641]
      %4731 = vst [vmem:[%s4649 + $0xa0] sm:%s4641] %v4730
      %v4732 = vld [vmem:[%s4648 + $0xa8] sm:%s4641]
      %4733 = vst [vmem:[%s4649 + $0xa4] sm:%s4641] %v4732
      %v4734 = vld [vmem:[%s4648 + $0xa4] sm:%s4641]
      %4735 = vst [vmem:[%s4649 + $0xa8] sm:%s4641] %v4734
      %v4736 = vld [vmem:[%s4648 + $0xac] sm:%s4641]
      %4737 = vst [vmem:[%s4649 + $0xac] sm:%s4641] %v4736
      %v4738 = vld [vmem:[%s4648 + $0xb0] sm:%s4641]
      %4739 = vst [vmem:[%s4649 + $0xb0] sm:%s4641] %v4738
      %v4740 = vld [vmem:[%s4648 + $0xb8] sm:%s4641]
      %4741 = vst [vmem:[%s4649 + $0xb4] sm:%s4641] %v4740
      %v4742 = vld [vmem:[%s4648 + $0xb4] sm:%s4641]
      %4743 = vst [vmem:[%s4649 + $0xb8] sm:%s4641] %v4742
      %v4744 = vld [vmem:[%s4648 + $0xbc] sm:%s4641]
      %4745 = vst [vmem:[%s4649 + $0xbc] sm:%s4641] %v4744
      %v4746 = vld [vmem:[%s4648 + $0xc0] sm:%s4641]
      %4747 = vst [vmem:[%s4649 + $0xc0] sm:%s4641] %v4746
      %v4748 = vld [vmem:[%s4648 + $0xc8] sm:%s4641]
      %4749 = vst [vmem:[%s4649 + $0xc4] sm:%s4641] %v4748
      %v4750 = vld [vmem:[%s4648 + $0xc4] sm:%s4641]
      %4751 = vst [vmem:[%s4649 + $0xc8] sm:%s4641] %v4750
      %v4752 = vld [vmem:[%s4648 + $0xcc] sm:%s4641]
      %4753 = vst [vmem:[%s4649 + $0xcc] sm:%s4641] %v4752
      %v4754 = vld [vmem:[%s4648 + $0xd0] sm:%s4641]
      %4755 = vst [vmem:[%s4649 + $0xd0] sm:%s4641] %v4754
      %v4756 = vld [vmem:[%s4648 + $0xd8] sm:%s4641]
      %4757 = vst [vmem:[%s4649 + $0xd4] sm:%s4641] %v4756
      %v4758 = vld [vmem:[%s4648 + $0xd4] sm:%s4641]
      %4759 = vst [vmem:[%s4649 + $0xd8] sm:%s4641] %v4758
      %v4760 = vld [vmem:[%s4648 + $0xdc] sm:%s4641]
      %4761 = vst [vmem:[%s4649 + $0xdc] sm:%s4641] %v4760
      %v4762 = vld [vmem:[%s4648 + $0xe0] sm:%s4641]
      %4763 = vst [vmem:[%s4649 + $0xe0] sm:%s4641] %v4762
      %v4764 = vld [vmem:[%s4648 + $0xe8] sm:%s4641]
      %4765 = vst [vmem:[%s4649 + $0xe4] sm:%s4641] %v4764
      %v4766 = vld [vmem:[%s4648 + $0xe4] sm:%s4641]
      %4767 = vst [vmem:[%s4649 + $0xe8] sm:%s4641] %v4766
      %v4768 = vld [vmem:[%s4648 + $0xec] sm:%s4641]
      %4769 = vst [vmem:[%s4649 + $0xec] sm:%s4641] %v4768
      %v4770 = vld [vmem:[%s4648 + $0xf0] sm:%s4641]
      %4771 = vst [vmem:[%s4649 + $0xf0] sm:%s4641] %v4770
      %v4772 = vld [vmem:[%s4648 + $0xf8] sm:%s4641]
      %4773 = vst [vmem:[%s4649 + $0xf4] sm:%s4641] %v4772
      %v4774 = vld [vmem:[%s4648 + $0xf4] sm:%s4641]
      %4775 = vst [vmem:[%s4649 + $0xf8] sm:%s4641] %v4774
      %v4776 = vld [vmem:[%s4648 + $0xfc] sm:%s4641]
      %4777 = vst [vmem:[%s4649 + $0xfc] sm:%s4641] %v4776
      %v4778 = vld [vmem:[%s4648 + $0x100] sm:%s4641]
      %4779 = vst [vmem:[%s4649 + $0x100] sm:%s4641] %v4778
      %v4780 = vld [vmem:[%s4648 + $0x108] sm:%s4641]
      %4781 = vst [vmem:[%s4649 + $0x104] sm:%s4641] %v4780
      %v4782 = vld [vmem:[%s4648 + $0x104] sm:%s4641]
      %4783 = vst [vmem:[%s4649 + $0x108] sm:%s4641] %v4782
      %v4784 = vld [vmem:[%s4648 + $0x10c] sm:%s4641]
      %4785 = vst [vmem:[%s4649 + $0x10c] sm:%s4641] %v4784
      %v4786 = vld [vmem:[%s4648 + $0x110] sm:%s4641]
      %4787 = vst [vmem:[%s4649 + $0x110] sm:%s4641] %v4786
      %v4788 = vld [vmem:[%s4648 + $0x118] sm:%s4641]
      %4789 = vst [vmem:[%s4649 + $0x114] sm:%s4641] %v4788
      %v4790 = vld [vmem:[%s4648 + $0x114] sm:%s4641]
      %4791 = vst [vmem:[%s4649 + $0x118] sm:%s4641] %v4790
      %v4792 = vld [vmem:[%s4648 + $0x11c] sm:%s4641]
      %4793 = vst [vmem:[%s4649 + $0x11c] sm:%s4641] %v4792
      %v4794 = vld [vmem:[%s4648 + $0x120] sm:%s4641]
      %4795 = vst [vmem:[%s4649 + $0x120] sm:%s4641] %v4794
      %v4796 = vld [vmem:[%s4648 + $0x128] sm:%s4641]
      %4797 = vst [vmem:[%s4649 + $0x124] sm:%s4641] %v4796
      %v4798 = vld [vmem:[%s4648 + $0x124] sm:%s4641]
      %4799 = vst [vmem:[%s4649 + $0x128] sm:%s4641] %v4798
      %v4800 = vld [vmem:[%s4648 + $0x12c] sm:%s4641]
      %4801 = vst [vmem:[%s4649 + $0x12c] sm:%s4641] %v4800
      %v4802 = vld [vmem:[%s4648 + $0x130] sm:%s4641]
      %4803 = vst [vmem:[%s4649 + $0x130] sm:%s4641] %v4802
      %v4804 = vld [vmem:[%s4648 + $0x138] sm:%s4641]
      %4805 = vst [vmem:[%s4649 + $0x134] sm:%s4641] %v4804
      %v4806 = vld [vmem:[%s4648 + $0x134] sm:%s4641]
      %4807 = vst [vmem:[%s4649 + $0x138] sm:%s4641] %v4806
      %v4808 = vld [vmem:[%s4648 + $0x13c] sm:%s4641]
      %4809 = vst [vmem:[%s4649 + $0x13c] sm:%s4641] %v4808
      %v4810 = vld [vmem:[%s4648 + $0x140] sm:%s4641]
      %4811 = vst [vmem:[%s4649 + $0x140] sm:%s4641] %v4810
      %v4812 = vld [vmem:[%s4648 + $0x148] sm:%s4641]
      %4813 = vst [vmem:[%s4649 + $0x144] sm:%s4641] %v4812
      %v4814 = vld [vmem:[%s4648 + $0x144] sm:%s4641]
      %4815 = vst [vmem:[%s4649 + $0x148] sm:%s4641] %v4814
      %v4816 = vld [vmem:[%s4648 + $0x14c] sm:%s4641]
      %4817 = vst [vmem:[%s4649 + $0x14c] sm:%s4641] %v4816
      %v4818 = vld [vmem:[%s4648 + $0x150] sm:%s4641]
      %4819 = vst [vmem:[%s4649 + $0x150] sm:%s4641] %v4818
      %v4820 = vld [vmem:[%s4648 + $0x158] sm:%s4641]
      %4821 = vst [vmem:[%s4649 + $0x154] sm:%s4641] %v4820
      %v4822 = vld [vmem:[%s4648 + $0x154] sm:%s4641]
      %4823 = vst [vmem:[%s4649 + $0x158] sm:%s4641] %v4822
      %v4824 = vld [vmem:[%s4648 + $0x15c] sm:%s4641]
      %4825 = vst [vmem:[%s4649 + $0x15c] sm:%s4641] %v4824
      %v4826 = vld [vmem:[%s4648 + $0x160] sm:%s4641]
      %4827 = vst [vmem:[%s4649 + $0x160] sm:%s4641] %v4826
      %v4828 = vld [vmem:[%s4648 + $0x168] sm:%s4641]
      %4829 = vst [vmem:[%s4649 + $0x164] sm:%s4641] %v4828
      %v4830 = vld [vmem:[%s4648 + $0x164] sm:%s4641]
      %4831 = vst [vmem:[%s4649 + $0x168] sm:%s4641] %v4830
      %v4832 = vld [vmem:[%s4648 + $0x16c] sm:%s4641]
      %4833 = vst [vmem:[%s4649 + $0x16c] sm:%s4641] %v4832
      %v4834 = vld [vmem:[%s4648 + $0x170] sm:%s4641]
      %4835 = vst [vmem:[%s4649 + $0x170] sm:%s4641] %v4834
      %v4836 = vld [vmem:[%s4648 + $0x178] sm:%s4641]
      %4837 = vst [vmem:[%s4649 + $0x174] sm:%s4641] %v4836
      %v4838 = vld [vmem:[%s4648 + $0x174] sm:%s4641]
      %4839 = vst [vmem:[%s4649 + $0x178] sm:%s4641] %v4838
      %v4840 = vld [vmem:[%s4648 + $0x17c] sm:%s4641]
      %4841 = vst [vmem:[%s4649 + $0x17c] sm:%s4641] %v4840
      %v4842 = vld [vmem:[%s4648 + $0x180] sm:%s4641]
      %4843 = vst [vmem:[%s4649 + $0x180] sm:%s4641] %v4842
      %v4844 = vld [vmem:[%s4648 + $0x188] sm:%s4641]
      %4845 = vst [vmem:[%s4649 + $0x184] sm:%s4641] %v4844
      %v4846 = vld [vmem:[%s4648 + $0x184] sm:%s4641]
      %4847 = vst [vmem:[%s4649 + $0x188] sm:%s4641] %v4846
      %v4848 = vld [vmem:[%s4648 + $0x18c] sm:%s4641]
      %4849 = vst [vmem:[%s4649 + $0x18c] sm:%s4641] %v4848
      %v4850 = vld [vmem:[%s4648 + $0x190] sm:%s4641]
      %4851 = vst [vmem:[%s4649 + $0x190] sm:%s4641] %v4850
      %v4852 = vld [vmem:[%s4648 + $0x198] sm:%s4641]
      %4853 = vst [vmem:[%s4649 + $0x194] sm:%s4641] %v4852
      %v4854 = vld [vmem:[%s4648 + $0x194] sm:%s4641]
      %4855 = vst [vmem:[%s4649 + $0x198] sm:%s4641] %v4854
      %v4856 = vld [vmem:[%s4648 + $0x19c] sm:%s4641]
      %4857 = vst [vmem:[%s4649 + $0x19c] sm:%s4641] %v4856
      %v4858 = vld [vmem:[%s4648 + $0x1a0] sm:%s4641]
      %4859 = vst [vmem:[%s4649 + $0x1a0] sm:%s4641] %v4858
      %v4860 = vld [vmem:[%s4648 + $0x1a8] sm:%s4641]
      %4861 = vst [vmem:[%s4649 + $0x1a4] sm:%s4641] %v4860
      %v4862 = vld [vmem:[%s4648 + $0x1a4] sm:%s4641]
      %4863 = vst [vmem:[%s4649 + $0x1a8] sm:%s4641] %v4862
      %v4864 = vld [vmem:[%s4648 + $0x1ac] sm:%s4641]
      %4865 = vst [vmem:[%s4649 + $0x1ac] sm:%s4641] %v4864
      %v4866 = vld [vmem:[%s4648 + $0x1b0] sm:%s4641]
      %4867 = vst [vmem:[%s4649 + $0x1b0] sm:%s4641] %v4866
      %v4868 = vld [vmem:[%s4648 + $0x1b8] sm:%s4641]
      %4869 = vst [vmem:[%s4649 + $0x1b4] sm:%s4641] %v4868
      %v4870 = vld [vmem:[%s4648 + $0x1b4] sm:%s4641]
      %4871 = vst [vmem:[%s4649 + $0x1b8] sm:%s4641] %v4870
      %v4872 = vld [vmem:[%s4648 + $0x1bc] sm:%s4641]
      %4873 = vst [vmem:[%s4649 + $0x1bc] sm:%s4641] %v4872
      %v4874 = vld [vmem:[%s4648 + $0x1c0] sm:%s4641]
      %4875 = vst [vmem:[%s4649 + $0x1c0] sm:%s4641] %v4874
      %v4876 = vld [vmem:[%s4648 + $0x1c8] sm:%s4641]
      %4877 = vst [vmem:[%s4649 + $0x1c4] sm:%s4641] %v4876
      %v4878 = vld [vmem:[%s4648 + $0x1c4] sm:%s4641]
      %4879 = vst [vmem:[%s4649 + $0x1c8] sm:%s4641] %v4878
      %v4880 = vld [vmem:[%s4648 + $0x1cc] sm:%s4641]
      %4881 = vst [vmem:[%s4649 + $0x1cc] sm:%s4641] %v4880
      %v4882 = vld [vmem:[%s4648 + $0x1d0] sm:%s4641]
      %4883 = vst [vmem:[%s4649 + $0x1d0] sm:%s4641] %v4882
      %v4884 = vld [vmem:[%s4648 + $0x1d8] sm:%s4641]
      %4885 = vst [vmem:[%s4649 + $0x1d4] sm:%s4641] %v4884
      %v4886 = vld [vmem:[%s4648 + $0x1d4] sm:%s4641]
      %4887 = vst [vmem:[%s4649 + $0x1d8] sm:%s4641] %v4886
      %v4888 = vld [vmem:[%s4648 + $0x1dc] sm:%s4641]
      %4889 = vst [vmem:[%s4649 + $0x1dc] sm:%s4641] %v4888
      %v4890 = vld [vmem:[%s4648 + $0x1e0] sm:%s4641]
      %4891 = vst [vmem:[%s4649 + $0x1e0] sm:%s4641] %v4890
      %v4892 = vld [vmem:[%s4648 + $0x1e8] sm:%s4641]
      %4893 = vst [vmem:[%s4649 + $0x1e4] sm:%s4641] %v4892
      %v4894 = vld [vmem:[%s4648 + $0x1e4] sm:%s4641]
      %4895 = vst [vmem:[%s4649 + $0x1e8] sm:%s4641] %v4894
      %v4896 = vld [vmem:[%s4648 + $0x1ec] sm:%s4641]
      %4897 = vst [vmem:[%s4649 + $0x1ec] sm:%s4641] %v4896
      %v4898 = vld [vmem:[%s4648 + $0x1f0] sm:%s4641]
      %4899 = vst [vmem:[%s4649 + $0x1f0] sm:%s4641] %v4898
      %v4900 = vld [vmem:[%s4648 + $0x1f8] sm:%s4641]
      %4901 = vst [vmem:[%s4649 + $0x1f4] sm:%s4641] %v4900
      %v4902 = vld [vmem:[%s4648 + $0x1f4] sm:%s4641]
      %4903 = vst [vmem:[%s4649 + $0x1f8] sm:%s4641] %v4902
      %v4904 = vld [vmem:[%s4648 + $0x1fc] sm:%s4641]
      %4905 = vst [vmem:[%s4649 + $0x1fc] sm:%s4641] %v4904
      %v4906 = vld [vmem:[%s4648 + $0x200] sm:%s4641]
      %4907 = vst [vmem:[%s4649 + $0x200] sm:%s4641] %v4906
      %v4908 = vld [vmem:[%s4648 + $0x208] sm:%s4641]
      %4909 = vst [vmem:[%s4649 + $0x204] sm:%s4641] %v4908
      %v4910 = vld [vmem:[%s4648 + $0x204] sm:%s4641]
      %4911 = vst [vmem:[%s4649 + $0x208] sm:%s4641] %v4910
      %v4912 = vld [vmem:[%s4648 + $0x20c] sm:%s4641]
      %4913 = vst [vmem:[%s4649 + $0x20c] sm:%s4641] %v4912
      %v4914 = vld [vmem:[%s4648 + $0x210] sm:%s4641]
      %4915 = vst [vmem:[%s4649 + $0x210] sm:%s4641] %v4914
      %v4916 = vld [vmem:[%s4648 + $0x218] sm:%s4641]
      %4917 = vst [vmem:[%s4649 + $0x214] sm:%s4641] %v4916
      %v4918 = vld [vmem:[%s4648 + $0x214] sm:%s4641]
      %4919 = vst [vmem:[%s4649 + $0x218] sm:%s4641] %v4918
      %v4920 = vld [vmem:[%s4648 + $0x21c] sm:%s4641]
      %4921 = vst [vmem:[%s4649 + $0x21c] sm:%s4641] %v4920
      %v4922 = vld [vmem:[%s4648 + $0x220] sm:%s4641]
      %4923 = vst [vmem:[%s4649 + $0x220] sm:%s4641] %v4922
      %v4924 = vld [vmem:[%s4648 + $0x228] sm:%s4641]
      %4925 = vst [vmem:[%s4649 + $0x224] sm:%s4641] %v4924
      %v4926 = vld [vmem:[%s4648 + $0x224] sm:%s4641]
      %4927 = vst [vmem:[%s4649 + $0x228] sm:%s4641] %v4926
      %v4928 = vld [vmem:[%s4648 + $0x22c] sm:%s4641]
      %4929 = vst [vmem:[%s4649 + $0x22c] sm:%s4641] %v4928
      %v4930 = vld [vmem:[%s4648 + $0x230] sm:%s4641]
      %4931 = vst [vmem:[%s4649 + $0x230] sm:%s4641] %v4930
      %v4932 = vld [vmem:[%s4648 + $0x238] sm:%s4641]
      %4933 = vst [vmem:[%s4649 + $0x234] sm:%s4641] %v4932
      %v4934 = vld [vmem:[%s4648 + $0x234] sm:%s4641]
      %4935 = vst [vmem:[%s4649 + $0x238] sm:%s4641] %v4934
      %v4936 = vld [vmem:[%s4648 + $0x23c] sm:%s4641]
      %4937 = vst [vmem:[%s4649 + $0x23c] sm:%s4641] %v4936
      %v4938 = vld [vmem:[%s4648 + $0x240] sm:%s4641]
      %4939 = vst [vmem:[%s4649 + $0x240] sm:%s4641] %v4938
      %v4940 = vld [vmem:[%s4648 + $0x248] sm:%s4641]
      %4941 = vst [vmem:[%s4649 + $0x244] sm:%s4641] %v4940
      %v4942 = vld [vmem:[%s4648 + $0x244] sm:%s4641]
      %4943 = vst [vmem:[%s4649 + $0x248] sm:%s4641] %v4942
      %v4944 = vld [vmem:[%s4648 + $0x24c] sm:%s4641]
      %4945 = vst [vmem:[%s4649 + $0x24c] sm:%s4641] %v4944
      %v4946 = vld [vmem:[%s4648 + $0x250] sm:%s4641]
      %4947 = vst [vmem:[%s4649 + $0x250] sm:%s4641] %v4946
      %v4948 = vld [vmem:[%s4648 + $0x258] sm:%s4641]
      %4949 = vst [vmem:[%s4649 + $0x254] sm:%s4641] %v4948
      %v4950 = vld [vmem:[%s4648 + $0x254] sm:%s4641]
      %4951 = vst [vmem:[%s4649 + $0x258] sm:%s4641] %v4950
      %v4952 = vld [vmem:[%s4648 + $0x25c] sm:%s4641]
      %4953 = vst [vmem:[%s4649 + $0x25c] sm:%s4641] %v4952
      %v4954 = vld [vmem:[%s4648 + $0x260] sm:%s4641]
      %4955 = vst [vmem:[%s4649 + $0x260] sm:%s4641] %v4954
      %v4956 = vld [vmem:[%s4648 + $0x268] sm:%s4641]
      %4957 = vst [vmem:[%s4649 + $0x264] sm:%s4641] %v4956
      %v4958 = vld [vmem:[%s4648 + $0x264] sm:%s4641]
      %4959 = vst [vmem:[%s4649 + $0x268] sm:%s4641] %v4958
      %v4960 = vld [vmem:[%s4648 + $0x26c] sm:%s4641]
      %4961 = vst [vmem:[%s4649 + $0x26c] sm:%s4641] %v4960
      %v4962 = vld [vmem:[%s4648 + $0x270] sm:%s4641]
      %4963 = vst [vmem:[%s4649 + $0x270] sm:%s4641] %v4962
      %v4964 = vld [vmem:[%s4648 + $0x278] sm:%s4641]
      %4965 = vst [vmem:[%s4649 + $0x274] sm:%s4641] %v4964
      %v4966 = vld [vmem:[%s4648 + $0x274] sm:%s4641]
      %4967 = vst [vmem:[%s4649 + $0x278] sm:%s4641] %v4966
      %v4968 = vld [vmem:[%s4648 + $0x27c] sm:%s4641]
      %4969 = vst [vmem:[%s4649 + $0x27c] sm:%s4641] %v4968
      %v4970 = vld [vmem:[%s4648 + $0x280] sm:%s4641]
      %4971 = vst [vmem:[%s4649 + $0x280] sm:%s4641] %v4970
      %v4972 = vld [vmem:[%s4648 + $0x288] sm:%s4641]
      %4973 = vst [vmem:[%s4649 + $0x284] sm:%s4641] %v4972
      %v4974 = vld [vmem:[%s4648 + $0x284] sm:%s4641]
      %4975 = vst [vmem:[%s4649 + $0x288] sm:%s4641] %v4974
      %v4976 = vld [vmem:[%s4648 + $0x28c] sm:%s4641]
      %4977 = vst [vmem:[%s4649 + $0x28c] sm:%s4641] %v4976
      %v4978 = vld [vmem:[%s4648 + $0x290] sm:%s4641]
      %4979 = vst [vmem:[%s4649 + $0x290] sm:%s4641] %v4978
      %v4980 = vld [vmem:[%s4648 + $0x298] sm:%s4641]
      %4981 = vst [vmem:[%s4649 + $0x294] sm:%s4641] %v4980
      %v4982 = vld [vmem:[%s4648 + $0x294] sm:%s4641]
      %4983 = vst [vmem:[%s4649 + $0x298] sm:%s4641] %v4982
      %v4984 = vld [vmem:[%s4648 + $0x29c] sm:%s4641]
      %4985 = vst [vmem:[%s4649 + $0x29c] sm:%s4641] %v4984
      %v4986 = vld [vmem:[%s4648 + $0x2a0] sm:%s4641]
      %4987 = vst [vmem:[%s4649 + $0x2a0] sm:%s4641] %v4986
      %v4988 = vld [vmem:[%s4648 + $0x2a8] sm:%s4641]
      %4989 = vst [vmem:[%s4649 + $0x2a4] sm:%s4641] %v4988
      %v4990 = vld [vmem:[%s4648 + $0x2a4] sm:%s4641]
      %4991 = vst [vmem:[%s4649 + $0x2a8] sm:%s4641] %v4990
      %v4992 = vld [vmem:[%s4648 + $0x2ac] sm:%s4641]
      %4993 = vst [vmem:[%s4649 + $0x2ac] sm:%s4641] %v4992
      %v4994 = vld [vmem:[%s4648 + $0x2b0] sm:%s4641]
      %4995 = vst [vmem:[%s4649 + $0x2b0] sm:%s4641] %v4994
      %v4996 = vld [vmem:[%s4648 + $0x2b8] sm:%s4641]
      %4997 = vst [vmem:[%s4649 + $0x2b4] sm:%s4641] %v4996
      %v4998 = vld [vmem:[%s4648 + $0x2b4] sm:%s4641]
      %4999 = vst [vmem:[%s4649 + $0x2b8] sm:%s4641] %v4998
      %v5000 = vld [vmem:[%s4648 + $0x2bc] sm:%s4641]
      %5001 = vst [vmem:[%s4649 + $0x2bc] sm:%s4641] %v5000
      %v5002 = vld [vmem:[%s4648 + $0x2c0] sm:%s4641]
      %5003 = vst [vmem:[%s4649 + $0x2c0] sm:%s4641] %v5002
      %v5004 = vld [vmem:[%s4648 + $0x2c8] sm:%s4641]
      %5005 = vst [vmem:[%s4649 + $0x2c4] sm:%s4641] %v5004
      %v5006 = vld [vmem:[%s4648 + $0x2c4] sm:%s4641]
      %5007 = vst [vmem:[%s4649 + $0x2c8] sm:%s4641] %v5006
      %v5008 = vld [vmem:[%s4648 + $0x2cc] sm:%s4641]
      %5009 = vst [vmem:[%s4649 + $0x2cc] sm:%s4641] %v5008
      %v5010 = vld [vmem:[%s4648 + $0x2d0] sm:%s4641]
      %5011 = vst [vmem:[%s4649 + $0x2d0] sm:%s4641] %v5010
      %v5012 = vld [vmem:[%s4648 + $0x2d8] sm:%s4641]
      %5013 = vst [vmem:[%s4649 + $0x2d4] sm:%s4641] %v5012
      %v5014 = vld [vmem:[%s4648 + $0x2d4] sm:%s4641]
      %5015 = vst [vmem:[%s4649 + $0x2d8] sm:%s4641] %v5014
      %v5016 = vld [vmem:[%s4648 + $0x2dc] sm:%s4641]
      %5017 = vst [vmem:[%s4649 + $0x2dc] sm:%s4641] %v5016
      %v5018 = vld [vmem:[%s4648 + $0x2e0] sm:%s4641]
      %5019 = vst [vmem:[%s4649 + $0x2e0] sm:%s4641] %v5018
      %v5020 = vld [vmem:[%s4648 + $0x2e8] sm:%s4641]
      %5021 = vst [vmem:[%s4649 + $0x2e4] sm:%s4641] %v5020
      %v5022 = vld [vmem:[%s4648 + $0x2e4] sm:%s4641]
      %5023 = vst [vmem:[%s4649 + $0x2e8] sm:%s4641] %v5022
      %v5024 = vld [vmem:[%s4648 + $0x2ec] sm:%s4641]
      %5025 = vst [vmem:[%s4649 + $0x2ec] sm:%s4641] %v5024
      %v5026 = vld [vmem:[%s4648 + $0x2f0] sm:%s4641]
      %5027 = vst [vmem:[%s4649 + $0x2f0] sm:%s4641] %v5026
      %v5028 = vld [vmem:[%s4648 + $0x2f8] sm:%s4641]
      %5029 = vst [vmem:[%s4649 + $0x2f4] sm:%s4641] %v5028
      %v5030 = vld [vmem:[%s4648 + $0x2f4] sm:%s4641]
      %5031 = vst [vmem:[%s4649 + $0x2f8] sm:%s4641] %v5030
      %v5032 = vld [vmem:[%s4648 + $0x2fc] sm:%s4641]
      %5033 = vst [vmem:[%s4649 + $0x2fc] sm:%s4641] %v5032
    $region170: #{conv_block.1} parent=164 // loop_footer
      %s4647 = sadd.s32 1, %s4643
    $region171: #{conv_block.1} parent=164 // loop_footer_branch
      %4642 = sbr.rel target = $region167
    $region172: #{conv_block.1} parent=164 // loop_exit
      _
  $region165: #{conv_block.1} parent=0 // pred_fallthru
    _
  // Predicated region
  $region191: #{conv_block.1} parent=0 // pred_check
    _
  $region192: #{conv_block.1} parent=0 // pred_check_branch
    %5447 = sbr.rel (0) target = $region194
  $region193: #{conv_block.1} parent=0 // pred_region
    %5448 = vsyncadd [#allocation3], 12288
  $region194: #{conv_block.1} parent=0 // pred_fallthru
    _
  %s5449 = sshll.u32 %s1717, 4
  %5450 = dma.done %s899, %s5449
  %v5451 = vrot.slane %v4624, 7
  %v5452 = vrot.slane %v4625, 7
  %v5453 = vrot.slane %v4626, 7
  %v5454 = vrot.slane %v4627, 7
  %v5455 = vrot.slane %v4628, 7
  %v5456 = vrot.slane %v4629, 7
  %v5457 = vrot.slane %v4630, 7
  %v5458 = vrot.slane %v4631, 7
  %v5459 = vsel %vm1728, %v5455, %v5457
  %v5460 = vsel %vm1728, %v5456, %v5458
  %v5461 = vsel %vm1728, %v5453, %v5455
  %v5462 = vsel %vm1728, %v5454, %v5456
  %v5463 = vsel %vm1728, %v5451, %v5453
  %v5464 = vsel %vm1728, %v5452, %v5454
  %v5465 = vsel %vm1728, %v5457, %v5451
  %v5466 = vsel %vm1728, %v5458, %v5452
  %v5467 = vsel %vm1741, %v5465, 0.0
  %v5468 = vsel %vm1741, %v5466, 0.0
  %v5469 = vsel %vm1742, %v5463, 0.0
  %v5470 = vsel %vm1742, %v5464, 0.0
  %v5471 = vsel %vm1743, %v5461, 0.0
  %v5472 = vsel %vm1743, %v5462, 0.0
  %v5473 = vsel %vm1744, %v5459, 0.0
  %v5474 = vsel %vm1744, %v5460, 0.0
  %v5475 = vrot.slane %v4624, 1
  %v5476 = vrot.slane %v4625, 1
  %v5477 = vrot.slane %v4626, 1
  %v5478 = vrot.slane %v4627, 1
  %v5479 = vrot.slane %v4628, 1
  %v5480 = vrot.slane %v4629, 1
  %v5481 = vrot.slane %v4630, 1
  %v5482 = vrot.slane %v4631, 1
  %v5483 = vsel %vm1761, %v5479, %v5481
  %v5484 = vsel %vm1761, %v5480, %v5482
  %v5485 = vsel %vm1761, %v5477, %v5479
  %v5486 = vsel %vm1761, %v5478, %v5480
  %v5487 = vsel %vm1761, %v5475, %v5477
  %v5488 = vsel %vm1761, %v5476, %v5478
  %v5489 = vsel %vm1761, %v5481, %v5475
  %v5490 = vsel %vm1761, %v5482, %v5476
  %v5491 = vsel %vm1774, %v5487, 0.0
  %v5492 = vsel %vm1774, %v5488, 0.0
  %v5493 = vsel %vm1775, %v5485, 0.0
  %v5494 = vsel %vm1775, %v5486, 0.0
  %v5495 = vsel %vm1776, %v5483, 0.0
  %v5496 = vsel %vm1776, %v5484, 0.0
  %v5497 = vsel %vm1777, %v5489, 0.0
  %v5498 = vsel %vm1777, %v5490, 0.0
  %v5499 = vpack.c.bf16 %v5469, %v5467
  %v5500 = vpack.c.bf16 %v5470, %v5468
  %v5501 = vpack.c.bf16 %v4626, %v4624
  %v5502 = vpack.c.bf16 %v4627, %v4625
  %v5503 = vpack.c.bf16 %v5493, %v5491
  %v5504 = vpack.c.bf16 %v5494, %v5492
  %v5505 = vpack.c.bf16 %v5473, %v5471
  %v5506 = vpack.c.bf16 %v5474, %v5472
  %v5507 = vpack.c.bf16 %v4630, %v4628
  %v5508 = vpack.c.bf16 %v4631, %v4629
  %v5509 = vpack.c.bf16 %v5497, %v5495
  %v5510 = vpack.c.bf16 %v5498, %v5496
  %v5511 = vld [vmem:[%s898] sm:$0xff]
  %v5512 = vld [vmem:[%s898 + $0x8] sm:$0xff]
  %v5513 = vld [vmem:[%s898 + $0x10] sm:$0xff]
  %v5514 = vld [vmem:[%s898 + $0x18] sm:$0xff]
  %v5515 = vld [vmem:[%s898 + $0x20] sm:$0xff]
  %v5516 = vld [vmem:[%s898 + $0x28] sm:$0xff]
  %v5517 = vld [vmem:[%s898 + $0x30] sm:$0xff]
  %v5518 = vld [vmem:[%s898 + $0x38] sm:$0xff]
  %v5519 = vld [vmem:[%s898 + $0x40] sm:$0xff]
  %v5520 = vld [vmem:[%s898 + $0x48] sm:$0xff]
  %v5521 = vld [vmem:[%s898 + $0x50] sm:$0xff]
  %v5522 = vld [vmem:[%s898 + $0x58] sm:$0xff]
  %v5523 = vld [vmem:[%s898 + $0x60] sm:$0xff]
  %v5524 = vld [vmem:[%s898 + $0x68] sm:$0xff]
  %v5525 = vld [vmem:[%s898 + $0x70] sm:$0xff]
  %v5526 = vld [vmem:[%s898 + $0x78] sm:$0xff]
  %v5527 = vld [vmem:[%s898 + $0x80] sm:$0xff]
  %v5528 = vld [vmem:[%s898 + $0x88] sm:$0xff]
  %v5529 = vld [vmem:[%s898 + $0x90] sm:$0xff]
  %v5530 = vld [vmem:[%s898 + $0x98] sm:$0xff]
  %v5531 = vld [vmem:[%s898 + $0xa0] sm:$0xff]
  %v5532 = vld [vmem:[%s898 + $0xa8] sm:$0xff]
  %v5533 = vld [vmem:[%s898 + $0xb0] sm:$0xff]
  %v5534 = vld [vmem:[%s898 + $0xb8] sm:$0xff]
  %v5535 = vld [vmem:[%s898 + $0xc0] sm:$0xff]
  %v5536 = vld [vmem:[%s898 + $0xc8] sm:$0xff]
  %v5537 = vld [vmem:[%s898 + $0xd0] sm:$0xff]
  %v5538 = vld [vmem:[%s898 + $0xd8] sm:$0xff]
  %v5539 = vld [vmem:[%s898 + $0xe0] sm:$0xff]
  %v5540 = vld [vmem:[%s898 + $0xe8] sm:$0xff]
  %v5541 = vld [vmem:[%s898 + $0xf0] sm:$0xff]
  %v5542 = vld [vmem:[%s898 + $0xf8] sm:$0xff]
  %v5543 = vld [vmem:[%s898 + $0x100] sm:$0xff]
  %v5544 = vld [vmem:[%s898 + $0x108] sm:$0xff]
  %v5545 = vld [vmem:[%s898 + $0x110] sm:$0xff]
  %v5546 = vld [vmem:[%s898 + $0x118] sm:$0xff]
  %v5547 = vld [vmem:[%s898 + $0x120] sm:$0xff]
  %v5548 = vld [vmem:[%s898 + $0x128] sm:$0xff]
  %v5549 = vld [vmem:[%s898 + $0x130] sm:$0xff]
  %v5550 = vld [vmem:[%s898 + $0x138] sm:$0xff]
  %v5551 = vld [vmem:[%s898 + $0x140] sm:$0xff]
  %v5552 = vld [vmem:[%s898 + $0x148] sm:$0xff]
  %v5553 = vld [vmem:[%s898 + $0x150] sm:$0xff]
  %v5554 = vld [vmem:[%s898 + $0x158] sm:$0xff]
  %v5555 = vld [vmem:[%s898 + $0x160] sm:$0xff]
  %v5556 = vld [vmem:[%s898 + $0x168] sm:$0xff]
  %v5557 = vld [vmem:[%s898 + $0x170] sm:$0xff]
  %v5558 = vld [vmem:[%s898 + $0x178] sm:$0xff]
  %v5559 = vld [vmem:[%s898 + $0x180] sm:$0xff]
  %v5560 = vld [vmem:[%s898 + $0x188] sm:$0xff]
  %v5561 = vld [vmem:[%s898 + $0x190] sm:$0xff]
  %v5562 = vld [vmem:[%s898 + $0x198] sm:$0xff]
  %v5563 = vld [vmem:[%s898 + $0x1a0] sm:$0xff]
  %v5564 = vld [vmem:[%s898 + $0x1a8] sm:$0xff]
  %v5565 = vld [vmem:[%s898 + $0x1b0] sm:$0xff]
  %v5566 = vld [vmem:[%s898 + $0x1b8] sm:$0xff]
  %v5567 = vld [vmem:[%s898 + $0x1c0] sm:$0xff]
  %v5568 = vld [vmem:[%s898 + $0x1c8] sm:$0xff]
  %v5569 = vld [vmem:[%s898 + $0x1d0] sm:$0xff]
  %v5570 = vld [vmem:[%s898 + $0x1d8] sm:$0xff]
  %v5571 = vld [vmem:[%s898 + $0x1e0] sm:$0xff]
  %v5572 = vld [vmem:[%s898 + $0x1e8] sm:$0xff]
  %v5573 = vld [vmem:[%s898 + $0x1f0] sm:$0xff]
  %v5574 = vld [vmem:[%s898 + $0x1f8] sm:$0xff]
  %v5575 = vld [vmem:[%s898 + $0x200] sm:$0xff]
  %v5576 = vld [vmem:[%s898 + $0x208] sm:$0xff]
  %v5577 = vld [vmem:[%s898 + $0x210] sm:$0xff]
  %v5578 = vld [vmem:[%s898 + $0x218] sm:$0xff]
  %v5579 = vld [vmem:[%s898 + $0x220] sm:$0xff]
  %v5580 = vld [vmem:[%s898 + $0x228] sm:$0xff]
  %v5581 = vld [vmem:[%s898 + $0x230] sm:$0xff]
  %v5582 = vld [vmem:[%s898 + $0x238] sm:$0xff]
  %v5583 = vld [vmem:[%s898 + $0x240] sm:$0xff]
  %v5584 = vld [vmem:[%s898 + $0x248] sm:$0xff]
  %v5585 = vld [vmem:[%s898 + $0x250] sm:$0xff]
  %v5586 = vld [vmem:[%s898 + $0x258] sm:$0xff]
  %v5587 = vld [vmem:[%s898 + $0x260] sm:$0xff]
  %v5588 = vld [vmem:[%s898 + $0x268] sm:$0xff]
  %v5589 = vld [vmem:[%s898 + $0x270] sm:$0xff]
  %v5590 = vld [vmem:[%s898 + $0x278] sm:$0xff]
  %v5591 = vld [vmem:[%s898 + $0x280] sm:$0xff]
  %v5592 = vld [vmem:[%s898 + $0x288] sm:$0xff]
  %v5593 = vld [vmem:[%s898 + $0x290] sm:$0xff]
  %v5594 = vld [vmem:[%s898 + $0x298] sm:$0xff]
  %v5595 = vld [vmem:[%s898 + $0x2a0] sm:$0xff]
  %v5596 = vld [vmem:[%s898 + $0x2a8] sm:$0xff]
  %v5597 = vld [vmem:[%s898 + $0x2b0] sm:$0xff]
  %v5598 = vld [vmem:[%s898 + $0x2b8] sm:$0xff]
  %v5599 = vld [vmem:[%s898 + $0x2c0] sm:$0xff]
  %v5600 = vld [vmem:[%s898 + $0x2c8] sm:$0xff]
  %v5601 = vld [vmem:[%s898 + $0x2d0] sm:$0xff]
  %v5602 = vld [vmem:[%s898 + $0x2d8] sm:$0xff]
  %v5603 = vld [vmem:[%s898 + $0x2e0] sm:$0xff]
  %v5604 = vld [vmem:[%s898 + $0x2e8] sm:$0xff]
  %v5605 = vld [vmem:[%s898 + $0x2f0] sm:$0xff]
  %v5606 = vld [vmem:[%s898 + $0x2f8] sm:$0xff]
  %s5607 = scalar_lea.vmem %s1, 6
  %v5608 = vld [vmem:[%s5607] sm:$0x3]
  %v5610 = vlaneseq
  %v5611 = vshrl.u32 %v5610, 7
  %v5612 = vsub.s32 0, %v5611
  %v5613 = vrot.slane %v5608, %v5612
  %v5614 = vlaneseq
  %v5615 = vshrl.u32 %v5614, 7
  %v5616 = vsub.s32 1, %v5615
  %v5617 = vrot.slane %v5608, %v5616
  %5620 = vmatprep.subr.bf16.mxu0 %v5512
  %5621 = vmatpush1.bf16.msra.mxu0 %v5511
  %5622 = vmatprep.subr.bf16.mxu0 %v5514
  %5623 = vmatpush1.bf16.msra.mxu0 %v5513
  %5624 = vmatprep.subr.bf16.mxu0 %v5516
  %5625 = vmatpush1.bf16.msra.mxu0 %v5515
  %5626 = vmatprep.subr.bf16.mxu0 %v5518
  %5627 = vmatpush1.bf16.msra.mxu0 %v5517
  %5628 = vmatprep.subr.bf16.mxu0 %v5520
  %5629 = vmatpush1.bf16.msra.mxu0 %v5519
  %5630 = vmatprep.subr.bf16.mxu0 %v5522
  %5631 = vmatpush1.bf16.msra.mxu0 %v5521
  %5632 = vmatprep.subr.bf16.mxu0 %v5524
  %5633 = vmatpush1.bf16.msra.mxu0 %v5523
  %5634 = vmatprep.subr.bf16.mxu0 %v5526
  %5635 = vmatpush1.bf16.msra.mxu0 %v5525
  %5636 = vmatprep.subr.bf16.mxu0 %v5528
  %5637 = vmatpush1.bf16.msra.mxu0 %v5527
  %5638 = vmatprep.subr.bf16.mxu0 %v5530
  %5639 = vmatpush1.bf16.msra.mxu0 %v5529
  %5640 = vmatprep.subr.bf16.mxu0 %v5532
  %5641 = vmatpush1.bf16.msra.mxu0 %v5531
  %5642 = vmatprep.subr.bf16.mxu0 %v5534
  %5643 = vmatpush1.bf16.msra.mxu0 %v5533
  %5644 = vmatprep.subr.bf16.mxu0 %v5536
  %5645 = vmatpush1.bf16.msra.mxu0 %v5535
  %5646 = vmatprep.subr.bf16.mxu0 %v5538
  %5647 = vmatpush1.bf16.msra.mxu0 %v5537
  %5648 = vmatprep.subr.bf16.mxu0 %v5540
  %5649 = vmatpush1.bf16.msra.mxu0 %v5539
  %5650 = vmatprep.subr.bf16.mxu0 %v5542
  %5651 = vmatpush1.bf16.msra.mxu0 %v5541
  %5652 = vmatprep.mubr.bf16.mxu0 %v5500
  %5653 = vmatmul.mubr.bf16.gmra.mrb[0].mxu0 %v5499
  %v5654 = vpop.f32.mrb[0].mxu0
  %v5655 = vadd.f32 %v5613, %v5654
  %v5656 = vpop.f32.mrb[0].mxu0
  %v5657 = vadd.f32 %v5617, %v5656
  %v5658 = vpop.f32.mrb[0].mxu0
  %v5659 = vadd.f32 %v5613, %v5658
  %v5660 = vpop.f32.mrb[0].mxu0
  %v5661 = vadd.f32 %v5617, %v5660
  %5662 = vmatprep.mubr.bf16.mxu0 %v5506
  %5663 = vmatmul.mubr.bf16.gmra.mrb[0].mxu0 %v5505
  %v5664 = vpop.f32.mrb[0].mxu0
  %v5665 = vadd.f32 %v5613, %v5664
  %v5666 = vpop.f32.mrb[0].mxu0
  %v5667 = vadd.f32 %v5617, %v5666
  %v5668 = vpop.f32.mrb[0].mxu0
  %v5669 = vadd.f32 %v5613, %v5668
  %v5670 = vpop.f32.mrb[0].mxu0
  %v5671 = vadd.f32 %v5617, %v5670
  %5672 = vdwg.mxu0
  %5673 = vmatprep.subr.bf16.mxu0 %v5544
  %5674 = vmatpush1.bf16.msra.mxu0 %v5543
  %5675 = vmatprep.subr.bf16.mxu0 %v5546
  %5676 = vmatpush1.bf16.msra.mxu0 %v5545
  %5677 = vmatprep.subr.bf16.mxu0 %v5548
  %5678 = vmatpush1.bf16.msra.mxu0 %v5547
  %5679 = vmatprep.subr.bf16.mxu0 %v5550
  %5680 = vmatpush1.bf16.msra.mxu0 %v5549
  %5681 = vmatprep.subr.bf16.mxu0 %v5552
  %5682 = vmatpush1.bf16.msra.mxu0 %v5551
  %5683 = vmatprep.subr.bf16.mxu0 %v5554
  %5684 = vmatpush1.bf16.msra.mxu0 %v5553
  %5685 = vmatprep.subr.bf16.mxu0 %v5556
  %5686 = vmatpush1.bf16.msra.mxu0 %v5555
  %5687 = vmatprep.subr.bf16.mxu0 %v5558
  %5688 = vmatpush1.bf16.msra.mxu0 %v5557
  %5689 = vmatprep.subr.bf16.mxu0 %v5560
  %5690 = vmatpush1.bf16.msra.mxu0 %v5559
  %5691 = vmatprep.subr.bf16.mxu0 %v5562
  %5692 = vmatpush1.bf16.msra.mxu0 %v5561
  %5693 = vmatprep.subr.bf16.mxu0 %v5564
  %5694 = vmatpush1.bf16.msra.mxu0 %v5563
  %5695 = vmatprep.subr.bf16.mxu0 %v5566
  %5696 = vmatpush1.bf16.msra.mxu0 %v5565
  %5697 = vmatprep.subr.bf16.mxu0 %v5568
  %5698 = vmatpush1.bf16.msra.mxu0 %v5567
  %5699 = vmatprep.subr.bf16.mxu0 %v5570
  %5700 = vmatpush1.bf16.msra.mxu0 %v5569
  %5701 = vmatprep.subr.bf16.mxu0 %v5572
  %5702 = vmatpush1.bf16.msra.mxu0 %v5571
  %5703 = vmatprep.subr.bf16.mxu0 %v5574
  %5704 = vmatpush1.bf16.msra.mxu0 %v5573
  %5705 = vmatprep.mubr.bf16.mxu0 %v5502
  %5706 = vmatmul.mubr.bf16.gmra.mrb[0].mxu0 %v5501
  %v5707 = vpop.f32.mrb[0].mxu0
  %v5708 = vadd.f32 %v5655, %v5707
  %v5709 = vpop.f32.mrb[0].mxu0
  %v5710 = vadd.f32 %v5657, %v5709
  %v5711 = vpop.f32.mrb[0].mxu0
  %v5712 = vadd.f32 %v5659, %v5711
  %v5713 = vpop.f32.mrb[0].mxu0
  %v5714 = vadd.f32 %v5661, %v5713
  %5715 = vmatprep.mubr.bf16.mxu0 %v5508
  %5716 = vmatmul.mubr.bf16.gmra.mrb[0].mxu0 %v5507
  %v5717 = vpop.f32.mrb[0].mxu0
  %v5718 = vadd.f32 %v5665, %v5717
  %v5719 = vpop.f32.mrb[0].mxu0
  %v5720 = vadd.f32 %v5667, %v5719
  %v5721 = vpop.f32.mrb[0].mxu0
  %v5722 = vadd.f32 %v5669, %v5721
  %v5723 = vpop.f32.mrb[0].mxu0
  %v5724 = vadd.f32 %v5671, %v5723
  %5725 = vdwg.mxu0
  %5726 = vmatprep.subr.bf16.mxu0 %v5576
  %5727 = vmatpush1.bf16.msra.mxu0 %v5575
  %5728 = vmatprep.subr.bf16.mxu0 %v5578
  %5729 = vmatpush1.bf16.msra.mxu0 %v5577
  %5730 = vmatprep.subr.bf16.mxu0 %v5580
  %5731 = vmatpush1.bf16.msra.mxu0 %v5579
  %5732 = vmatprep.subr.bf16.mxu0 %v5582
  %5733 = vmatpush1.bf16.msra.mxu0 %v5581
  %5734 = vmatprep.subr.bf16.mxu0 %v5584
  %5735 = vmatpush1.bf16.msra.mxu0 %v5583
  %5736 = vmatprep.subr.bf16.mxu0 %v5586
  %5737 = vmatpush1.bf16.msra.mxu0 %v5585
  %5738 = vmatprep.subr.bf16.mxu0 %v5588
  %5739 = vmatpush1.bf16.msra.mxu0 %v5587
  %5740 = vmatprep.subr.bf16.mxu0 %v5590
  %5741 = vmatpush1.bf16.msra.mxu0 %v5589
  %5742 = vmatprep.subr.bf16.mxu0 %v5592
  %5743 = vmatpush1.bf16.msra.mxu0 %v5591
  %5744 = vmatprep.subr.bf16.mxu0 %v5594
  %5745 = vmatpush1.bf16.msra.mxu0 %v5593
  %5746 = vmatprep.subr.bf16.mxu0 %v5596
  %5747 = vmatpush1.bf16.msra.mxu0 %v5595
  %5748 = vmatprep.subr.bf16.mxu0 %v5598
  %5749 = vmatpush1.bf16.msra.mxu0 %v5597
  %5750 = vmatprep.subr.bf16.mxu0 %v5600
  %5751 = vmatpush1.bf16.msra.mxu0 %v5599
  %5752 = vmatprep.subr.bf16.mxu0 %v5602
  %5753 = vmatpush1.bf16.msra.mxu0 %v5601
  %5754 = vmatprep.subr.bf16.mxu0 %v5604
  %5755 = vmatpush1.bf16.msra.mxu0 %v5603
  %5756 = vmatprep.subr.bf16.mxu0 %v5606
  %5757 = vmatpush1.bf16.msra.mxu0 %v5605
  %5758 = vmatprep.mubr.bf16.mxu0 %v5504
  %5759 = vmatmul.mubr.bf16.gmra.mrb[0].mxu0 %v5503
  %v5760 = vpop.f32.mrb[0].mxu0
  %v5761 = vadd.f32 %v5708, %v5760
  %v5762 = vpop.f32.mrb[0].mxu0
  %v5763 = vadd.f32 %v5710, %v5762
  %v5764 = vpop.f32.mrb[0].mxu0
  %v5765 = vadd.f32 %v5712, %v5764
  %v5766 = vpop.f32.mrb[0].mxu0
  %v5767 = vadd.f32 %v5714, %v5766
  %5768 = vmatprep.mubr.bf16.mxu0 %v5510
  %5769 = vmatmul.mubr.bf16.gmra.mrb[0].mxu0 %v5509
  %v5770 = vpop.f32.mrb[0].mxu0
  %v5771 = vadd.f32 %v5718, %v5770
  %v5772 = vpop.f32.mrb[0].mxu0
  %v5773 = vadd.f32 %v5720, %v5772
  %v5774 = vpop.f32.mrb[0].mxu0
  %v5775 = vadd.f32 %v5722, %v5774
  %v5776 = vpop.f32.mrb[0].mxu0
  %v5777 = vadd.f32 %v5724, %v5776
  %5778 = vdwg.mxu0
  %v5779 = vmax.f32 %v5761, 0.0
  %v5780 = vmax.f32 %v5763, 0.0
  %v5781 = vmax.f32 %v5765, 0.0
  %v5782 = vmax.f32 %v5767, 0.0
  %v5783 = vmax.f32 %v5771, 0.0
  %v5784 = vmax.f32 %v5773, 0.0
  %v5785 = vmax.f32 %v5775, 0.0
  %v5786 = vmax.f32 %v5777, 0.0
  %s5787 = sshll.u32 %s1717, 4
  %5788 = dma.done [#allocation3], %s5787
  %v5789 = vrot.slane %v5779, 7
  %v5790 = vrot.slane %v5780, 7
  %v5791 = vrot.slane %v5781, 7
  %v5792 = vrot.slane %v5782, 7
  %v5793 = vrot.slane %v5783, 7
  %v5794 = vrot.slane %v5784, 7
  %v5795 = vrot.slane %v5785, 7
  %v5796 = vrot.slane %v5786, 7
  %v5797 = vsel %vm1728, %v5793, %v5795
  %v5798 = vsel %vm1728, %v5794, %v5796
  %v5799 = vsel %vm1728, %v5791, %v5793
  %v5800 = vsel %vm1728, %v5792, %v5794
  %v5801 = vsel %vm1728, %v5789, %v5791
  %v5802 = vsel %vm1728, %v5790, %v5792
  %v5803 = vsel %vm1728, %v5795, %v5789
  %v5804 = vsel %vm1728, %v5796, %v5790
  %v5805 = vsel %vm1741, %v5803, 0.0
  %v5806 = vsel %vm1741, %v5804, 0.0
  %v5807 = vsel %vm1742, %v5801, 0.0
  %v5808 = vsel %vm1742, %v5802, 0.0
  %v5809 = vsel %vm1743, %v5799, 0.0
  %v5810 = vsel %vm1743, %v5800, 0.0
  %v5811 = vsel %vm1744, %v5797, 0.0
  %v5812 = vsel %vm1744, %v5798, 0.0
  %v5813 = vrot.slane %v5779, 1
  %v5814 = vrot.slane %v5780, 1
  %v5815 = vrot.slane %v5781, 1
  %v5816 = vrot.slane %v5782, 1
  %v5817 = vrot.slane %v5783, 1
  %v5818 = vrot.slane %v5784, 1
  %v5819 = vrot.slane %v5785, 1
  %v5820 = vrot.slane %v5786, 1
  %v5821 = vsel %vm1761, %v5817, %v5819
  %v5822 = vsel %vm1761, %v5818, %v5820
  %v5823 = vsel %vm1761, %v5815, %v5817
  %v5824 = vsel %vm1761, %v5816, %v5818
  %v5825 = vsel %vm1761, %v5813, %v5815
  %v5826 = vsel %vm1761, %v5814, %v5816
  %v5827 = vsel %vm1761, %v5819, %v5813
  %v5828 = vsel %vm1761, %v5820, %v5814
  %v5829 = vsel %vm1774, %v5825, 0.0
  %v5830 = vsel %vm1774, %v5826, 0.0
  %v5831 = vsel %vm1775, %v5823, 0.0
  %v5832 = vsel %vm1775, %v5824, 0.0
  %v5833 = vsel %vm1776, %v5821, 0.0
  %v5834 = vsel %vm1776, %v5822, 0.0
  %v5835 = vsel %vm1777, %v5827, 0.0
  %v5836 = vsel %vm1777, %v5828, 0.0
  %v5837 = vpack.c.bf16 %v5807, %v5805
  %v5838 = vpack.c.bf16 %v5808, %v5806
  %v5839 = vpack.c.bf16 %v5781, %v5779
  %v5840 = vpack.c.bf16 %v5782, %v5780
  %v5841 = vpack.c.bf16 %v5831, %v5829
  %v5842 = vpack.c.bf16 %v5832, %v5830
  %v5843 = vpack.c.bf16 %v5811, %v5809
  %v5844 = vpack.c.bf16 %v5812, %v5810
  %v5845 = vpack.c.bf16 %v5785, %v5783
  %v5846 = vpack.c.bf16 %v5786, %v5784
  %v5847 = vpack.c.bf16 %v5835, %v5833
  %v5848 = vpack.c.bf16 %v5836, %v5834
  %v5849 = vld [vmem:[#allocation2] sm:$0xff]
  %v5850 = vld [vmem:[#allocation2 + $0x8] sm:$0xff]
  %v5851 = vld [vmem:[#allocation2 + $0x10] sm:$0xff]
  %v5852 = vld [vmem:[#allocation2 + $0x18] sm:$0xff]
  %v5853 = vld [vmem:[#allocation2 + $0x20] sm:$0xff]
  %v5854 = vld [vmem:[#allocation2 + $0x28] sm:$0xff]
  %v5855 = vld [vmem:[#allocation2 + $0x30] sm:$0xff]
  %v5856 = vld [vmem:[#allocation2 + $0x38] sm:$0xff]
  %v5857 = vld [vmem:[#allocation2 + $0x40] sm:$0xff]
  %v5858 = vld [vmem:[#allocation2 + $0x48] sm:$0xff]
  %v5859 = vld [vmem:[#allocation2 + $0x50] sm:$0xff]
  %v5860 = vld [vmem:[#allocation2 + $0x58] sm:$0xff]
  %v5861 = vld [vmem:[#allocation2 + $0x60] sm:$0xff]
  %v5862 = vld [vmem:[#allocation2 + $0x68] sm:$0xff]
  %v5863 = vld [vmem:[#allocation2 + $0x70] sm:$0xff]
  %v5864 = vld [vmem:[#allocation2 + $0x78] sm:$0xff]
  %v5865 = vld [vmem:[#allocation2 + $0x80] sm:$0xff]
  %v5866 = vld [vmem:[#allocation2 + $0x88] sm:$0xff]
  %v5867 = vld [vmem:[#allocation2 + $0x90] sm:$0xff]
  %v5868 = vld [vmem:[#allocation2 + $0x98] sm:$0xff]
  %v5869 = vld [vmem:[#allocation2 + $0xa0] sm:$0xff]
  %v5870 = vld [vmem:[#allocation2 + $0xa8] sm:$0xff]
  %v5871 = vld [vmem:[#allocation2 + $0xb0] sm:$0xff]
  %v5872 = vld [vmem:[#allocation2 + $0xb8] sm:$0xff]
  %v5873 = vld [vmem:[#allocation2 + $0xc0] sm:$0xff]
  %v5874 = vld [vmem:[#allocation2 + $0xc8] sm:$0xff]
  %v5875 = vld [vmem:[#allocation2 + $0xd0] sm:$0xff]
  %v5876 = vld [vmem:[#allocation2 + $0xd8] sm:$0xff]
  %v5877 = vld [vmem:[#allocation2 + $0xe0] sm:$0xff]
  %v5878 = vld [vmem:[#allocation2 + $0xe8] sm:$0xff]
  %v5879 = vld [vmem:[#allocation2 + $0xf0] sm:$0xff]
  %v5880 = vld [vmem:[#allocation2 + $0xf8] sm:$0xff]
  %v5881 = vld [vmem:[#allocation2 + $0x100] sm:$0xff]
  %v5882 = vld [vmem:[#allocation2 + $0x108] sm:$0xff]
  %v5883 = vld [vmem:[#allocation2 + $0x110] sm:$0xff]
  %v5884 = vld [vmem:[#allocation2 + $0x118] sm:$0xff]
  %v5885 = vld [vmem:[#allocation2 + $0x120] sm:$0xff]
  %v5886 = vld [vmem:[#allocation2 + $0x128] sm:$0xff]
  %v5887 = vld [vmem:[#allocation2 + $0x130] sm:$0xff]
  %v5888 = vld [vmem:[#allocation2 + $0x138] sm:$0xff]
  %v5889 = vld [vmem:[#allocation2 + $0x140] sm:$0xff]
  %v5890 = vld [vmem:[#allocation2 + $0x148] sm:$0xff]
  %v5891 = vld [vmem:[#allocation2 + $0x150] sm:$0xff]
  %v5892 = vld [vmem:[#allocation2 + $0x158] sm:$0xff]
  %v5893 = vld [vmem:[#allocation2 + $0x160] sm:$0xff]
  %v5894 = vld [vmem:[#allocation2 + $0x168] sm:$0xff]
  %v5895 = vld [vmem:[#allocation2 + $0x170] sm:$0xff]
  %v5896 = vld [vmem:[#allocation2 + $0x178] sm:$0xff]
  %v5897 = vld [vmem:[#allocation2 + $0x180] sm:$0xff]
  %v5898 = vld [vmem:[#allocation2 + $0x188] sm:$0xff]
  %v5899 = vld [vmem:[#allocation2 + $0x190] sm:$0xff]
  %v5900 = vld [vmem:[#allocation2 + $0x198] sm:$0xff]
  %v5901 = vld [vmem:[#allocation2 + $0x1a0] sm:$0xff]
  %v5902 = vld [vmem:[#allocation2 + $0x1a8] sm:$0xff]
  %v5903 = vld [vmem:[#allocation2 + $0x1b0] sm:$0xff]
  %v5904 = vld [vmem:[#allocation2 + $0x1b8] sm:$0xff]
  %v5905 = vld [vmem:[#allocation2 + $0x1c0] sm:$0xff]
  %v5906 = vld [vmem:[#allocation2 + $0x1c8] sm:$0xff]
  %v5907 = vld [vmem:[#allocation2 + $0x1d0] sm:$0xff]
  %v5908 = vld [vmem:[#allocation2 + $0x1d8] sm:$0xff]
  %v5909 = vld [vmem:[#allocation2 + $0x1e0] sm:$0xff]
  %v5910 = vld [vmem:[#allocation2 + $0x1e8] sm:$0xff]
  %v5911 = vld [vmem:[#allocation2 + $0x1f0] sm:$0xff]
  %v5912 = vld [vmem:[#allocation2 + $0x1f8] sm:$0xff]
  %v5913 = vld [vmem:[#allocation2 + $0x200] sm:$0xff]
  %v5914 = vld [vmem:[#allocation2 + $0x208] sm:$0xff]
  %v5915 = vld [vmem:[#allocation2 + $0x210] sm:$0xff]
  %v5916 = vld [vmem:[#allocation2 + $0x218] sm:$0xff]
  %v5917 = vld [vmem:[#allocation2 + $0x220] sm:$0xff]
  %v5918 = vld [vmem:[#allocation2 + $0x228] sm:$0xff]
  %v5919 = vld [vmem:[#allocation2 + $0x230] sm:$0xff]
  %v5920 = vld [vmem:[#allocation2 + $0x238] sm:$0xff]
  %v5921 = vld [vmem:[#allocation2 + $0x240] sm:$0xff]
  %v5922 = vld [vmem:[#allocation2 + $0x248] sm:$0xff]
  %v5923 = vld [vmem:[#allocation2 + $0x250] sm:$0xff]
  %v5924 = vld [vmem:[#allocation2 + $0x258] sm:$0xff]
  %v5925 = vld [vmem:[#allocation2 + $0x260] sm:$0xff]
  %v5926 = vld [vmem:[#allocation2 + $0x268] sm:$0xff]
  %v5927 = vld [vmem:[#allocation2 + $0x270] sm:$0xff]
  %v5928 = vld [vmem:[#allocation2 + $0x278] sm:$0xff]
  %v5929 = vld [vmem:[#allocation2 + $0x280] sm:$0xff]
  %v5930 = vld [vmem:[#allocation2 + $0x288] sm:$0xff]
  %v5931 = vld [vmem:[#allocation2 + $0x290] sm:$0xff]
  %v5932 = vld [vmem:[#allocation2 + $0x298] sm:$0xff]
  %v5933 = vld [vmem:[#allocation2 + $0x2a0] sm:$0xff]
  %v5934 = vld [vmem:[#allocation2 + $0x2a8] sm:$0xff]
  %v5935 = vld [vmem:[#allocation2 + $0x2b0] sm:$0xff]
  %v5936 = vld [vmem:[#allocation2 + $0x2b8] sm:$0xff]
  %v5937 = vld [vmem:[#allocation2 + $0x2c0] sm:$0xff]
  %v5938 = vld [vmem:[#allocation2 + $0x2c8] sm:$0xff]
  %v5939 = vld [vmem:[#allocation2 + $0x2d0] sm:$0xff]
  %v5940 = vld [vmem:[#allocation2 + $0x2d8] sm:$0xff]
  %v5941 = vld [vmem:[#allocation2 + $0x2e0] sm:$0xff]
  %v5942 = vld [vmem:[#allocation2 + $0x2e8] sm:$0xff]
  %v5943 = vld [vmem:[#allocation2 + $0x2f0] sm:$0xff]
  %v5944 = vld [vmem:[#allocation2 + $0x2f8] sm:$0xff]
  %s5945 = scalar_lea.vmem %s1, 8
  %v5946 = vld [vmem:[%s5945] sm:$0x3]
  %v5948 = vlaneseq
  %v5949 = vshrl.u32 %v5948, 7
  %v5950 = vsub.s32 0, %v5949
  %v5951 = vrot.slane %v5946, %v5950
  %v5952 = vlaneseq
  %v5953 = vshrl.u32 %v5952, 7
  %v5954 = vsub.s32 1, %v5953
  %v5955 = vrot.slane %v5946, %v5954
  %5958 = vmatprep.subr.bf16.mxu0 %v5850
  %5959 = vmatpush1.bf16.msra.mxu0 %v5849
  %5960 = vmatprep.subr.bf16.mxu0 %v5852
  %5961 = vmatpush1.bf16.msra.mxu0 %v5851
  %5962 = vmatprep.subr.bf16.mxu0 %v5854
  %5963 = vmatpush1.bf16.msra.mxu0 %v5853
  %5964 = vmatprep.subr.bf16.mxu0 %v5856
  %5965 = vmatpush1.bf16.msra.mxu0 %v5855
  %5966 = vmatprep.subr.bf16.mxu0 %v5858
  %5967 = vmatpush1.bf16.msra.mxu0 %v5857
  %5968 = vmatprep.subr.bf16.mxu0 %v5860
  %5969 = vmatpush1.bf16.msra.mxu0 %v5859
  %5970 = vmatprep.subr.bf16.mxu0 %v5862
  %5971 = vmatpush1.bf16.msra.mxu0 %v5861
  %5972 = vmatprep.subr.bf16.mxu0 %v5864
  %5973 = vmatpush1.bf16.msra.mxu0 %v5863
  %5974 = vmatprep.subr.bf16.mxu0 %v5866
  %5975 = vmatpush1.bf16.msra.mxu0 %v5865
  %5976 = vmatprep.subr.bf16.mxu0 %v5868
  %5977 = vmatpush1.bf16.msra.mxu0 %v5867
  %5978 = vmatprep.subr.bf16.mxu0 %v5870
  %5979 = vmatpush1.bf16.msra.mxu0 %v5869
  %5980 = vmatprep.subr.bf16.mxu0 %v5872
  %5981 = vmatpush1.bf16.msra.mxu0 %v5871
  %5982 = vmatprep.subr.bf16.mxu0 %v5874
  %5983 = vmatpush1.bf16.msra.mxu0 %v5873
  %5984 = vmatprep.subr.bf16.mxu0 %v5876
  %5985 = vmatpush1.bf16.msra.mxu0 %v5875
  %5986 = vmatprep.subr.bf16.mxu0 %v5878
  %5987 = vmatpush1.bf16.msra.mxu0 %v5877
  %5988 = vmatprep.subr.bf16.mxu0 %v5880
  %5989 = vmatpush1.bf16.msra.mxu0 %v5879
  %5990 = vmatprep.mubr.bf16.mxu0 %v5838
  %5991 = vmatmul.mubr.bf16.gmra.mrb[0].mxu0 %v5837
  %v5992 = vpop.f32.mrb[0].mxu0
  %v5993 = vadd.f32 %v5951, %v5992
  %v5994 = vpop.f32.mrb[0].mxu0
  %v5995 = vadd.f32 %v5955, %v5994
  %v5996 = vpop.f32.mrb[0].mxu0
  %v5997 = vadd.f32 %v5951, %v5996
  %v5998 = vpop.f32.mrb[0].mxu0
  %v5999 = vadd.f32 %v5955, %v5998
  %6000 = vmatprep.mubr.bf16.mxu0 %v5844
  %6001 = vmatmul.mubr.bf16.gmra.mrb[0].mxu0 %v5843
  %v6002 = vpop.f32.mrb[0].mxu0
  %v6003 = vadd.f32 %v5951, %v6002
  %v6004 = vpop.f32.mrb[0].mxu0
  %v6005 = vadd.f32 %v5955, %v6004
  %v6006 = vpop.f32.mrb[0].mxu0
  %v6007 = vadd.f32 %v5951, %v6006
  %v6008 = vpop.f32.mrb[0].mxu0
  %v6009 = vadd.f32 %v5955, %v6008
  %6010 = vdwg.mxu0
  %6011 = vmatprep.subr.bf16.mxu0 %v5882
  %6012 = vmatpush1.bf16.msra.mxu0 %v5881
  %6013 = vmatprep.subr.bf16.mxu0 %v5884
  %6014 = vmatpush1.bf16.msra.mxu0 %v5883
  %6015 = vmatprep.subr.bf16.mxu0 %v5886
  %6016 = vmatpush1.bf16.msra.mxu0 %v5885
  %6017 = vmatprep.subr.bf16.mxu0 %v5888
  %6018 = vmatpush1.bf16.msra.mxu0 %v5887
  %6019 = vmatprep.subr.bf16.mxu0 %v5890
  %6020 = vmatpush1.bf16.msra.mxu0 %v5889
  %6021 = vmatprep.subr.bf16.mxu0 %v5892
  %6022 = vmatpush1.bf16.msra.mxu0 %v5891
  %6023 = vmatprep.subr.bf16.mxu0 %v5894
  %6024 = vmatpush1.bf16.msra.mxu0 %v5893
  %6025 = vmatprep.subr.bf16.mxu0 %v5896
  %6026 = vmatpush1.bf16.msra.mxu0 %v5895
  %6027 = vmatprep.subr.bf16.mxu0 %v5898
  %6028 = vmatpush1.bf16.msra.mxu0 %v5897
  %6029 = vmatprep.subr.bf16.mxu0 %v5900
  %6030 = vmatpush1.bf16.msra.mxu0 %v5899
  %6031 = vmatprep.subr.bf16.mxu0 %v5902
  %6032 = vmatpush1.bf16.msra.mxu0 %v5901
  %6033 = vmatprep.subr.bf16.mxu0 %v5904
  %6034 = vmatpush1.bf16.msra.mxu0 %v5903
  %6035 = vmatprep.subr.bf16.mxu0 %v5906
  %6036 = vmatpush1.bf16.msra.mxu0 %v5905
  %6037 = vmatprep.subr.bf16.mxu0 %v5908
  %6038 = vmatpush1.bf16.msra.mxu0 %v5907
  %6039 = vmatprep.subr.bf16.mxu0 %v5910
  %6040 = vmatpush1.bf16.msra.mxu0 %v5909
  %6041 = vmatprep.subr.bf16.mxu0 %v5912
  %6042 = vmatpush1.bf16.msra.mxu0 %v5911
  %6043 = vmatprep.mubr.bf16.mxu0 %v5840
  %6044 = vmatmul.mubr.bf16.gmra.mrb[0].mxu0 %v5839
  %v6045 = vpop.f32.mrb[0].mxu0
  %v6046 = vadd.f32 %v5993, %v6045
  %v6047 = vpop.f32.mrb[0].mxu0
  %v6048 = vadd.f32 %v5995, %v6047
  %v6049 = vpop.f32.mrb[0].mxu0
  %v6050 = vadd.f32 %v5997, %v6049
  %v6051 = vpop.f32.mrb[0].mxu0
  %v6052 = vadd.f32 %v5999, %v6051
  %6053 = vmatprep.mubr.bf16.mxu0 %v5846
  %6054 = vmatmul.mubr.bf16.gmra.mrb[0].mxu0 %v5845
  %v6055 = vpop.f32.mrb[0].mxu0
  %v6056 = vadd.f32 %v6003, %v6055
  %v6057 = vpop.f32.mrb[0].mxu0
  %v6058 = vadd.f32 %v6005, %v6057
  %v6059 = vpop.f32.mrb[0].mxu0
  %v6060 = vadd.f32 %v6007, %v6059
  %v6061 = vpop.f32.mrb[0].mxu0
  %v6062 = vadd.f32 %v6009, %v6061
  %6063 = vdwg.mxu0
  %6064 = vmatprep.subr.bf16.mxu0 %v5914
  %6065 = vmatpush1.bf16.msra.mxu0 %v5913
  %6066 = vmatprep.subr.bf16.mxu0 %v5916
  %6067 = vmatpush1.bf16.msra.mxu0 %v5915
  %6068 = vmatprep.subr.bf16.mxu0 %v5918
  %6069 = vmatpush1.bf16.msra.mxu0 %v5917
  %6070 = vmatprep.subr.bf16.mxu0 %v5920
  %6071 = vmatpush1.bf16.msra.mxu0 %v5919
  %6072 = vmatprep.subr.bf16.mxu0 %v5922
  %6073 = vmatpush1.bf16.msra.mxu0 %v5921
  %6074 = vmatprep.subr.bf16.mxu0 %v5924
  %6075 = vmatpush1.bf16.msra.mxu0 %v5923
  %6076 = vmatprep.subr.bf16.mxu0 %v5926
  %6077 = vmatpush1.bf16.msra.mxu0 %v5925
  %6078 = vmatprep.subr.bf16.mxu0 %v5928
  %6079 = vmatpush1.bf16.msra.mxu0 %v5927
  %6080 = vmatprep.subr.bf16.mxu0 %v5930
  %6081 = vmatpush1.bf16.msra.mxu0 %v5929
  %6082 = vmatprep.subr.bf16.mxu0 %v5932
  %6083 = vmatpush1.bf16.msra.mxu0 %v5931
  %6084 = vmatprep.subr.bf16.mxu0 %v5934
  %6085 = vmatpush1.bf16.msra.mxu0 %v5933
  %6086 = vmatprep.subr.bf16.mxu0 %v5936
  %6087 = vmatpush1.bf16.msra.mxu0 %v5935
  %6088 = vmatprep.subr.bf16.mxu0 %v5938
  %6089 = vmatpush1.bf16.msra.mxu0 %v5937
  %6090 = vmatprep.subr.bf16.mxu0 %v5940
  %6091 = vmatpush1.bf16.msra.mxu0 %v5939
  %6092 = vmatprep.subr.bf16.mxu0 %v5942
  %6093 = vmatpush1.bf16.msra.mxu0 %v5941
  %6094 = vmatprep.subr.bf16.mxu0 %v5944
  %6095 = vmatpush1.bf16.msra.mxu0 %v5943
  %6096 = vmatprep.mubr.bf16.mxu0 %v5842
  %6097 = vmatmul.mubr.bf16.gmra.mrb[0].mxu0 %v5841
  %v6098 = vpop.f32.mrb[0].mxu0
  %v6099 = vadd.f32 %v6046, %v6098
  %v6100 = vpop.f32.mrb[0].mxu0
  %v6101 = vadd.f32 %v6048, %v6100
  %v6102 = vpop.f32.mrb[0].mxu0
  %v6103 = vadd.f32 %v6050, %v6102
  %v6104 = vpop.f32.mrb[0].mxu0
  %v6105 = vadd.f32 %v6052, %v6104
  %6106 = vmatprep.mubr.bf16.mxu0 %v5848
  %6107 = vmatmul.mubr.bf16.gmra.mrb[0].mxu0 %v5847
  %v6108 = vpop.f32.mrb[0].mxu0
  %v6109 = vadd.f32 %v6056, %v6108
  %v6110 = vpop.f32.mrb[0].mxu0
  %v6111 = vadd.f32 %v6058, %v6110
  %v6112 = vpop.f32.mrb[0].mxu0
  %v6113 = vadd.f32 %v6060, %v6112
  %v6114 = vpop.f32.mrb[0].mxu0
  %v6115 = vadd.f32 %v6062, %v6114
  %6116 = vdwg.mxu0
  %v6117 = vmax.f32 %v6099, 0.0
  %v6118 = vmax.f32 %v6101, 0.0
  %v6119 = vmax.f32 %v6103, 0.0
  %v6120 = vmax.f32 %v6105, 0.0
  %v6121 = vmax.f32 %v6109, 0.0
  %v6122 = vmax.f32 %v6111, 0.0
  %v6123 = vmax.f32 %v6113, 0.0
  %v6124 = vmax.f32 %v6115, 0.0
  %6125 = vst [vmem:[%s3] sm:$0xff] %v6117
  %6126 = vst [vmem:[%s3 + $0x8] sm:$0xff] %v6118
  %6127 = vst [vmem:[%s3 + $0x10] sm:$0xff] %v6119
  %6128 = vst [vmem:[%s3 + $0x18] sm:$0xff] %v6120
  %6129 = vst [vmem:[%s3 + $0x20] sm:$0xff] %v6121
  %6130 = vst [vmem:[%s3 + $0x28] sm:$0xff] %v6122
  %6131 = vst [vmem:[%s3 + $0x30] sm:$0xff] %v6123
  %6132 = vst [vmem:[%s3 + $0x38] sm:$0xff] %v6124
  // Predicated region
  $region195: #{conv_block.1} parent=0 // pred_check
    _
  $region196: #{conv_block.1} parent=0 // pred_check_branch
    %6134 = sbr.rel (0) target = $region198
  $region197: #{conv_block.1} parent=0 // pred_region
    _
  $region198: #{conv_block.1} parent=0 // pred_fallthru
    _
  // Predicated region
  $region199: #{conv_block.1} parent=0 // pred_check
    _
  $region200: #{conv_block.1} parent=0 // pred_check_branch
    %6136 = sbr.rel (0) target = $region202
  $region201: #{conv_block.1} parent=0 // pred_region
    _
  $region202: #{conv_block.1} parent=0 // pred_fallthru
    _
  %6137 = vsyncmov [#allocation3]
  %s6138 = vpop.sfrf %6137
  %p6139 = scmp.eq.s32.totalorder %s6138, 0
  %p6140 = pneg %p6139
  %6142 = shalt.err (%p6140)
  %s6143 = scalar_lea.sflag [#allocation3], 1
  %6144 = vsyncmov %s6143
  %s6145 = vpop.sfrf %6144
  %p6146 = scmp.eq.s32.totalorder %s6145, 0
  %p6147 = pneg %p6146
  %6149 = shalt.err (%p6147)

</llo_original>
